<compile_context>
chip_gen: v7x
topology: tpu7x:2x2x1
jax: 0.10.0
libtpu: 0.0.40
codegen_flags: <defaults>
</compile_context>

<pallas_src>
import jax
import jax.numpy as jnp
from jax.experimental import pallas as pl
from jax.experimental.pallas import tpu as pltpu


def _round_up(v, m):
    return ((v + m - 1) // m) * m


def _attn_net_kernel(x_ref, w1_ref, b1_ref, w2_ref, b2_ref, out_ref):
    # Fused: A^T = (tanh(x @ W1 + b1) @ W2 + b2)^T, stored lane-dense along N.
    x = x_ref[...].astype(jnp.bfloat16)                     # in-kernel f32->bf16 (VPU, hidden under DMA)
    h = jnp.dot(x, w1_ref[...],
                preferred_element_type=jnp.float32)         # (TN, D) f32 acc on the MXU
    h = jnp.tanh(h + b1_ref[...])                           # f32 bias add + tanh (EUP)
    a = jnp.dot(h.astype(jnp.bfloat16), w2_ref[...],
                preferred_element_type=jnp.float32)         # (TN, C_lanes) f32
    a = a + b2_ref[...]
    a_t = a.T                                               # (C_lanes, TN) — XLU transpose, hidden under MXU/DMA
    out_ref[...] = a_t[:out_ref.shape[0], :].astype(out_ref.dtype)


def attn_net_forward(x, w1, b1, w2, b2, *, block_rows=1024):
    """Pallas forward for Attn_Net.

    x : (N, L) float32
    w1: (L, D), b1: (1, D)      (weights stored as (in, out), i.e. torch W.T)
    w2: (D, C), b2: (1, C)
    returns (A, x) with A of shape (N, C) -- same semantics as the torch module.
    """
    N, L = x.shape
    D = w1.shape[1]
    C = w2.shape[1]

    # Pad n_classes up to one full 128-lane slab for the MXU / in-kernel transpose.
    C_lanes = _round_up(C, 128)

    # Big row tile (mem-bound kernel). If N is smaller than one tile, use a single
    # full-array block (always a legal BlockSpec); otherwise a 128/256-aligned tile
    # with a masked ragged tail via the cdiv grid — no wrapper-side padding of x.
    TN = block_rows if N >= block_rows else N
    grid = (pl.cdiv(N, TN),)

    # Weights/biases are tiny (~0.6 MiB); one-time casts/pads are negligible.
    w1_b = w1.astype(jnp.bfloat16)
    b1_f = b1.astype(jnp.float32).reshape(1, D)
    w2_b = jnp.pad(w2.astype(jnp.bfloat16), ((0, 0), (0, C_lanes - C)))
    b2_f = jnp.pad(b2.astype(jnp.float32).reshape(1, C), ((0, 0), (0, C_lanes - C)))

    a_t = pl.pallas_call(
        _attn_net_kernel,
        out_shape=jax.ShapeDtypeStruct((C, N), jnp.float32),
        grid_spec=pl.GridSpec(
            grid=grid,
            in_specs=[
                pl.BlockSpec((TN, L), lambda i: (i, 0)),        # x: streamed over N (f32)
                pl.BlockSpec((L, D), lambda i: (0, 0)),         # w1: VMEM-resident
                pl.BlockSpec((1, D), lambda i: (0, 0)),         # b1: VMEM-resident
                pl.BlockSpec((D, C_lanes), lambda i: (0, 0)),   # w2: VMEM-resident (lane-padded)
                pl.BlockSpec((1, C_lanes), lambda i: (0, 0)),   # b2: VMEM-resident
            ],
            out_specs=pl.BlockSpec((C, TN), lambda i: (0, i)),  # transposed, lane-dense along N
        ),
        compiler_params=pltpu.CompilerParams(
            dimension_semantics=("parallel",),                  # megacore sharding on v7x
            vmem_limit_bytes=48 << 20,                          # headroom above v5e's 16 MiB default
        ),
    )(x, w1_b, b1_f, w2_b, b2_f)

    a = a_t.T.astype(x.dtype)  # (N, C); trivial for small C
    return a, x


def init_params(key, L, D, n_classes, dtype=jnp.float32):
    """Deterministic synthetic parameters (torch-Linear-like uniform init)."""
    k1, k2, k3, k4 = jax.random.split(key, 4)
    lim1 = 1.0 / (L ** 0.5)
    lim2 = 1.0 / (D ** 0.5)
    w1 = jax.random.uniform(k1, (L, D), dtype, -lim1, lim1)
    b1 = jax.random.uniform(k2, (1, D), dtype, -lim1, lim1)
    w2 = jax.random.uniform(k3, (D, n_classes), dtype, -lim2, lim2)
    b2 = jax.random.uniform(k4, (1, n_classes), dtype, -lim2, lim2)
    return w1, b1, w2, b2


if __name__ == "__main__":
    # Module-default feature sizes (L=1024, D=256, n_classes=1). N chosen so the
    # grid has multiple steps plus a ragged tail (exercises the cdiv/masked path).
    # TODO(synk): nn.Dropout(0.25) branch (dropout=True, training mode) not implemented;
    # the default module (dropout=False) and eval-mode forward are exactly covered.
    N, L, D, n_classes = 2000, 1024, 256, 1

    key = jax.random.PRNGKey(0)
    kx, kp = jax.random.split(key)
    x = jax.random.normal(kx, (N, L), jnp.float32)
    w1, b1, w2, b2 = init_params(kp, L, D, n_classes)

    a, x_out = attn_net_forward(x, w1, b1, w2, b2)
    jax.block_until_ready(a)
    jax.block_until_ready(x_out)

    # Reference (pure f32 JAX, same math as the torch module). bf16 MXU operands in
    # the kernel -> loosened tolerance (accumulation / bias / tanh stay f32).
    a_ref = jnp.tanh(x @ w1 + b1) @ w2 + b2
    assert a.shape == (N, n_classes)
    assert x_out.shape == (N, L)
    assert jnp.allclose(a, a_ref, atol=3e-2, rtol=3e-2), float(
        jnp.max(jnp.abs(a - a_ref)))
    assert jnp.array_equal(x_out, x)

    print("KERNEL_OK")
</pallas_src>

<mosaic_0001>
module attributes {stable_mosaic.version = 11 : i64} {
  func.func @_attn_net_kernel(%arg0: i32, %arg1: memref<1024x1024xf32, #tpu.memory_space<vmem>>, %arg2: memref<1024x256xbf16, #tpu.memory_space<vmem>>, %arg3: memref<1x256xf32, #tpu.memory_space<vmem>>, %arg4: memref<256x128xbf16, #tpu.memory_space<vmem>>, %arg5: memref<1x128xf32, #tpu.memory_space<vmem>>, %arg6: memref<1x1024xf32, #tpu.memory_space<vmem>>) attributes {dimension_semantics = [#tpu.dimension_semantics<parallel>], iteration_bounds = array<i64: 2>, scalar_prefetch = 0 : i64, scratch_operands = 0 : i64, tpu.core_type = #tpu.core_type<tc>, window_params = [{transform_indices = @transform_0, window_bounds = array<i64: 1024, 1024>}, {pipeline_mode = #tpu.pipeline_mode<synchronous>, transform_indices = @transform_1, window_bounds = array<i64: 1024, 256>}, {pipeline_mode = #tpu.pipeline_mode<synchronous>, transform_indices = @transform_2, window_bounds = array<i64: 1, 256>}, {pipeline_mode = #tpu.pipeline_mode<synchronous>, transform_indices = @transform_3, window_bounds = array<i64: 256, 128>}, {pipeline_mode = #tpu.pipeline_mode<synchronous>, transform_indices = @transform_4, window_bounds = array<i64: 1, 128>}, {transform_indices = @transform_5, window_bounds = array<i64: 1, 1024>}]} {
    %c0 = arith.constant 0 : index
    %c0_0 = arith.constant 0 : index
    %0 = vector.load %arg1[%c0, %c0_0] : memref<1024x1024xf32, #tpu.memory_space<vmem>>, vector<1024x1024xf32>
    %1 = arith.truncf %0 : vector<1024x1024xf32> to vector<1024x1024xbf16>
    %c0_1 = arith.constant 0 : index
    %c0_2 = arith.constant 0 : index
    %2 = vector.load %arg2[%c0_1, %c0_2] : memref<1024x256xbf16, #tpu.memory_space<vmem>>, vector<1024x256xbf16>
    %cst = arith.constant dense<0.000000e+00> : vector<1024x256xf32>
    %3 = tpu.matmul %1, %2, %cst {dimension_numbers = #tpu.dot_dimension_numbers<[1], [0], [0], [1], [0, 0, 1, 1], [], []>} : vector<1024x1024xbf16>, vector<1024x256xbf16>, vector<1024x256xf32> -> vector<1024x256xf32>
    %c0_3 = arith.constant 0 : index
    %c0_4 = arith.constant 0 : index
    %4 = vector.load %arg3[%c0_3, %c0_4] : memref<1x256xf32, #tpu.memory_space<vmem>>, vector<1x256xf32>
    %5 = vector.broadcast %4 : vector<1x256xf32> to vector<1024x256xf32>
    %6 = arith.addf %3, %5 : vector<1024x256xf32>
    %7 = math.tanh %6 : vector<1024x256xf32>
    %8 = arith.truncf %7 : vector<1024x256xf32> to vector<1024x256xbf16>
    %c0_5 = arith.constant 0 : index
    %c0_6 = arith.constant 0 : index
    %9 = vector.load %arg4[%c0_5, %c0_6] : memref<256x128xbf16, #tpu.memory_space<vmem>>, vector<256x128xbf16>
    %cst_7 = arith.constant dense<0.000000e+00> : vector<1024x128xf32>
    %10 = tpu.matmul %8, %9, %cst_7 {dimension_numbers = #tpu.dot_dimension_numbers<[1], [0], [0], [1], [0, 0, 1, 1], [], []>} : vector<1024x256xbf16>, vector<256x128xbf16>, vector<1024x128xf32> -> vector<1024x128xf32>
    %c0_8 = arith.constant 0 : index
    %c0_9 = arith.constant 0 : index
    %11 = vector.load %arg5[%c0_8, %c0_9] : memref<1x128xf32, #tpu.memory_space<vmem>>, vector<1x128xf32>
    %12 = vector.broadcast %11 : vector<1x128xf32> to vector<1024x128xf32>
    %13 = arith.addf %10, %12 : vector<1024x128xf32>
    %14 = tpu.transpose %13, [1, 0] : vector<1024x128xf32> -> vector<128x1024xf32>
    %15 = vector.extract_strided_slice %14 {offsets = [0, 0], sizes = [1, 1024], strides = [1, 1]} : vector<128x1024xf32> to vector<1x1024xf32>
    %c0_10 = arith.constant 0 : index
    %c0_11 = arith.constant 0 : index
    %16 = vector.load %arg6[%c0_10, %c0_11] : memref<1x1024xf32, #tpu.memory_space<vmem>>, vector<1x1024xf32>
    tpu.vector_store %arg6[%c0_10, %c0_11], %15 {strides = array<i32>} : memref<1x1024xf32, #tpu.memory_space<vmem>>, vector<1x1024xf32>,
    return
  }
  func.func @transform_0(%arg0: i32) -> (i32, i32) {
    %c0_i32 = arith.constant 0 : i32
    %c0_i32_0 = arith.constant 0 : i32
    return %arg0, %c0_i32 : i32, i32
  }
  func.func @transform_1(%arg0: i32) -> (i32, i32) {
    %c0_i32 = arith.constant 0 : i32
    %c0_i32_0 = arith.constant 0 : i32
    %c0_i32_1 = arith.constant 0 : i32
    return %c0_i32, %c0_i32_0 : i32, i32
  }
  func.func @transform_2(%arg0: i32) -> (i32, i32) {
    %c0_i32 = arith.constant 0 : i32
    %c0_i32_0 = arith.constant 0 : i32
    %c0_i32_1 = arith.constant 0 : i32
    return %c0_i32, %c0_i32_0 : i32, i32
  }
  func.func @transform_3(%arg0: i32) -> (i32, i32) {
    %c0_i32 = arith.constant 0 : i32
    %c0_i32_0 = arith.constant 0 : i32
    %c0_i32_1 = arith.constant 0 : i32
    return %c0_i32, %c0_i32_0 : i32, i32
  }
  func.func @transform_4(%arg0: i32) -> (i32, i32) {
    %c0_i32 = arith.constant 0 : i32
    %c0_i32_0 = arith.constant 0 : i32
    %c0_i32_1 = arith.constant 0 : i32
    return %c0_i32, %c0_i32_0 : i32, i32
  }
  func.func @transform_5(%arg0: i32) -> (i32, i32) {
    %c0_i32 = arith.constant 0 : i32
    %c0_i32_0 = arith.constant 0 : i32
    return %c0_i32, %arg0 : i32, i32
  }
}

</mosaic_0001>

<llo_original>
// kernel: tpu_custom_call.1
$region0: #{tpu_custom_call.1}
  #allocation0 [shape = 'u32[]', space=smem, size = 0x4, offset = 0x4, fixed_abs, tag = 'smem constant byte address 0x4 - core index']
  #allocation1 [shape = 'u32[144,128]{1,0:T(1,128)}', space=vmem, size = 0x12000, scoped, tag = 'internal scratch']
  %s0 = inlined_call_operand.hbm [shape: f32[2000,1024], index: 0, kind: input, shape index: {}]
  %s1 = inlined_call_operand.hbm [shape: bf16[1024,256], index: 1, kind: input, shape index: {}]
  %s2 = inlined_call_operand.hbm [shape: f32[1,256], index: 2, kind: input, shape index: {}]
  %s3 = inlined_call_operand.hbm [shape: bf16[256,128], index: 3, kind: input, shape index: {}]
  %s4 = inlined_call_operand.hbm [shape: f32[1,128], index: 4, kind: input, shape index: {}]
  %s5 = inlined_call_operand.hbm [shape: f32[1,2000], index: 5, kind: output, shape index: {}]
  %s6 = sld [smem:[#allocation0]]
  $region73: #{tpu_custom_call.1} parent=0
    _
  %s8 = ssub.s32 1, %s6
  %s9 = scalar_select 0, %s8, %s6
  $region1: #{tpu_custom_call.1} parent=0
    #allocation2 [shape = 'u8[8388608]{0}', space=vmem, size = 0x800000, scoped, tag = 'input window, operand 0']
    #allocation3 [shape = 's32[2]{0}', space=sflag, size = 0x8, scoped, tag = 'scoped memory for tpu_custom_call.1']
    #allocation4 [shape = 's32[2]{0}', space=sflag, size = 0x8, scoped, tag = 'scoped memory for tpu_custom_call.1']
    #allocation5 [shape = 'u8[524288]{0}', space=vmem, size = 0x80000, scoped, tag = 'input window, operand 1, single buffered']
    #allocation6 [shape = 's32[1]{0}', space=sflag, size = 0x4, scoped, tag = 'scoped memory for tpu_custom_call.1']
    #allocation7 [shape = 'u8[1024]{0}', space=vmem, size = 0x400, scoped, tag = 'input window, operand 2, single buffered']
    #allocation8 [shape = 'u8[65536]{0}', space=vmem, size = 0x10000, scoped, tag = 'input window, operand 3, single buffered']
    #allocation9 [shape = 's32[1]{0}', space=sflag, size = 0x4, scoped, tag = 'scoped memory for tpu_custom_call.1']
    #allocation10 [shape = 'u8[512]{0}', space=vmem, size = 0x400, scoped, tag = 'input window, operand 4, single buffered']
    #allocation11 [shape = 'u8[8192]{0}', space=vmem, size = 0x2000, scoped, tag = 'output window, operand 0']
    %10 = vsyncpa [#allocation3], 0
    %s11 = scalar_lea.sflag [#allocation3], 1
    %12 = vsyncpa %s11, 0
    %13 = vsyncpa [#allocation6], 0
    %14 = vsyncpa [#allocation9], 0
    %15 = vsyncpa [#allocation4], 0
    %s16 = scalar_lea.sflag [#allocation4], 1
    %17 = vsyncpa %s16, 0
    loop: start=0, step=1, limit=4
    $region2: #{tpu_custom_call.1} parent=1 // loop_pre_header
      _
    $region3: #{tpu_custom_call.1} parent=1 // loop_header
      %s19 = sphi 0, %s23
      %p20 = scmp.ge.s32.totalorder %s19, 4
      %s29 = sphi 0, %s31
      %s32 = sphi 0, %s29
      %s33 = sphi 0, %s32
      %s49 = sphi 0, %s33
      %s53 = sphi 0, %s53
      %s55 = sphi 0, %s53
      %s56 = sphi 0, %s55
      %s70 = sphi 0, %s56
      %s74 = sphi 0, %s74
      %s76 = sphi 0, %s74
      %s77 = sphi 0, %s76
      %s91 = sphi 0, %s77
      %s95 = sphi 0, %s95
      %s97 = sphi 0, %s95
      %s98 = sphi 0, %s97
      %s112 = sphi 0, %s98
      %s116 = sphi 0, %s116
      %s118 = sphi 0, %s116
      %s119 = sphi 0, %s118
      %s133 = sphi 0, %s119
      %s139 = sphi 0, %s141
      %s142 = sphi 0, %s139
      %s143 = sphi 0, %s142
      %s159 = sphi 0, %s143
    $region4: #{tpu_custom_call.1} parent=1 // loop_header_branch
      %22 = sbr.rel (%p20) target = $region8
    $region5: #{tpu_custom_call.1} parent=1 // loop_body
      %s24 = ssub.s32 %s19, 1
      %s25 = ssub.s32 %s19, 2
      %s26 = sadd.s32 %s19, 1
      %s27 = ssub.s32 %s19, %s26
      %p28 = scmp.eq.s32.totalorder %s27, 0
      %s30 = sadd.s32 %s29, 1
      %s31 = scalar_select %p28, %s29, %s30
      %p34 = pneg %p28
      %p35 = scmp.eq.s32.totalorder %s19, 1
      %p36 = por %p34, %p35
      %p37 = scmp.ne.s32.totalorder %s29, %s32
      %p38 = scmp.eq.s32.totalorder %s19, 0
      %p39 = por %p37, %p38
      %p40 = scmp.ne.s32.totalorder %s29, %s32
      %p41 = scmp.eq.s32.totalorder %s24, 1
      %p42 = por %p40, %p41
      %p43 = scmp.ne.s32.totalorder %s32, %s33
      %p44 = scmp.eq.s32.totalorder %s24, 0
      %p45 = por %p43, %p44
      %p46 = scmp.ne.s32.totalorder %s32, %s33
      %p47 = scmp.eq.s32.totalorder %s25, 1
      %p48 = por %p46, %p47
      %p50 = scmp.ne.s32.totalorder %s33, %s49
      %p51 = scmp.eq.s32.totalorder %s25, 0
      %p52 = por %p50, %p51
      %s54 = sadd.s32 %s53, 1
      %p57 = scmp.eq.s32.totalorder %s19, 1
      %p58 = scmp.ne.s32.totalorder %s53, %s55
      %p59 = scmp.eq.s32.totalorder %s19, 0
      %p60 = por %p58, %p59
      %p61 = scmp.ne.s32.totalorder %s53, %s55
      %p62 = scmp.eq.s32.totalorder %s24, 1
      %p63 = por %p61, %p62
      %p64 = scmp.ne.s32.totalorder %s55, %s56
      %p65 = scmp.eq.s32.totalorder %s24, 0
      %p66 = por %p64, %p65
      %p67 = scmp.ne.s32.totalorder %s55, %s56
      %p68 = scmp.eq.s32.totalorder %s25, 1
      %p69 = por %p67, %p68
      %p71 = scmp.ne.s32.totalorder %s56, %s70
      %p72 = scmp.eq.s32.totalorder %s25, 0
      %p73 = por %p71, %p72
      %s75 = sadd.s32 %s74, 1
      %p78 = scmp.eq.s32.totalorder %s19, 1
      %p79 = scmp.ne.s32.totalorder %s74, %s76
      %p80 = scmp.eq.s32.totalorder %s19, 0
      %p81 = por %p79, %p80
      %p82 = scmp.ne.s32.totalorder %s74, %s76
      %p83 = scmp.eq.s32.totalorder %s24, 1
      %p84 = por %p82, %p83
      %p85 = scmp.ne.s32.totalorder %s76, %s77
      %p86 = scmp.eq.s32.totalorder %s24, 0
      %p87 = por %p85, %p86
      %p88 = scmp.ne.s32.totalorder %s76, %s77
      %p89 = scmp.eq.s32.totalorder %s25, 1
      %p90 = por %p88, %p89
      %p92 = scmp.ne.s32.totalorder %s77, %s91
      %p93 = scmp.eq.s32.totalorder %s25, 0
      %p94 = por %p92, %p93
      %s96 = sadd.s32 %s95, 1
      %p99 = scmp.eq.s32.totalorder %s19, 1
      %p100 = scmp.ne.s32.totalorder %s95, %s97
      %p101 = scmp.eq.s32.totalorder %s19, 0
      %p102 = por %p100, %p101
      %p103 = scmp.ne.s32.totalorder %s95, %s97
      %p104 = scmp.eq.s32.totalorder %s24, 1
      %p105 = por %p103, %p104
      %p106 = scmp.ne.s32.totalorder %s97, %s98
      %p107 = scmp.eq.s32.totalorder %s24, 0
      %p108 = por %p106, %p107
      %p109 = scmp.ne.s32.totalorder %s97, %s98
      %p110 = scmp.eq.s32.totalorder %s25, 1
      %p111 = por %p109, %p110
      %p113 = scmp.ne.s32.totalorder %s98, %s112
      %p114 = scmp.eq.s32.totalorder %s25, 0
      %p115 = por %p113, %p114
      %s117 = sadd.s32 %s116, 1
      %p120 = scmp.eq.s32.totalorder %s19, 1
      %p121 = scmp.ne.s32.totalorder %s116, %s118
      %p122 = scmp.eq.s32.totalorder %s19, 0
      %p123 = por %p121, %p122
      %p124 = scmp.ne.s32.totalorder %s116, %s118
      %p125 = scmp.eq.s32.totalorder %s24, 1
      %p126 = por %p124, %p125
      %p127 = scmp.ne.s32.totalorder %s118, %s119
      %p128 = scmp.eq.s32.totalorder %s24, 0
      %p129 = por %p127, %p128
      %p130 = scmp.ne.s32.totalorder %s118, %s119
      %p131 = scmp.eq.s32.totalorder %s25, 1
      %p132 = por %p130, %p131
      %p134 = scmp.ne.s32.totalorder %s119, %s133
      %p135 = scmp.eq.s32.totalorder %s25, 0
      %p136 = por %p134, %p135
      %s137 = ssub.s32 %s19, %s26
      %p138 = scmp.eq.s32.totalorder %s137, 0
      %s140 = sadd.s32 %s139, 1
      %s141 = scalar_select %p138, %s139, %s140
      %p144 = pneg %p138
      %p145 = scmp.eq.s32.totalorder %s19, 1
      %p146 = por %p144, %p145
      %p147 = scmp.ne.s32.totalorder %s139, %s142
      %p148 = scmp.eq.s32.totalorder %s19, 0
      %p149 = por %p147, %p148
      %p150 = scmp.ne.s32.totalorder %s139, %s142
      %p151 = scmp.eq.s32.totalorder %s24, 1
      %p152 = por %p150, %p151
      %p153 = scmp.ne.s32.totalorder %s142, %s143
      %p154 = scmp.eq.s32.totalorder %s24, 0
      %p155 = por %p153, %p154
      %p156 = scmp.ne.s32.totalorder %s142, %s143
      %p157 = scmp.eq.s32.totalorder %s25, 1
      %p158 = por %p156, %p157
      %p160 = scmp.ne.s32.totalorder %s143, %s159
      %p161 = scmp.eq.s32.totalorder %s25, 0
      %p162 = por %p160, %p161
      %p163 = scmp.le.s32.totalorder 1, %s19
      %p164 = scmp.lt.s32.totalorder %s19, 3
      %p165 = pnand %p163, %p164
      %p166 = pneg %p165
      // Predicated region
      $region9: #{tpu_custom_call.1} parent=5 // pred_check
        _
      $region10: #{tpu_custom_call.1} parent=5 // pred_check_branch
        %168 = sbr.rel (%p165) target = $region12
      $region11: #{tpu_custom_call.1} parent=5 // pred_region
        %s169 = ssub.s32 %s19, 1
        // Predicated region
        $region13: #{tpu_custom_call.1} parent=11 // pred_check
          %p170 = pneg %p66
        $region14: #{tpu_custom_call.1} parent=11 // pred_check_branch
          %172 = sbr.rel (%p170) target = $region16
        $region15: #{tpu_custom_call.1} parent=11 // pred_region
          %s174 = ssub.s32 16384, 16384
          %175 = vsyncadd [#allocation6], %s174
          %s176 = sshll.u32 [#allocation5], 4
          %s177 = int_to_ptr.vmem [resolvable:$true] %s176
          %182 = dma.hbm_to_vmem [thread:$0]  %s1, 16384, %s177, [#allocation6], 128, 128, 8
        $region16: #{tpu_custom_call.1} parent=11 // pred_fallthru
          _
        // Predicated region
        $region17: #{tpu_custom_call.1} parent=11 // pred_check
          %p183 = pneg %p87
        $region18: #{tpu_custom_call.1} parent=11 // pred_check_branch
          %185 = sbr.rel (%p183) target = $region20
        $region19: #{tpu_custom_call.1} parent=11 // pred_region
          %s187 = ssub.s32 32, 32
          %188 = vsyncadd [#allocation6], %s187
          %s190 = sshll.u32 [#allocation7], 4
          %s191 = int_to_ptr.vmem [resolvable:$true] %s190
          %193 = dma.hbm_to_vmem [thread:$0]  %s2, 32, %s191, [#allocation6]
        $region20: #{tpu_custom_call.1} parent=11 // pred_fallthru
          _
        // Predicated region
        $region21: #{tpu_custom_call.1} parent=11 // pred_check
          %p194 = pneg %p108
        $region22: #{tpu_custom_call.1} parent=11 // pred_check_branch
          %196 = sbr.rel (%p194) target = $region24
        $region23: #{tpu_custom_call.1} parent=11 // pred_region
          %s198 = ssub.s32 2048, 2048
          %199 = vsyncadd [#allocation9], %s198
          %s200 = sshll.u32 [#allocation8], 4
          %s201 = int_to_ptr.vmem [resolvable:$true] %s200
          %206 = dma.hbm_to_vmem [thread:$0]  %s3, 2048, %s201, [#allocation9], 64, 64, 4
        $region24: #{tpu_custom_call.1} parent=11 // pred_fallthru
          _
        // Predicated region
        $region25: #{tpu_custom_call.1} parent=11 // pred_check
          %p207 = pneg %p129
        $region26: #{tpu_custom_call.1} parent=11 // pred_check_branch
          %209 = sbr.rel (%p207) target = $region28
        $region27: #{tpu_custom_call.1} parent=11 // pred_region
          %s211 = ssub.s32 16, 16
          %212 = vsyncadd [#allocation9], %s211
          %s214 = sshll.u32 [#allocation10], 4
          %s215 = int_to_ptr.vmem [resolvable:$true] %s214
          %217 = dma.hbm_to_vmem [thread:$0]  %s4, 16, %s215, [#allocation9]
        $region28: #{tpu_custom_call.1} parent=11 // pred_fallthru
          _
      $region12: #{tpu_custom_call.1} parent=5 // pred_fallthru
        _
      %p218 = scmp.lt.s32.totalorder %s19, 2
      // Predicated region
      $region29: #{tpu_custom_call.1} parent=5 // pred_check
        %p219 = pneg %p218
      $region30: #{tpu_custom_call.1} parent=5 // pred_check_branch
        %221 = sbr.rel (%p219) target = $region32
      $region31: #{tpu_custom_call.1} parent=5 // pred_region
        // Predicated region
        $region33: #{tpu_custom_call.1} parent=31 // pred_check
          %p222 = pneg %p39
        $region34: #{tpu_custom_call.1} parent=31 // pred_check_branch
          %224 = sbr.rel (%p222) target = $region36
        $region35: #{tpu_custom_call.1} parent=31 // pred_region
          %s225 = sand.u32 %s29, 1
          %s226 = scalar_lea.sflag [#allocation3], %s225
          %s227 = sand.u32 %s29, 1
          %s228 = smul.addr %s227, 8192
          %s229 = scalar_lea.vmem [#allocation2], %s228
          %s230 = smul.u32 128, %s19
          %s231 = ssub.s32 250, %s230
          %p232 = scmp.lt.s32.totalorder %s231, 128
          %s233 = scalar_select %p232, %s231, 128
          %s234 = smul.u32 128, %s233
          %s235 = smul.u32 %s234, 8
          %s237 = ssub.s32 131072, %s235
          %238 = vsyncadd %s226, %s237
          %p239 = scmp.ne.s32.totalorder 0, %s235
          %s240 = smul.addr %s230, 8
          %s241 = smul.addr %s240, 128
          %s242 = scalar_lea.hbm %s0, %s241
          %s243 = smul.u32 64, %s233
          %s244 = sshll.u32 %s229, 4
          %s245 = int_to_ptr.vmem [resolvable:$true] %s244
          %s246 = sshll.u32 %s243, 4
          %250 = dma.hbm_to_vmem [thread:$0]  (%p239), %s242, %s246, %s245, %s226, 1024, 1024, 64
        $region36: #{tpu_custom_call.1} parent=31 // pred_fallthru
          _
      $region32: #{tpu_custom_call.1} parent=5 // pred_fallthru
        _
      %p251 = scmp.le.s32.totalorder 1, %s19
      %p252 = scmp.lt.s32.totalorder %s19, 3
      %p253 = pnand %p251, %p252
      %p254 = pneg %p253
      // Predicated region
      $region37: #{tpu_custom_call.1} parent=5 // pred_check
        _
      $region38: #{tpu_custom_call.1} parent=5 // pred_check_branch
        %256 = sbr.rel (%p253) target = $region40
      $region39: #{tpu_custom_call.1} parent=5 // pred_region
        %s257 = ssub.s32 %s19, 1
        %s258 = sand.u32 %s32, 1
        %s259 = scalar_lea.sflag [#allocation3], %s258
        %s260 = sand.u32 %s32, 1
        %s261 = smul.addr %s260, 8192
        %s262 = scalar_lea.vmem [#allocation2], %s261
        // Predicated region
        $region41: #{tpu_custom_call.1} parent=39 // pred_check
          %p263 = pneg %p45
        $region42: #{tpu_custom_call.1} parent=39 // pred_check_branch
          %265 = sbr.rel (%p263) target = $region44
        $region43: #{tpu_custom_call.1} parent=39 // pred_region
          %266 = dma.done %s259, 131072
        $region44: #{tpu_custom_call.1} parent=39 // pred_fallthru
          _
        // Predicated region
        $region45: #{tpu_custom_call.1} parent=39 // pred_check
          %p267 = pneg %p66
        $region46: #{tpu_custom_call.1} parent=39 // pred_check_branch
          %269 = sbr.rel (%p267) target = $region48
        $region47: #{tpu_custom_call.1} parent=39 // pred_region
          %270 = dma.done [#allocation6], 16384
        $region48: #{tpu_custom_call.1} parent=39 // pred_fallthru
          _
        // Predicated region
        $region49: #{tpu_custom_call.1} parent=39 // pred_check
          %p271 = pneg %p87
        $region50: #{tpu_custom_call.1} parent=39 // pred_check_branch
          %273 = sbr.rel (%p271) target = $region52
        $region51: #{tpu_custom_call.1} parent=39 // pred_region
          %274 = dma.done [#allocation6], 32
        $region52: #{tpu_custom_call.1} parent=39 // pred_fallthru
          _
        // Predicated region
        $region53: #{tpu_custom_call.1} parent=39 // pred_check
          %p275 = pneg %p108
        $region54: #{tpu_custom_call.1} parent=39 // pred_check_branch
          %277 = sbr.rel (%p275) target = $region56
        $region55: #{tpu_custom_call.1} parent=39 // pred_region
          %278 = dma.done [#allocation9], 2048
        $region56: #{tpu_custom_call.1} parent=39 // pred_fallthru
          _
        // Predicated region
        $region57: #{tpu_custom_call.1} parent=39 // pred_check
          %p279 = pneg %p129
        $region58: #{tpu_custom_call.1} parent=39 // pred_check_branch
          %281 = sbr.rel (%p279) target = $region60
        $region59: #{tpu_custom_call.1} parent=39 // pred_region
          %282 = dma.done [#allocation9], 16
        $region60: #{tpu_custom_call.1} parent=39 // pred_fallthru
          _
        %s283 = sand.u32 %s32, 1
        %s284 = scalar_lea.sflag [#allocation3], %s283
        %s285 = sand.u32 %s32, 1
        %s286 = smul.addr %s285, 8192
        %s287 = scalar_lea.vmem [#allocation2], %s286
        %p288 = pneg %p45
        %p289 = pneg %p42
        %p290 = pneg %p66
        %p291 = pneg %p63
        %p292 = pneg %p87
        %p293 = pneg %p84
        %p294 = pneg %p108
        %p295 = pneg %p105
        %p296 = pneg %p129
        %p297 = pneg %p126
        %p298 = pneg %p155
        %p299 = pneg %p152
        %s300 = sand.u32 %s142, 1
        %s301 = scalar_lea.sflag [#allocation4], %s300
        %s302 = sand.u32 %s142, 1
        %s303 = smul.addr %s302, 8
        %s304 = scalar_lea.vmem [#allocation11], %s303
        %s305 = smul.u32 128, %s24
        %s306 = ssub.s32 250, %s305
        %p307 = scmp.lt.s32.totalorder %s306, 128
        %s308 = scalar_select %p307, %s306, 128
        %s309 = smul.u32 128, %s308
        %s310 = smul.u32 %s309, 8
        %s311 = smul.u32 8, %s24
        %v313 = vld [vmem:[%s262] sm:$0xff]
        %v314 = vld [vmem:[%s262 + $0x8] sm:$0xff]
        %v315 = vld [vmem:[%s262 + $0x10] sm:$0xff]
        %v316 = vld [vmem:[%s262 + $0x18] sm:$0xff]
        %v317 = vld [vmem:[%s262 + $0x20] sm:$0xff]
        %v318 = vld [vmem:[%s262 + $0x28] sm:$0xff]
        %v319 = vld [vmem:[%s262 + $0x30] sm:$0xff]
        %v320 = vld [vmem:[%s262 + $0x38] sm:$0xff]
        %v321 = vld [vmem:[%s262 + $0x40] sm:$0xff]
        %v322 = vld [vmem:[%s262 + $0x48] sm:$0xff]
        %v323 = vld [vmem:[%s262 + $0x50] sm:$0xff]
        %v324 = vld [vmem:[%s262 + $0x58] sm:$0xff]
        %v325 = vld [vmem:[%s262 + $0x60] sm:$0xff]
        %v326 = vld [vmem:[%s262 + $0x68] sm:$0xff]
        %v327 = vld [vmem:[%s262 + $0x70] sm:$0xff]
        %v328 = vld [vmem:[%s262 + $0x78] sm:$0xff]
        %v329 = vld [vmem:[%s262 + $0x80] sm:$0xff]
        %v330 = vld [vmem:[%s262 + $0x88] sm:$0xff]
        %v331 = vld [vmem:[%s262 + $0x90] sm:$0xff]
        %v332 = vld [vmem:[%s262 + $0x98] sm:$0xff]
        %v333 = vld [vmem:[%s262 + $0xa0] sm:$0xff]
        %v334 = vld [vmem:[%s262 + $0xa8] sm:$0xff]
        %v335 = vld [vmem:[%s262 + $0xb0] sm:$0xff]
        %v336 = vld [vmem:[%s262 + $0xb8] sm:$0xff]
        %v337 = vld [vmem:[%s262 + $0xc0] sm:$0xff]
        %v338 = vld [vmem:[%s262 + $0xc8] sm:$0xff]
        %v339 = vld [vmem:[%s262 + $0xd0] sm:$0xff]
        %v340 = vld [vmem:[%s262 + $0xd8] sm:$0xff]
        %v341 = vld [vmem:[%s262 + $0xe0] sm:$0xff]
        %v342 = vld [vmem:[%s262 + $0xe8] sm:$0xff]
        %v343 = vld [vmem:[%s262 + $0xf0] sm:$0xff]
        %v344 = vld [vmem:[%s262 + $0xf8] sm:$0xff]
        %v345 = vld [vmem:[%s262 + $0x100] sm:$0xff]
        %v346 = vld [vmem:[%s262 + $0x108] sm:$0xff]
        %v347 = vld [vmem:[%s262 + $0x110] sm:$0xff]
        %v348 = vld [vmem:[%s262 + $0x118] sm:$0xff]
        %v349 = vld [vmem:[%s262 + $0x120] sm:$0xff]
        %v350 = vld [vmem:[%s262 + $0x128] sm:$0xff]
        %v351 = vld [vmem:[%s262 + $0x130] sm:$0xff]
        %v352 = vld [vmem:[%s262 + $0x138] sm:$0xff]
        %v353 = vld [vmem:[%s262 + $0x140] sm:$0xff]
        %v354 = vld [vmem:[%s262 + $0x148] sm:$0xff]
        %v355 = vld [vmem:[%s262 + $0x150] sm:$0xff]
        %v356 = vld [vmem:[%s262 + $0x158] sm:$0xff]
        %v357 = vld [vmem:[%s262 + $0x160] sm:$0xff]
        %v358 = vld [vmem:[%s262 + $0x168] sm:$0xff]
        %v359 = vld [vmem:[%s262 + $0x170] sm:$0xff]
        %v360 = vld [vmem:[%s262 + $0x178] sm:$0xff]
        %v361 = vld [vmem:[%s262 + $0x180] sm:$0xff]
        %v362 = vld [vmem:[%s262 + $0x188] sm:$0xff]
        %v363 = vld [vmem:[%s262 + $0x190] sm:$0xff]
        %v364 = vld [vmem:[%s262 + $0x198] sm:$0xff]
        %v365 = vld [vmem:[%s262 + $0x1a0] sm:$0xff]
        %v366 = vld [vmem:[%s262 + $0x1a8] sm:$0xff]
        %v367 = vld [vmem:[%s262 + $0x1b0] sm:$0xff]
        %v368 = vld [vmem:[%s262 + $0x1b8] sm:$0xff]
        %v369 = vld [vmem:[%s262 + $0x1c0] sm:$0xff]
        %v370 = vld [vmem:[%s262 + $0x1c8] sm:$0xff]
        %v371 = vld [vmem:[%s262 + $0x1d0] sm:$0xff]
        %v372 = vld [vmem:[%s262 + $0x1d8] sm:$0xff]
        %v373 = vld [vmem:[%s262 + $0x1e0] sm:$0xff]
        %v374 = vld [vmem:[%s262 + $0x1e8] sm:$0xff]
        %v375 = vld [vmem:[%s262 + $0x1f0] sm:$0xff]
        %v376 = vld [vmem:[%s262 + $0x1f8] sm:$0xff]
        %v377 = vld [vmem:[%s262 + $0x200] sm:$0xff]
        %v378 = vld [vmem:[%s262 + $0x208] sm:$0xff]
        %v379 = vld [vmem:[%s262 + $0x210] sm:$0xff]
        %v380 = vld [vmem:[%s262 + $0x218] sm:$0xff]
        %v381 = vld [vmem:[%s262 + $0x220] sm:$0xff]
        %v382 = vld [vmem:[%s262 + $0x228] sm:$0xff]
        %v383 = vld [vmem:[%s262 + $0x230] sm:$0xff]
        %v384 = vld [vmem:[%s262 + $0x238] sm:$0xff]
        %v385 = vld [vmem:[%s262 + $0x240] sm:$0xff]
        %v386 = vld [vmem:[%s262 + $0x248] sm:$0xff]
        %v387 = vld [vmem:[%s262 + $0x250] sm:$0xff]
        %v388 = vld [vmem:[%s262 + $0x258] sm:$0xff]
        %v389 = vld [vmem:[%s262 + $0x260] sm:$0xff]
        %v390 = vld [vmem:[%s262 + $0x268] sm:$0xff]
        %v391 = vld [vmem:[%s262 + $0x270] sm:$0xff]
        %v392 = vld [vmem:[%s262 + $0x278] sm:$0xff]
        %v393 = vld [vmem:[%s262 + $0x280] sm:$0xff]
        %v394 = vld [vmem:[%s262 + $0x288] sm:$0xff]
        %v395 = vld [vmem:[%s262 + $0x290] sm:$0xff]
        %v396 = vld [vmem:[%s262 + $0x298] sm:$0xff]
        %v397 = vld [vmem:[%s262 + $0x2a0] sm:$0xff]
        %v398 = vld [vmem:[%s262 + $0x2a8] sm:$0xff]
        %v399 = vld [vmem:[%s262 + $0x2b0] sm:$0xff]
        %v400 = vld [vmem:[%s262 + $0x2b8] sm:$0xff]
        %v401 = vld [vmem:[%s262 + $0x2c0] sm:$0xff]
        %v402 = vld [vmem:[%s262 + $0x2c8] sm:$0xff]
        %v403 = vld [vmem:[%s262 + $0x2d0] sm:$0xff]
        %v404 = vld [vmem:[%s262 + $0x2d8] sm:$0xff]
        %v405 = vld [vmem:[%s262 + $0x2e0] sm:$0xff]
        %v406 = vld [vmem:[%s262 + $0x2e8] sm:$0xff]
        %v407 = vld [vmem:[%s262 + $0x2f0] sm:$0xff]
        %v408 = vld [vmem:[%s262 + $0x2f8] sm:$0xff]
        %v409 = vld [vmem:[%s262 + $0x300] sm:$0xff]
        %v410 = vld [vmem:[%s262 + $0x308] sm:$0xff]
        %v411 = vld [vmem:[%s262 + $0x310] sm:$0xff]
        %v412 = vld [vmem:[%s262 + $0x318] sm:$0xff]
        %v413 = vld [vmem:[%s262 + $0x320] sm:$0xff]
        %v414 = vld [vmem:[%s262 + $0x328] sm:$0xff]
        %v415 = vld [vmem:[%s262 + $0x330] sm:$0xff]
        %v416 = vld [vmem:[%s262 + $0x338] sm:$0xff]
        %v417 = vld [vmem:[%s262 + $0x340] sm:$0xff]
        %v418 = vld [vmem:[%s262 + $0x348] sm:$0xff]
        %v419 = vld [vmem:[%s262 + $0x350] sm:$0xff]
        %v420 = vld [vmem:[%s262 + $0x358] sm:$0xff]
        %v421 = vld [vmem:[%s262 + $0x360] sm:$0xff]
        %v422 = vld [vmem:[%s262 + $0x368] sm:$0xff]
        %v423 = vld [vmem:[%s262 + $0x370] sm:$0xff]
        %v424 = vld [vmem:[%s262 + $0x378] sm:$0xff]
        %v425 = vld [vmem:[%s262 + $0x380] sm:$0xff]
        %v426 = vld [vmem:[%s262 + $0x388] sm:$0xff]
        %v427 = vld [vmem:[%s262 + $0x390] sm:$0xff]
        %v428 = vld [vmem:[%s262 + $0x398] sm:$0xff]
        %v429 = vld [vmem:[%s262 + $0x3a0] sm:$0xff]
        %v430 = vld [vmem:[%s262 + $0x3a8] sm:$0xff]
        %v431 = vld [vmem:[%s262 + $0x3b0] sm:$0xff]
        %v432 = vld [vmem:[%s262 + $0x3b8] sm:$0xff]
        %v433 = vld [vmem:[%s262 + $0x3c0] sm:$0xff]
        %v434 = vld [vmem:[%s262 + $0x3c8] sm:$0xff]
        %v435 = vld [vmem:[%s262 + $0x3d0] sm:$0xff]
        %v436 = vld [vmem:[%s262 + $0x3d8] sm:$0xff]
        %v437 = vld [vmem:[%s262 + $0x3e0] sm:$0xff]
        %v438 = vld [vmem:[%s262 + $0x3e8] sm:$0xff]
        %v439 = vld [vmem:[%s262 + $0x3f0] sm:$0xff]
        %v440 = vld [vmem:[%s262 + $0x3f8] sm:$0xff]
        %v441 = vld [vmem:[%s262 + $0x400] sm:$0xff]
        %v442 = vld [vmem:[%s262 + $0x408] sm:$0xff]
        %v443 = vld [vmem:[%s262 + $0x410] sm:$0xff]
        %v444 = vld [vmem:[%s262 + $0x418] sm:$0xff]
        %v445 = vld [vmem:[%s262 + $0x420] sm:$0xff]
        %v446 = vld [vmem:[%s262 + $0x428] sm:$0xff]
        %v447 = vld [vmem:[%s262 + $0x430] sm:$0xff]
        %v448 = vld [vmem:[%s262 + $0x438] sm:$0xff]
        %v449 = vld [vmem:[%s262 + $0x440] sm:$0xff]
        %v450 = vld [vmem:[%s262 + $0x448] sm:$0xff]
        %v451 = vld [vmem:[%s262 + $0x450] sm:$0xff]
        %v452 = vld [vmem:[%s262 + $0x458] sm:$0xff]
        %v453 = vld [vmem:[%s262 + $0x460] sm:$0xff]
        %v454 = vld [vmem:[%s262 + $0x468] sm:$0xff]
        %v455 = vld [vmem:[%s262 + $0x470] sm:$0xff]
        %v456 = vld [vmem:[%s262 + $0x478] sm:$0xff]
        %v457 = vld [vmem:[%s262 + $0x480] sm:$0xff]
        %v458 = vld [vmem:[%s262 + $0x488] sm:$0xff]
        %v459 = vld [vmem:[%s262 + $0x490] sm:$0xff]
        %v460 = vld [vmem:[%s262 + $0x498] sm:$0xff]
        %v461 = vld [vmem:[%s262 + $0x4a0] sm:$0xff]
        %v462 = vld [vmem:[%s262 + $0x4a8] sm:$0xff]
        %v463 = vld [vmem:[%s262 + $0x4b0] sm:$0xff]
        %v464 = vld [vmem:[%s262 + $0x4b8] sm:$0xff]
        %v465 = vld [vmem:[%s262 + $0x4c0] sm:$0xff]
        %v466 = vld [vmem:[%s262 + $0x4c8] sm:$0xff]
        %v467 = vld [vmem:[%s262 + $0x4d0] sm:$0xff]
        %v468 = vld [vmem:[%s262 + $0x4d8] sm:$0xff]
        %v469 = vld [vmem:[%s262 + $0x4e0] sm:$0xff]
        %v470 = vld [vmem:[%s262 + $0x4e8] sm:$0xff]
        %v471 = vld [vmem:[%s262 + $0x4f0] sm:$0xff]
        %v472 = vld [vmem:[%s262 + $0x4f8] sm:$0xff]
        %v473 = vld [vmem:[%s262 + $0x500] sm:$0xff]
        %v474 = vld [vmem:[%s262 + $0x508] sm:$0xff]
        %v475 = vld [vmem:[%s262 + $0x510] sm:$0xff]
        %v476 = vld [vmem:[%s262 + $0x518] sm:$0xff]
        %v477 = vld [vmem:[%s262 + $0x520] sm:$0xff]
        %v478 = vld [vmem:[%s262 + $0x528] sm:$0xff]
        %v479 = vld [vmem:[%s262 + $0x530] sm:$0xff]
        %v480 = vld [vmem:[%s262 + $0x538] sm:$0xff]
        %v481 = vld [vmem:[%s262 + $0x540] sm:$0xff]
        %v482 = vld [vmem:[%s262 + $0x548] sm:$0xff]
        %v483 = vld [vmem:[%s262 + $0x550] sm:$0xff]
        %v484 = vld [vmem:[%s262 + $0x558] sm:$0xff]
        %v485 = vld [vmem:[%s262 + $0x560] sm:$0xff]
        %v486 = vld [vmem:[%s262 + $0x568] sm:$0xff]
        %v487 = vld [vmem:[%s262 + $0x570] sm:$0xff]
        %v488 = vld [vmem:[%s262 + $0x578] sm:$0xff]
        %v489 = vld [vmem:[%s262 + $0x580] sm:$0xff]
        %v490 = vld [vmem:[%s262 + $0x588] sm:$0xff]
        %v491 = vld [vmem:[%s262 + $0x590] sm:$0xff]
        %v492 = vld [vmem:[%s262 + $0x598] sm:$0xff]
        %v493 = vld [vmem:[%s262 + $0x5a0] sm:$0xff]
        %v494 = vld [vmem:[%s262 + $0x5a8] sm:$0xff]
        %v495 = vld [vmem:[%s262 + $0x5b0] sm:$0xff]
        %v496 = vld [vmem:[%s262 + $0x5b8] sm:$0xff]
        %v497 = vld [vmem:[%s262 + $0x5c0] sm:$0xff]
        %v498 = vld [vmem:[%s262 + $0x5c8] sm:$0xff]
        %v499 = vld [vmem:[%s262 + $0x5d0] sm:$0xff]
        %v500 = vld [vmem:[%s262 + $0x5d8] sm:$0xff]
        %v501 = vld [vmem:[%s262 + $0x5e0] sm:$0xff]
        %v502 = vld [vmem:[%s262 + $0x5e8] sm:$0xff]
        %v503 = vld [vmem:[%s262 + $0x5f0] sm:$0xff]
        %v504 = vld [vmem:[%s262 + $0x5f8] sm:$0xff]
        %v505 = vld [vmem:[%s262 + $0x600] sm:$0xff]
        %v506 = vld [vmem:[%s262 + $0x608] sm:$0xff]
        %v507 = vld [vmem:[%s262 + $0x610] sm:$0xff]
        %v508 = vld [vmem:[%s262 + $0x618] sm:$0xff]
        %v509 = vld [vmem:[%s262 + $0x620] sm:$0xff]
        %v510 = vld [vmem:[%s262 + $0x628] sm:$0xff]
        %v511 = vld [vmem:[%s262 + $0x630] sm:$0xff]
        %v512 = vld [vmem:[%s262 + $0x638] sm:$0xff]
        %v513 = vld [vmem:[%s262 + $0x640] sm:$0xff]
        %v514 = vld [vmem:[%s262 + $0x648] sm:$0xff]
        %v515 = vld [vmem:[%s262 + $0x650] sm:$0xff]
        %v516 = vld [vmem:[%s262 + $0x658] sm:$0xff]
        %v517 = vld [vmem:[%s262 + $0x660] sm:$0xff]
        %v518 = vld [vmem:[%s262 + $0x668] sm:$0xff]
        %v519 = vld [vmem:[%s262 + $0x670] sm:$0xff]
        %v520 = vld [vmem:[%s262 + $0x678] sm:$0xff]
        %v521 = vld [vmem:[%s262 + $0x680] sm:$0xff]
        %v522 = vld [vmem:[%s262 + $0x688] sm:$0xff]
        %v523 = vld [vmem:[%s262 + $0x690] sm:$0xff]
        %v524 = vld [vmem:[%s262 + $0x698] sm:$0xff]
        %v525 = vld [vmem:[%s262 + $0x6a0] sm:$0xff]
        %v526 = vld [vmem:[%s262 + $0x6a8] sm:$0xff]
        %v527 = vld [vmem:[%s262 + $0x6b0] sm:$0xff]
        %v528 = vld [vmem:[%s262 + $0x6b8] sm:$0xff]
        %v529 = vld [vmem:[%s262 + $0x6c0] sm:$0xff]
        %v530 = vld [vmem:[%s262 + $0x6c8] sm:$0xff]
        %v531 = vld [vmem:[%s262 + $0x6d0] sm:$0xff]
        %v532 = vld [vmem:[%s262 + $0x6d8] sm:$0xff]
        %v533 = vld [vmem:[%s262 + $0x6e0] sm:$0xff]
        %v534 = vld [vmem:[%s262 + $0x6e8] sm:$0xff]
        %v535 = vld [vmem:[%s262 + $0x6f0] sm:$0xff]
        %v536 = vld [vmem:[%s262 + $0x6f8] sm:$0xff]
        %v537 = vld [vmem:[%s262 + $0x700] sm:$0xff]
        %v538 = vld [vmem:[%s262 + $0x708] sm:$0xff]
        %v539 = vld [vmem:[%s262 + $0x710] sm:$0xff]
        %v540 = vld [vmem:[%s262 + $0x718] sm:$0xff]
        %v541 = vld [vmem:[%s262 + $0x720] sm:$0xff]
        %v542 = vld [vmem:[%s262 + $0x728] sm:$0xff]
        %v543 = vld [vmem:[%s262 + $0x730] sm:$0xff]
        %v544 = vld [vmem:[%s262 + $0x738] sm:$0xff]
        %v545 = vld [vmem:[%s262 + $0x740] sm:$0xff]
        %v546 = vld [vmem:[%s262 + $0x748] sm:$0xff]
        %v547 = vld [vmem:[%s262 + $0x750] sm:$0xff]
        %v548 = vld [vmem:[%s262 + $0x758] sm:$0xff]
        %v549 = vld [vmem:[%s262 + $0x760] sm:$0xff]
        %v550 = vld [vmem:[%s262 + $0x768] sm:$0xff]
        %v551 = vld [vmem:[%s262 + $0x770] sm:$0xff]
        %v552 = vld [vmem:[%s262 + $0x778] sm:$0xff]
        %v553 = vld [vmem:[%s262 + $0x780] sm:$0xff]
        %v554 = vld [vmem:[%s262 + $0x788] sm:$0xff]
        %v555 = vld [vmem:[%s262 + $0x790] sm:$0xff]
        %v556 = vld [vmem:[%s262 + $0x798] sm:$0xff]
        %v557 = vld [vmem:[%s262 + $0x7a0] sm:$0xff]
        %v558 = vld [vmem:[%s262 + $0x7a8] sm:$0xff]
        %v559 = vld [vmem:[%s262 + $0x7b0] sm:$0xff]
        %v560 = vld [vmem:[%s262 + $0x7b8] sm:$0xff]
        %v561 = vld [vmem:[%s262 + $0x7c0] sm:$0xff]
        %v562 = vld [vmem:[%s262 + $0x7c8] sm:$0xff]
        %v563 = vld [vmem:[%s262 + $0x7d0] sm:$0xff]
        %v564 = vld [vmem:[%s262 + $0x7d8] sm:$0xff]
        %v565 = vld [vmem:[%s262 + $0x7e0] sm:$0xff]
        %v566 = vld [vmem:[%s262 + $0x7e8] sm:$0xff]
        %v567 = vld [vmem:[%s262 + $0x7f0] sm:$0xff]
        %v568 = vld [vmem:[%s262 + $0x7f8] sm:$0xff]
        %v569 = vld [vmem:[%s262 + $0x800] sm:$0xff]
        %v570 = vld [vmem:[%s262 + $0x808] sm:$0xff]
        %v571 = vld [vmem:[%s262 + $0x810] sm:$0xff]
        %v572 = vld [vmem:[%s262 + $0x818] sm:$0xff]
        %v573 = vld [vmem:[%s262 + $0x820] sm:$0xff]
        %v574 = vld [vmem:[%s262 + $0x828] sm:$0xff]
        %v575 = vld [vmem:[%s262 + $0x830] sm:$0xff]
        %v576 = vld [vmem:[%s262 + $0x838] sm:$0xff]
        %v577 = vld [vmem:[%s262 + $0x840] sm:$0xff]
        %v578 = vld [vmem:[%s262 + $0x848] sm:$0xff]
        %v579 = vld [vmem:[%s262 + $0x850] sm:$0xff]
        %v580 = vld [vmem:[%s262 + $0x858] sm:$0xff]
        %v581 = vld [vmem:[%s262 + $0x860] sm:$0xff]
        %v582 = vld [vmem:[%s262 + $0x868] sm:$0xff]
        %v583 = vld [vmem:[%s262 + $0x870] sm:$0xff]
        %v584 = vld [vmem:[%s262 + $0x878] sm:$0xff]
        %v585 = vld [vmem:[%s262 + $0x880] sm:$0xff]
        %v586 = vld [vmem:[%s262 + $0x888] sm:$0xff]
        %v587 = vld [vmem:[%s262 + $0x890] sm:$0xff]
        %v588 = vld [vmem:[%s262 + $0x898] sm:$0xff]
        %v589 = vld [vmem:[%s262 + $0x8a0] sm:$0xff]
        %v590 = vld [vmem:[%s262 + $0x8a8] sm:$0xff]
        %v591 = vld [vmem:[%s262 + $0x8b0] sm:$0xff]
        %v592 = vld [vmem:[%s262 + $0x8b8] sm:$0xff]
        %v593 = vld [vmem:[%s262 + $0x8c0] sm:$0xff]
        %v594 = vld [vmem:[%s262 + $0x8c8] sm:$0xff]
        %v595 = vld [vmem:[%s262 + $0x8d0] sm:$0xff]
        %v596 = vld [vmem:[%s262 + $0x8d8] sm:$0xff]
        %v597 = vld [vmem:[%s262 + $0x8e0] sm:$0xff]
        %v598 = vld [vmem:[%s262 + $0x8e8] sm:$0xff]
        %v599 = vld [vmem:[%s262 + $0x8f0] sm:$0xff]
        %v600 = vld [vmem:[%s262 + $0x8f8] sm:$0xff]
        %v601 = vld [vmem:[%s262 + $0x900] sm:$0xff]
        %v602 = vld [vmem:[%s262 + $0x908] sm:$0xff]
        %v603 = vld [vmem:[%s262 + $0x910] sm:$0xff]
        %v604 = vld [vmem:[%s262 + $0x918] sm:$0xff]
        %v605 = vld [vmem:[%s262 + $0x920] sm:$0xff]
        %v606 = vld [vmem:[%s262 + $0x928] sm:$0xff]
        %v607 = vld [vmem:[%s262 + $0x930] sm:$0xff]
        %v608 = vld [vmem:[%s262 + $0x938] sm:$0xff]
        %v609 = vld [vmem:[%s262 + $0x940] sm:$0xff]
        %v610 = vld [vmem:[%s262 + $0x948] sm:$0xff]
        %v611 = vld [vmem:[%s262 + $0x950] sm:$0xff]
        %v612 = vld [vmem:[%s262 + $0x958] sm:$0xff]
        %v613 = vld [vmem:[%s262 + $0x960] sm:$0xff]
        %v614 = vld [vmem:[%s262 + $0x968] sm:$0xff]
        %v615 = vld [vmem:[%s262 + $0x970] sm:$0xff]
        %v616 = vld [vmem:[%s262 + $0x978] sm:$0xff]
        %v617 = vld [vmem:[%s262 + $0x980] sm:$0xff]
        %v618 = vld [vmem:[%s262 + $0x988] sm:$0xff]
        %v619 = vld [vmem:[%s262 + $0x990] sm:$0xff]
        %v620 = vld [vmem:[%s262 + $0x998] sm:$0xff]
        %v621 = vld [vmem:[%s262 + $0x9a0] sm:$0xff]
        %v622 = vld [vmem:[%s262 + $0x9a8] sm:$0xff]
        %v623 = vld [vmem:[%s262 + $0x9b0] sm:$0xff]
        %v624 = vld [vmem:[%s262 + $0x9b8] sm:$0xff]
        %v625 = vld [vmem:[%s262 + $0x9c0] sm:$0xff]
        %v626 = vld [vmem:[%s262 + $0x9c8] sm:$0xff]
        %v627 = vld [vmem:[%s262 + $0x9d0] sm:$0xff]
        %v628 = vld [vmem:[%s262 + $0x9d8] sm:$0xff]
        %v629 = vld [vmem:[%s262 + $0x9e0] sm:$0xff]
        %v630 = vld [vmem:[%s262 + $0x9e8] sm:$0xff]
        %v631 = vld [vmem:[%s262 + $0x9f0] sm:$0xff]
        %v632 = vld [vmem:[%s262 + $0x9f8] sm:$0xff]
        %v633 = vld [vmem:[%s262 + $0xa00] sm:$0xff]
        %v634 = vld [vmem:[%s262 + $0xa08] sm:$0xff]
        %v635 = vld [vmem:[%s262 + $0xa10] sm:$0xff]
        %v636 = vld [vmem:[%s262 + $0xa18] sm:$0xff]
        %v637 = vld [vmem:[%s262 + $0xa20] sm:$0xff]
        %v638 = vld [vmem:[%s262 + $0xa28] sm:$0xff]
        %v639 = vld [vmem:[%s262 + $0xa30] sm:$0xff]
        %v640 = vld [vmem:[%s262 + $0xa38] sm:$0xff]
        %v641 = vld [vmem:[%s262 + $0xa40] sm:$0xff]
        %v642 = vld [vmem:[%s262 + $0xa48] sm:$0xff]
        %v643 = vld [vmem:[%s262 + $0xa50] sm:$0xff]
        %v644 = vld [vmem:[%s262 + $0xa58] sm:$0xff]
        %v645 = vld [vmem:[%s262 + $0xa60] sm:$0xff]
        %v646 = vld [vmem:[%s262 + $0xa68] sm:$0xff]
        %v647 = vld [vmem:[%s262 + $0xa70] sm:$0xff]
        %v648 = vld [vmem:[%s262 + $0xa78] sm:$0xff]
        %v649 = vld [vmem:[%s262 + $0xa80] sm:$0xff]
        %v650 = vld [vmem:[%s262 + $0xa88] sm:$0xff]
        %v651 = vld [vmem:[%s262 + $0xa90] sm:$0xff]
        %v652 = vld [vmem:[%s262 + $0xa98] sm:$0xff]
        %v653 = vld [vmem:[%s262 + $0xaa0] sm:$0xff]
        %v654 = vld [vmem:[%s262 + $0xaa8] sm:$0xff]
        %v655 = vld [vmem:[%s262 + $0xab0] sm:$0xff]
        %v656 = vld [vmem:[%s262 + $0xab8] sm:$0xff]
        %v657 = vld [vmem:[%s262 + $0xac0] sm:$0xff]
        %v658 = vld [vmem:[%s262 + $0xac8] sm:$0xff]
        %v659 = vld [vmem:[%s262 + $0xad0] sm:$0xff]
        %v660 = vld [vmem:[%s262 + $0xad8] sm:$0xff]
        %v661 = vld [vmem:[%s262 + $0xae0] sm:$0xff]
        %v662 = vld [vmem:[%s262 + $0xae8] sm:$0xff]
        %v663 = vld [vmem:[%s262 + $0xaf0] sm:$0xff]
        %v664 = vld [vmem:[%s262 + $0xaf8] sm:$0xff]
        %v665 = vld [vmem:[%s262 + $0xb00] sm:$0xff]
        %v666 = vld [vmem:[%s262 + $0xb08] sm:$0xff]
        %v667 = vld [vmem:[%s262 + $0xb10] sm:$0xff]
        %v668 = vld [vmem:[%s262 + $0xb18] sm:$0xff]
        %v669 = vld [vmem:[%s262 + $0xb20] sm:$0xff]
        %v670 = vld [vmem:[%s262 + $0xb28] sm:$0xff]
        %v671 = vld [vmem:[%s262 + $0xb30] sm:$0xff]
        %v672 = vld [vmem:[%s262 + $0xb38] sm:$0xff]
        %v673 = vld [vmem:[%s262 + $0xb40] sm:$0xff]
        %v674 = vld [vmem:[%s262 + $0xb48] sm:$0xff]
        %v675 = vld [vmem:[%s262 + $0xb50] sm:$0xff]
        %v676 = vld [vmem:[%s262 + $0xb58] sm:$0xff]
        %v677 = vld [vmem:[%s262 + $0xb60] sm:$0xff]
        %v678 = vld [vmem:[%s262 + $0xb68] sm:$0xff]
        %v679 = vld [vmem:[%s262 + $0xb70] sm:$0xff]
        %v680 = vld [vmem:[%s262 + $0xb78] sm:$0xff]
        %v681 = vld [vmem:[%s262 + $0xb80] sm:$0xff]
        %v682 = vld [vmem:[%s262 + $0xb88] sm:$0xff]
        %v683 = vld [vmem:[%s262 + $0xb90] sm:$0xff]
        %v684 = vld [vmem:[%s262 + $0xb98] sm:$0xff]
        %v685 = vld [vmem:[%s262 + $0xba0] sm:$0xff]
        %v686 = vld [vmem:[%s262 + $0xba8] sm:$0xff]
        %v687 = vld [vmem:[%s262 + $0xbb0] sm:$0xff]
        %v688 = vld [vmem:[%s262 + $0xbb8] sm:$0xff]
        %v689 = vld [vmem:[%s262 + $0xbc0] sm:$0xff]
        %v690 = vld [vmem:[%s262 + $0xbc8] sm:$0xff]
        %v691 = vld [vmem:[%s262 + $0xbd0] sm:$0xff]
        %v692 = vld [vmem:[%s262 + $0xbd8] sm:$0xff]
        %v693 = vld [vmem:[%s262 + $0xbe0] sm:$0xff]
        %v694 = vld [vmem:[%s262 + $0xbe8] sm:$0xff]
        %v695 = vld [vmem:[%s262 + $0xbf0] sm:$0xff]
        %v696 = vld [vmem:[%s262 + $0xbf8] sm:$0xff]
        %v697 = vld [vmem:[%s262 + $0xc00] sm:$0xff]
        %v698 = vld [vmem:[%s262 + $0xc08] sm:$0xff]
        %v699 = vld [vmem:[%s262 + $0xc10] sm:$0xff]
        %v700 = vld [vmem:[%s262 + $0xc18] sm:$0xff]
        %v701 = vld [vmem:[%s262 + $0xc20] sm:$0xff]
        %v702 = vld [vmem:[%s262 + $0xc28] sm:$0xff]
        %v703 = vld [vmem:[%s262 + $0xc30] sm:$0xff]
        %v704 = vld [vmem:[%s262 + $0xc38] sm:$0xff]
        %v705 = vld [vmem:[%s262 + $0xc40] sm:$0xff]
        %v706 = vld [vmem:[%s262 + $0xc48] sm:$0xff]
        %v707 = vld [vmem:[%s262 + $0xc50] sm:$0xff]
        %v708 = vld [vmem:[%s262 + $0xc58] sm:$0xff]
        %v709 = vld [vmem:[%s262 + $0xc60] sm:$0xff]
        %v710 = vld [vmem:[%s262 + $0xc68] sm:$0xff]
        %v711 = vld [vmem:[%s262 + $0xc70] sm:$0xff]
        %v712 = vld [vmem:[%s262 + $0xc78] sm:$0xff]
        %v713 = vld [vmem:[%s262 + $0xc80] sm:$0xff]
        %v714 = vld [vmem:[%s262 + $0xc88] sm:$0xff]
        %v715 = vld [vmem:[%s262 + $0xc90] sm:$0xff]
        %v716 = vld [vmem:[%s262 + $0xc98] sm:$0xff]
        %v717 = vld [vmem:[%s262 + $0xca0] sm:$0xff]
        %v718 = vld [vmem:[%s262 + $0xca8] sm:$0xff]
        %v719 = vld [vmem:[%s262 + $0xcb0] sm:$0xff]
        %v720 = vld [vmem:[%s262 + $0xcb8] sm:$0xff]
        %v721 = vld [vmem:[%s262 + $0xcc0] sm:$0xff]
        %v722 = vld [vmem:[%s262 + $0xcc8] sm:$0xff]
        %v723 = vld [vmem:[%s262 + $0xcd0] sm:$0xff]
        %v724 = vld [vmem:[%s262 + $0xcd8] sm:$0xff]
        %v725 = vld [vmem:[%s262 + $0xce0] sm:$0xff]
        %v726 = vld [vmem:[%s262 + $0xce8] sm:$0xff]
        %v727 = vld [vmem:[%s262 + $0xcf0] sm:$0xff]
        %v728 = vld [vmem:[%s262 + $0xcf8] sm:$0xff]
        %v729 = vld [vmem:[%s262 + $0xd00] sm:$0xff]
        %v730 = vld [vmem:[%s262 + $0xd08] sm:$0xff]
        %v731 = vld [vmem:[%s262 + $0xd10] sm:$0xff]
        %v732 = vld [vmem:[%s262 + $0xd18] sm:$0xff]
        %v733 = vld [vmem:[%s262 + $0xd20] sm:$0xff]
        %v734 = vld [vmem:[%s262 + $0xd28] sm:$0xff]
        %v735 = vld [vmem:[%s262 + $0xd30] sm:$0xff]
        %v736 = vld [vmem:[%s262 + $0xd38] sm:$0xff]
        %v737 = vld [vmem:[%s262 + $0xd40] sm:$0xff]
        %v738 = vld [vmem:[%s262 + $0xd48] sm:$0xff]
        %v739 = vld [vmem:[%s262 + $0xd50] sm:$0xff]
        %v740 = vld [vmem:[%s262 + $0xd58] sm:$0xff]
        %v741 = vld [vmem:[%s262 + $0xd60] sm:$0xff]
        %v742 = vld [vmem:[%s262 + $0xd68] sm:$0xff]
        %v743 = vld [vmem:[%s262 + $0xd70] sm:$0xff]
        %v744 = vld [vmem:[%s262 + $0xd78] sm:$0xff]
        %v745 = vld [vmem:[%s262 + $0xd80] sm:$0xff]
        %v746 = vld [vmem:[%s262 + $0xd88] sm:$0xff]
        %v747 = vld [vmem:[%s262 + $0xd90] sm:$0xff]
        %v748 = vld [vmem:[%s262 + $0xd98] sm:$0xff]
        %v749 = vld [vmem:[%s262 + $0xda0] sm:$0xff]
        %v750 = vld [vmem:[%s262 + $0xda8] sm:$0xff]
        %v751 = vld [vmem:[%s262 + $0xdb0] sm:$0xff]
        %v752 = vld [vmem:[%s262 + $0xdb8] sm:$0xff]
        %v753 = vld [vmem:[%s262 + $0xdc0] sm:$0xff]
        %v754 = vld [vmem:[%s262 + $0xdc8] sm:$0xff]
        %v755 = vld [vmem:[%s262 + $0xdd0] sm:$0xff]
        %v756 = vld [vmem:[%s262 + $0xdd8] sm:$0xff]
        %v757 = vld [vmem:[%s262 + $0xde0] sm:$0xff]
        %v758 = vld [vmem:[%s262 + $0xde8] sm:$0xff]
        %v759 = vld [vmem:[%s262 + $0xdf0] sm:$0xff]
        %v760 = vld [vmem:[%s262 + $0xdf8] sm:$0xff]
        %v761 = vld [vmem:[%s262 + $0xe00] sm:$0xff]
        %v762 = vld [vmem:[%s262 + $0xe08] sm:$0xff]
        %v763 = vld [vmem:[%s262 + $0xe10] sm:$0xff]
        %v764 = vld [vmem:[%s262 + $0xe18] sm:$0xff]
        %v765 = vld [vmem:[%s262 + $0xe20] sm:$0xff]
        %v766 = vld [vmem:[%s262 + $0xe28] sm:$0xff]
        %v767 = vld [vmem:[%s262 + $0xe30] sm:$0xff]
        %v768 = vld [vmem:[%s262 + $0xe38] sm:$0xff]
        %v769 = vld [vmem:[%s262 + $0xe40] sm:$0xff]
        %v770 = vld [vmem:[%s262 + $0xe48] sm:$0xff]
        %v771 = vld [vmem:[%s262 + $0xe50] sm:$0xff]
        %v772 = vld [vmem:[%s262 + $0xe58] sm:$0xff]
        %v773 = vld [vmem:[%s262 + $0xe60] sm:$0xff]
        %v774 = vld [vmem:[%s262 + $0xe68] sm:$0xff]
        %v775 = vld [vmem:[%s262 + $0xe70] sm:$0xff]
        %v776 = vld [vmem:[%s262 + $0xe78] sm:$0xff]
        %v777 = vld [vmem:[%s262 + $0xe80] sm:$0xff]
        %v778 = vld [vmem:[%s262 + $0xe88] sm:$0xff]
        %v779 = vld [vmem:[%s262 + $0xe90] sm:$0xff]
        %v780 = vld [vmem:[%s262 + $0xe98] sm:$0xff]
        %v781 = vld [vmem:[%s262 + $0xea0] sm:$0xff]
        %v782 = vld [vmem:[%s262 + $0xea8] sm:$0xff]
        %v783 = vld [vmem:[%s262 + $0xeb0] sm:$0xff]
        %v784 = vld [vmem:[%s262 + $0xeb8] sm:$0xff]
        %v785 = vld [vmem:[%s262 + $0xec0] sm:$0xff]
        %v786 = vld [vmem:[%s262 + $0xec8] sm:$0xff]
        %v787 = vld [vmem:[%s262 + $0xed0] sm:$0xff]
        %v788 = vld [vmem:[%s262 + $0xed8] sm:$0xff]
        %v789 = vld [vmem:[%s262 + $0xee0] sm:$0xff]
        %v790 = vld [vmem:[%s262 + $0xee8] sm:$0xff]
        %v791 = vld [vmem:[%s262 + $0xef0] sm:$0xff]
        %v792 = vld [vmem:[%s262 + $0xef8] sm:$0xff]
        %v793 = vld [vmem:[%s262 + $0xf00] sm:$0xff]
        %v794 = vld [vmem:[%s262 + $0xf08] sm:$0xff]
        %v795 = vld [vmem:[%s262 + $0xf10] sm:$0xff]
        %v796 = vld [vmem:[%s262 + $0xf18] sm:$0xff]
        %v797 = vld [vmem:[%s262 + $0xf20] sm:$0xff]
        %v798 = vld [vmem:[%s262 + $0xf28] sm:$0xff]
        %v799 = vld [vmem:[%s262 + $0xf30] sm:$0xff]
        %v800 = vld [vmem:[%s262 + $0xf38] sm:$0xff]
        %v801 = vld [vmem:[%s262 + $0xf40] sm:$0xff]
        %v802 = vld [vmem:[%s262 + $0xf48] sm:$0xff]
        %v803 = vld [vmem:[%s262 + $0xf50] sm:$0xff]
        %v804 = vld [vmem:[%s262 + $0xf58] sm:$0xff]
        %v805 = vld [vmem:[%s262 + $0xf60] sm:$0xff]
        %v806 = vld [vmem:[%s262 + $0xf68] sm:$0xff]
        %v807 = vld [vmem:[%s262 + $0xf70] sm:$0xff]
        %v808 = vld [vmem:[%s262 + $0xf78] sm:$0xff]
        %v809 = vld [vmem:[%s262 + $0xf80] sm:$0xff]
        %v810 = vld [vmem:[%s262 + $0xf88] sm:$0xff]
        %v811 = vld [vmem:[%s262 + $0xf90] sm:$0xff]
        %v812 = vld [vmem:[%s262 + $0xf98] sm:$0xff]
        %v813 = vld [vmem:[%s262 + $0xfa0] sm:$0xff]
        %v814 = vld [vmem:[%s262 + $0xfa8] sm:$0xff]
        %v815 = vld [vmem:[%s262 + $0xfb0] sm:$0xff]
        %v816 = vld [vmem:[%s262 + $0xfb8] sm:$0xff]
        %v817 = vld [vmem:[%s262 + $0xfc0] sm:$0xff]
        %v818 = vld [vmem:[%s262 + $0xfc8] sm:$0xff]
        %v819 = vld [vmem:[%s262 + $0xfd0] sm:$0xff]
        %v820 = vld [vmem:[%s262 + $0xfd8] sm:$0xff]
        %v821 = vld [vmem:[%s262 + $0xfe0] sm:$0xff]
        %v822 = vld [vmem:[%s262 + $0xfe8] sm:$0xff]
        %v823 = vld [vmem:[%s262 + $0xff0] sm:$0xff]
        %v824 = vld [vmem:[%s262 + $0xff8] sm:$0xff]
        %v825 = vld [vmem:[%s262 + $0x1000] sm:$0xff]
        %v826 = vld [vmem:[%s262 + $0x1008] sm:$0xff]
        %v827 = vld [vmem:[%s262 + $0x1010] sm:$0xff]
        %v828 = vld [vmem:[%s262 + $0x1018] sm:$0xff]
        %v829 = vld [vmem:[%s262 + $0x1020] sm:$0xff]
        %v830 = vld [vmem:[%s262 + $0x1028] sm:$0xff]
        %v831 = vld [vmem:[%s262 + $0x1030] sm:$0xff]
        %v832 = vld [vmem:[%s262 + $0x1038] sm:$0xff]
        %v833 = vld [vmem:[%s262 + $0x1040] sm:$0xff]
        %v834 = vld [vmem:[%s262 + $0x1048] sm:$0xff]
        %v835 = vld [vmem:[%s262 + $0x1050] sm:$0xff]
        %v836 = vld [vmem:[%s262 + $0x1058] sm:$0xff]
        %v837 = vld [vmem:[%s262 + $0x1060] sm:$0xff]
        %v838 = vld [vmem:[%s262 + $0x1068] sm:$0xff]
        %v839 = vld [vmem:[%s262 + $0x1070] sm:$0xff]
        %v840 = vld [vmem:[%s262 + $0x1078] sm:$0xff]
        %v841 = vld [vmem:[%s262 + $0x1080] sm:$0xff]
        %v842 = vld [vmem:[%s262 + $0x1088] sm:$0xff]
        %v843 = vld [vmem:[%s262 + $0x1090] sm:$0xff]
        %v844 = vld [vmem:[%s262 + $0x1098] sm:$0xff]
        %v845 = vld [vmem:[%s262 + $0x10a0] sm:$0xff]
        %v846 = vld [vmem:[%s262 + $0x10a8] sm:$0xff]
        %v847 = vld [vmem:[%s262 + $0x10b0] sm:$0xff]
        %v848 = vld [vmem:[%s262 + $0x10b8] sm:$0xff]
        %v849 = vld [vmem:[%s262 + $0x10c0] sm:$0xff]
        %v850 = vld [vmem:[%s262 + $0x10c8] sm:$0xff]
        %v851 = vld [vmem:[%s262 + $0x10d0] sm:$0xff]
        %v852 = vld [vmem:[%s262 + $0x10d8] sm:$0xff]
        %v853 = vld [vmem:[%s262 + $0x10e0] sm:$0xff]
        %v854 = vld [vmem:[%s262 + $0x10e8] sm:$0xff]
        %v855 = vld [vmem:[%s262 + $0x10f0] sm:$0xff]
        %v856 = vld [vmem:[%s262 + $0x10f8] sm:$0xff]
        %v857 = vld [vmem:[%s262 + $0x1100] sm:$0xff]
        %v858 = vld [vmem:[%s262 + $0x1108] sm:$0xff]
        %v859 = vld [vmem:[%s262 + $0x1110] sm:$0xff]
        %v860 = vld [vmem:[%s262 + $0x1118] sm:$0xff]
        %v861 = vld [vmem:[%s262 + $0x1120] sm:$0xff]
        %v862 = vld [vmem:[%s262 + $0x1128] sm:$0xff]
        %v863 = vld [vmem:[%s262 + $0x1130] sm:$0xff]
        %v864 = vld [vmem:[%s262 + $0x1138] sm:$0xff]
        %v865 = vld [vmem:[%s262 + $0x1140] sm:$0xff]
        %v866 = vld [vmem:[%s262 + $0x1148] sm:$0xff]
        %v867 = vld [vmem:[%s262 + $0x1150] sm:$0xff]
        %v868 = vld [vmem:[%s262 + $0x1158] sm:$0xff]
        %v869 = vld [vmem:[%s262 + $0x1160] sm:$0xff]
        %v870 = vld [vmem:[%s262 + $0x1168] sm:$0xff]
        %v871 = vld [vmem:[%s262 + $0x1170] sm:$0xff]
        %v872 = vld [vmem:[%s262 + $0x1178] sm:$0xff]
        %v873 = vld [vmem:[%s262 + $0x1180] sm:$0xff]
        %v874 = vld [vmem:[%s262 + $0x1188] sm:$0xff]
        %v875 = vld [vmem:[%s262 + $0x1190] sm:$0xff]
        %v876 = vld [vmem:[%s262 + $0x1198] sm:$0xff]
        %v877 = vld [vmem:[%s262 + $0x11a0] sm:$0xff]
        %v878 = vld [vmem:[%s262 + $0x11a8] sm:$0xff]
        %v879 = vld [vmem:[%s262 + $0x11b0] sm:$0xff]
        %v880 = vld [vmem:[%s262 + $0x11b8] sm:$0xff]
        %v881 = vld [vmem:[%s262 + $0x11c0] sm:$0xff]
        %v882 = vld [vmem:[%s262 + $0x11c8] sm:$0xff]
        %v883 = vld [vmem:[%s262 + $0x11d0] sm:$0xff]
        %v884 = vld [vmem:[%s262 + $0x11d8] sm:$0xff]
        %v885 = vld [vmem:[%s262 + $0x11e0] sm:$0xff]
        %v886 = vld [vmem:[%s262 + $0x11e8] sm:$0xff]
        %v887 = vld [vmem:[%s262 + $0x11f0] sm:$0xff]
        %v888 = vld [vmem:[%s262 + $0x11f8] sm:$0xff]
        %v889 = vld [vmem:[%s262 + $0x1200] sm:$0xff]
        %v890 = vld [vmem:[%s262 + $0x1208] sm:$0xff]
        %v891 = vld [vmem:[%s262 + $0x1210] sm:$0xff]
        %v892 = vld [vmem:[%s262 + $0x1218] sm:$0xff]
        %v893 = vld [vmem:[%s262 + $0x1220] sm:$0xff]
        %v894 = vld [vmem:[%s262 + $0x1228] sm:$0xff]
        %v895 = vld [vmem:[%s262 + $0x1230] sm:$0xff]
        %v896 = vld [vmem:[%s262 + $0x1238] sm:$0xff]
        %v897 = vld [vmem:[%s262 + $0x1240] sm:$0xff]
        %v898 = vld [vmem:[%s262 + $0x1248] sm:$0xff]
        %v899 = vld [vmem:[%s262 + $0x1250] sm:$0xff]
        %v900 = vld [vmem:[%s262 + $0x1258] sm:$0xff]
        %v901 = vld [vmem:[%s262 + $0x1260] sm:$0xff]
        %v902 = vld [vmem:[%s262 + $0x1268] sm:$0xff]
        %v903 = vld [vmem:[%s262 + $0x1270] sm:$0xff]
        %v904 = vld [vmem:[%s262 + $0x1278] sm:$0xff]
        %v905 = vld [vmem:[%s262 + $0x1280] sm:$0xff]
        %v906 = vld [vmem:[%s262 + $0x1288] sm:$0xff]
        %v907 = vld [vmem:[%s262 + $0x1290] sm:$0xff]
        %v908 = vld [vmem:[%s262 + $0x1298] sm:$0xff]
        %v909 = vld [vmem:[%s262 + $0x12a0] sm:$0xff]
        %v910 = vld [vmem:[%s262 + $0x12a8] sm:$0xff]
        %v911 = vld [vmem:[%s262 + $0x12b0] sm:$0xff]
        %v912 = vld [vmem:[%s262 + $0x12b8] sm:$0xff]
        %v913 = vld [vmem:[%s262 + $0x12c0] sm:$0xff]
        %v914 = vld [vmem:[%s262 + $0x12c8] sm:$0xff]
        %v915 = vld [vmem:[%s262 + $0x12d0] sm:$0xff]
        %v916 = vld [vmem:[%s262 + $0x12d8] sm:$0xff]
        %v917 = vld [vmem:[%s262 + $0x12e0] sm:$0xff]
        %v918 = vld [vmem:[%s262 + $0x12e8] sm:$0xff]
        %v919 = vld [vmem:[%s262 + $0x12f0] sm:$0xff]
        %v920 = vld [vmem:[%s262 + $0x12f8] sm:$0xff]
        %v921 = vld [vmem:[%s262 + $0x1300] sm:$0xff]
        %v922 = vld [vmem:[%s262 + $0x1308] sm:$0xff]
        %v923 = vld [vmem:[%s262 + $0x1310] sm:$0xff]
        %v924 = vld [vmem:[%s262 + $0x1318] sm:$0xff]
        %v925 = vld [vmem:[%s262 + $0x1320] sm:$0xff]
        %v926 = vld [vmem:[%s262 + $0x1328] sm:$0xff]
        %v927 = vld [vmem:[%s262 + $0x1330] sm:$0xff]
        %v928 = vld [vmem:[%s262 + $0x1338] sm:$0xff]
        %v929 = vld [vmem:[%s262 + $0x1340] sm:$0xff]
        %v930 = vld [vmem:[%s262 + $0x1348] sm:$0xff]
        %v931 = vld [vmem:[%s262 + $0x1350] sm:$0xff]
        %v932 = vld [vmem:[%s262 + $0x1358] sm:$0xff]
        %v933 = vld [vmem:[%s262 + $0x1360] sm:$0xff]
        %v934 = vld [vmem:[%s262 + $0x1368] sm:$0xff]
        %v935 = vld [vmem:[%s262 + $0x1370] sm:$0xff]
        %v936 = vld [vmem:[%s262 + $0x1378] sm:$0xff]
        %v937 = vld [vmem:[%s262 + $0x1380] sm:$0xff]
        %v938 = vld [vmem:[%s262 + $0x1388] sm:$0xff]
        %v939 = vld [vmem:[%s262 + $0x1390] sm:$0xff]
        %v940 = vld [vmem:[%s262 + $0x1398] sm:$0xff]
        %v941 = vld [vmem:[%s262 + $0x13a0] sm:$0xff]
        %v942 = vld [vmem:[%s262 + $0x13a8] sm:$0xff]
        %v943 = vld [vmem:[%s262 + $0x13b0] sm:$0xff]
        %v944 = vld [vmem:[%s262 + $0x13b8] sm:$0xff]
        %v945 = vld [vmem:[%s262 + $0x13c0] sm:$0xff]
        %v946 = vld [vmem:[%s262 + $0x13c8] sm:$0xff]
        %v947 = vld [vmem:[%s262 + $0x13d0] sm:$0xff]
        %v948 = vld [vmem:[%s262 + $0x13d8] sm:$0xff]
        %v949 = vld [vmem:[%s262 + $0x13e0] sm:$0xff]
        %v950 = vld [vmem:[%s262 + $0x13e8] sm:$0xff]
        %v951 = vld [vmem:[%s262 + $0x13f0] sm:$0xff]
        %v952 = vld [vmem:[%s262 + $0x13f8] sm:$0xff]
        %v953 = vld [vmem:[%s262 + $0x1400] sm:$0xff]
        %v954 = vld [vmem:[%s262 + $0x1408] sm:$0xff]
        %v955 = vld [vmem:[%s262 + $0x1410] sm:$0xff]
        %v956 = vld [vmem:[%s262 + $0x1418] sm:$0xff]
        %v957 = vld [vmem:[%s262 + $0x1420] sm:$0xff]
        %v958 = vld [vmem:[%s262 + $0x1428] sm:$0xff]
        %v959 = vld [vmem:[%s262 + $0x1430] sm:$0xff]
        %v960 = vld [vmem:[%s262 + $0x1438] sm:$0xff]
        %v961 = vld [vmem:[%s262 + $0x1440] sm:$0xff]
        %v962 = vld [vmem:[%s262 + $0x1448] sm:$0xff]
        %v963 = vld [vmem:[%s262 + $0x1450] sm:$0xff]
        %v964 = vld [vmem:[%s262 + $0x1458] sm:$0xff]
        %v965 = vld [vmem:[%s262 + $0x1460] sm:$0xff]
        %v966 = vld [vmem:[%s262 + $0x1468] sm:$0xff]
        %v967 = vld [vmem:[%s262 + $0x1470] sm:$0xff]
        %v968 = vld [vmem:[%s262 + $0x1478] sm:$0xff]
        %v969 = vld [vmem:[%s262 + $0x1480] sm:$0xff]
        %v970 = vld [vmem:[%s262 + $0x1488] sm:$0xff]
        %v971 = vld [vmem:[%s262 + $0x1490] sm:$0xff]
        %v972 = vld [vmem:[%s262 + $0x1498] sm:$0xff]
        %v973 = vld [vmem:[%s262 + $0x14a0] sm:$0xff]
        %v974 = vld [vmem:[%s262 + $0x14a8] sm:$0xff]
        %v975 = vld [vmem:[%s262 + $0x14b0] sm:$0xff]
        %v976 = vld [vmem:[%s262 + $0x14b8] sm:$0xff]
        %v977 = vld [vmem:[%s262 + $0x14c0] sm:$0xff]
        %v978 = vld [vmem:[%s262 + $0x14c8] sm:$0xff]
        %v979 = vld [vmem:[%s262 + $0x14d0] sm:$0xff]
        %v980 = vld [vmem:[%s262 + $0x14d8] sm:$0xff]
        %v981 = vld [vmem:[%s262 + $0x14e0] sm:$0xff]
        %v982 = vld [vmem:[%s262 + $0x14e8] sm:$0xff]
        %v983 = vld [vmem:[%s262 + $0x14f0] sm:$0xff]
        %v984 = vld [vmem:[%s262 + $0x14f8] sm:$0xff]
        %v985 = vld [vmem:[%s262 + $0x1500] sm:$0xff]
        %v986 = vld [vmem:[%s262 + $0x1508] sm:$0xff]
        %v987 = vld [vmem:[%s262 + $0x1510] sm:$0xff]
        %v988 = vld [vmem:[%s262 + $0x1518] sm:$0xff]
        %v989 = vld [vmem:[%s262 + $0x1520] sm:$0xff]
        %v990 = vld [vmem:[%s262 + $0x1528] sm:$0xff]
        %v991 = vld [vmem:[%s262 + $0x1530] sm:$0xff]
        %v992 = vld [vmem:[%s262 + $0x1538] sm:$0xff]
        %v993 = vld [vmem:[%s262 + $0x1540] sm:$0xff]
        %v994 = vld [vmem:[%s262 + $0x1548] sm:$0xff]
        %v995 = vld [vmem:[%s262 + $0x1550] sm:$0xff]
        %v996 = vld [vmem:[%s262 + $0x1558] sm:$0xff]
        %v997 = vld [vmem:[%s262 + $0x1560] sm:$0xff]
        %v998 = vld [vmem:[%s262 + $0x1568] sm:$0xff]
        %v999 = vld [vmem:[%s262 + $0x1570] sm:$0xff]
        %v1000 = vld [vmem:[%s262 + $0x1578] sm:$0xff]
        %v1001 = vld [vmem:[%s262 + $0x1580] sm:$0xff]
        %v1002 = vld [vmem:[%s262 + $0x1588] sm:$0xff]
        %v1003 = vld [vmem:[%s262 + $0x1590] sm:$0xff]
        %v1004 = vld [vmem:[%s262 + $0x1598] sm:$0xff]
        %v1005 = vld [vmem:[%s262 + $0x15a0] sm:$0xff]
        %v1006 = vld [vmem:[%s262 + $0x15a8] sm:$0xff]
        %v1007 = vld [vmem:[%s262 + $0x15b0] sm:$0xff]
        %v1008 = vld [vmem:[%s262 + $0x15b8] sm:$0xff]
        %v1009 = vld [vmem:[%s262 + $0x15c0] sm:$0xff]
        %v1010 = vld [vmem:[%s262 + $0x15c8] sm:$0xff]
        %v1011 = vld [vmem:[%s262 + $0x15d0] sm:$0xff]
        %v1012 = vld [vmem:[%s262 + $0x15d8] sm:$0xff]
        %v1013 = vld [vmem:[%s262 + $0x15e0] sm:$0xff]
        %v1014 = vld [vmem:[%s262 + $0x15e8] sm:$0xff]
        %v1015 = vld [vmem:[%s262 + $0x15f0] sm:$0xff]
        %v1016 = vld [vmem:[%s262 + $0x15f8] sm:$0xff]
        %v1017 = vld [vmem:[%s262 + $0x1600] sm:$0xff]
        %v1018 = vld [vmem:[%s262 + $0x1608] sm:$0xff]
        %v1019 = vld [vmem:[%s262 + $0x1610] sm:$0xff]
        %v1020 = vld [vmem:[%s262 + $0x1618] sm:$0xff]
        %v1021 = vld [vmem:[%s262 + $0x1620] sm:$0xff]
        %v1022 = vld [vmem:[%s262 + $0x1628] sm:$0xff]
        %v1023 = vld [vmem:[%s262 + $0x1630] sm:$0xff]
        %v1024 = vld [vmem:[%s262 + $0x1638] sm:$0xff]
        %v1025 = vld [vmem:[%s262 + $0x1640] sm:$0xff]
        %v1026 = vld [vmem:[%s262 + $0x1648] sm:$0xff]
        %v1027 = vld [vmem:[%s262 + $0x1650] sm:$0xff]
        %v1028 = vld [vmem:[%s262 + $0x1658] sm:$0xff]
        %v1029 = vld [vmem:[%s262 + $0x1660] sm:$0xff]
        %v1030 = vld [vmem:[%s262 + $0x1668] sm:$0xff]
        %v1031 = vld [vmem:[%s262 + $0x1670] sm:$0xff]
        %v1032 = vld [vmem:[%s262 + $0x1678] sm:$0xff]
        %v1033 = vld [vmem:[%s262 + $0x1680] sm:$0xff]
        %v1034 = vld [vmem:[%s262 + $0x1688] sm:$0xff]
        %v1035 = vld [vmem:[%s262 + $0x1690] sm:$0xff]
        %v1036 = vld [vmem:[%s262 + $0x1698] sm:$0xff]
        %v1037 = vld [vmem:[%s262 + $0x16a0] sm:$0xff]
        %v1038 = vld [vmem:[%s262 + $0x16a8] sm:$0xff]
        %v1039 = vld [vmem:[%s262 + $0x16b0] sm:$0xff]
        %v1040 = vld [vmem:[%s262 + $0x16b8] sm:$0xff]
        %v1041 = vld [vmem:[%s262 + $0x16c0] sm:$0xff]
        %v1042 = vld [vmem:[%s262 + $0x16c8] sm:$0xff]
        %v1043 = vld [vmem:[%s262 + $0x16d0] sm:$0xff]
        %v1044 = vld [vmem:[%s262 + $0x16d8] sm:$0xff]
        %v1045 = vld [vmem:[%s262 + $0x16e0] sm:$0xff]
        %v1046 = vld [vmem:[%s262 + $0x16e8] sm:$0xff]
        %v1047 = vld [vmem:[%s262 + $0x16f0] sm:$0xff]
        %v1048 = vld [vmem:[%s262 + $0x16f8] sm:$0xff]
        %v1049 = vld [vmem:[%s262 + $0x1700] sm:$0xff]
        %v1050 = vld [vmem:[%s262 + $0x1708] sm:$0xff]
        %v1051 = vld [vmem:[%s262 + $0x1710] sm:$0xff]
        %v1052 = vld [vmem:[%s262 + $0x1718] sm:$0xff]
        %v1053 = vld [vmem:[%s262 + $0x1720] sm:$0xff]
        %v1054 = vld [vmem:[%s262 + $0x1728] sm:$0xff]
        %v1055 = vld [vmem:[%s262 + $0x1730] sm:$0xff]
        %v1056 = vld [vmem:[%s262 + $0x1738] sm:$0xff]
        %v1057 = vld [vmem:[%s262 + $0x1740] sm:$0xff]
        %v1058 = vld [vmem:[%s262 + $0x1748] sm:$0xff]
        %v1059 = vld [vmem:[%s262 + $0x1750] sm:$0xff]
        %v1060 = vld [vmem:[%s262 + $0x1758] sm:$0xff]
        %v1061 = vld [vmem:[%s262 + $0x1760] sm:$0xff]
        %v1062 = vld [vmem:[%s262 + $0x1768] sm:$0xff]
        %v1063 = vld [vmem:[%s262 + $0x1770] sm:$0xff]
        %v1064 = vld [vmem:[%s262 + $0x1778] sm:$0xff]
        %v1065 = vld [vmem:[%s262 + $0x1780] sm:$0xff]
        %v1066 = vld [vmem:[%s262 + $0x1788] sm:$0xff]
        %v1067 = vld [vmem:[%s262 + $0x1790] sm:$0xff]
        %v1068 = vld [vmem:[%s262 + $0x1798] sm:$0xff]
        %v1069 = vld [vmem:[%s262 + $0x17a0] sm:$0xff]
        %v1070 = vld [vmem:[%s262 + $0x17a8] sm:$0xff]
        %v1071 = vld [vmem:[%s262 + $0x17b0] sm:$0xff]
        %v1072 = vld [vmem:[%s262 + $0x17b8] sm:$0xff]
        %v1073 = vld [vmem:[%s262 + $0x17c0] sm:$0xff]
        %v1074 = vld [vmem:[%s262 + $0x17c8] sm:$0xff]
        %v1075 = vld [vmem:[%s262 + $0x17d0] sm:$0xff]
        %v1076 = vld [vmem:[%s262 + $0x17d8] sm:$0xff]
        %v1077 = vld [vmem:[%s262 + $0x17e0] sm:$0xff]
        %v1078 = vld [vmem:[%s262 + $0x17e8] sm:$0xff]
        %v1079 = vld [vmem:[%s262 + $0x17f0] sm:$0xff]
        %v1080 = vld [vmem:[%s262 + $0x17f8] sm:$0xff]
        %v1081 = vld [vmem:[%s262 + $0x1800] sm:$0xff]
        %v1082 = vld [vmem:[%s262 + $0x1808] sm:$0xff]
        %v1083 = vld [vmem:[%s262 + $0x1810] sm:$0xff]
        %v1084 = vld [vmem:[%s262 + $0x1818] sm:$0xff]
        %v1085 = vld [vmem:[%s262 + $0x1820] sm:$0xff]
        %v1086 = vld [vmem:[%s262 + $0x1828] sm:$0xff]
        %v1087 = vld [vmem:[%s262 + $0x1830] sm:$0xff]
        %v1088 = vld [vmem:[%s262 + $0x1838] sm:$0xff]
        %v1089 = vld [vmem:[%s262 + $0x1840] sm:$0xff]
        %v1090 = vld [vmem:[%s262 + $0x1848] sm:$0xff]
        %v1091 = vld [vmem:[%s262 + $0x1850] sm:$0xff]
        %v1092 = vld [vmem:[%s262 + $0x1858] sm:$0xff]
        %v1093 = vld [vmem:[%s262 + $0x1860] sm:$0xff]
        %v1094 = vld [vmem:[%s262 + $0x1868] sm:$0xff]
        %v1095 = vld [vmem:[%s262 + $0x1870] sm:$0xff]
        %v1096 = vld [vmem:[%s262 + $0x1878] sm:$0xff]
        %v1097 = vld [vmem:[%s262 + $0x1880] sm:$0xff]
        %v1098 = vld [vmem:[%s262 + $0x1888] sm:$0xff]
        %v1099 = vld [vmem:[%s262 + $0x1890] sm:$0xff]
        %v1100 = vld [vmem:[%s262 + $0x1898] sm:$0xff]
        %v1101 = vld [vmem:[%s262 + $0x18a0] sm:$0xff]
        %v1102 = vld [vmem:[%s262 + $0x18a8] sm:$0xff]
        %v1103 = vld [vmem:[%s262 + $0x18b0] sm:$0xff]
        %v1104 = vld [vmem:[%s262 + $0x18b8] sm:$0xff]
        %v1105 = vld [vmem:[%s262 + $0x18c0] sm:$0xff]
        %v1106 = vld [vmem:[%s262 + $0x18c8] sm:$0xff]
        %v1107 = vld [vmem:[%s262 + $0x18d0] sm:$0xff]
        %v1108 = vld [vmem:[%s262 + $0x18d8] sm:$0xff]
        %v1109 = vld [vmem:[%s262 + $0x18e0] sm:$0xff]
        %v1110 = vld [vmem:[%s262 + $0x18e8] sm:$0xff]
        %v1111 = vld [vmem:[%s262 + $0x18f0] sm:$0xff]
        %v1112 = vld [vmem:[%s262 + $0x18f8] sm:$0xff]
        %v1113 = vld [vmem:[%s262 + $0x1900] sm:$0xff]
        %v1114 = vld [vmem:[%s262 + $0x1908] sm:$0xff]
        %v1115 = vld [vmem:[%s262 + $0x1910] sm:$0xff]
        %v1116 = vld [vmem:[%s262 + $0x1918] sm:$0xff]
        %v1117 = vld [vmem:[%s262 + $0x1920] sm:$0xff]
        %v1118 = vld [vmem:[%s262 + $0x1928] sm:$0xff]
        %v1119 = vld [vmem:[%s262 + $0x1930] sm:$0xff]
        %v1120 = vld [vmem:[%s262 + $0x1938] sm:$0xff]
        %v1121 = vld [vmem:[%s262 + $0x1940] sm:$0xff]
        %v1122 = vld [vmem:[%s262 + $0x1948] sm:$0xff]
        %v1123 = vld [vmem:[%s262 + $0x1950] sm:$0xff]
        %v1124 = vld [vmem:[%s262 + $0x1958] sm:$0xff]
        %v1125 = vld [vmem:[%s262 + $0x1960] sm:$0xff]
        %v1126 = vld [vmem:[%s262 + $0x1968] sm:$0xff]
        %v1127 = vld [vmem:[%s262 + $0x1970] sm:$0xff]
        %v1128 = vld [vmem:[%s262 + $0x1978] sm:$0xff]
        %v1129 = vld [vmem:[%s262 + $0x1980] sm:$0xff]
        %v1130 = vld [vmem:[%s262 + $0x1988] sm:$0xff]
        %v1131 = vld [vmem:[%s262 + $0x1990] sm:$0xff]
        %v1132 = vld [vmem:[%s262 + $0x1998] sm:$0xff]
        %v1133 = vld [vmem:[%s262 + $0x19a0] sm:$0xff]
        %v1134 = vld [vmem:[%s262 + $0x19a8] sm:$0xff]
        %v1135 = vld [vmem:[%s262 + $0x19b0] sm:$0xff]
        %v1136 = vld [vmem:[%s262 + $0x19b8] sm:$0xff]
        %v1137 = vld [vmem:[%s262 + $0x19c0] sm:$0xff]
        %v1138 = vld [vmem:[%s262 + $0x19c8] sm:$0xff]
        %v1139 = vld [vmem:[%s262 + $0x19d0] sm:$0xff]
        %v1140 = vld [vmem:[%s262 + $0x19d8] sm:$0xff]
        %v1141 = vld [vmem:[%s262 + $0x19e0] sm:$0xff]
        %v1142 = vld [vmem:[%s262 + $0x19e8] sm:$0xff]
        %v1143 = vld [vmem:[%s262 + $0x19f0] sm:$0xff]
        %v1144 = vld [vmem:[%s262 + $0x19f8] sm:$0xff]
        %v1145 = vld [vmem:[%s262 + $0x1a00] sm:$0xff]
        %v1146 = vld [vmem:[%s262 + $0x1a08] sm:$0xff]
        %v1147 = vld [vmem:[%s262 + $0x1a10] sm:$0xff]
        %v1148 = vld [vmem:[%s262 + $0x1a18] sm:$0xff]
        %v1149 = vld [vmem:[%s262 + $0x1a20] sm:$0xff]
        %v1150 = vld [vmem:[%s262 + $0x1a28] sm:$0xff]
        %v1151 = vld [vmem:[%s262 + $0x1a30] sm:$0xff]
        %v1152 = vld [vmem:[%s262 + $0x1a38] sm:$0xff]
        %v1153 = vld [vmem:[%s262 + $0x1a40] sm:$0xff]
        %v1154 = vld [vmem:[%s262 + $0x1a48] sm:$0xff]
        %v1155 = vld [vmem:[%s262 + $0x1a50] sm:$0xff]
        %v1156 = vld [vmem:[%s262 + $0x1a58] sm:$0xff]
        %v1157 = vld [vmem:[%s262 + $0x1a60] sm:$0xff]
        %v1158 = vld [vmem:[%s262 + $0x1a68] sm:$0xff]
        %v1159 = vld [vmem:[%s262 + $0x1a70] sm:$0xff]
        %v1160 = vld [vmem:[%s262 + $0x1a78] sm:$0xff]
        %v1161 = vld [vmem:[%s262 + $0x1a80] sm:$0xff]
        %v1162 = vld [vmem:[%s262 + $0x1a88] sm:$0xff]
        %v1163 = vld [vmem:[%s262 + $0x1a90] sm:$0xff]
        %v1164 = vld [vmem:[%s262 + $0x1a98] sm:$0xff]
        %v1165 = vld [vmem:[%s262 + $0x1aa0] sm:$0xff]
        %v1166 = vld [vmem:[%s262 + $0x1aa8] sm:$0xff]
        %v1167 = vld [vmem:[%s262 + $0x1ab0] sm:$0xff]
        %v1168 = vld [vmem:[%s262 + $0x1ab8] sm:$0xff]
        %v1169 = vld [vmem:[%s262 + $0x1ac0] sm:$0xff]
        %v1170 = vld [vmem:[%s262 + $0x1ac8] sm:$0xff]
        %v1171 = vld [vmem:[%s262 + $0x1ad0] sm:$0xff]
        %v1172 = vld [vmem:[%s262 + $0x1ad8] sm:$0xff]
        %v1173 = vld [vmem:[%s262 + $0x1ae0] sm:$0xff]
        %v1174 = vld [vmem:[%s262 + $0x1ae8] sm:$0xff]
        %v1175 = vld [vmem:[%s262 + $0x1af0] sm:$0xff]
        %v1176 = vld [vmem:[%s262 + $0x1af8] sm:$0xff]
        %v1177 = vld [vmem:[%s262 + $0x1b00] sm:$0xff]
        %v1178 = vld [vmem:[%s262 + $0x1b08] sm:$0xff]
        %v1179 = vld [vmem:[%s262 + $0x1b10] sm:$0xff]
        %v1180 = vld [vmem:[%s262 + $0x1b18] sm:$0xff]
        %v1181 = vld [vmem:[%s262 + $0x1b20] sm:$0xff]
        %v1182 = vld [vmem:[%s262 + $0x1b28] sm:$0xff]
        %v1183 = vld [vmem:[%s262 + $0x1b30] sm:$0xff]
        %v1184 = vld [vmem:[%s262 + $0x1b38] sm:$0xff]
        %v1185 = vld [vmem:[%s262 + $0x1b40] sm:$0xff]
        %v1186 = vld [vmem:[%s262 + $0x1b48] sm:$0xff]
        %v1187 = vld [vmem:[%s262 + $0x1b50] sm:$0xff]
        %v1188 = vld [vmem:[%s262 + $0x1b58] sm:$0xff]
        %v1189 = vld [vmem:[%s262 + $0x1b60] sm:$0xff]
        %v1190 = vld [vmem:[%s262 + $0x1b68] sm:$0xff]
        %v1191 = vld [vmem:[%s262 + $0x1b70] sm:$0xff]
        %v1192 = vld [vmem:[%s262 + $0x1b78] sm:$0xff]
        %v1193 = vld [vmem:[%s262 + $0x1b80] sm:$0xff]
        %v1194 = vld [vmem:[%s262 + $0x1b88] sm:$0xff]
        %v1195 = vld [vmem:[%s262 + $0x1b90] sm:$0xff]
        %v1196 = vld [vmem:[%s262 + $0x1b98] sm:$0xff]
        %v1197 = vld [vmem:[%s262 + $0x1ba0] sm:$0xff]
        %v1198 = vld [vmem:[%s262 + $0x1ba8] sm:$0xff]
        %v1199 = vld [vmem:[%s262 + $0x1bb0] sm:$0xff]
        %v1200 = vld [vmem:[%s262 + $0x1bb8] sm:$0xff]
        %v1201 = vld [vmem:[%s262 + $0x1bc0] sm:$0xff]
        %v1202 = vld [vmem:[%s262 + $0x1bc8] sm:$0xff]
        %v1203 = vld [vmem:[%s262 + $0x1bd0] sm:$0xff]
        %v1204 = vld [vmem:[%s262 + $0x1bd8] sm:$0xff]
        %v1205 = vld [vmem:[%s262 + $0x1be0] sm:$0xff]
        %v1206 = vld [vmem:[%s262 + $0x1be8] sm:$0xff]
        %v1207 = vld [vmem:[%s262 + $0x1bf0] sm:$0xff]
        %v1208 = vld [vmem:[%s262 + $0x1bf8] sm:$0xff]
        %v1209 = vld [vmem:[%s262 + $0x1c00] sm:$0xff]
        %v1210 = vld [vmem:[%s262 + $0x1c08] sm:$0xff]
        %v1211 = vld [vmem:[%s262 + $0x1c10] sm:$0xff]
        %v1212 = vld [vmem:[%s262 + $0x1c18] sm:$0xff]
        %v1213 = vld [vmem:[%s262 + $0x1c20] sm:$0xff]
        %v1214 = vld [vmem:[%s262 + $0x1c28] sm:$0xff]
        %v1215 = vld [vmem:[%s262 + $0x1c30] sm:$0xff]
        %v1216 = vld [vmem:[%s262 + $0x1c38] sm:$0xff]
        %v1217 = vld [vmem:[%s262 + $0x1c40] sm:$0xff]
        %v1218 = vld [vmem:[%s262 + $0x1c48] sm:$0xff]
        %v1219 = vld [vmem:[%s262 + $0x1c50] sm:$0xff]
        %v1220 = vld [vmem:[%s262 + $0x1c58] sm:$0xff]
        %v1221 = vld [vmem:[%s262 + $0x1c60] sm:$0xff]
        %v1222 = vld [vmem:[%s262 + $0x1c68] sm:$0xff]
        %v1223 = vld [vmem:[%s262 + $0x1c70] sm:$0xff]
        %v1224 = vld [vmem:[%s262 + $0x1c78] sm:$0xff]
        %v1225 = vld [vmem:[%s262 + $0x1c80] sm:$0xff]
        %v1226 = vld [vmem:[%s262 + $0x1c88] sm:$0xff]
        %v1227 = vld [vmem:[%s262 + $0x1c90] sm:$0xff]
        %v1228 = vld [vmem:[%s262 + $0x1c98] sm:$0xff]
        %v1229 = vld [vmem:[%s262 + $0x1ca0] sm:$0xff]
        %v1230 = vld [vmem:[%s262 + $0x1ca8] sm:$0xff]
        %v1231 = vld [vmem:[%s262 + $0x1cb0] sm:$0xff]
        %v1232 = vld [vmem:[%s262 + $0x1cb8] sm:$0xff]
        %v1233 = vld [vmem:[%s262 + $0x1cc0] sm:$0xff]
        %v1234 = vld [vmem:[%s262 + $0x1cc8] sm:$0xff]
        %v1235 = vld [vmem:[%s262 + $0x1cd0] sm:$0xff]
        %v1236 = vld [vmem:[%s262 + $0x1cd8] sm:$0xff]
        %v1237 = vld [vmem:[%s262 + $0x1ce0] sm:$0xff]
        %v1238 = vld [vmem:[%s262 + $0x1ce8] sm:$0xff]
        %v1239 = vld [vmem:[%s262 + $0x1cf0] sm:$0xff]
        %v1240 = vld [vmem:[%s262 + $0x1cf8] sm:$0xff]
        %v1241 = vld [vmem:[%s262 + $0x1d00] sm:$0xff]
        %v1242 = vld [vmem:[%s262 + $0x1d08] sm:$0xff]
        %v1243 = vld [vmem:[%s262 + $0x1d10] sm:$0xff]
        %v1244 = vld [vmem:[%s262 + $0x1d18] sm:$0xff]
        %v1245 = vld [vmem:[%s262 + $0x1d20] sm:$0xff]
        %v1246 = vld [vmem:[%s262 + $0x1d28] sm:$0xff]
        %v1247 = vld [vmem:[%s262 + $0x1d30] sm:$0xff]
        %v1248 = vld [vmem:[%s262 + $0x1d38] sm:$0xff]
        %v1249 = vld [vmem:[%s262 + $0x1d40] sm:$0xff]
        %v1250 = vld [vmem:[%s262 + $0x1d48] sm:$0xff]
        %v1251 = vld [vmem:[%s262 + $0x1d50] sm:$0xff]
        %v1252 = vld [vmem:[%s262 + $0x1d58] sm:$0xff]
        %v1253 = vld [vmem:[%s262 + $0x1d60] sm:$0xff]
        %v1254 = vld [vmem:[%s262 + $0x1d68] sm:$0xff]
        %v1255 = vld [vmem:[%s262 + $0x1d70] sm:$0xff]
        %v1256 = vld [vmem:[%s262 + $0x1d78] sm:$0xff]
        %v1257 = vld [vmem:[%s262 + $0x1d80] sm:$0xff]
        %v1258 = vld [vmem:[%s262 + $0x1d88] sm:$0xff]
        %v1259 = vld [vmem:[%s262 + $0x1d90] sm:$0xff]
        %v1260 = vld [vmem:[%s262 + $0x1d98] sm:$0xff]
        %v1261 = vld [vmem:[%s262 + $0x1da0] sm:$0xff]
        %v1262 = vld [vmem:[%s262 + $0x1da8] sm:$0xff]
        %v1263 = vld [vmem:[%s262 + $0x1db0] sm:$0xff]
        %v1264 = vld [vmem:[%s262 + $0x1db8] sm:$0xff]
        %v1265 = vld [vmem:[%s262 + $0x1dc0] sm:$0xff]
        %v1266 = vld [vmem:[%s262 + $0x1dc8] sm:$0xff]
        %v1267 = vld [vmem:[%s262 + $0x1dd0] sm:$0xff]
        %v1268 = vld [vmem:[%s262 + $0x1dd8] sm:$0xff]
        %v1269 = vld [vmem:[%s262 + $0x1de0] sm:$0xff]
        %v1270 = vld [vmem:[%s262 + $0x1de8] sm:$0xff]
        %v1271 = vld [vmem:[%s262 + $0x1df0] sm:$0xff]
        %v1272 = vld [vmem:[%s262 + $0x1df8] sm:$0xff]
        %v1273 = vld [vmem:[%s262 + $0x1e00] sm:$0xff]
        %v1274 = vld [vmem:[%s262 + $0x1e08] sm:$0xff]
        %v1275 = vld [vmem:[%s262 + $0x1e10] sm:$0xff]
        %v1276 = vld [vmem:[%s262 + $0x1e18] sm:$0xff]
        %v1277 = vld [vmem:[%s262 + $0x1e20] sm:$0xff]
        %v1278 = vld [vmem:[%s262 + $0x1e28] sm:$0xff]
        %v1279 = vld [vmem:[%s262 + $0x1e30] sm:$0xff]
        %v1280 = vld [vmem:[%s262 + $0x1e38] sm:$0xff]
        %v1281 = vld [vmem:[%s262 + $0x1e40] sm:$0xff]
        %v1282 = vld [vmem:[%s262 + $0x1e48] sm:$0xff]
        %v1283 = vld [vmem:[%s262 + $0x1e50] sm:$0xff]
        %v1284 = vld [vmem:[%s262 + $0x1e58] sm:$0xff]
        %v1285 = vld [vmem:[%s262 + $0x1e60] sm:$0xff]
        %v1286 = vld [vmem:[%s262 + $0x1e68] sm:$0xff]
        %v1287 = vld [vmem:[%s262 + $0x1e70] sm:$0xff]
        %v1288 = vld [vmem:[%s262 + $0x1e78] sm:$0xff]
        %v1289 = vld [vmem:[%s262 + $0x1e80] sm:$0xff]
        %v1290 = vld [vmem:[%s262 + $0x1e88] sm:$0xff]
        %v1291 = vld [vmem:[%s262 + $0x1e90] sm:$0xff]
        %v1292 = vld [vmem:[%s262 + $0x1e98] sm:$0xff]
        %v1293 = vld [vmem:[%s262 + $0x1ea0] sm:$0xff]
        %v1294 = vld [vmem:[%s262 + $0x1ea8] sm:$0xff]
        %v1295 = vld [vmem:[%s262 + $0x1eb0] sm:$0xff]
        %v1296 = vld [vmem:[%s262 + $0x1eb8] sm:$0xff]
        %v1297 = vld [vmem:[%s262 + $0x1ec0] sm:$0xff]
        %v1298 = vld [vmem:[%s262 + $0x1ec8] sm:$0xff]
        %v1299 = vld [vmem:[%s262 + $0x1ed0] sm:$0xff]
        %v1300 = vld [vmem:[%s262 + $0x1ed8] sm:$0xff]
        %v1301 = vld [vmem:[%s262 + $0x1ee0] sm:$0xff]
        %v1302 = vld [vmem:[%s262 + $0x1ee8] sm:$0xff]
        %v1303 = vld [vmem:[%s262 + $0x1ef0] sm:$0xff]
        %v1304 = vld [vmem:[%s262 + $0x1ef8] sm:$0xff]
        %v1305 = vld [vmem:[%s262 + $0x1f00] sm:$0xff]
        %v1306 = vld [vmem:[%s262 + $0x1f08] sm:$0xff]
        %v1307 = vld [vmem:[%s262 + $0x1f10] sm:$0xff]
        %v1308 = vld [vmem:[%s262 + $0x1f18] sm:$0xff]
        %v1309 = vld [vmem:[%s262 + $0x1f20] sm:$0xff]
        %v1310 = vld [vmem:[%s262 + $0x1f28] sm:$0xff]
        %v1311 = vld [vmem:[%s262 + $0x1f30] sm:$0xff]
        %v1312 = vld [vmem:[%s262 + $0x1f38] sm:$0xff]
        %v1313 = vld [vmem:[%s262 + $0x1f40] sm:$0xff]
        %v1314 = vld [vmem:[%s262 + $0x1f48] sm:$0xff]
        %v1315 = vld [vmem:[%s262 + $0x1f50] sm:$0xff]
        %v1316 = vld [vmem:[%s262 + $0x1f58] sm:$0xff]
        %v1317 = vld [vmem:[%s262 + $0x1f60] sm:$0xff]
        %v1318 = vld [vmem:[%s262 + $0x1f68] sm:$0xff]
        %v1319 = vld [vmem:[%s262 + $0x1f70] sm:$0xff]
        %v1320 = vld [vmem:[%s262 + $0x1f78] sm:$0xff]
        %v1321 = vld [vmem:[%s262 + $0x1f80] sm:$0xff]
        %v1322 = vld [vmem:[%s262 + $0x1f88] sm:$0xff]
        %v1323 = vld [vmem:[%s262 + $0x1f90] sm:$0xff]
        %v1324 = vld [vmem:[%s262 + $0x1f98] sm:$0xff]
        %v1325 = vld [vmem:[%s262 + $0x1fa0] sm:$0xff]
        %v1326 = vld [vmem:[%s262 + $0x1fa8] sm:$0xff]
        %v1327 = vld [vmem:[%s262 + $0x1fb0] sm:$0xff]
        %v1328 = vld [vmem:[%s262 + $0x1fb8] sm:$0xff]
        %v1329 = vld [vmem:[%s262 + $0x1fc0] sm:$0xff]
        %v1330 = vld [vmem:[%s262 + $0x1fc8] sm:$0xff]
        %v1331 = vld [vmem:[%s262 + $0x1fd0] sm:$0xff]
        %v1332 = vld [vmem:[%s262 + $0x1fd8] sm:$0xff]
        %v1333 = vld [vmem:[%s262 + $0x1fe0] sm:$0xff]
        %v1334 = vld [vmem:[%s262 + $0x1fe8] sm:$0xff]
        %v1335 = vld [vmem:[%s262 + $0x1ff0] sm:$0xff]
        %v1336 = vld [vmem:[%s262 + $0x1ff8] sm:$0xff]
        %v1337 = vpack.c.bf16 %v321, %v313
        %v1338 = vpack.c.bf16 %v322, %v314
        %v1339 = vpack.c.bf16 %v323, %v315
        %v1340 = vpack.c.bf16 %v324, %v316
        %v1341 = vpack.c.bf16 %v325, %v317
        %v1342 = vpack.c.bf16 %v326, %v318
        %v1343 = vpack.c.bf16 %v327, %v319
        %v1344 = vpack.c.bf16 %v328, %v320
        %v1345 = vpack.c.bf16 %v337, %v329
        %v1346 = vpack.c.bf16 %v338, %v330
        %v1347 = vpack.c.bf16 %v339, %v331
        %v1348 = vpack.c.bf16 %v340, %v332
        %v1349 = vpack.c.bf16 %v341, %v333
        %v1350 = vpack.c.bf16 %v342, %v334
        %v1351 = vpack.c.bf16 %v343, %v335
        %v1352 = vpack.c.bf16 %v344, %v336
        %v1353 = vpack.c.bf16 %v353, %v345
        %v1354 = vpack.c.bf16 %v354, %v346
        %v1355 = vpack.c.bf16 %v355, %v347
        %v1356 = vpack.c.bf16 %v356, %v348
        %v1357 = vpack.c.bf16 %v357, %v349
        %v1358 = vpack.c.bf16 %v358, %v350
        %v1359 = vpack.c.bf16 %v359, %v351
        %v1360 = vpack.c.bf16 %v360, %v352
        %v1361 = vpack.c.bf16 %v369, %v361
        %v1362 = vpack.c.bf16 %v370, %v362
        %v1363 = vpack.c.bf16 %v371, %v363
        %v1364 = vpack.c.bf16 %v372, %v364
        %v1365 = vpack.c.bf16 %v373, %v365
        %v1366 = vpack.c.bf16 %v374, %v366
        %v1367 = vpack.c.bf16 %v375, %v367
        %v1368 = vpack.c.bf16 %v376, %v368
        %v1369 = vpack.c.bf16 %v385, %v377
        %v1370 = vpack.c.bf16 %v386, %v378
        %v1371 = vpack.c.bf16 %v387, %v379
        %v1372 = vpack.c.bf16 %v388, %v380
        %v1373 = vpack.c.bf16 %v389, %v381
        %v1374 = vpack.c.bf16 %v390, %v382
        %v1375 = vpack.c.bf16 %v391, %v383
        %v1376 = vpack.c.bf16 %v392, %v384
        %v1377 = vpack.c.bf16 %v401, %v393
        %v1378 = vpack.c.bf16 %v402, %v394
        %v1379 = vpack.c.bf16 %v403, %v395
        %v1380 = vpack.c.bf16 %v404, %v396
        %v1381 = vpack.c.bf16 %v405, %v397
        %v1382 = vpack.c.bf16 %v406, %v398
        %v1383 = vpack.c.bf16 %v407, %v399
        %v1384 = vpack.c.bf16 %v408, %v400
        %v1385 = vpack.c.bf16 %v417, %v409
        %v1386 = vpack.c.bf16 %v418, %v410
        %v1387 = vpack.c.bf16 %v419, %v411
        %v1388 = vpack.c.bf16 %v420, %v412
        %v1389 = vpack.c.bf16 %v421, %v413
        %v1390 = vpack.c.bf16 %v422, %v414
        %v1391 = vpack.c.bf16 %v423, %v415
        %v1392 = vpack.c.bf16 %v424, %v416
        %v1393 = vpack.c.bf16 %v433, %v425
        %v1394 = vpack.c.bf16 %v434, %v426
        %v1395 = vpack.c.bf16 %v435, %v427
        %v1396 = vpack.c.bf16 %v436, %v428
        %v1397 = vpack.c.bf16 %v437, %v429
        %v1398 = vpack.c.bf16 %v438, %v430
        %v1399 = vpack.c.bf16 %v439, %v431
        %v1400 = vpack.c.bf16 %v440, %v432
        %v1401 = vpack.c.bf16 %v449, %v441
        %v1402 = vpack.c.bf16 %v450, %v442
        %v1403 = vpack.c.bf16 %v451, %v443
        %v1404 = vpack.c.bf16 %v452, %v444
        %v1405 = vpack.c.bf16 %v453, %v445
        %v1406 = vpack.c.bf16 %v454, %v446
        %v1407 = vpack.c.bf16 %v455, %v447
        %v1408 = vpack.c.bf16 %v456, %v448
        %v1409 = vpack.c.bf16 %v465, %v457
        %v1410 = vpack.c.bf16 %v466, %v458
        %v1411 = vpack.c.bf16 %v467, %v459
        %v1412 = vpack.c.bf16 %v468, %v460
        %v1413 = vpack.c.bf16 %v469, %v461
        %v1414 = vpack.c.bf16 %v470, %v462
        %v1415 = vpack.c.bf16 %v471, %v463
        %v1416 = vpack.c.bf16 %v472, %v464
        %v1417 = vpack.c.bf16 %v481, %v473
        %v1418 = vpack.c.bf16 %v482, %v474
        %v1419 = vpack.c.bf16 %v483, %v475
        %v1420 = vpack.c.bf16 %v484, %v476
        %v1421 = vpack.c.bf16 %v485, %v477
        %v1422 = vpack.c.bf16 %v486, %v478
        %v1423 = vpack.c.bf16 %v487, %v479
        %v1424 = vpack.c.bf16 %v488, %v480
        %v1425 = vpack.c.bf16 %v497, %v489
        %v1426 = vpack.c.bf16 %v498, %v490
        %v1427 = vpack.c.bf16 %v499, %v491
        %v1428 = vpack.c.bf16 %v500, %v492
        %v1429 = vpack.c.bf16 %v501, %v493
        %v1430 = vpack.c.bf16 %v502, %v494
        %v1431 = vpack.c.bf16 %v503, %v495
        %v1432 = vpack.c.bf16 %v504, %v496
        %v1433 = vpack.c.bf16 %v513, %v505
        %v1434 = vpack.c.bf16 %v514, %v506
        %v1435 = vpack.c.bf16 %v515, %v507
        %v1436 = vpack.c.bf16 %v516, %v508
        %v1437 = vpack.c.bf16 %v517, %v509
        %v1438 = vpack.c.bf16 %v518, %v510
        %v1439 = vpack.c.bf16 %v519, %v511
        %v1440 = vpack.c.bf16 %v520, %v512
        %v1441 = vpack.c.bf16 %v529, %v521
        %v1442 = vpack.c.bf16 %v530, %v522
        %v1443 = vpack.c.bf16 %v531, %v523
        %v1444 = vpack.c.bf16 %v532, %v524
        %v1445 = vpack.c.bf16 %v533, %v525
        %v1446 = vpack.c.bf16 %v534, %v526
        %v1447 = vpack.c.bf16 %v535, %v527
        %v1448 = vpack.c.bf16 %v536, %v528
        %v1449 = vpack.c.bf16 %v545, %v537
        %v1450 = vpack.c.bf16 %v546, %v538
        %v1451 = vpack.c.bf16 %v547, %v539
        %v1452 = vpack.c.bf16 %v548, %v540
        %v1453 = vpack.c.bf16 %v549, %v541
        %v1454 = vpack.c.bf16 %v550, %v542
        %v1455 = vpack.c.bf16 %v551, %v543
        %v1456 = vpack.c.bf16 %v552, %v544
        %v1457 = vpack.c.bf16 %v561, %v553
        %v1458 = vpack.c.bf16 %v562, %v554
        %v1459 = vpack.c.bf16 %v563, %v555
        %v1460 = vpack.c.bf16 %v564, %v556
        %v1461 = vpack.c.bf16 %v565, %v557
        %v1462 = vpack.c.bf16 %v566, %v558
        %v1463 = vpack.c.bf16 %v567, %v559
        %v1464 = vpack.c.bf16 %v568, %v560
        %v1465 = vpack.c.bf16 %v577, %v569
        %v1466 = vpack.c.bf16 %v578, %v570
        %v1467 = vpack.c.bf16 %v579, %v571
        %v1468 = vpack.c.bf16 %v580, %v572
        %v1469 = vpack.c.bf16 %v581, %v573
        %v1470 = vpack.c.bf16 %v582, %v574
        %v1471 = vpack.c.bf16 %v583, %v575
        %v1472 = vpack.c.bf16 %v584, %v576
        %v1473 = vpack.c.bf16 %v593, %v585
        %v1474 = vpack.c.bf16 %v594, %v586
        %v1475 = vpack.c.bf16 %v595, %v587
        %v1476 = vpack.c.bf16 %v596, %v588
        %v1477 = vpack.c.bf16 %v597, %v589
        %v1478 = vpack.c.bf16 %v598, %v590
        %v1479 = vpack.c.bf16 %v599, %v591
        %v1480 = vpack.c.bf16 %v600, %v592
        %v1481 = vpack.c.bf16 %v609, %v601
        %v1482 = vpack.c.bf16 %v610, %v602
        %v1483 = vpack.c.bf16 %v611, %v603
        %v1484 = vpack.c.bf16 %v612, %v604
        %v1485 = vpack.c.bf16 %v613, %v605
        %v1486 = vpack.c.bf16 %v614, %v606
        %v1487 = vpack.c.bf16 %v615, %v607
        %v1488 = vpack.c.bf16 %v616, %v608
        %v1489 = vpack.c.bf16 %v625, %v617
        %v1490 = vpack.c.bf16 %v626, %v618
        %v1491 = vpack.c.bf16 %v627, %v619
        %v1492 = vpack.c.bf16 %v628, %v620
        %v1493 = vpack.c.bf16 %v629, %v621
        %v1494 = vpack.c.bf16 %v630, %v622
        %v1495 = vpack.c.bf16 %v631, %v623
        %v1496 = vpack.c.bf16 %v632, %v624
        %v1497 = vpack.c.bf16 %v641, %v633
        %v1498 = vpack.c.bf16 %v642, %v634
        %v1499 = vpack.c.bf16 %v643, %v635
        %v1500 = vpack.c.bf16 %v644, %v636
        %v1501 = vpack.c.bf16 %v645, %v637
        %v1502 = vpack.c.bf16 %v646, %v638
        %v1503 = vpack.c.bf16 %v647, %v639
        %v1504 = vpack.c.bf16 %v648, %v640
        %v1505 = vpack.c.bf16 %v657, %v649
        %v1506 = vpack.c.bf16 %v658, %v650
        %v1507 = vpack.c.bf16 %v659, %v651
        %v1508 = vpack.c.bf16 %v660, %v652
        %v1509 = vpack.c.bf16 %v661, %v653
        %v1510 = vpack.c.bf16 %v662, %v654
        %v1511 = vpack.c.bf16 %v663, %v655
        %v1512 = vpack.c.bf16 %v664, %v656
        %v1513 = vpack.c.bf16 %v673, %v665
        %v1514 = vpack.c.bf16 %v674, %v666
        %v1515 = vpack.c.bf16 %v675, %v667
        %v1516 = vpack.c.bf16 %v676, %v668
        %v1517 = vpack.c.bf16 %v677, %v669
        %v1518 = vpack.c.bf16 %v678, %v670
        %v1519 = vpack.c.bf16 %v679, %v671
        %v1520 = vpack.c.bf16 %v680, %v672
        %v1521 = vpack.c.bf16 %v689, %v681
        %v1522 = vpack.c.bf16 %v690, %v682
        %v1523 = vpack.c.bf16 %v691, %v683
        %v1524 = vpack.c.bf16 %v692, %v684
        %v1525 = vpack.c.bf16 %v693, %v685
        %v1526 = vpack.c.bf16 %v694, %v686
        %v1527 = vpack.c.bf16 %v695, %v687
        %v1528 = vpack.c.bf16 %v696, %v688
        %v1529 = vpack.c.bf16 %v705, %v697
        %v1530 = vpack.c.bf16 %v706, %v698
        %v1531 = vpack.c.bf16 %v707, %v699
        %v1532 = vpack.c.bf16 %v708, %v700
        %v1533 = vpack.c.bf16 %v709, %v701
        %v1534 = vpack.c.bf16 %v710, %v702
        %v1535 = vpack.c.bf16 %v711, %v703
        %v1536 = vpack.c.bf16 %v712, %v704
        %v1537 = vpack.c.bf16 %v721, %v713
        %v1538 = vpack.c.bf16 %v722, %v714
        %v1539 = vpack.c.bf16 %v723, %v715
        %v1540 = vpack.c.bf16 %v724, %v716
        %v1541 = vpack.c.bf16 %v725, %v717
        %v1542 = vpack.c.bf16 %v726, %v718
        %v1543 = vpack.c.bf16 %v727, %v719
        %v1544 = vpack.c.bf16 %v728, %v720
        %v1545 = vpack.c.bf16 %v737, %v729
        %v1546 = vpack.c.bf16 %v738, %v730
        %v1547 = vpack.c.bf16 %v739, %v731
        %v1548 = vpack.c.bf16 %v740, %v732
        %v1549 = vpack.c.bf16 %v741, %v733
        %v1550 = vpack.c.bf16 %v742, %v734
        %v1551 = vpack.c.bf16 %v743, %v735
        %v1552 = vpack.c.bf16 %v744, %v736
        %v1553 = vpack.c.bf16 %v753, %v745
        %v1554 = vpack.c.bf16 %v754, %v746
        %v1555 = vpack.c.bf16 %v755, %v747
        %v1556 = vpack.c.bf16 %v756, %v748
        %v1557 = vpack.c.bf16 %v757, %v749
        %v1558 = vpack.c.bf16 %v758, %v750
        %v1559 = vpack.c.bf16 %v759, %v751
        %v1560 = vpack.c.bf16 %v760, %v752
        %v1561 = vpack.c.bf16 %v769, %v761
        %v1562 = vpack.c.bf16 %v770, %v762
        %v1563 = vpack.c.bf16 %v771, %v763
        %v1564 = vpack.c.bf16 %v772, %v764
        %v1565 = vpack.c.bf16 %v773, %v765
        %v1566 = vpack.c.bf16 %v774, %v766
        %v1567 = vpack.c.bf16 %v775, %v767
        %v1568 = vpack.c.bf16 %v776, %v768
        %v1569 = vpack.c.bf16 %v785, %v777
        %v1570 = vpack.c.bf16 %v786, %v778
        %v1571 = vpack.c.bf16 %v787, %v779
        %v1572 = vpack.c.bf16 %v788, %v780
        %v1573 = vpack.c.bf16 %v789, %v781
        %v1574 = vpack.c.bf16 %v790, %v782
        %v1575 = vpack.c.bf16 %v791, %v783
        %v1576 = vpack.c.bf16 %v792, %v784
        %v1577 = vpack.c.bf16 %v801, %v793
        %v1578 = vpack.c.bf16 %v802, %v794
        %v1579 = vpack.c.bf16 %v803, %v795
        %v1580 = vpack.c.bf16 %v804, %v796
        %v1581 = vpack.c.bf16 %v805, %v797
        %v1582 = vpack.c.bf16 %v806, %v798
        %v1583 = vpack.c.bf16 %v807, %v799
        %v1584 = vpack.c.bf16 %v808, %v800
        %v1585 = vpack.c.bf16 %v817, %v809
        %v1586 = vpack.c.bf16 %v818, %v810
        %v1587 = vpack.c.bf16 %v819, %v811
        %v1588 = vpack.c.bf16 %v820, %v812
        %v1589 = vpack.c.bf16 %v821, %v813
        %v1590 = vpack.c.bf16 %v822, %v814
        %v1591 = vpack.c.bf16 %v823, %v815
        %v1592 = vpack.c.bf16 %v824, %v816
        %v1593 = vpack.c.bf16 %v833, %v825
        %v1594 = vpack.c.bf16 %v834, %v826
        %v1595 = vpack.c.bf16 %v835, %v827
        %v1596 = vpack.c.bf16 %v836, %v828
        %v1597 = vpack.c.bf16 %v837, %v829
        %v1598 = vpack.c.bf16 %v838, %v830
        %v1599 = vpack.c.bf16 %v839, %v831
        %v1600 = vpack.c.bf16 %v840, %v832
        %v1601 = vpack.c.bf16 %v849, %v841
        %v1602 = vpack.c.bf16 %v850, %v842
        %v1603 = vpack.c.bf16 %v851, %v843
        %v1604 = vpack.c.bf16 %v852, %v844
        %v1605 = vpack.c.bf16 %v853, %v845
        %v1606 = vpack.c.bf16 %v854, %v846
        %v1607 = vpack.c.bf16 %v855, %v847
        %v1608 = vpack.c.bf16 %v856, %v848
        %v1609 = vpack.c.bf16 %v865, %v857
        %v1610 = vpack.c.bf16 %v866, %v858
        %v1611 = vpack.c.bf16 %v867, %v859
        %v1612 = vpack.c.bf16 %v868, %v860
        %v1613 = vpack.c.bf16 %v869, %v861
        %v1614 = vpack.c.bf16 %v870, %v862
        %v1615 = vpack.c.bf16 %v871, %v863
        %v1616 = vpack.c.bf16 %v872, %v864
        %v1617 = vpack.c.bf16 %v881, %v873
        %v1618 = vpack.c.bf16 %v882, %v874
        %v1619 = vpack.c.bf16 %v883, %v875
        %v1620 = vpack.c.bf16 %v884, %v876
        %v1621 = vpack.c.bf16 %v885, %v877
        %v1622 = vpack.c.bf16 %v886, %v878
        %v1623 = vpack.c.bf16 %v887, %v879
        %v1624 = vpack.c.bf16 %v888, %v880
        %v1625 = vpack.c.bf16 %v897, %v889
        %v1626 = vpack.c.bf16 %v898, %v890
        %v1627 = vpack.c.bf16 %v899, %v891
        %v1628 = vpack.c.bf16 %v900, %v892
        %v1629 = vpack.c.bf16 %v901, %v893
        %v1630 = vpack.c.bf16 %v902, %v894
        %v1631 = vpack.c.bf16 %v903, %v895
        %v1632 = vpack.c.bf16 %v904, %v896
        %v1633 = vpack.c.bf16 %v913, %v905
        %v1634 = vpack.c.bf16 %v914, %v906
        %v1635 = vpack.c.bf16 %v915, %v907
        %v1636 = vpack.c.bf16 %v916, %v908
        %v1637 = vpack.c.bf16 %v917, %v909
        %v1638 = vpack.c.bf16 %v918, %v910
        %v1639 = vpack.c.bf16 %v919, %v911
        %v1640 = vpack.c.bf16 %v920, %v912
        %v1641 = vpack.c.bf16 %v929, %v921
        %v1642 = vpack.c.bf16 %v930, %v922
        %v1643 = vpack.c.bf16 %v931, %v923
        %v1644 = vpack.c.bf16 %v932, %v924
        %v1645 = vpack.c.bf16 %v933, %v925
        %v1646 = vpack.c.bf16 %v934, %v926
        %v1647 = vpack.c.bf16 %v935, %v927
        %v1648 = vpack.c.bf16 %v936, %v928
        %v1649 = vpack.c.bf16 %v945, %v937
        %v1650 = vpack.c.bf16 %v946, %v938
        %v1651 = vpack.c.bf16 %v947, %v939
        %v1652 = vpack.c.bf16 %v948, %v940
        %v1653 = vpack.c.bf16 %v949, %v941
        %v1654 = vpack.c.bf16 %v950, %v942
        %v1655 = vpack.c.bf16 %v951, %v943
        %v1656 = vpack.c.bf16 %v952, %v944
        %v1657 = vpack.c.bf16 %v961, %v953
        %v1658 = vpack.c.bf16 %v962, %v954
        %v1659 = vpack.c.bf16 %v963, %v955
        %v1660 = vpack.c.bf16 %v964, %v956
        %v1661 = vpack.c.bf16 %v965, %v957
        %v1662 = vpack.c.bf16 %v966, %v958
        %v1663 = vpack.c.bf16 %v967, %v959
        %v1664 = vpack.c.bf16 %v968, %v960
        %v1665 = vpack.c.bf16 %v977, %v969
        %v1666 = vpack.c.bf16 %v978, %v970
        %v1667 = vpack.c.bf16 %v979, %v971
        %v1668 = vpack.c.bf16 %v980, %v972
        %v1669 = vpack.c.bf16 %v981, %v973
        %v1670 = vpack.c.bf16 %v982, %v974
        %v1671 = vpack.c.bf16 %v983, %v975
        %v1672 = vpack.c.bf16 %v984, %v976
        %v1673 = vpack.c.bf16 %v993, %v985
        %v1674 = vpack.c.bf16 %v994, %v986
        %v1675 = vpack.c.bf16 %v995, %v987
        %v1676 = vpack.c.bf16 %v996, %v988
        %v1677 = vpack.c.bf16 %v997, %v989
        %v1678 = vpack.c.bf16 %v998, %v990
        %v1679 = vpack.c.bf16 %v999, %v991
        %v1680 = vpack.c.bf16 %v1000, %v992
        %v1681 = vpack.c.bf16 %v1009, %v1001
        %v1682 = vpack.c.bf16 %v1010, %v1002
        %v1683 = vpack.c.bf16 %v1011, %v1003
        %v1684 = vpack.c.bf16 %v1012, %v1004
        %v1685 = vpack.c.bf16 %v1013, %v1005
        %v1686 = vpack.c.bf16 %v1014, %v1006
        %v1687 = vpack.c.bf16 %v1015, %v1007
        %v1688 = vpack.c.bf16 %v1016, %v1008
        %v1689 = vpack.c.bf16 %v1025, %v1017
        %v1690 = vpack.c.bf16 %v1026, %v1018
        %v1691 = vpack.c.bf16 %v1027, %v1019
        %v1692 = vpack.c.bf16 %v1028, %v1020
        %v1693 = vpack.c.bf16 %v1029, %v1021
        %v1694 = vpack.c.bf16 %v1030, %v1022
        %v1695 = vpack.c.bf16 %v1031, %v1023
        %v1696 = vpack.c.bf16 %v1032, %v1024
        %v1697 = vpack.c.bf16 %v1041, %v1033
        %v1698 = vpack.c.bf16 %v1042, %v1034
        %v1699 = vpack.c.bf16 %v1043, %v1035
        %v1700 = vpack.c.bf16 %v1044, %v1036
        %v1701 = vpack.c.bf16 %v1045, %v1037
        %v1702 = vpack.c.bf16 %v1046, %v1038
        %v1703 = vpack.c.bf16 %v1047, %v1039
        %v1704 = vpack.c.bf16 %v1048, %v1040
        %v1705 = vpack.c.bf16 %v1057, %v1049
        %v1706 = vpack.c.bf16 %v1058, %v1050
        %v1707 = vpack.c.bf16 %v1059, %v1051
        %v1708 = vpack.c.bf16 %v1060, %v1052
        %v1709 = vpack.c.bf16 %v1061, %v1053
        %v1710 = vpack.c.bf16 %v1062, %v1054
        %v1711 = vpack.c.bf16 %v1063, %v1055
        %v1712 = vpack.c.bf16 %v1064, %v1056
        %v1713 = vpack.c.bf16 %v1073, %v1065
        %v1714 = vpack.c.bf16 %v1074, %v1066
        %v1715 = vpack.c.bf16 %v1075, %v1067
        %v1716 = vpack.c.bf16 %v1076, %v1068
        %v1717 = vpack.c.bf16 %v1077, %v1069
        %v1718 = vpack.c.bf16 %v1078, %v1070
        %v1719 = vpack.c.bf16 %v1079, %v1071
        %v1720 = vpack.c.bf16 %v1080, %v1072
        %v1721 = vpack.c.bf16 %v1089, %v1081
        %v1722 = vpack.c.bf16 %v1090, %v1082
        %v1723 = vpack.c.bf16 %v1091, %v1083
        %v1724 = vpack.c.bf16 %v1092, %v1084
        %v1725 = vpack.c.bf16 %v1093, %v1085
        %v1726 = vpack.c.bf16 %v1094, %v1086
        %v1727 = vpack.c.bf16 %v1095, %v1087
        %v1728 = vpack.c.bf16 %v1096, %v1088
        %v1729 = vpack.c.bf16 %v1105, %v1097
        %v1730 = vpack.c.bf16 %v1106, %v1098
        %v1731 = vpack.c.bf16 %v1107, %v1099
        %v1732 = vpack.c.bf16 %v1108, %v1100
        %v1733 = vpack.c.bf16 %v1109, %v1101
        %v1734 = vpack.c.bf16 %v1110, %v1102
        %v1735 = vpack.c.bf16 %v1111, %v1103
        %v1736 = vpack.c.bf16 %v1112, %v1104
        %v1737 = vpack.c.bf16 %v1121, %v1113
        %v1738 = vpack.c.bf16 %v1122, %v1114
        %v1739 = vpack.c.bf16 %v1123, %v1115
        %v1740 = vpack.c.bf16 %v1124, %v1116
        %v1741 = vpack.c.bf16 %v1125, %v1117
        %v1742 = vpack.c.bf16 %v1126, %v1118
        %v1743 = vpack.c.bf16 %v1127, %v1119
        %v1744 = vpack.c.bf16 %v1128, %v1120
        %v1745 = vpack.c.bf16 %v1137, %v1129
        %v1746 = vpack.c.bf16 %v1138, %v1130
        %v1747 = vpack.c.bf16 %v1139, %v1131
        %v1748 = vpack.c.bf16 %v1140, %v1132
        %v1749 = vpack.c.bf16 %v1141, %v1133
        %v1750 = vpack.c.bf16 %v1142, %v1134
        %v1751 = vpack.c.bf16 %v1143, %v1135
        %v1752 = vpack.c.bf16 %v1144, %v1136
        %v1753 = vpack.c.bf16 %v1153, %v1145
        %v1754 = vpack.c.bf16 %v1154, %v1146
        %v1755 = vpack.c.bf16 %v1155, %v1147
        %v1756 = vpack.c.bf16 %v1156, %v1148
        %v1757 = vpack.c.bf16 %v1157, %v1149
        %v1758 = vpack.c.bf16 %v1158, %v1150
        %v1759 = vpack.c.bf16 %v1159, %v1151
        %v1760 = vpack.c.bf16 %v1160, %v1152
        %v1761 = vpack.c.bf16 %v1169, %v1161
        %v1762 = vpack.c.bf16 %v1170, %v1162
        %v1763 = vpack.c.bf16 %v1171, %v1163
        %v1764 = vpack.c.bf16 %v1172, %v1164
        %v1765 = vpack.c.bf16 %v1173, %v1165
        %v1766 = vpack.c.bf16 %v1174, %v1166
        %v1767 = vpack.c.bf16 %v1175, %v1167
        %v1768 = vpack.c.bf16 %v1176, %v1168
        %v1769 = vpack.c.bf16 %v1185, %v1177
        %v1770 = vpack.c.bf16 %v1186, %v1178
        %v1771 = vpack.c.bf16 %v1187, %v1179
        %v1772 = vpack.c.bf16 %v1188, %v1180
        %v1773 = vpack.c.bf16 %v1189, %v1181
        %v1774 = vpack.c.bf16 %v1190, %v1182
        %v1775 = vpack.c.bf16 %v1191, %v1183
        %v1776 = vpack.c.bf16 %v1192, %v1184
        %v1777 = vpack.c.bf16 %v1201, %v1193
        %v1778 = vpack.c.bf16 %v1202, %v1194
        %v1779 = vpack.c.bf16 %v1203, %v1195
        %v1780 = vpack.c.bf16 %v1204, %v1196
        %v1781 = vpack.c.bf16 %v1205, %v1197
        %v1782 = vpack.c.bf16 %v1206, %v1198
        %v1783 = vpack.c.bf16 %v1207, %v1199
        %v1784 = vpack.c.bf16 %v1208, %v1200
        %v1785 = vpack.c.bf16 %v1217, %v1209
        %v1786 = vpack.c.bf16 %v1218, %v1210
        %v1787 = vpack.c.bf16 %v1219, %v1211
        %v1788 = vpack.c.bf16 %v1220, %v1212
        %v1789 = vpack.c.bf16 %v1221, %v1213
        %v1790 = vpack.c.bf16 %v1222, %v1214
        %v1791 = vpack.c.bf16 %v1223, %v1215
        %v1792 = vpack.c.bf16 %v1224, %v1216
        %v1793 = vpack.c.bf16 %v1233, %v1225
        %v1794 = vpack.c.bf16 %v1234, %v1226
        %v1795 = vpack.c.bf16 %v1235, %v1227
        %v1796 = vpack.c.bf16 %v1236, %v1228
        %v1797 = vpack.c.bf16 %v1237, %v1229
        %v1798 = vpack.c.bf16 %v1238, %v1230
        %v1799 = vpack.c.bf16 %v1239, %v1231
        %v1800 = vpack.c.bf16 %v1240, %v1232
        %v1801 = vpack.c.bf16 %v1249, %v1241
        %v1802 = vpack.c.bf16 %v1250, %v1242
        %v1803 = vpack.c.bf16 %v1251, %v1243
        %v1804 = vpack.c.bf16 %v1252, %v1244
        %v1805 = vpack.c.bf16 %v1253, %v1245
        %v1806 = vpack.c.bf16 %v1254, %v1246
        %v1807 = vpack.c.bf16 %v1255, %v1247
        %v1808 = vpack.c.bf16 %v1256, %v1248
        %v1809 = vpack.c.bf16 %v1265, %v1257
        %v1810 = vpack.c.bf16 %v1266, %v1258
        %v1811 = vpack.c.bf16 %v1267, %v1259
        %v1812 = vpack.c.bf16 %v1268, %v1260
        %v1813 = vpack.c.bf16 %v1269, %v1261
        %v1814 = vpack.c.bf16 %v1270, %v1262
        %v1815 = vpack.c.bf16 %v1271, %v1263
        %v1816 = vpack.c.bf16 %v1272, %v1264
        %v1817 = vpack.c.bf16 %v1281, %v1273
        %v1818 = vpack.c.bf16 %v1282, %v1274
        %v1819 = vpack.c.bf16 %v1283, %v1275
        %v1820 = vpack.c.bf16 %v1284, %v1276
        %v1821 = vpack.c.bf16 %v1285, %v1277
        %v1822 = vpack.c.bf16 %v1286, %v1278
        %v1823 = vpack.c.bf16 %v1287, %v1279
        %v1824 = vpack.c.bf16 %v1288, %v1280
        %v1825 = vpack.c.bf16 %v1297, %v1289
        %v1826 = vpack.c.bf16 %v1298, %v1290
        %v1827 = vpack.c.bf16 %v1299, %v1291
        %v1828 = vpack.c.bf16 %v1300, %v1292
        %v1829 = vpack.c.bf16 %v1301, %v1293
        %v1830 = vpack.c.bf16 %v1302, %v1294
        %v1831 = vpack.c.bf16 %v1303, %v1295
        %v1832 = vpack.c.bf16 %v1304, %v1296
        %v1833 = vpack.c.bf16 %v1313, %v1305
        %v1834 = vpack.c.bf16 %v1314, %v1306
        %v1835 = vpack.c.bf16 %v1315, %v1307
        %v1836 = vpack.c.bf16 %v1316, %v1308
        %v1837 = vpack.c.bf16 %v1317, %v1309
        %v1838 = vpack.c.bf16 %v1318, %v1310
        %v1839 = vpack.c.bf16 %v1319, %v1311
        %v1840 = vpack.c.bf16 %v1320, %v1312
        %v1841 = vpack.c.bf16 %v1329, %v1321
        %v1842 = vpack.c.bf16 %v1330, %v1322
        %v1843 = vpack.c.bf16 %v1331, %v1323
        %v1844 = vpack.c.bf16 %v1332, %v1324
        %v1845 = vpack.c.bf16 %v1333, %v1325
        %v1846 = vpack.c.bf16 %v1334, %v1326
        %v1847 = vpack.c.bf16 %v1335, %v1327
        %v1848 = vpack.c.bf16 %v1336, %v1328
        %v1849 = vld [vmem:[#allocation5] sm:$0xff]
        %v1850 = vld [vmem:[#allocation5 + $0x8] sm:$0xff]
        %v1851 = vld [vmem:[#allocation5 + $0x10] sm:$0xff]
        %v1852 = vld [vmem:[#allocation5 + $0x18] sm:$0xff]
        %v1853 = vld [vmem:[#allocation5 + $0x20] sm:$0xff]
        %v1854 = vld [vmem:[#allocation5 + $0x28] sm:$0xff]
        %v1855 = vld [vmem:[#allocation5 + $0x30] sm:$0xff]
        %v1856 = vld [vmem:[#allocation5 + $0x38] sm:$0xff]
        %v1857 = vld [vmem:[#allocation5 + $0x40] sm:$0xff]
        %v1858 = vld [vmem:[#allocation5 + $0x48] sm:$0xff]
        %v1859 = vld [vmem:[#allocation5 + $0x50] sm:$0xff]
        %v1860 = vld [vmem:[#allocation5 + $0x58] sm:$0xff]
        %v1861 = vld [vmem:[#allocation5 + $0x60] sm:$0xff]
        %v1862 = vld [vmem:[#allocation5 + $0x68] sm:$0xff]
        %v1863 = vld [vmem:[#allocation5 + $0x70] sm:$0xff]
        %v1864 = vld [vmem:[#allocation5 + $0x78] sm:$0xff]
        %v1865 = vld [vmem:[#allocation5 + $0x80] sm:$0xff]
        %v1866 = vld [vmem:[#allocation5 + $0x88] sm:$0xff]
        %v1867 = vld [vmem:[#allocation5 + $0x90] sm:$0xff]
        %v1868 = vld [vmem:[#allocation5 + $0x98] sm:$0xff]
        %v1869 = vld [vmem:[#allocation5 + $0xa0] sm:$0xff]
        %v1870 = vld [vmem:[#allocation5 + $0xa8] sm:$0xff]
        %v1871 = vld [vmem:[#allocation5 + $0xb0] sm:$0xff]
        %v1872 = vld [vmem:[#allocation5 + $0xb8] sm:$0xff]
        %v1873 = vld [vmem:[#allocation5 + $0xc0] sm:$0xff]
        %v1874 = vld [vmem:[#allocation5 + $0xc8] sm:$0xff]
        %v1875 = vld [vmem:[#allocation5 + $0xd0] sm:$0xff]
        %v1876 = vld [vmem:[#allocation5 + $0xd8] sm:$0xff]
        %v1877 = vld [vmem:[#allocation5 + $0xe0] sm:$0xff]
        %v1878 = vld [vmem:[#allocation5 + $0xe8] sm:$0xff]
        %v1879 = vld [vmem:[#allocation5 + $0xf0] sm:$0xff]
        %v1880 = vld [vmem:[#allocation5 + $0xf8] sm:$0xff]
        %v1881 = vld [vmem:[#allocation5 + $0x100] sm:$0xff]
        %v1882 = vld [vmem:[#allocation5 + $0x108] sm:$0xff]
        %v1883 = vld [vmem:[#allocation5 + $0x110] sm:$0xff]
        %v1884 = vld [vmem:[#allocation5 + $0x118] sm:$0xff]
        %v1885 = vld [vmem:[#allocation5 + $0x120] sm:$0xff]
        %v1886 = vld [vmem:[#allocation5 + $0x128] sm:$0xff]
        %v1887 = vld [vmem:[#allocation5 + $0x130] sm:$0xff]
        %v1888 = vld [vmem:[#allocation5 + $0x138] sm:$0xff]
        %v1889 = vld [vmem:[#allocation5 + $0x140] sm:$0xff]
        %v1890 = vld [vmem:[#allocation5 + $0x148] sm:$0xff]
        %v1891 = vld [vmem:[#allocation5 + $0x150] sm:$0xff]
        %v1892 = vld [vmem:[#allocation5 + $0x158] sm:$0xff]
        %v1893 = vld [vmem:[#allocation5 + $0x160] sm:$0xff]
        %v1894 = vld [vmem:[#allocation5 + $0x168] sm:$0xff]
        %v1895 = vld [vmem:[#allocation5 + $0x170] sm:$0xff]
        %v1896 = vld [vmem:[#allocation5 + $0x178] sm:$0xff]
        %v1897 = vld [vmem:[#allocation5 + $0x180] sm:$0xff]
        %v1898 = vld [vmem:[#allocation5 + $0x188] sm:$0xff]
        %v1899 = vld [vmem:[#allocation5 + $0x190] sm:$0xff]
        %v1900 = vld [vmem:[#allocation5 + $0x198] sm:$0xff]
        %v1901 = vld [vmem:[#allocation5 + $0x1a0] sm:$0xff]
        %v1902 = vld [vmem:[#allocation5 + $0x1a8] sm:$0xff]
        %v1903 = vld [vmem:[#allocation5 + $0x1b0] sm:$0xff]
        %v1904 = vld [vmem:[#allocation5 + $0x1b8] sm:$0xff]
        %v1905 = vld [vmem:[#allocation5 + $0x1c0] sm:$0xff]
        %v1906 = vld [vmem:[#allocation5 + $0x1c8] sm:$0xff]
        %v1907 = vld [vmem:[#allocation5 + $0x1d0] sm:$0xff]
        %v1908 = vld [vmem:[#allocation5 + $0x1d8] sm:$0xff]
        %v1909 = vld [vmem:[#allocation5 + $0x1e0] sm:$0xff]
        %v1910 = vld [vmem:[#allocation5 + $0x1e8] sm:$0xff]
        %v1911 = vld [vmem:[#allocation5 + $0x1f0] sm:$0xff]
        %v1912 = vld [vmem:[#allocation5 + $0x1f8] sm:$0xff]
        %v1913 = vld [vmem:[#allocation5 + $0x200] sm:$0xff]
        %v1914 = vld [vmem:[#allocation5 + $0x208] sm:$0xff]
        %v1915 = vld [vmem:[#allocation5 + $0x210] sm:$0xff]
        %v1916 = vld [vmem:[#allocation5 + $0x218] sm:$0xff]
        %v1917 = vld [vmem:[#allocation5 + $0x220] sm:$0xff]
        %v1918 = vld [vmem:[#allocation5 + $0x228] sm:$0xff]
        %v1919 = vld [vmem:[#allocation5 + $0x230] sm:$0xff]
        %v1920 = vld [vmem:[#allocation5 + $0x238] sm:$0xff]
        %v1921 = vld [vmem:[#allocation5 + $0x240] sm:$0xff]
        %v1922 = vld [vmem:[#allocation5 + $0x248] sm:$0xff]
        %v1923 = vld [vmem:[#allocation5 + $0x250] sm:$0xff]
        %v1924 = vld [vmem:[#allocation5 + $0x258] sm:$0xff]
        %v1925 = vld [vmem:[#allocation5 + $0x260] sm:$0xff]
        %v1926 = vld [vmem:[#allocation5 + $0x268] sm:$0xff]
        %v1927 = vld [vmem:[#allocation5 + $0x270] sm:$0xff]
        %v1928 = vld [vmem:[#allocation5 + $0x278] sm:$0xff]
        %v1929 = vld [vmem:[#allocation5 + $0x280] sm:$0xff]
        %v1930 = vld [vmem:[#allocation5 + $0x288] sm:$0xff]
        %v1931 = vld [vmem:[#allocation5 + $0x290] sm:$0xff]
        %v1932 = vld [vmem:[#allocation5 + $0x298] sm:$0xff]
        %v1933 = vld [vmem:[#allocation5 + $0x2a0] sm:$0xff]
        %v1934 = vld [vmem:[#allocation5 + $0x2a8] sm:$0xff]
        %v1935 = vld [vmem:[#allocation5 + $0x2b0] sm:$0xff]
        %v1936 = vld [vmem:[#allocation5 + $0x2b8] sm:$0xff]
        %v1937 = vld [vmem:[#allocation5 + $0x2c0] sm:$0xff]
        %v1938 = vld [vmem:[#allocation5 + $0x2c8] sm:$0xff]
        %v1939 = vld [vmem:[#allocation5 + $0x2d0] sm:$0xff]
        %v1940 = vld [vmem:[#allocation5 + $0x2d8] sm:$0xff]
        %v1941 = vld [vmem:[#allocation5 + $0x2e0] sm:$0xff]
        %v1942 = vld [vmem:[#allocation5 + $0x2e8] sm:$0xff]
        %v1943 = vld [vmem:[#allocation5 + $0x2f0] sm:$0xff]
        %v1944 = vld [vmem:[#allocation5 + $0x2f8] sm:$0xff]
        %v1945 = vld [vmem:[#allocation5 + $0x300] sm:$0xff]
        %v1946 = vld [vmem:[#allocation5 + $0x308] sm:$0xff]
        %v1947 = vld [vmem:[#allocation5 + $0x310] sm:$0xff]
        %v1948 = vld [vmem:[#allocation5 + $0x318] sm:$0xff]
        %v1949 = vld [vmem:[#allocation5 + $0x320] sm:$0xff]
        %v1950 = vld [vmem:[#allocation5 + $0x328] sm:$0xff]
        %v1951 = vld [vmem:[#allocation5 + $0x330] sm:$0xff]
        %v1952 = vld [vmem:[#allocation5 + $0x338] sm:$0xff]
        %v1953 = vld [vmem:[#allocation5 + $0x340] sm:$0xff]
        %v1954 = vld [vmem:[#allocation5 + $0x348] sm:$0xff]
        %v1955 = vld [vmem:[#allocation5 + $0x350] sm:$0xff]
        %v1956 = vld [vmem:[#allocation5 + $0x358] sm:$0xff]
        %v1957 = vld [vmem:[#allocation5 + $0x360] sm:$0xff]
        %v1958 = vld [vmem:[#allocation5 + $0x368] sm:$0xff]
        %v1959 = vld [vmem:[#allocation5 + $0x370] sm:$0xff]
        %v1960 = vld [vmem:[#allocation5 + $0x378] sm:$0xff]
        %v1961 = vld [vmem:[#allocation5 + $0x380] sm:$0xff]
        %v1962 = vld [vmem:[#allocation5 + $0x388] sm:$0xff]
        %v1963 = vld [vmem:[#allocation5 + $0x390] sm:$0xff]
        %v1964 = vld [vmem:[#allocation5 + $0x398] sm:$0xff]
        %v1965 = vld [vmem:[#allocation5 + $0x3a0] sm:$0xff]
        %v1966 = vld [vmem:[#allocation5 + $0x3a8] sm:$0xff]
        %v1967 = vld [vmem:[#allocation5 + $0x3b0] sm:$0xff]
        %v1968 = vld [vmem:[#allocation5 + $0x3b8] sm:$0xff]
        %v1969 = vld [vmem:[#allocation5 + $0x3c0] sm:$0xff]
        %v1970 = vld [vmem:[#allocation5 + $0x3c8] sm:$0xff]
        %v1971 = vld [vmem:[#allocation5 + $0x3d0] sm:$0xff]
        %v1972 = vld [vmem:[#allocation5 + $0x3d8] sm:$0xff]
        %v1973 = vld [vmem:[#allocation5 + $0x3e0] sm:$0xff]
        %v1974 = vld [vmem:[#allocation5 + $0x3e8] sm:$0xff]
        %v1975 = vld [vmem:[#allocation5 + $0x3f0] sm:$0xff]
        %v1976 = vld [vmem:[#allocation5 + $0x3f8] sm:$0xff]
        %v1977 = vld [vmem:[#allocation7] sm:$0x3]
        %v1979 = vlaneseq
        %v1980 = vshrl.u32 %v1979, 7
        %v1981 = vsub.s32 0, %v1980
        %v1982 = vrot.slane %v1977, %v1981
        %v1983 = vlaneseq
        %v1984 = vshrl.u32 %v1983, 7
        %v1985 = vsub.s32 1, %v1984
        %v1986 = vrot.slane %v1977, %v1985
        %v2117 = vunpack.c.l.b16 %v1849
        %v2118 = vunpack.c.h.b16 %v1849
        %v2119 = vunpack.c.l.b16 %v1850
        %v2120 = vunpack.c.h.b16 %v1850
        %v2121 = vunpack.c.l.b16 %v1851
        %v2122 = vunpack.c.h.b16 %v1851
        %v2123 = vunpack.c.l.b16 %v1852
        %v2124 = vunpack.c.h.b16 %v1852
        %v2125 = vunpack.c.l.b16 %v1853
        %v2126 = vunpack.c.h.b16 %v1853
        %v2127 = vunpack.c.l.b16 %v1854
        %v2128 = vunpack.c.h.b16 %v1854
        %v2129 = vunpack.c.l.b16 %v1855
        %v2130 = vunpack.c.h.b16 %v1855
        %v2131 = vunpack.c.l.b16 %v1856
        %v2132 = vunpack.c.h.b16 %v1856
        %v2133 = vunpack.c.l.b16 %v1857
        %v2134 = vunpack.c.h.b16 %v1857
        %v2135 = vunpack.c.l.b16 %v1858
        %v2136 = vunpack.c.h.b16 %v1858
        %v2137 = vunpack.c.l.b16 %v1859
        %v2138 = vunpack.c.h.b16 %v1859
        %v2139 = vunpack.c.l.b16 %v1860
        %v2140 = vunpack.c.h.b16 %v1860
        %v2141 = vunpack.c.l.b16 %v1861
        %v2142 = vunpack.c.h.b16 %v1861
        %v2143 = vunpack.c.l.b16 %v1862
        %v2144 = vunpack.c.h.b16 %v1862
        %v2145 = vunpack.c.l.b16 %v1863
        %v2146 = vunpack.c.h.b16 %v1863
        %v2147 = vunpack.c.l.b16 %v1864
        %v2148 = vunpack.c.h.b16 %v1864
        %v2149 = vunpack.c.l.b16 %v1865
        %v2150 = vunpack.c.h.b16 %v1865
        %v2151 = vunpack.c.l.b16 %v1866
        %v2152 = vunpack.c.h.b16 %v1866
        %v2153 = vunpack.c.l.b16 %v1867
        %v2154 = vunpack.c.h.b16 %v1867
        %v2155 = vunpack.c.l.b16 %v1868
        %v2156 = vunpack.c.h.b16 %v1868
        %v2157 = vunpack.c.l.b16 %v1869
        %v2158 = vunpack.c.h.b16 %v1869
        %v2159 = vunpack.c.l.b16 %v1870
        %v2160 = vunpack.c.h.b16 %v1870
        %v2161 = vunpack.c.l.b16 %v1871
        %v2162 = vunpack.c.h.b16 %v1871
        %v2163 = vunpack.c.l.b16 %v1872
        %v2164 = vunpack.c.h.b16 %v1872
        %v2165 = vunpack.c.l.b16 %v1873
        %v2166 = vunpack.c.h.b16 %v1873
        %v2167 = vunpack.c.l.b16 %v1874
        %v2168 = vunpack.c.h.b16 %v1874
        %v2169 = vunpack.c.l.b16 %v1875
        %v2170 = vunpack.c.h.b16 %v1875
        %v2171 = vunpack.c.l.b16 %v1876
        %v2172 = vunpack.c.h.b16 %v1876
        %v2173 = vunpack.c.l.b16 %v1877
        %v2174 = vunpack.c.h.b16 %v1877
        %v2175 = vunpack.c.l.b16 %v1878
        %v2176 = vunpack.c.h.b16 %v1878
        %v2177 = vunpack.c.l.b16 %v1879
        %v2178 = vunpack.c.h.b16 %v1879
        %v2179 = vunpack.c.l.b16 %v1880
        %v2180 = vunpack.c.h.b16 %v1880
        %v2181 = vunpack.c.l.b16 %v1881
        %v2182 = vunpack.c.h.b16 %v1881
        %v2183 = vunpack.c.l.b16 %v1882
        %v2184 = vunpack.c.h.b16 %v1882
        %v2185 = vunpack.c.l.b16 %v1883
        %v2186 = vunpack.c.h.b16 %v1883
        %v2187 = vunpack.c.l.b16 %v1884
        %v2188 = vunpack.c.h.b16 %v1884
        %v2189 = vunpack.c.l.b16 %v1885
        %v2190 = vunpack.c.h.b16 %v1885
        %v2191 = vunpack.c.l.b16 %v1886
        %v2192 = vunpack.c.h.b16 %v1886
        %v2193 = vunpack.c.l.b16 %v1887
        %v2194 = vunpack.c.h.b16 %v1887
        %v2195 = vunpack.c.l.b16 %v1888
        %v2196 = vunpack.c.h.b16 %v1888
        %v2197 = vunpack.c.l.b16 %v1889
        %v2198 = vunpack.c.h.b16 %v1889
        %v2199 = vunpack.c.l.b16 %v1890
        %v2200 = vunpack.c.h.b16 %v1890
        %v2201 = vunpack.c.l.b16 %v1891
        %v2202 = vunpack.c.h.b16 %v1891
        %v2203 = vunpack.c.l.b16 %v1892
        %v2204 = vunpack.c.h.b16 %v1892
        %v2205 = vunpack.c.l.b16 %v1893
        %v2206 = vunpack.c.h.b16 %v1893
        %v2207 = vunpack.c.l.b16 %v1894
        %v2208 = vunpack.c.h.b16 %v1894
        %v2209 = vunpack.c.l.b16 %v1895
        %v2210 = vunpack.c.h.b16 %v1895
        %v2211 = vunpack.c.l.b16 %v1896
        %v2212 = vunpack.c.h.b16 %v1896
        %v2213 = vunpack.c.l.b16 %v1897
        %v2214 = vunpack.c.h.b16 %v1897
        %v2215 = vunpack.c.l.b16 %v1898
        %v2216 = vunpack.c.h.b16 %v1898
        %v2217 = vunpack.c.l.b16 %v1899
        %v2218 = vunpack.c.h.b16 %v1899
        %v2219 = vunpack.c.l.b16 %v1900
        %v2220 = vunpack.c.h.b16 %v1900
        %v2221 = vunpack.c.l.b16 %v1901
        %v2222 = vunpack.c.h.b16 %v1901
        %v2223 = vunpack.c.l.b16 %v1902
        %v2224 = vunpack.c.h.b16 %v1902
        %v2225 = vunpack.c.l.b16 %v1903
        %v2226 = vunpack.c.h.b16 %v1903
        %v2227 = vunpack.c.l.b16 %v1904
        %v2228 = vunpack.c.h.b16 %v1904
        %v2229 = vunpack.c.l.b16 %v1905
        %v2230 = vunpack.c.h.b16 %v1905
        %v2231 = vunpack.c.l.b16 %v1906
        %v2232 = vunpack.c.h.b16 %v1906
        %v2233 = vunpack.c.l.b16 %v1907
        %v2234 = vunpack.c.h.b16 %v1907
        %v2235 = vunpack.c.l.b16 %v1908
        %v2236 = vunpack.c.h.b16 %v1908
        %v2237 = vunpack.c.l.b16 %v1909
        %v2238 = vunpack.c.h.b16 %v1909
        %v2239 = vunpack.c.l.b16 %v1910
        %v2240 = vunpack.c.h.b16 %v1910
        %v2241 = vunpack.c.l.b16 %v1911
        %v2242 = vunpack.c.h.b16 %v1911
        %v2243 = vunpack.c.l.b16 %v1912
        %v2244 = vunpack.c.h.b16 %v1912
        %v2245 = vunpack.c.l.b16 %v1913
        %v2246 = vunpack.c.h.b16 %v1913
        %v2247 = vunpack.c.l.b16 %v1914
        %v2248 = vunpack.c.h.b16 %v1914
        %v2249 = vunpack.c.l.b16 %v1915
        %v2250 = vunpack.c.h.b16 %v1915
        %v2251 = vunpack.c.l.b16 %v1916
        %v2252 = vunpack.c.h.b16 %v1916
        %v2253 = vunpack.c.l.b16 %v1917
        %v2254 = vunpack.c.h.b16 %v1917
        %v2255 = vunpack.c.l.b16 %v1918
        %v2256 = vunpack.c.h.b16 %v1918
        %v2257 = vunpack.c.l.b16 %v1919
        %v2258 = vunpack.c.h.b16 %v1919
        %v2259 = vunpack.c.l.b16 %v1920
        %v2260 = vunpack.c.h.b16 %v1920
        %v2261 = vunpack.c.l.b16 %v1921
        %v2262 = vunpack.c.h.b16 %v1921
        %v2263 = vunpack.c.l.b16 %v1922
        %v2264 = vunpack.c.h.b16 %v1922
        %v2265 = vunpack.c.l.b16 %v1923
        %v2266 = vunpack.c.h.b16 %v1923
        %v2267 = vunpack.c.l.b16 %v1924
        %v2268 = vunpack.c.h.b16 %v1924
        %v2269 = vunpack.c.l.b16 %v1925
        %v2270 = vunpack.c.h.b16 %v1925
        %v2271 = vunpack.c.l.b16 %v1926
        %v2272 = vunpack.c.h.b16 %v1926
        %v2273 = vunpack.c.l.b16 %v1927
        %v2274 = vunpack.c.h.b16 %v1927
        %v2275 = vunpack.c.l.b16 %v1928
        %v2276 = vunpack.c.h.b16 %v1928
        %v2277 = vunpack.c.l.b16 %v1929
        %v2278 = vunpack.c.h.b16 %v1929
        %v2279 = vunpack.c.l.b16 %v1930
        %v2280 = vunpack.c.h.b16 %v1930
        %v2281 = vunpack.c.l.b16 %v1931
        %v2282 = vunpack.c.h.b16 %v1931
        %v2283 = vunpack.c.l.b16 %v1932
        %v2284 = vunpack.c.h.b16 %v1932
        %v2285 = vunpack.c.l.b16 %v1933
        %v2286 = vunpack.c.h.b16 %v1933
        %v2287 = vunpack.c.l.b16 %v1934
        %v2288 = vunpack.c.h.b16 %v1934
        %v2289 = vunpack.c.l.b16 %v1935
        %v2290 = vunpack.c.h.b16 %v1935
        %v2291 = vunpack.c.l.b16 %v1936
        %v2292 = vunpack.c.h.b16 %v1936
        %v2293 = vunpack.c.l.b16 %v1937
        %v2294 = vunpack.c.h.b16 %v1937
        %v2295 = vunpack.c.l.b16 %v1938
        %v2296 = vunpack.c.h.b16 %v1938
        %v2297 = vunpack.c.l.b16 %v1939
        %v2298 = vunpack.c.h.b16 %v1939
        %v2299 = vunpack.c.l.b16 %v1940
        %v2300 = vunpack.c.h.b16 %v1940
        %v2301 = vunpack.c.l.b16 %v1941
        %v2302 = vunpack.c.h.b16 %v1941
        %v2303 = vunpack.c.l.b16 %v1942
        %v2304 = vunpack.c.h.b16 %v1942
        %v2305 = vunpack.c.l.b16 %v1943
        %v2306 = vunpack.c.h.b16 %v1943
        %v2307 = vunpack.c.l.b16 %v1944
        %v2308 = vunpack.c.h.b16 %v1944
        %v2309 = vunpack.c.l.b16 %v1945
        %v2310 = vunpack.c.h.b16 %v1945
        %v2311 = vunpack.c.l.b16 %v1946
        %v2312 = vunpack.c.h.b16 %v1946
        %v2313 = vunpack.c.l.b16 %v1947
        %v2314 = vunpack.c.h.b16 %v1947
        %v2315 = vunpack.c.l.b16 %v1948
        %v2316 = vunpack.c.h.b16 %v1948
        %v2317 = vunpack.c.l.b16 %v1949
        %v2318 = vunpack.c.h.b16 %v1949
        %v2319 = vunpack.c.l.b16 %v1950
        %v2320 = vunpack.c.h.b16 %v1950
        %v2321 = vunpack.c.l.b16 %v1951
        %v2322 = vunpack.c.h.b16 %v1951
        %v2323 = vunpack.c.l.b16 %v1952
        %v2324 = vunpack.c.h.b16 %v1952
        %v2325 = vunpack.c.l.b16 %v1953
        %v2326 = vunpack.c.h.b16 %v1953
        %v2327 = vunpack.c.l.b16 %v1954
        %v2328 = vunpack.c.h.b16 %v1954
        %v2329 = vunpack.c.l.b16 %v1955
        %v2330 = vunpack.c.h.b16 %v1955
        %v2331 = vunpack.c.l.b16 %v1956
        %v2332 = vunpack.c.h.b16 %v1956
        %v2333 = vunpack.c.l.b16 %v1957
        %v2334 = vunpack.c.h.b16 %v1957
        %v2335 = vunpack.c.l.b16 %v1958
        %v2336 = vunpack.c.h.b16 %v1958
        %v2337 = vunpack.c.l.b16 %v1959
        %v2338 = vunpack.c.h.b16 %v1959
        %v2339 = vunpack.c.l.b16 %v1960
        %v2340 = vunpack.c.h.b16 %v1960
        %v2341 = vunpack.c.l.b16 %v1961
        %v2342 = vunpack.c.h.b16 %v1961
        %v2343 = vunpack.c.l.b16 %v1962
        %v2344 = vunpack.c.h.b16 %v1962
        %v2345 = vunpack.c.l.b16 %v1963
        %v2346 = vunpack.c.h.b16 %v1963
        %v2347 = vunpack.c.l.b16 %v1964
        %v2348 = vunpack.c.h.b16 %v1964
        %v2349 = vunpack.c.l.b16 %v1965
        %v2350 = vunpack.c.h.b16 %v1965
        %v2351 = vunpack.c.l.b16 %v1966
        %v2352 = vunpack.c.h.b16 %v1966
        %v2353 = vunpack.c.l.b16 %v1967
        %v2354 = vunpack.c.h.b16 %v1967
        %v2355 = vunpack.c.l.b16 %v1968
        %v2356 = vunpack.c.h.b16 %v1968
        %v2357 = vunpack.c.l.b16 %v1969
        %v2358 = vunpack.c.h.b16 %v1969
        %v2359 = vunpack.c.l.b16 %v1970
        %v2360 = vunpack.c.h.b16 %v1970
        %v2361 = vunpack.c.l.b16 %v1971
        %v2362 = vunpack.c.h.b16 %v1971
        %v2363 = vunpack.c.l.b16 %v1972
        %v2364 = vunpack.c.h.b16 %v1972
        %v2365 = vunpack.c.l.b16 %v1973
        %v2366 = vunpack.c.h.b16 %v1973
        %v2367 = vunpack.c.l.b16 %v1974
        %v2368 = vunpack.c.h.b16 %v1974
        %v2369 = vunpack.c.l.b16 %v1975
        %v2370 = vunpack.c.h.b16 %v1975
        %v2371 = vunpack.c.l.b16 %v1976
        %v2372 = vunpack.c.h.b16 %v1976
        %v2373 = vpack.c.b16 %v2119, %v2117
        %v2374 = vpack.c.b16 %v2120, %v2118
        %v2375 = vpack.c.b16 %v2123, %v2121
        %v2376 = vpack.c.b16 %v2124, %v2122
        %v2377 = vpack.c.b16 %v2127, %v2125
        %v2378 = vpack.c.b16 %v2128, %v2126
        %v2379 = vpack.c.b16 %v2131, %v2129
        %v2380 = vpack.c.b16 %v2132, %v2130
        %v2381 = vpack.c.b16 %v2135, %v2133
        %v2382 = vpack.c.b16 %v2136, %v2134
        %v2383 = vpack.c.b16 %v2139, %v2137
        %v2384 = vpack.c.b16 %v2140, %v2138
        %v2385 = vpack.c.b16 %v2143, %v2141
        %v2386 = vpack.c.b16 %v2144, %v2142
        %v2387 = vpack.c.b16 %v2147, %v2145
        %v2388 = vpack.c.b16 %v2148, %v2146
        %v2389 = vpack.c.b16 %v2151, %v2149
        %v2390 = vpack.c.b16 %v2152, %v2150
        %v2391 = vpack.c.b16 %v2155, %v2153
        %v2392 = vpack.c.b16 %v2156, %v2154
        %v2393 = vpack.c.b16 %v2159, %v2157
        %v2394 = vpack.c.b16 %v2160, %v2158
        %v2395 = vpack.c.b16 %v2163, %v2161
        %v2396 = vpack.c.b16 %v2164, %v2162
        %v2397 = vpack.c.b16 %v2167, %v2165
        %v2398 = vpack.c.b16 %v2168, %v2166
        %v2399 = vpack.c.b16 %v2171, %v2169
        %v2400 = vpack.c.b16 %v2172, %v2170
        %v2401 = vpack.c.b16 %v2175, %v2173
        %v2402 = vpack.c.b16 %v2176, %v2174
        %v2403 = vpack.c.b16 %v2179, %v2177
        %v2404 = vpack.c.b16 %v2180, %v2178
        %v2405 = vpack.c.b16 %v2183, %v2181
        %v2406 = vpack.c.b16 %v2184, %v2182
        %v2407 = vpack.c.b16 %v2187, %v2185
        %v2408 = vpack.c.b16 %v2188, %v2186
        %v2409 = vpack.c.b16 %v2191, %v2189
        %v2410 = vpack.c.b16 %v2192, %v2190
        %v2411 = vpack.c.b16 %v2195, %v2193
        %v2412 = vpack.c.b16 %v2196, %v2194
        %v2413 = vpack.c.b16 %v2199, %v2197
        %v2414 = vpack.c.b16 %v2200, %v2198
        %v2415 = vpack.c.b16 %v2203, %v2201
        %v2416 = vpack.c.b16 %v2204, %v2202
        %v2417 = vpack.c.b16 %v2207, %v2205
        %v2418 = vpack.c.b16 %v2208, %v2206
        %v2419 = vpack.c.b16 %v2211, %v2209
        %v2420 = vpack.c.b16 %v2212, %v2210
        %v2421 = vpack.c.b16 %v2215, %v2213
        %v2422 = vpack.c.b16 %v2216, %v2214
        %v2423 = vpack.c.b16 %v2219, %v2217
        %v2424 = vpack.c.b16 %v2220, %v2218
        %v2425 = vpack.c.b16 %v2223, %v2221
        %v2426 = vpack.c.b16 %v2224, %v2222
        %v2427 = vpack.c.b16 %v2227, %v2225
        %v2428 = vpack.c.b16 %v2228, %v2226
        %v2429 = vpack.c.b16 %v2231, %v2229
        %v2430 = vpack.c.b16 %v2232, %v2230
        %v2431 = vpack.c.b16 %v2235, %v2233
        %v2432 = vpack.c.b16 %v2236, %v2234
        %v2433 = vpack.c.b16 %v2239, %v2237
        %v2434 = vpack.c.b16 %v2240, %v2238
        %v2435 = vpack.c.b16 %v2243, %v2241
        %v2436 = vpack.c.b16 %v2244, %v2242
        %v2437 = vpack.c.b16 %v2247, %v2245
        %v2438 = vpack.c.b16 %v2248, %v2246
        %v2439 = vpack.c.b16 %v2251, %v2249
        %v2440 = vpack.c.b16 %v2252, %v2250
        %v2441 = vpack.c.b16 %v2255, %v2253
        %v2442 = vpack.c.b16 %v2256, %v2254
        %v2443 = vpack.c.b16 %v2259, %v2257
        %v2444 = vpack.c.b16 %v2260, %v2258
        %v2445 = vpack.c.b16 %v2263, %v2261
        %v2446 = vpack.c.b16 %v2264, %v2262
        %v2447 = vpack.c.b16 %v2267, %v2265
        %v2448 = vpack.c.b16 %v2268, %v2266
        %v2449 = vpack.c.b16 %v2271, %v2269
        %v2450 = vpack.c.b16 %v2272, %v2270
        %v2451 = vpack.c.b16 %v2275, %v2273
        %v2452 = vpack.c.b16 %v2276, %v2274
        %v2453 = vpack.c.b16 %v2279, %v2277
        %v2454 = vpack.c.b16 %v2280, %v2278
        %v2455 = vpack.c.b16 %v2283, %v2281
        %v2456 = vpack.c.b16 %v2284, %v2282
        %v2457 = vpack.c.b16 %v2287, %v2285
        %v2458 = vpack.c.b16 %v2288, %v2286
        %v2459 = vpack.c.b16 %v2291, %v2289
        %v2460 = vpack.c.b16 %v2292, %v2290
        %v2461 = vpack.c.b16 %v2295, %v2293
        %v2462 = vpack.c.b16 %v2296, %v2294
        %v2463 = vpack.c.b16 %v2299, %v2297
        %v2464 = vpack.c.b16 %v2300, %v2298
        %v2465 = vpack.c.b16 %v2303, %v2301
        %v2466 = vpack.c.b16 %v2304, %v2302
        %v2467 = vpack.c.b16 %v2307, %v2305
        %v2468 = vpack.c.b16 %v2308, %v2306
        %v2469 = vpack.c.b16 %v2311, %v2309
        %v2470 = vpack.c.b16 %v2312, %v2310
        %v2471 = vpack.c.b16 %v2315, %v2313
        %v2472 = vpack.c.b16 %v2316, %v2314
        %v2473 = vpack.c.b16 %v2319, %v2317
        %v2474 = vpack.c.b16 %v2320, %v2318
        %v2475 = vpack.c.b16 %v2323, %v2321
        %v2476 = vpack.c.b16 %v2324, %v2322
        %v2477 = vpack.c.b16 %v2327, %v2325
        %v2478 = vpack.c.b16 %v2328, %v2326
        %v2479 = vpack.c.b16 %v2331, %v2329
        %v2480 = vpack.c.b16 %v2332, %v2330
        %v2481 = vpack.c.b16 %v2335, %v2333
        %v2482 = vpack.c.b16 %v2336, %v2334
        %v2483 = vpack.c.b16 %v2339, %v2337
        %v2484 = vpack.c.b16 %v2340, %v2338
        %v2485 = vpack.c.b16 %v2343, %v2341
        %v2486 = vpack.c.b16 %v2344, %v2342
        %v2487 = vpack.c.b16 %v2347, %v2345
        %v2488 = vpack.c.b16 %v2348, %v2346
        %v2489 = vpack.c.b16 %v2351, %v2349
        %v2490 = vpack.c.b16 %v2352, %v2350
        %v2491 = vpack.c.b16 %v2355, %v2353
        %v2492 = vpack.c.b16 %v2356, %v2354
        %v2493 = vpack.c.b16 %v2359, %v2357
        %v2494 = vpack.c.b16 %v2360, %v2358
        %v2495 = vpack.c.b16 %v2363, %v2361
        %v2496 = vpack.c.b16 %v2364, %v2362
        %v2497 = vpack.c.b16 %v2367, %v2365
        %v2498 = vpack.c.b16 %v2368, %v2366
        %v2499 = vpack.c.b16 %v2371, %v2369
        %v2500 = vpack.c.b16 %v2372, %v2370
        %2629 = vmatprep.subr.bf16.mxu0 %v2374
        %2630 = vmatpush1.bf16.msra.mxu0 %v2373
        %2631 = vmatprep.subr.bf16.mxu0 %v2376
        %2632 = vmatpush1.bf16.msra.mxu0 %v2375
        %2633 = vmatprep.subr.bf16.mxu0 %v2378
        %2634 = vmatpush1.bf16.msra.mxu0 %v2377
        %2635 = vmatprep.subr.bf16.mxu0 %v2380
        %2636 = vmatpush1.bf16.msra.mxu0 %v2379
        %2637 = vmatprep.subr.bf16.mxu0 %v2382
        %2638 = vmatpush1.bf16.msra.mxu0 %v2381
        %2639 = vmatprep.subr.bf16.mxu0 %v2384
        %2640 = vmatpush1.bf16.msra.mxu0 %v2383
        %2641 = vmatprep.subr.bf16.mxu0 %v2386
        %2642 = vmatpush1.bf16.msra.mxu0 %v2385
        %2643 = vmatprep.subr.bf16.mxu0 %v2388
        %2644 = vmatpush1.bf16.msra.mxu0 %v2387
        %2645 = vmatprep.subr.bf16.mxu0 %v2390
        %2646 = vmatpush1.bf16.msra.mxu0 %v2389
        %2647 = vmatprep.subr.bf16.mxu0 %v2392
        %2648 = vmatpush1.bf16.msra.mxu0 %v2391
        %2649 = vmatprep.subr.bf16.mxu0 %v2394
        %2650 = vmatpush1.bf16.msra.mxu0 %v2393
        %2651 = vmatprep.subr.bf16.mxu0 %v2396
        %2652 = vmatpush1.bf16.msra.mxu0 %v2395
        %2653 = vmatprep.subr.bf16.mxu0 %v2398
        %2654 = vmatpush1.bf16.msra.mxu0 %v2397
        %2655 = vmatprep.subr.bf16.mxu0 %v2400
        %2656 = vmatpush1.bf16.msra.mxu0 %v2399
        %2657 = vmatprep.subr.bf16.mxu0 %v2402
        %2658 = vmatpush1.bf16.msra.mxu0 %v2401
        %2659 = vmatprep.subr.bf16.mxu0 %v2404
        %2660 = vmatpush1.bf16.msra.mxu0 %v2403
        %2661 = vmatprep.mubr.bf16.mxu0 %v1338
        %2662 = vmatmul.mubr.bf16.gmra.mrb[0].mxu0 %v1337
        %v2663 = vpop.f32.mrb[0].mxu0
        %v2664 = vadd.f32 %v1982, %v2663
        %v2665 = vpop.f32.mrb[0].mxu0
        %v2666 = vadd.f32 %v1986, %v2665
        %v2667 = vpop.f32.mrb[0].mxu0
        %v2668 = vadd.f32 %v1982, %v2667
        %v2669 = vpop.f32.mrb[0].mxu0
        %v2670 = vadd.f32 %v1986, %v2669
        %2671 = vmatprep.mubr.bf16.mxu0 %v1346
        %2672 = vmatmul.mubr.bf16.gmra.mrb[0].mxu0 %v1345
        %v2673 = vpop.f32.mrb[0].mxu0
        %v2674 = vadd.f32 %v1982, %v2673
        %v2675 = vpop.f32.mrb[0].mxu0
        %v2676 = vadd.f32 %v1986, %v2675
        %v2677 = vpop.f32.mrb[0].mxu0
        %v2678 = vadd.f32 %v1982, %v2677
        %v2679 = vpop.f32.mrb[0].mxu0
        %v2680 = vadd.f32 %v1986, %v2679
        %2681 = vmatprep.mubr.bf16.mxu0 %v1354
        %2682 = vmatmul.mubr.bf16.gmra.mrb[0].mxu0 %v1353
        %v2683 = vpop.f32.mrb[0].mxu0
        %v2684 = vadd.f32 %v1982, %v2683
        %v2685 = vpop.f32.mrb[0].mxu0
        %v2686 = vadd.f32 %v1986, %v2685
        %v2687 = vpop.f32.mrb[0].mxu0
        %v2688 = vadd.f32 %v1982, %v2687
        %v2689 = vpop.f32.mrb[0].mxu0
        %v2690 = vadd.f32 %v1986, %v2689
        %2691 = vmatprep.mubr.bf16.mxu0 %v1362
        %2692 = vmatmul.mubr.bf16.gmra.mrb[0].mxu0 %v1361
        %v2693 = vpop.f32.mrb[0].mxu0
        %v2694 = vadd.f32 %v1982, %v2693
        %v2695 = vpop.f32.mrb[0].mxu0
        %v2696 = vadd.f32 %v1986, %v2695
        %v2697 = vpop.f32.mrb[0].mxu0
        %v2698 = vadd.f32 %v1982, %v2697
        %v2699 = vpop.f32.mrb[0].mxu0
        %v2700 = vadd.f32 %v1986, %v2699
        %2701 = vmatprep.mubr.bf16.mxu0 %v1370
        %2702 = vmatmul.mubr.bf16.gmra.mrb[0].mxu0 %v1369
        %v2703 = vpop.f32.mrb[0].mxu0
        %v2704 = vadd.f32 %v1982, %v2703
        %v2705 = vpop.f32.mrb[0].mxu0
        %v2706 = vadd.f32 %v1986, %v2705
        %v2707 = vpop.f32.mrb[0].mxu0
        %v2708 = vadd.f32 %v1982, %v2707
        %v2709 = vpop.f32.mrb[0].mxu0
        %v2710 = vadd.f32 %v1986, %v2709
        %2711 = vmatprep.mubr.bf16.mxu0 %v1378
        %2712 = vmatmul.mubr.bf16.gmra.mrb[0].mxu0 %v1377
        %v2713 = vpop.f32.mrb[0].mxu0
        %v2714 = vadd.f32 %v1982, %v2713
        %v2715 = vpop.f32.mrb[0].mxu0
        %v2716 = vadd.f32 %v1986, %v2715
        %v2717 = vpop.f32.mrb[0].mxu0
        %v2718 = vadd.f32 %v1982, %v2717
        %v2719 = vpop.f32.mrb[0].mxu0
        %v2720 = vadd.f32 %v1986, %v2719
        %2721 = vmatprep.mubr.bf16.mxu0 %v1386
        %2722 = vmatmul.mubr.bf16.gmra.mrb[0].mxu0 %v1385
        %v2723 = vpop.f32.mrb[0].mxu0
        %v2724 = vadd.f32 %v1982, %v2723
        %v2725 = vpop.f32.mrb[0].mxu0
        %v2726 = vadd.f32 %v1986, %v2725
        %v2727 = vpop.f32.mrb[0].mxu0
        %v2728 = vadd.f32 %v1982, %v2727
        %v2729 = vpop.f32.mrb[0].mxu0
        %v2730 = vadd.f32 %v1986, %v2729
        %2731 = vmatprep.mubr.bf16.mxu0 %v1394
        %2732 = vmatmul.mubr.bf16.gmra.mrb[0].mxu0 %v1393
        %v2733 = vpop.f32.mrb[0].mxu0
        %v2734 = vadd.f32 %v1982, %v2733
        %v2735 = vpop.f32.mrb[0].mxu0
        %v2736 = vadd.f32 %v1986, %v2735
        %v2737 = vpop.f32.mrb[0].mxu0
        %v2738 = vadd.f32 %v1982, %v2737
        %v2739 = vpop.f32.mrb[0].mxu0
        %v2740 = vadd.f32 %v1986, %v2739
        %2741 = vmatprep.mubr.bf16.mxu0 %v1402
        %2742 = vmatmul.mubr.bf16.gmra.mrb[0].mxu0 %v1401
        %v2743 = vpop.f32.mrb[0].mxu0
        %v2744 = vadd.f32 %v1982, %v2743
        %v2745 = vpop.f32.mrb[0].mxu0
        %v2746 = vadd.f32 %v1986, %v2745
        %v2747 = vpop.f32.mrb[0].mxu0
        %v2748 = vadd.f32 %v1982, %v2747
        %v2749 = vpop.f32.mrb[0].mxu0
        %v2750 = vadd.f32 %v1986, %v2749
        %2751 = vmatprep.mubr.bf16.mxu0 %v1410
        %2752 = vmatmul.mubr.bf16.gmra.mrb[0].mxu0 %v1409
        %v2753 = vpop.f32.mrb[0].mxu0
        %v2754 = vadd.f32 %v1982, %v2753
        %v2755 = vpop.f32.mrb[0].mxu0
        %v2756 = vadd.f32 %v1986, %v2755
        %v2757 = vpop.f32.mrb[0].mxu0
        %v2758 = vadd.f32 %v1982, %v2757
        %v2759 = vpop.f32.mrb[0].mxu0
        %v2760 = vadd.f32 %v1986, %v2759
        %2761 = vmatprep.mubr.bf16.mxu0 %v1418
        %2762 = vmatmul.mubr.bf16.gmra.mrb[0].mxu0 %v1417
        %v2763 = vpop.f32.mrb[0].mxu0
        %v2764 = vadd.f32 %v1982, %v2763
        %v2765 = vpop.f32.mrb[0].mxu0
        %v2766 = vadd.f32 %v1986, %v2765
        %v2767 = vpop.f32.mrb[0].mxu0
        %v2768 = vadd.f32 %v1982, %v2767
        %v2769 = vpop.f32.mrb[0].mxu0
        %v2770 = vadd.f32 %v1986, %v2769
        %2771 = vmatprep.mubr.bf16.mxu0 %v1426
        %2772 = vmatmul.mubr.bf16.gmra.mrb[0].mxu0 %v1425
        %v2773 = vpop.f32.mrb[0].mxu0
        %v2774 = vadd.f32 %v1982, %v2773
        %v2775 = vpop.f32.mrb[0].mxu0
        %v2776 = vadd.f32 %v1986, %v2775
        %v2777 = vpop.f32.mrb[0].mxu0
        %v2778 = vadd.f32 %v1982, %v2777
        %v2779 = vpop.f32.mrb[0].mxu0
        %v2780 = vadd.f32 %v1986, %v2779
        %2781 = vmatprep.mubr.bf16.mxu0 %v1434
        %2782 = vmatmul.mubr.bf16.gmra.mrb[0].mxu0 %v1433
        %v2783 = vpop.f32.mrb[0].mxu0
        %v2784 = vadd.f32 %v1982, %v2783
        %v2785 = vpop.f32.mrb[0].mxu0
        %v2786 = vadd.f32 %v1986, %v2785
        %v2787 = vpop.f32.mrb[0].mxu0
        %v2788 = vadd.f32 %v1982, %v2787
        %v2789 = vpop.f32.mrb[0].mxu0
        %v2790 = vadd.f32 %v1986, %v2789
        %2791 = vmatprep.mubr.bf16.mxu0 %v1442
        %2792 = vmatmul.mubr.bf16.gmra.mrb[0].mxu0 %v1441
        %v2793 = vpop.f32.mrb[0].mxu0
        %v2794 = vadd.f32 %v1982, %v2793
        %v2795 = vpop.f32.mrb[0].mxu0
        %v2796 = vadd.f32 %v1986, %v2795
        %v2797 = vpop.f32.mrb[0].mxu0
        %v2798 = vadd.f32 %v1982, %v2797
        %v2799 = vpop.f32.mrb[0].mxu0
        %v2800 = vadd.f32 %v1986, %v2799
        %2801 = vmatprep.mubr.bf16.mxu0 %v1450
        %2802 = vmatmul.mubr.bf16.gmra.mrb[0].mxu0 %v1449
        %v2803 = vpop.f32.mrb[0].mxu0
        %v2804 = vadd.f32 %v1982, %v2803
        %v2805 = vpop.f32.mrb[0].mxu0
        %v2806 = vadd.f32 %v1986, %v2805
        %v2807 = vpop.f32.mrb[0].mxu0
        %v2808 = vadd.f32 %v1982, %v2807
        %v2809 = vpop.f32.mrb[0].mxu0
        %v2810 = vadd.f32 %v1986, %v2809
        %2811 = vmatprep.mubr.bf16.mxu0 %v1458
        %2812 = vmatmul.mubr.bf16.gmra.mrb[0].mxu0 %v1457
        %v2813 = vpop.f32.mrb[0].mxu0
        %v2814 = vadd.f32 %v1982, %v2813
        %v2815 = vpop.f32.mrb[0].mxu0
        %v2816 = vadd.f32 %v1986, %v2815
        %v2817 = vpop.f32.mrb[0].mxu0
        %v2818 = vadd.f32 %v1982, %v2817
        %v2819 = vpop.f32.mrb[0].mxu0
        %v2820 = vadd.f32 %v1986, %v2819
        %2821 = vmatprep.mubr.bf16.mxu0 %v1466
        %2822 = vmatmul.mubr.bf16.gmra.mrb[0].mxu0 %v1465
        %v2823 = vpop.f32.mrb[0].mxu0
        %v2824 = vadd.f32 %v1982, %v2823
        %v2825 = vpop.f32.mrb[0].mxu0
        %v2826 = vadd.f32 %v1986, %v2825
        %v2827 = vpop.f32.mrb[0].mxu0
        %v2828 = vadd.f32 %v1982, %v2827
        %v2829 = vpop.f32.mrb[0].mxu0
        %v2830 = vadd.f32 %v1986, %v2829
        %2831 = vmatprep.mubr.bf16.mxu0 %v1474
        %2832 = vmatmul.mubr.bf16.gmra.mrb[0].mxu0 %v1473
        %v2833 = vpop.f32.mrb[0].mxu0
        %v2834 = vadd.f32 %v1982, %v2833
        %v2835 = vpop.f32.mrb[0].mxu0
        %v2836 = vadd.f32 %v1986, %v2835
        %v2837 = vpop.f32.mrb[0].mxu0
        %v2838 = vadd.f32 %v1982, %v2837
        %v2839 = vpop.f32.mrb[0].mxu0
        %v2840 = vadd.f32 %v1986, %v2839
        %2841 = vmatprep.mubr.bf16.mxu0 %v1482
        %2842 = vmatmul.mubr.bf16.gmra.mrb[0].mxu0 %v1481
        %v2843 = vpop.f32.mrb[0].mxu0
        %v2844 = vadd.f32 %v1982, %v2843
        %v2845 = vpop.f32.mrb[0].mxu0
        %v2846 = vadd.f32 %v1986, %v2845
        %v2847 = vpop.f32.mrb[0].mxu0
        %v2848 = vadd.f32 %v1982, %v2847
        %v2849 = vpop.f32.mrb[0].mxu0
        %v2850 = vadd.f32 %v1986, %v2849
        %2851 = vmatprep.mubr.bf16.mxu0 %v1490
        %2852 = vmatmul.mubr.bf16.gmra.mrb[0].mxu0 %v1489
        %v2853 = vpop.f32.mrb[0].mxu0
        %v2854 = vadd.f32 %v1982, %v2853
        %v2855 = vpop.f32.mrb[0].mxu0
        %v2856 = vadd.f32 %v1986, %v2855
        %v2857 = vpop.f32.mrb[0].mxu0
        %v2858 = vadd.f32 %v1982, %v2857
        %v2859 = vpop.f32.mrb[0].mxu0
        %v2860 = vadd.f32 %v1986, %v2859
        %2861 = vmatprep.mubr.bf16.mxu0 %v1498
        %2862 = vmatmul.mubr.bf16.gmra.mrb[0].mxu0 %v1497
        %v2863 = vpop.f32.mrb[0].mxu0
        %v2864 = vadd.f32 %v1982, %v2863
        %v2865 = vpop.f32.mrb[0].mxu0
        %v2866 = vadd.f32 %v1986, %v2865
        %v2867 = vpop.f32.mrb[0].mxu0
        %v2868 = vadd.f32 %v1982, %v2867
        %v2869 = vpop.f32.mrb[0].mxu0
        %v2870 = vadd.f32 %v1986, %v2869
        %2871 = vmatprep.mubr.bf16.mxu0 %v1506
        %2872 = vmatmul.mubr.bf16.gmra.mrb[0].mxu0 %v1505
        %v2873 = vpop.f32.mrb[0].mxu0
        %v2874 = vadd.f32 %v1982, %v2873
        %v2875 = vpop.f32.mrb[0].mxu0
        %v2876 = vadd.f32 %v1986, %v2875
        %v2877 = vpop.f32.mrb[0].mxu0
        %v2878 = vadd.f32 %v1982, %v2877
        %v2879 = vpop.f32.mrb[0].mxu0
        %v2880 = vadd.f32 %v1986, %v2879
        %2881 = vmatprep.mubr.bf16.mxu0 %v1514
        %2882 = vmatmul.mubr.bf16.gmra.mrb[0].mxu0 %v1513
        %v2883 = vpop.f32.mrb[0].mxu0
        %v2884 = vadd.f32 %v1982, %v2883
        %v2885 = vpop.f32.mrb[0].mxu0
        %v2886 = vadd.f32 %v1986, %v2885
        %v2887 = vpop.f32.mrb[0].mxu0
        %v2888 = vadd.f32 %v1982, %v2887
        %v2889 = vpop.f32.mrb[0].mxu0
        %v2890 = vadd.f32 %v1986, %v2889
        %2891 = vmatprep.mubr.bf16.mxu0 %v1522
        %2892 = vmatmul.mubr.bf16.gmra.mrb[0].mxu0 %v1521
        %v2893 = vpop.f32.mrb[0].mxu0
        %v2894 = vadd.f32 %v1982, %v2893
        %v2895 = vpop.f32.mrb[0].mxu0
        %v2896 = vadd.f32 %v1986, %v2895
        %v2897 = vpop.f32.mrb[0].mxu0
        %v2898 = vadd.f32 %v1982, %v2897
        %v2899 = vpop.f32.mrb[0].mxu0
        %v2900 = vadd.f32 %v1986, %v2899
        %2901 = vmatprep.mubr.bf16.mxu0 %v1530
        %2902 = vmatmul.mubr.bf16.gmra.mrb[0].mxu0 %v1529
        %v2903 = vpop.f32.mrb[0].mxu0
        %v2904 = vadd.f32 %v1982, %v2903
        %v2905 = vpop.f32.mrb[0].mxu0
        %v2906 = vadd.f32 %v1986, %v2905
        %v2907 = vpop.f32.mrb[0].mxu0
        %v2908 = vadd.f32 %v1982, %v2907
        %v2909 = vpop.f32.mrb[0].mxu0
        %v2910 = vadd.f32 %v1986, %v2909
        %2911 = vmatprep.mubr.bf16.mxu0 %v1538
        %2912 = vmatmul.mubr.bf16.gmra.mrb[0].mxu0 %v1537
        %v2913 = vpop.f32.mrb[0].mxu0
        %v2914 = vadd.f32 %v1982, %v2913
        %v2915 = vpop.f32.mrb[0].mxu0
        %v2916 = vadd.f32 %v1986, %v2915
        %v2917 = vpop.f32.mrb[0].mxu0
        %v2918 = vadd.f32 %v1982, %v2917
        %v2919 = vpop.f32.mrb[0].mxu0
        %v2920 = vadd.f32 %v1986, %v2919
        %2921 = vmatprep.mubr.bf16.mxu0 %v1546
        %2922 = vmatmul.mubr.bf16.gmra.mrb[0].mxu0 %v1545
        %v2923 = vpop.f32.mrb[0].mxu0
        %v2924 = vadd.f32 %v1982, %v2923
        %v2925 = vpop.f32.mrb[0].mxu0
        %v2926 = vadd.f32 %v1986, %v2925
        %v2927 = vpop.f32.mrb[0].mxu0
        %v2928 = vadd.f32 %v1982, %v2927
        %v2929 = vpop.f32.mrb[0].mxu0
        %v2930 = vadd.f32 %v1986, %v2929
        %2931 = vmatprep.mubr.bf16.mxu0 %v1554
        %2932 = vmatmul.mubr.bf16.gmra.mrb[0].mxu0 %v1553
        %v2933 = vpop.f32.mrb[0].mxu0
        %v2934 = vadd.f32 %v1982, %v2933
        %v2935 = vpop.f32.mrb[0].mxu0
        %v2936 = vadd.f32 %v1986, %v2935
        %v2937 = vpop.f32.mrb[0].mxu0
        %v2938 = vadd.f32 %v1982, %v2937
        %v2939 = vpop.f32.mrb[0].mxu0
        %v2940 = vadd.f32 %v1986, %v2939
        %2941 = vmatprep.mubr.bf16.mxu0 %v1562
        %2942 = vmatmul.mubr.bf16.gmra.mrb[0].mxu0 %v1561
        %v2943 = vpop.f32.mrb[0].mxu0
        %v2944 = vadd.f32 %v1982, %v2943
        %v2945 = vpop.f32.mrb[0].mxu0
        %v2946 = vadd.f32 %v1986, %v2945
        %v2947 = vpop.f32.mrb[0].mxu0
        %v2948 = vadd.f32 %v1982, %v2947
        %v2949 = vpop.f32.mrb[0].mxu0
        %v2950 = vadd.f32 %v1986, %v2949
        %2951 = vmatprep.mubr.bf16.mxu0 %v1570
        %2952 = vmatmul.mubr.bf16.gmra.mrb[0].mxu0 %v1569
        %v2953 = vpop.f32.mrb[0].mxu0
        %v2954 = vadd.f32 %v1982, %v2953
        %v2955 = vpop.f32.mrb[0].mxu0
        %v2956 = vadd.f32 %v1986, %v2955
        %v2957 = vpop.f32.mrb[0].mxu0
        %v2958 = vadd.f32 %v1982, %v2957
        %v2959 = vpop.f32.mrb[0].mxu0
        %v2960 = vadd.f32 %v1986, %v2959
        %2961 = vmatprep.mubr.bf16.mxu0 %v1578
        %2962 = vmatmul.mubr.bf16.gmra.mrb[0].mxu0 %v1577
        %v2963 = vpop.f32.mrb[0].mxu0
        %v2964 = vadd.f32 %v1982, %v2963
        %v2965 = vpop.f32.mrb[0].mxu0
        %v2966 = vadd.f32 %v1986, %v2965
        %v2967 = vpop.f32.mrb[0].mxu0
        %v2968 = vadd.f32 %v1982, %v2967
        %v2969 = vpop.f32.mrb[0].mxu0
        %v2970 = vadd.f32 %v1986, %v2969
        %2971 = vmatprep.mubr.bf16.mxu0 %v1586
        %2972 = vmatmul.mubr.bf16.gmra.mrb[0].mxu0 %v1585
        %v2973 = vpop.f32.mrb[0].mxu0
        %v2974 = vadd.f32 %v1982, %v2973
        %v2975 = vpop.f32.mrb[0].mxu0
        %v2976 = vadd.f32 %v1986, %v2975
        %v2977 = vpop.f32.mrb[0].mxu0
        %v2978 = vadd.f32 %v1982, %v2977
        %v2979 = vpop.f32.mrb[0].mxu0
        %v2980 = vadd.f32 %v1986, %v2979
        %2981 = vmatprep.mubr.bf16.mxu0 %v1594
        %2982 = vmatmul.mubr.bf16.gmra.mrb[0].mxu0 %v1593
        %v2983 = vpop.f32.mrb[0].mxu0
        %v2984 = vadd.f32 %v1982, %v2983
        %v2985 = vpop.f32.mrb[0].mxu0
        %v2986 = vadd.f32 %v1986, %v2985
        %v2987 = vpop.f32.mrb[0].mxu0
        %v2988 = vadd.f32 %v1982, %v2987
        %v2989 = vpop.f32.mrb[0].mxu0
        %v2990 = vadd.f32 %v1986, %v2989
        %2991 = vmatprep.mubr.bf16.mxu0 %v1602
        %2992 = vmatmul.mubr.bf16.gmra.mrb[0].mxu0 %v1601
        %v2993 = vpop.f32.mrb[0].mxu0
        %v2994 = vadd.f32 %v1982, %v2993
        %v2995 = vpop.f32.mrb[0].mxu0
        %v2996 = vadd.f32 %v1986, %v2995
        %v2997 = vpop.f32.mrb[0].mxu0
        %v2998 = vadd.f32 %v1982, %v2997
        %v2999 = vpop.f32.mrb[0].mxu0
        %v3000 = vadd.f32 %v1986, %v2999
        %3001 = vmatprep.mubr.bf16.mxu0 %v1610
        %3002 = vmatmul.mubr.bf16.gmra.mrb[0].mxu0 %v1609
        %v3003 = vpop.f32.mrb[0].mxu0
        %v3004 = vadd.f32 %v1982, %v3003
        %v3005 = vpop.f32.mrb[0].mxu0
        %v3006 = vadd.f32 %v1986, %v3005
        %v3007 = vpop.f32.mrb[0].mxu0
        %v3008 = vadd.f32 %v1982, %v3007
        %v3009 = vpop.f32.mrb[0].mxu0
        %v3010 = vadd.f32 %v1986, %v3009
        %3011 = vmatprep.mubr.bf16.mxu0 %v1618
        %3012 = vmatmul.mubr.bf16.gmra.mrb[0].mxu0 %v1617
        %v3013 = vpop.f32.mrb[0].mxu0
        %v3014 = vadd.f32 %v1982, %v3013
        %v3015 = vpop.f32.mrb[0].mxu0
        %v3016 = vadd.f32 %v1986, %v3015
        %v3017 = vpop.f32.mrb[0].mxu0
        %v3018 = vadd.f32 %v1982, %v3017
        %v3019 = vpop.f32.mrb[0].mxu0
        %v3020 = vadd.f32 %v1986, %v3019
        %3021 = vmatprep.mubr.bf16.mxu0 %v1626
        %3022 = vmatmul.mubr.bf16.gmra.mrb[0].mxu0 %v1625
        %v3023 = vpop.f32.mrb[0].mxu0
        %v3024 = vadd.f32 %v1982, %v3023
        %v3025 = vpop.f32.mrb[0].mxu0
        %v3026 = vadd.f32 %v1986, %v3025
        %v3027 = vpop.f32.mrb[0].mxu0
        %v3028 = vadd.f32 %v1982, %v3027
        %v3029 = vpop.f32.mrb[0].mxu0
        %v3030 = vadd.f32 %v1986, %v3029
        %3031 = vmatprep.mubr.bf16.mxu0 %v1634
        %3032 = vmatmul.mubr.bf16.gmra.mrb[0].mxu0 %v1633
        %v3033 = vpop.f32.mrb[0].mxu0
        %v3034 = vadd.f32 %v1982, %v3033
        %v3035 = vpop.f32.mrb[0].mxu0
        %v3036 = vadd.f32 %v1986, %v3035
        %v3037 = vpop.f32.mrb[0].mxu0
        %v3038 = vadd.f32 %v1982, %v3037
        %v3039 = vpop.f32.mrb[0].mxu0
        %v3040 = vadd.f32 %v1986, %v3039
        %3041 = vmatprep.mubr.bf16.mxu0 %v1642
        %3042 = vmatmul.mubr.bf16.gmra.mrb[0].mxu0 %v1641
        %v3043 = vpop.f32.mrb[0].mxu0
        %v3044 = vadd.f32 %v1982, %v3043
        %v3045 = vpop.f32.mrb[0].mxu0
        %v3046 = vadd.f32 %v1986, %v3045
        %v3047 = vpop.f32.mrb[0].mxu0
        %v3048 = vadd.f32 %v1982, %v3047
        %v3049 = vpop.f32.mrb[0].mxu0
        %v3050 = vadd.f32 %v1986, %v3049
        %3051 = vmatprep.mubr.bf16.mxu0 %v1650
        %3052 = vmatmul.mubr.bf16.gmra.mrb[0].mxu0 %v1649
        %v3053 = vpop.f32.mrb[0].mxu0
        %v3054 = vadd.f32 %v1982, %v3053
        %v3055 = vpop.f32.mrb[0].mxu0
        %v3056 = vadd.f32 %v1986, %v3055
        %v3057 = vpop.f32.mrb[0].mxu0
        %v3058 = vadd.f32 %v1982, %v3057
        %v3059 = vpop.f32.mrb[0].mxu0
        %v3060 = vadd.f32 %v1986, %v3059
        %3061 = vmatprep.mubr.bf16.mxu0 %v1658
        %3062 = vmatmul.mubr.bf16.gmra.mrb[0].mxu0 %v1657
        %v3063 = vpop.f32.mrb[0].mxu0
        %v3064 = vadd.f32 %v1982, %v3063
        %v3065 = vpop.f32.mrb[0].mxu0
        %v3066 = vadd.f32 %v1986, %v3065
        %v3067 = vpop.f32.mrb[0].mxu0
        %v3068 = vadd.f32 %v1982, %v3067
        %v3069 = vpop.f32.mrb[0].mxu0
        %v3070 = vadd.f32 %v1986, %v3069
        %3071 = vmatprep.mubr.bf16.mxu0 %v1666
        %3072 = vmatmul.mubr.bf16.gmra.mrb[0].mxu0 %v1665
        %v3073 = vpop.f32.mrb[0].mxu0
        %v3074 = vadd.f32 %v1982, %v3073
        %v3075 = vpop.f32.mrb[0].mxu0
        %v3076 = vadd.f32 %v1986, %v3075
        %v3077 = vpop.f32.mrb[0].mxu0
        %v3078 = vadd.f32 %v1982, %v3077
        %v3079 = vpop.f32.mrb[0].mxu0
        %v3080 = vadd.f32 %v1986, %v3079
        %3081 = vmatprep.mubr.bf16.mxu0 %v1674
        %3082 = vmatmul.mubr.bf16.gmra.mrb[0].mxu0 %v1673
        %v3083 = vpop.f32.mrb[0].mxu0
        %v3084 = vadd.f32 %v1982, %v3083
        %v3085 = vpop.f32.mrb[0].mxu0
        %v3086 = vadd.f32 %v1986, %v3085
        %v3087 = vpop.f32.mrb[0].mxu0
        %v3088 = vadd.f32 %v1982, %v3087
        %v3089 = vpop.f32.mrb[0].mxu0
        %v3090 = vadd.f32 %v1986, %v3089
        %3091 = vmatprep.mubr.bf16.mxu0 %v1682
        %3092 = vmatmul.mubr.bf16.gmra.mrb[0].mxu0 %v1681
        %v3093 = vpop.f32.mrb[0].mxu0
        %v3094 = vadd.f32 %v1982, %v3093
        %v3095 = vpop.f32.mrb[0].mxu0
        %v3096 = vadd.f32 %v1986, %v3095
        %v3097 = vpop.f32.mrb[0].mxu0
        %v3098 = vadd.f32 %v1982, %v3097
        %v3099 = vpop.f32.mrb[0].mxu0
        %v3100 = vadd.f32 %v1986, %v3099
        %3101 = vmatprep.mubr.bf16.mxu0 %v1690
        %3102 = vmatmul.mubr.bf16.gmra.mrb[0].mxu0 %v1689
        %v3103 = vpop.f32.mrb[0].mxu0
        %v3104 = vadd.f32 %v1982, %v3103
        %v3105 = vpop.f32.mrb[0].mxu0
        %v3106 = vadd.f32 %v1986, %v3105
        %v3107 = vpop.f32.mrb[0].mxu0
        %v3108 = vadd.f32 %v1982, %v3107
        %v3109 = vpop.f32.mrb[0].mxu0
        %v3110 = vadd.f32 %v1986, %v3109
        %3111 = vmatprep.mubr.bf16.mxu0 %v1698
        %3112 = vmatmul.mubr.bf16.gmra.mrb[0].mxu0 %v1697
        %v3113 = vpop.f32.mrb[0].mxu0
        %v3114 = vadd.f32 %v1982, %v3113
        %v3115 = vpop.f32.mrb[0].mxu0
        %v3116 = vadd.f32 %v1986, %v3115
        %v3117 = vpop.f32.mrb[0].mxu0
        %v3118 = vadd.f32 %v1982, %v3117
        %v3119 = vpop.f32.mrb[0].mxu0
        %v3120 = vadd.f32 %v1986, %v3119
        %3121 = vmatprep.mubr.bf16.mxu0 %v1706
        %3122 = vmatmul.mubr.bf16.gmra.mrb[0].mxu0 %v1705
        %v3123 = vpop.f32.mrb[0].mxu0
        %v3124 = vadd.f32 %v1982, %v3123
        %v3125 = vpop.f32.mrb[0].mxu0
        %v3126 = vadd.f32 %v1986, %v3125
        %v3127 = vpop.f32.mrb[0].mxu0
        %v3128 = vadd.f32 %v1982, %v3127
        %v3129 = vpop.f32.mrb[0].mxu0
        %v3130 = vadd.f32 %v1986, %v3129
        %3131 = vmatprep.mubr.bf16.mxu0 %v1714
        %3132 = vmatmul.mubr.bf16.gmra.mrb[0].mxu0 %v1713
        %v3133 = vpop.f32.mrb[0].mxu0
        %v3134 = vadd.f32 %v1982, %v3133
        %v3135 = vpop.f32.mrb[0].mxu0
        %v3136 = vadd.f32 %v1986, %v3135
        %v3137 = vpop.f32.mrb[0].mxu0
        %v3138 = vadd.f32 %v1982, %v3137
        %v3139 = vpop.f32.mrb[0].mxu0
        %v3140 = vadd.f32 %v1986, %v3139
        %3141 = vmatprep.mubr.bf16.mxu0 %v1722
        %3142 = vmatmul.mubr.bf16.gmra.mrb[0].mxu0 %v1721
        %v3143 = vpop.f32.mrb[0].mxu0
        %v3144 = vadd.f32 %v1982, %v3143
        %v3145 = vpop.f32.mrb[0].mxu0
        %v3146 = vadd.f32 %v1986, %v3145
        %v3147 = vpop.f32.mrb[0].mxu0
        %v3148 = vadd.f32 %v1982, %v3147
        %v3149 = vpop.f32.mrb[0].mxu0
        %v3150 = vadd.f32 %v1986, %v3149
        %3151 = vmatprep.mubr.bf16.mxu0 %v1730
        %3152 = vmatmul.mubr.bf16.gmra.mrb[0].mxu0 %v1729
        %v3153 = vpop.f32.mrb[0].mxu0
        %v3154 = vadd.f32 %v1982, %v3153
        %v3155 = vpop.f32.mrb[0].mxu0
        %v3156 = vadd.f32 %v1986, %v3155
        %v3157 = vpop.f32.mrb[0].mxu0
        %v3158 = vadd.f32 %v1982, %v3157
        %v3159 = vpop.f32.mrb[0].mxu0
        %v3160 = vadd.f32 %v1986, %v3159
        %3161 = vmatprep.mubr.bf16.mxu0 %v1738
        %3162 = vmatmul.mubr.bf16.gmra.mrb[0].mxu0 %v1737
        %v3163 = vpop.f32.mrb[0].mxu0
        %v3164 = vadd.f32 %v1982, %v3163
        %v3165 = vpop.f32.mrb[0].mxu0
        %v3166 = vadd.f32 %v1986, %v3165
        %v3167 = vpop.f32.mrb[0].mxu0
        %v3168 = vadd.f32 %v1982, %v3167
        %v3169 = vpop.f32.mrb[0].mxu0
        %v3170 = vadd.f32 %v1986, %v3169
        %3171 = vmatprep.mubr.bf16.mxu0 %v1746
        %3172 = vmatmul.mubr.bf16.gmra.mrb[0].mxu0 %v1745
        %v3173 = vpop.f32.mrb[0].mxu0
        %v3174 = vadd.f32 %v1982, %v3173
        %v3175 = vpop.f32.mrb[0].mxu0
        %v3176 = vadd.f32 %v1986, %v3175
        %v3177 = vpop.f32.mrb[0].mxu0
        %v3178 = vadd.f32 %v1982, %v3177
        %v3179 = vpop.f32.mrb[0].mxu0
        %v3180 = vadd.f32 %v1986, %v3179
        %3181 = vmatprep.mubr.bf16.mxu0 %v1754
        %3182 = vmatmul.mubr.bf16.gmra.mrb[0].mxu0 %v1753
        %v3183 = vpop.f32.mrb[0].mxu0
        %v3184 = vadd.f32 %v1982, %v3183
        %v3185 = vpop.f32.mrb[0].mxu0
        %v3186 = vadd.f32 %v1986, %v3185
        %v3187 = vpop.f32.mrb[0].mxu0
        %v3188 = vadd.f32 %v1982, %v3187
        %v3189 = vpop.f32.mrb[0].mxu0
        %v3190 = vadd.f32 %v1986, %v3189
        %3191 = vmatprep.mubr.bf16.mxu0 %v1762
        %3192 = vmatmul.mubr.bf16.gmra.mrb[0].mxu0 %v1761
        %v3193 = vpop.f32.mrb[0].mxu0
        %v3194 = vadd.f32 %v1982, %v3193
        %v3195 = vpop.f32.mrb[0].mxu0
        %v3196 = vadd.f32 %v1986, %v3195
        %v3197 = vpop.f32.mrb[0].mxu0
        %v3198 = vadd.f32 %v1982, %v3197
        %v3199 = vpop.f32.mrb[0].mxu0
        %v3200 = vadd.f32 %v1986, %v3199
        %3201 = vmatprep.mubr.bf16.mxu0 %v1770
        %3202 = vmatmul.mubr.bf16.gmra.mrb[0].mxu0 %v1769
        %v3203 = vpop.f32.mrb[0].mxu0
        %v3204 = vadd.f32 %v1982, %v3203
        %v3205 = vpop.f32.mrb[0].mxu0
        %v3206 = vadd.f32 %v1986, %v3205
        %v3207 = vpop.f32.mrb[0].mxu0
        %v3208 = vadd.f32 %v1982, %v3207
        %v3209 = vpop.f32.mrb[0].mxu0
        %v3210 = vadd.f32 %v1986, %v3209
        %3211 = vmatprep.mubr.bf16.mxu0 %v1778
        %3212 = vmatmul.mubr.bf16.gmra.mrb[0].mxu0 %v1777
        %v3213 = vpop.f32.mrb[0].mxu0
        %v3214 = vadd.f32 %v1982, %v3213
        %v3215 = vpop.f32.mrb[0].mxu0
        %v3216 = vadd.f32 %v1986, %v3215
        %v3217 = vpop.f32.mrb[0].mxu0
        %v3218 = vadd.f32 %v1982, %v3217
        %v3219 = vpop.f32.mrb[0].mxu0
        %v3220 = vadd.f32 %v1986, %v3219
        %3221 = vmatprep.mubr.bf16.mxu0 %v1786
        %3222 = vmatmul.mubr.bf16.gmra.mrb[0].mxu0 %v1785
        %v3223 = vpop.f32.mrb[0].mxu0
        %v3224 = vadd.f32 %v1982, %v3223
        %v3225 = vpop.f32.mrb[0].mxu0
        %v3226 = vadd.f32 %v1986, %v3225
        %v3227 = vpop.f32.mrb[0].mxu0
        %v3228 = vadd.f32 %v1982, %v3227
        %v3229 = vpop.f32.mrb[0].mxu0
        %v3230 = vadd.f32 %v1986, %v3229
        %3231 = vmatprep.mubr.bf16.mxu0 %v1794
        %3232 = vmatmul.mubr.bf16.gmra.mrb[0].mxu0 %v1793
        %v3233 = vpop.f32.mrb[0].mxu0
        %v3234 = vadd.f32 %v1982, %v3233
        %v3235 = vpop.f32.mrb[0].mxu0
        %v3236 = vadd.f32 %v1986, %v3235
        %v3237 = vpop.f32.mrb[0].mxu0
        %v3238 = vadd.f32 %v1982, %v3237
        %v3239 = vpop.f32.mrb[0].mxu0
        %v3240 = vadd.f32 %v1986, %v3239
        %3241 = vmatprep.mubr.bf16.mxu0 %v1802
        %3242 = vmatmul.mubr.bf16.gmra.mrb[0].mxu0 %v1801
        %v3243 = vpop.f32.mrb[0].mxu0
        %v3244 = vadd.f32 %v1982, %v3243
        %v3245 = vpop.f32.mrb[0].mxu0
        %v3246 = vadd.f32 %v1986, %v3245
        %v3247 = vpop.f32.mrb[0].mxu0
        %v3248 = vadd.f32 %v1982, %v3247
        %v3249 = vpop.f32.mrb[0].mxu0
        %v3250 = vadd.f32 %v1986, %v3249
        %3251 = vmatprep.mubr.bf16.mxu0 %v1810
        %3252 = vmatmul.mubr.bf16.gmra.mrb[0].mxu0 %v1809
        %v3253 = vpop.f32.mrb[0].mxu0
        %v3254 = vadd.f32 %v1982, %v3253
        %v3255 = vpop.f32.mrb[0].mxu0
        %v3256 = vadd.f32 %v1986, %v3255
        %v3257 = vpop.f32.mrb[0].mxu0
        %v3258 = vadd.f32 %v1982, %v3257
        %v3259 = vpop.f32.mrb[0].mxu0
        %v3260 = vadd.f32 %v1986, %v3259
        %3261 = vmatprep.mubr.bf16.mxu0 %v1818
        %3262 = vmatmul.mubr.bf16.gmra.mrb[0].mxu0 %v1817
        %v3263 = vpop.f32.mrb[0].mxu0
        %v3264 = vadd.f32 %v1982, %v3263
        %v3265 = vpop.f32.mrb[0].mxu0
        %v3266 = vadd.f32 %v1986, %v3265
        %v3267 = vpop.f32.mrb[0].mxu0
        %v3268 = vadd.f32 %v1982, %v3267
        %v3269 = vpop.f32.mrb[0].mxu0
        %v3270 = vadd.f32 %v1986, %v3269
        %3271 = vmatprep.mubr.bf16.mxu0 %v1826
        %3272 = vmatmul.mubr.bf16.gmra.mrb[0].mxu0 %v1825
        %v3273 = vpop.f32.mrb[0].mxu0
        %v3274 = vadd.f32 %v1982, %v3273
        %v3275 = vpop.f32.mrb[0].mxu0
        %v3276 = vadd.f32 %v1986, %v3275
        %v3277 = vpop.f32.mrb[0].mxu0
        %v3278 = vadd.f32 %v1982, %v3277
        %v3279 = vpop.f32.mrb[0].mxu0
        %v3280 = vadd.f32 %v1986, %v3279
        %3281 = vmatprep.mubr.bf16.mxu0 %v1834
        %3282 = vmatmul.mubr.bf16.gmra.mrb[0].mxu0 %v1833
        %v3283 = vpop.f32.mrb[0].mxu0
        %v3284 = vadd.f32 %v1982, %v3283
        %v3285 = vpop.f32.mrb[0].mxu0
        %v3286 = vadd.f32 %v1986, %v3285
        %v3287 = vpop.f32.mrb[0].mxu0
        %v3288 = vadd.f32 %v1982, %v3287
        %v3289 = vpop.f32.mrb[0].mxu0
        %v3290 = vadd.f32 %v1986, %v3289
        %3291 = vmatprep.mubr.bf16.mxu0 %v1842
        %3292 = vmatmul.mubr.bf16.gmra.mrb[0].mxu0 %v1841
        %v3293 = vpop.f32.mrb[0].mxu0
        %v3294 = vadd.f32 %v1982, %v3293
        %v3295 = vpop.f32.mrb[0].mxu0
        %v3296 = vadd.f32 %v1986, %v3295
        %v3297 = vpop.f32.mrb[0].mxu0
        %v3298 = vadd.f32 %v1982, %v3297
        %v3299 = vpop.f32.mrb[0].mxu0
        %v3300 = vadd.f32 %v1986, %v3299
        %3301 = vdwg.mxu0
        %3302 = vmatprep.subr.bf16.mxu0 %v2406
        %3303 = vmatpush1.bf16.msra.mxu0 %v2405
        %3304 = vmatprep.subr.bf16.mxu0 %v2408
        %3305 = vmatpush1.bf16.msra.mxu0 %v2407
        %3306 = vmatprep.subr.bf16.mxu0 %v2410
        %3307 = vmatpush1.bf16.msra.mxu0 %v2409
        %3308 = vmatprep.subr.bf16.mxu0 %v2412
        %3309 = vmatpush1.bf16.msra.mxu0 %v2411
        %3310 = vmatprep.subr.bf16.mxu0 %v2414
        %3311 = vmatpush1.bf16.msra.mxu0 %v2413
        %3312 = vmatprep.subr.bf16.mxu0 %v2416
        %3313 = vmatpush1.bf16.msra.mxu0 %v2415
        %3314 = vmatprep.subr.bf16.mxu0 %v2418
        %3315 = vmatpush1.bf16.msra.mxu0 %v2417
        %3316 = vmatprep.subr.bf16.mxu0 %v2420
        %3317 = vmatpush1.bf16.msra.mxu0 %v2419
        %3318 = vmatprep.subr.bf16.mxu0 %v2422
        %3319 = vmatpush1.bf16.msra.mxu0 %v2421
        %3320 = vmatprep.subr.bf16.mxu0 %v2424
        %3321 = vmatpush1.bf16.msra.mxu0 %v2423
        %3322 = vmatprep.subr.bf16.mxu0 %v2426
        %3323 = vmatpush1.bf16.msra.mxu0 %v2425
        %3324 = vmatprep.subr.bf16.mxu0 %v2428
        %3325 = vmatpush1.bf16.msra.mxu0 %v2427
        %3326 = vmatprep.subr.bf16.mxu0 %v2430
        %3327 = vmatpush1.bf16.msra.mxu0 %v2429
        %3328 = vmatprep.subr.bf16.mxu0 %v2432
        %3329 = vmatpush1.bf16.msra.mxu0 %v2431
        %3330 = vmatprep.subr.bf16.mxu0 %v2434
        %3331 = vmatpush1.bf16.msra.mxu0 %v2433
        %3332 = vmatprep.subr.bf16.mxu0 %v2436
        %3333 = vmatpush1.bf16.msra.mxu0 %v2435
        %3334 = vmatprep.mubr.bf16.mxu0 %v1340
        %3335 = vmatmul.mubr.bf16.gmra.mrb[0].mxu0 %v1339
        %v3336 = vpop.f32.mrb[0].mxu0
        %v3337 = vadd.f32 %v2664, %v3336
        %v3338 = vpop.f32.mrb[0].mxu0
        %v3339 = vadd.f32 %v2666, %v3338
        %v3340 = vpop.f32.mrb[0].mxu0
        %v3341 = vadd.f32 %v2668, %v3340
        %v3342 = vpop.f32.mrb[0].mxu0
        %v3343 = vadd.f32 %v2670, %v3342
        %3344 = vmatprep.mubr.bf16.mxu0 %v1348
        %3345 = vmatmul.mubr.bf16.gmra.mrb[0].mxu0 %v1347
        %v3346 = vpop.f32.mrb[0].mxu0
        %v3347 = vadd.f32 %v2674, %v3346
        %v3348 = vpop.f32.mrb[0].mxu0
        %v3349 = vadd.f32 %v2676, %v3348
        %v3350 = vpop.f32.mrb[0].mxu0
        %v3351 = vadd.f32 %v2678, %v3350
        %v3352 = vpop.f32.mrb[0].mxu0
        %v3353 = vadd.f32 %v2680, %v3352
        %3354 = vmatprep.mubr.bf16.mxu0 %v1356
        %3355 = vmatmul.mubr.bf16.gmra.mrb[0].mxu0 %v1355
        %v3356 = vpop.f32.mrb[0].mxu0
        %v3357 = vadd.f32 %v2684, %v3356
        %v3358 = vpop.f32.mrb[0].mxu0
        %v3359 = vadd.f32 %v2686, %v3358
        %v3360 = vpop.f32.mrb[0].mxu0
        %v3361 = vadd.f32 %v2688, %v3360
        %v3362 = vpop.f32.mrb[0].mxu0
        %v3363 = vadd.f32 %v2690, %v3362
        %3364 = vmatprep.mubr.bf16.mxu0 %v1364
        %3365 = vmatmul.mubr.bf16.gmra.mrb[0].mxu0 %v1363
        %v3366 = vpop.f32.mrb[0].mxu0
        %v3367 = vadd.f32 %v2694, %v3366
        %v3368 = vpop.f32.mrb[0].mxu0
        %v3369 = vadd.f32 %v2696, %v3368
        %v3370 = vpop.f32.mrb[0].mxu0
        %v3371 = vadd.f32 %v2698, %v3370
        %v3372 = vpop.f32.mrb[0].mxu0
        %v3373 = vadd.f32 %v2700, %v3372
        %3374 = vmatprep.mubr.bf16.mxu0 %v1372
        %3375 = vmatmul.mubr.bf16.gmra.mrb[0].mxu0 %v1371
        %v3376 = vpop.f32.mrb[0].mxu0
        %v3377 = vadd.f32 %v2704, %v3376
        %v3378 = vpop.f32.mrb[0].mxu0
        %v3379 = vadd.f32 %v2706, %v3378
        %v3380 = vpop.f32.mrb[0].mxu0
        %v3381 = vadd.f32 %v2708, %v3380
        %v3382 = vpop.f32.mrb[0].mxu0
        %v3383 = vadd.f32 %v2710, %v3382
        %3384 = vmatprep.mubr.bf16.mxu0 %v1380
        %3385 = vmatmul.mubr.bf16.gmra.mrb[0].mxu0 %v1379
        %v3386 = vpop.f32.mrb[0].mxu0
        %v3387 = vadd.f32 %v2714, %v3386
        %v3388 = vpop.f32.mrb[0].mxu0
        %v3389 = vadd.f32 %v2716, %v3388
        %v3390 = vpop.f32.mrb[0].mxu0
        %v3391 = vadd.f32 %v2718, %v3390
        %v3392 = vpop.f32.mrb[0].mxu0
        %v3393 = vadd.f32 %v2720, %v3392
        %3394 = vmatprep.mubr.bf16.mxu0 %v1388
        %3395 = vmatmul.mubr.bf16.gmra.mrb[0].mxu0 %v1387
        %v3396 = vpop.f32.mrb[0].mxu0
        %v3397 = vadd.f32 %v2724, %v3396
        %v3398 = vpop.f32.mrb[0].mxu0
        %v3399 = vadd.f32 %v2726, %v3398
        %v3400 = vpop.f32.mrb[0].mxu0
        %v3401 = vadd.f32 %v2728, %v3400
        %v3402 = vpop.f32.mrb[0].mxu0
        %v3403 = vadd.f32 %v2730, %v3402
        %3404 = vmatprep.mubr.bf16.mxu0 %v1396
        %3405 = vmatmul.mubr.bf16.gmra.mrb[0].mxu0 %v1395
        %v3406 = vpop.f32.mrb[0].mxu0
        %v3407 = vadd.f32 %v2734, %v3406
        %v3408 = vpop.f32.mrb[0].mxu0
        %v3409 = vadd.f32 %v2736, %v3408
        %v3410 = vpop.f32.mrb[0].mxu0
        %v3411 = vadd.f32 %v2738, %v3410
        %v3412 = vpop.f32.mrb[0].mxu0
        %v3413 = vadd.f32 %v2740, %v3412
        %3414 = vmatprep.mubr.bf16.mxu0 %v1404
        %3415 = vmatmul.mubr.bf16.gmra.mrb[0].mxu0 %v1403
        %v3416 = vpop.f32.mrb[0].mxu0
        %v3417 = vadd.f32 %v2744, %v3416
        %v3418 = vpop.f32.mrb[0].mxu0
        %v3419 = vadd.f32 %v2746, %v3418
        %v3420 = vpop.f32.mrb[0].mxu0
        %v3421 = vadd.f32 %v2748, %v3420
        %v3422 = vpop.f32.mrb[0].mxu0
        %v3423 = vadd.f32 %v2750, %v3422
        %3424 = vmatprep.mubr.bf16.mxu0 %v1412
        %3425 = vmatmul.mubr.bf16.gmra.mrb[0].mxu0 %v1411
        %v3426 = vpop.f32.mrb[0].mxu0
        %v3427 = vadd.f32 %v2754, %v3426
        %v3428 = vpop.f32.mrb[0].mxu0
        %v3429 = vadd.f32 %v2756, %v3428
        %v3430 = vpop.f32.mrb[0].mxu0
        %v3431 = vadd.f32 %v2758, %v3430
        %v3432 = vpop.f32.mrb[0].mxu0
        %v3433 = vadd.f32 %v2760, %v3432
        %3434 = vmatprep.mubr.bf16.mxu0 %v1420
        %3435 = vmatmul.mubr.bf16.gmra.mrb[0].mxu0 %v1419
        %v3436 = vpop.f32.mrb[0].mxu0
        %v3437 = vadd.f32 %v2764, %v3436
        %v3438 = vpop.f32.mrb[0].mxu0
        %v3439 = vadd.f32 %v2766, %v3438
        %v3440 = vpop.f32.mrb[0].mxu0
        %v3441 = vadd.f32 %v2768, %v3440
        %v3442 = vpop.f32.mrb[0].mxu0
        %v3443 = vadd.f32 %v2770, %v3442
        %3444 = vmatprep.mubr.bf16.mxu0 %v1428
        %3445 = vmatmul.mubr.bf16.gmra.mrb[0].mxu0 %v1427
        %v3446 = vpop.f32.mrb[0].mxu0
        %v3447 = vadd.f32 %v2774, %v3446
        %v3448 = vpop.f32.mrb[0].mxu0
        %v3449 = vadd.f32 %v2776, %v3448
        %v3450 = vpop.f32.mrb[0].mxu0
        %v3451 = vadd.f32 %v2778, %v3450
        %v3452 = vpop.f32.mrb[0].mxu0
        %v3453 = vadd.f32 %v2780, %v3452
        %3454 = vmatprep.mubr.bf16.mxu0 %v1436
        %3455 = vmatmul.mubr.bf16.gmra.mrb[0].mxu0 %v1435
        %v3456 = vpop.f32.mrb[0].mxu0
        %v3457 = vadd.f32 %v2784, %v3456
        %v3458 = vpop.f32.mrb[0].mxu0
        %v3459 = vadd.f32 %v2786, %v3458
        %v3460 = vpop.f32.mrb[0].mxu0
        %v3461 = vadd.f32 %v2788, %v3460
        %v3462 = vpop.f32.mrb[0].mxu0
        %v3463 = vadd.f32 %v2790, %v3462
        %3464 = vmatprep.mubr.bf16.mxu0 %v1444
        %3465 = vmatmul.mubr.bf16.gmra.mrb[0].mxu0 %v1443
        %v3466 = vpop.f32.mrb[0].mxu0
        %v3467 = vadd.f32 %v2794, %v3466
        %v3468 = vpop.f32.mrb[0].mxu0
        %v3469 = vadd.f32 %v2796, %v3468
        %v3470 = vpop.f32.mrb[0].mxu0
        %v3471 = vadd.f32 %v2798, %v3470
        %v3472 = vpop.f32.mrb[0].mxu0
        %v3473 = vadd.f32 %v2800, %v3472
        %3474 = vmatprep.mubr.bf16.mxu0 %v1452
        %3475 = vmatmul.mubr.bf16.gmra.mrb[0].mxu0 %v1451
        %v3476 = vpop.f32.mrb[0].mxu0
        %v3477 = vadd.f32 %v2804, %v3476
        %v3478 = vpop.f32.mrb[0].mxu0
        %v3479 = vadd.f32 %v2806, %v3478
        %v3480 = vpop.f32.mrb[0].mxu0
        %v3481 = vadd.f32 %v2808, %v3480
        %v3482 = vpop.f32.mrb[0].mxu0
        %v3483 = vadd.f32 %v2810, %v3482
        %3484 = vmatprep.mubr.bf16.mxu0 %v1460
        %3485 = vmatmul.mubr.bf16.gmra.mrb[0].mxu0 %v1459
        %v3486 = vpop.f32.mrb[0].mxu0
        %v3487 = vadd.f32 %v2814, %v3486
        %v3488 = vpop.f32.mrb[0].mxu0
        %v3489 = vadd.f32 %v2816, %v3488
        %v3490 = vpop.f32.mrb[0].mxu0
        %v3491 = vadd.f32 %v2818, %v3490
        %v3492 = vpop.f32.mrb[0].mxu0
        %v3493 = vadd.f32 %v2820, %v3492
        %3494 = vmatprep.mubr.bf16.mxu0 %v1468
        %3495 = vmatmul.mubr.bf16.gmra.mrb[0].mxu0 %v1467
        %v3496 = vpop.f32.mrb[0].mxu0
        %v3497 = vadd.f32 %v2824, %v3496
        %v3498 = vpop.f32.mrb[0].mxu0
        %v3499 = vadd.f32 %v2826, %v3498
        %v3500 = vpop.f32.mrb[0].mxu0
        %v3501 = vadd.f32 %v2828, %v3500
        %v3502 = vpop.f32.mrb[0].mxu0
        %v3503 = vadd.f32 %v2830, %v3502
        %3504 = vmatprep.mubr.bf16.mxu0 %v1476
        %3505 = vmatmul.mubr.bf16.gmra.mrb[0].mxu0 %v1475
        %v3506 = vpop.f32.mrb[0].mxu0
        %v3507 = vadd.f32 %v2834, %v3506
        %v3508 = vpop.f32.mrb[0].mxu0
        %v3509 = vadd.f32 %v2836, %v3508
        %v3510 = vpop.f32.mrb[0].mxu0
        %v3511 = vadd.f32 %v2838, %v3510
        %v3512 = vpop.f32.mrb[0].mxu0
        %v3513 = vadd.f32 %v2840, %v3512
        %3514 = vmatprep.mubr.bf16.mxu0 %v1484
        %3515 = vmatmul.mubr.bf16.gmra.mrb[0].mxu0 %v1483
        %v3516 = vpop.f32.mrb[0].mxu0
        %v3517 = vadd.f32 %v2844, %v3516
        %v3518 = vpop.f32.mrb[0].mxu0
        %v3519 = vadd.f32 %v2846, %v3518
        %v3520 = vpop.f32.mrb[0].mxu0
        %v3521 = vadd.f32 %v2848, %v3520
        %v3522 = vpop.f32.mrb[0].mxu0
        %v3523 = vadd.f32 %v2850, %v3522
        %3524 = vmatprep.mubr.bf16.mxu0 %v1492
        %3525 = vmatmul.mubr.bf16.gmra.mrb[0].mxu0 %v1491
        %v3526 = vpop.f32.mrb[0].mxu0
        %v3527 = vadd.f32 %v2854, %v3526
        %v3528 = vpop.f32.mrb[0].mxu0
        %v3529 = vadd.f32 %v2856, %v3528
        %v3530 = vpop.f32.mrb[0].mxu0
        %v3531 = vadd.f32 %v2858, %v3530
        %v3532 = vpop.f32.mrb[0].mxu0
        %v3533 = vadd.f32 %v2860, %v3532
        %3534 = vmatprep.mubr.bf16.mxu0 %v1500
        %3535 = vmatmul.mubr.bf16.gmra.mrb[0].mxu0 %v1499
        %v3536 = vpop.f32.mrb[0].mxu0
        %v3537 = vadd.f32 %v2864, %v3536
        %v3538 = vpop.f32.mrb[0].mxu0
        %v3539 = vadd.f32 %v2866, %v3538
        %v3540 = vpop.f32.mrb[0].mxu0
        %v3541 = vadd.f32 %v2868, %v3540
        %v3542 = vpop.f32.mrb[0].mxu0
        %v3543 = vadd.f32 %v2870, %v3542
        %3544 = vmatprep.mubr.bf16.mxu0 %v1508
        %3545 = vmatmul.mubr.bf16.gmra.mrb[0].mxu0 %v1507
        %v3546 = vpop.f32.mrb[0].mxu0
        %v3547 = vadd.f32 %v2874, %v3546
        %v3548 = vpop.f32.mrb[0].mxu0
        %v3549 = vadd.f32 %v2876, %v3548
        %v3550 = vpop.f32.mrb[0].mxu0
        %v3551 = vadd.f32 %v2878, %v3550
        %v3552 = vpop.f32.mrb[0].mxu0
        %v3553 = vadd.f32 %v2880, %v3552
        %3554 = vmatprep.mubr.bf16.mxu0 %v1516
        %3555 = vmatmul.mubr.bf16.gmra.mrb[0].mxu0 %v1515
        %v3556 = vpop.f32.mrb[0].mxu0
        %v3557 = vadd.f32 %v2884, %v3556
        %v3558 = vpop.f32.mrb[0].mxu0
        %v3559 = vadd.f32 %v2886, %v3558
        %v3560 = vpop.f32.mrb[0].mxu0
        %v3561 = vadd.f32 %v2888, %v3560
        %v3562 = vpop.f32.mrb[0].mxu0
        %v3563 = vadd.f32 %v2890, %v3562
        %3564 = vmatprep.mubr.bf16.mxu0 %v1524
        %3565 = vmatmul.mubr.bf16.gmra.mrb[0].mxu0 %v1523
        %v3566 = vpop.f32.mrb[0].mxu0
        %v3567 = vadd.f32 %v2894, %v3566
        %v3568 = vpop.f32.mrb[0].mxu0
        %v3569 = vadd.f32 %v2896, %v3568
        %v3570 = vpop.f32.mrb[0].mxu0
        %v3571 = vadd.f32 %v2898, %v3570
        %v3572 = vpop.f32.mrb[0].mxu0
        %v3573 = vadd.f32 %v2900, %v3572
        %3574 = vmatprep.mubr.bf16.mxu0 %v1532
        %3575 = vmatmul.mubr.bf16.gmra.mrb[0].mxu0 %v1531
        %v3576 = vpop.f32.mrb[0].mxu0
        %v3577 = vadd.f32 %v2904, %v3576
        %v3578 = vpop.f32.mrb[0].mxu0
        %v3579 = vadd.f32 %v2906, %v3578
        %v3580 = vpop.f32.mrb[0].mxu0
        %v3581 = vadd.f32 %v2908, %v3580
        %v3582 = vpop.f32.mrb[0].mxu0
        %v3583 = vadd.f32 %v2910, %v3582
        %3584 = vmatprep.mubr.bf16.mxu0 %v1540
        %3585 = vmatmul.mubr.bf16.gmra.mrb[0].mxu0 %v1539
        %v3586 = vpop.f32.mrb[0].mxu0
        %v3587 = vadd.f32 %v2914, %v3586
        %v3588 = vpop.f32.mrb[0].mxu0
        %v3589 = vadd.f32 %v2916, %v3588
        %v3590 = vpop.f32.mrb[0].mxu0
        %v3591 = vadd.f32 %v2918, %v3590
        %v3592 = vpop.f32.mrb[0].mxu0
        %v3593 = vadd.f32 %v2920, %v3592
        %3594 = vmatprep.mubr.bf16.mxu0 %v1548
        %3595 = vmatmul.mubr.bf16.gmra.mrb[0].mxu0 %v1547
        %v3596 = vpop.f32.mrb[0].mxu0
        %v3597 = vadd.f32 %v2924, %v3596
        %v3598 = vpop.f32.mrb[0].mxu0
        %v3599 = vadd.f32 %v2926, %v3598
        %v3600 = vpop.f32.mrb[0].mxu0
        %v3601 = vadd.f32 %v2928, %v3600
        %v3602 = vpop.f32.mrb[0].mxu0
        %v3603 = vadd.f32 %v2930, %v3602
        %3604 = vmatprep.mubr.bf16.mxu0 %v1556
        %3605 = vmatmul.mubr.bf16.gmra.mrb[0].mxu0 %v1555
        %v3606 = vpop.f32.mrb[0].mxu0
        %v3607 = vadd.f32 %v2934, %v3606
        %v3608 = vpop.f32.mrb[0].mxu0
        %v3609 = vadd.f32 %v2936, %v3608
        %v3610 = vpop.f32.mrb[0].mxu0
        %v3611 = vadd.f32 %v2938, %v3610
        %v3612 = vpop.f32.mrb[0].mxu0
        %v3613 = vadd.f32 %v2940, %v3612
        %3614 = vmatprep.mubr.bf16.mxu0 %v1564
        %3615 = vmatmul.mubr.bf16.gmra.mrb[0].mxu0 %v1563
        %v3616 = vpop.f32.mrb[0].mxu0
        %v3617 = vadd.f32 %v2944, %v3616
        %v3618 = vpop.f32.mrb[0].mxu0
        %v3619 = vadd.f32 %v2946, %v3618
        %v3620 = vpop.f32.mrb[0].mxu0
        %v3621 = vadd.f32 %v2948, %v3620
        %v3622 = vpop.f32.mrb[0].mxu0
        %v3623 = vadd.f32 %v2950, %v3622
        %3624 = vmatprep.mubr.bf16.mxu0 %v1572
        %3625 = vmatmul.mubr.bf16.gmra.mrb[0].mxu0 %v1571
        %v3626 = vpop.f32.mrb[0].mxu0
        %v3627 = vadd.f32 %v2954, %v3626
        %v3628 = vpop.f32.mrb[0].mxu0
        %v3629 = vadd.f32 %v2956, %v3628
        %v3630 = vpop.f32.mrb[0].mxu0
        %v3631 = vadd.f32 %v2958, %v3630
        %v3632 = vpop.f32.mrb[0].mxu0
        %v3633 = vadd.f32 %v2960, %v3632
        %3634 = vmatprep.mubr.bf16.mxu0 %v1580
        %3635 = vmatmul.mubr.bf16.gmra.mrb[0].mxu0 %v1579
        %v3636 = vpop.f32.mrb[0].mxu0
        %v3637 = vadd.f32 %v2964, %v3636
        %v3638 = vpop.f32.mrb[0].mxu0
        %v3639 = vadd.f32 %v2966, %v3638
        %v3640 = vpop.f32.mrb[0].mxu0
        %v3641 = vadd.f32 %v2968, %v3640
        %v3642 = vpop.f32.mrb[0].mxu0
        %v3643 = vadd.f32 %v2970, %v3642
        %3644 = vmatprep.mubr.bf16.mxu0 %v1588
        %3645 = vmatmul.mubr.bf16.gmra.mrb[0].mxu0 %v1587
        %v3646 = vpop.f32.mrb[0].mxu0
        %v3647 = vadd.f32 %v2974, %v3646
        %v3648 = vpop.f32.mrb[0].mxu0
        %v3649 = vadd.f32 %v2976, %v3648
        %v3650 = vpop.f32.mrb[0].mxu0
        %v3651 = vadd.f32 %v2978, %v3650
        %v3652 = vpop.f32.mrb[0].mxu0
        %v3653 = vadd.f32 %v2980, %v3652
        %3654 = vmatprep.mubr.bf16.mxu0 %v1596
        %3655 = vmatmul.mubr.bf16.gmra.mrb[0].mxu0 %v1595
        %v3656 = vpop.f32.mrb[0].mxu0
        %v3657 = vadd.f32 %v2984, %v3656
        %v3658 = vpop.f32.mrb[0].mxu0
        %v3659 = vadd.f32 %v2986, %v3658
        %v3660 = vpop.f32.mrb[0].mxu0
        %v3661 = vadd.f32 %v2988, %v3660
        %v3662 = vpop.f32.mrb[0].mxu0
        %v3663 = vadd.f32 %v2990, %v3662
        %3664 = vmatprep.mubr.bf16.mxu0 %v1604
        %3665 = vmatmul.mubr.bf16.gmra.mrb[0].mxu0 %v1603
        %v3666 = vpop.f32.mrb[0].mxu0
        %v3667 = vadd.f32 %v2994, %v3666
        %v3668 = vpop.f32.mrb[0].mxu0
        %v3669 = vadd.f32 %v2996, %v3668
        %v3670 = vpop.f32.mrb[0].mxu0
        %v3671 = vadd.f32 %v2998, %v3670
        %v3672 = vpop.f32.mrb[0].mxu0
        %v3673 = vadd.f32 %v3000, %v3672
        %3674 = vmatprep.mubr.bf16.mxu0 %v1612
        %3675 = vmatmul.mubr.bf16.gmra.mrb[0].mxu0 %v1611
        %v3676 = vpop.f32.mrb[0].mxu0
        %v3677 = vadd.f32 %v3004, %v3676
        %v3678 = vpop.f32.mrb[0].mxu0
        %v3679 = vadd.f32 %v3006, %v3678
        %v3680 = vpop.f32.mrb[0].mxu0
        %v3681 = vadd.f32 %v3008, %v3680
        %v3682 = vpop.f32.mrb[0].mxu0
        %v3683 = vadd.f32 %v3010, %v3682
        %3684 = vmatprep.mubr.bf16.mxu0 %v1620
        %3685 = vmatmul.mubr.bf16.gmra.mrb[0].mxu0 %v1619
        %v3686 = vpop.f32.mrb[0].mxu0
        %v3687 = vadd.f32 %v3014, %v3686
        %v3688 = vpop.f32.mrb[0].mxu0
        %v3689 = vadd.f32 %v3016, %v3688
        %v3690 = vpop.f32.mrb[0].mxu0
        %v3691 = vadd.f32 %v3018, %v3690
        %v3692 = vpop.f32.mrb[0].mxu0
        %v3693 = vadd.f32 %v3020, %v3692
        %3694 = vmatprep.mubr.bf16.mxu0 %v1628
        %3695 = vmatmul.mubr.bf16.gmra.mrb[0].mxu0 %v1627
        %v3696 = vpop.f32.mrb[0].mxu0
        %v3697 = vadd.f32 %v3024, %v3696
        %v3698 = vpop.f32.mrb[0].mxu0
        %v3699 = vadd.f32 %v3026, %v3698
        %v3700 = vpop.f32.mrb[0].mxu0
        %v3701 = vadd.f32 %v3028, %v3700
        %v3702 = vpop.f32.mrb[0].mxu0
        %v3703 = vadd.f32 %v3030, %v3702
        %3704 = vmatprep.mubr.bf16.mxu0 %v1636
        %3705 = vmatmul.mubr.bf16.gmra.mrb[0].mxu0 %v1635
        %v3706 = vpop.f32.mrb[0].mxu0
        %v3707 = vadd.f32 %v3034, %v3706
        %v3708 = vpop.f32.mrb[0].mxu0
        %v3709 = vadd.f32 %v3036, %v3708
        %v3710 = vpop.f32.mrb[0].mxu0
        %v3711 = vadd.f32 %v3038, %v3710
        %v3712 = vpop.f32.mrb[0].mxu0
        %v3713 = vadd.f32 %v3040, %v3712
        %3714 = vmatprep.mubr.bf16.mxu0 %v1644
        %3715 = vmatmul.mubr.bf16.gmra.mrb[0].mxu0 %v1643
        %v3716 = vpop.f32.mrb[0].mxu0
        %v3717 = vadd.f32 %v3044, %v3716
        %v3718 = vpop.f32.mrb[0].mxu0
        %v3719 = vadd.f32 %v3046, %v3718
        %v3720 = vpop.f32.mrb[0].mxu0
        %v3721 = vadd.f32 %v3048, %v3720
        %v3722 = vpop.f32.mrb[0].mxu0
        %v3723 = vadd.f32 %v3050, %v3722
        %3724 = vmatprep.mubr.bf16.mxu0 %v1652
        %3725 = vmatmul.mubr.bf16.gmra.mrb[0].mxu0 %v1651
        %v3726 = vpop.f32.mrb[0].mxu0
        %v3727 = vadd.f32 %v3054, %v3726
        %v3728 = vpop.f32.mrb[0].mxu0
        %v3729 = vadd.f32 %v3056, %v3728
        %v3730 = vpop.f32.mrb[0].mxu0
        %v3731 = vadd.f32 %v3058, %v3730
        %v3732 = vpop.f32.mrb[0].mxu0
        %v3733 = vadd.f32 %v3060, %v3732
        %3734 = vmatprep.mubr.bf16.mxu0 %v1660
        %3735 = vmatmul.mubr.bf16.gmra.mrb[0].mxu0 %v1659
        %v3736 = vpop.f32.mrb[0].mxu0
        %v3737 = vadd.f32 %v3064, %v3736
        %v3738 = vpop.f32.mrb[0].mxu0
        %v3739 = vadd.f32 %v3066, %v3738
        %v3740 = vpop.f32.mrb[0].mxu0
        %v3741 = vadd.f32 %v3068, %v3740
        %v3742 = vpop.f32.mrb[0].mxu0
        %v3743 = vadd.f32 %v3070, %v3742
        %3744 = vmatprep.mubr.bf16.mxu0 %v1668
        %3745 = vmatmul.mubr.bf16.gmra.mrb[0].mxu0 %v1667
        %v3746 = vpop.f32.mrb[0].mxu0
        %v3747 = vadd.f32 %v3074, %v3746
        %v3748 = vpop.f32.mrb[0].mxu0
        %v3749 = vadd.f32 %v3076, %v3748
        %v3750 = vpop.f32.mrb[0].mxu0
        %v3751 = vadd.f32 %v3078, %v3750
        %v3752 = vpop.f32.mrb[0].mxu0
        %v3753 = vadd.f32 %v3080, %v3752
        %3754 = vmatprep.mubr.bf16.mxu0 %v1676
        %3755 = vmatmul.mubr.bf16.gmra.mrb[0].mxu0 %v1675
        %v3756 = vpop.f32.mrb[0].mxu0
        %v3757 = vadd.f32 %v3084, %v3756
        %v3758 = vpop.f32.mrb[0].mxu0
        %v3759 = vadd.f32 %v3086, %v3758
        %v3760 = vpop.f32.mrb[0].mxu0
        %v3761 = vadd.f32 %v3088, %v3760
        %v3762 = vpop.f32.mrb[0].mxu0
        %v3763 = vadd.f32 %v3090, %v3762
        %3764 = vmatprep.mubr.bf16.mxu0 %v1684
        %3765 = vmatmul.mubr.bf16.gmra.mrb[0].mxu0 %v1683
        %v3766 = vpop.f32.mrb[0].mxu0
        %v3767 = vadd.f32 %v3094, %v3766
        %v3768 = vpop.f32.mrb[0].mxu0
        %v3769 = vadd.f32 %v3096, %v3768
        %v3770 = vpop.f32.mrb[0].mxu0
        %v3771 = vadd.f32 %v3098, %v3770
        %v3772 = vpop.f32.mrb[0].mxu0
        %v3773 = vadd.f32 %v3100, %v3772
        %3774 = vmatprep.mubr.bf16.mxu0 %v1692
        %3775 = vmatmul.mubr.bf16.gmra.mrb[0].mxu0 %v1691
        %v3776 = vpop.f32.mrb[0].mxu0
        %v3777 = vadd.f32 %v3104, %v3776
        %v3778 = vpop.f32.mrb[0].mxu0
        %v3779 = vadd.f32 %v3106, %v3778
        %v3780 = vpop.f32.mrb[0].mxu0
        %v3781 = vadd.f32 %v3108, %v3780
        %v3782 = vpop.f32.mrb[0].mxu0
        %v3783 = vadd.f32 %v3110, %v3782
        %3784 = vmatprep.mubr.bf16.mxu0 %v1700
        %3785 = vmatmul.mubr.bf16.gmra.mrb[0].mxu0 %v1699
        %v3786 = vpop.f32.mrb[0].mxu0
        %v3787 = vadd.f32 %v3114, %v3786
        %v3788 = vpop.f32.mrb[0].mxu0
        %v3789 = vadd.f32 %v3116, %v3788
        %v3790 = vpop.f32.mrb[0].mxu0
        %v3791 = vadd.f32 %v3118, %v3790
        %v3792 = vpop.f32.mrb[0].mxu0
        %v3793 = vadd.f32 %v3120, %v3792
        %3794 = vmatprep.mubr.bf16.mxu0 %v1708
        %3795 = vmatmul.mubr.bf16.gmra.mrb[0].mxu0 %v1707
        %v3796 = vpop.f32.mrb[0].mxu0
        %v3797 = vadd.f32 %v3124, %v3796
        %v3798 = vpop.f32.mrb[0].mxu0
        %v3799 = vadd.f32 %v3126, %v3798
        %v3800 = vpop.f32.mrb[0].mxu0
        %v3801 = vadd.f32 %v3128, %v3800
        %v3802 = vpop.f32.mrb[0].mxu0
        %v3803 = vadd.f32 %v3130, %v3802
        %3804 = vmatprep.mubr.bf16.mxu0 %v1716
        %3805 = vmatmul.mubr.bf16.gmra.mrb[0].mxu0 %v1715
        %v3806 = vpop.f32.mrb[0].mxu0
        %v3807 = vadd.f32 %v3134, %v3806
        %v3808 = vpop.f32.mrb[0].mxu0
        %v3809 = vadd.f32 %v3136, %v3808
        %v3810 = vpop.f32.mrb[0].mxu0
        %v3811 = vadd.f32 %v3138, %v3810
        %v3812 = vpop.f32.mrb[0].mxu0
        %v3813 = vadd.f32 %v3140, %v3812
        %3814 = vmatprep.mubr.bf16.mxu0 %v1724
        %3815 = vmatmul.mubr.bf16.gmra.mrb[0].mxu0 %v1723
        %v3816 = vpop.f32.mrb[0].mxu0
        %v3817 = vadd.f32 %v3144, %v3816
        %v3818 = vpop.f32.mrb[0].mxu0
        %v3819 = vadd.f32 %v3146, %v3818
        %v3820 = vpop.f32.mrb[0].mxu0
        %v3821 = vadd.f32 %v3148, %v3820
        %v3822 = vpop.f32.mrb[0].mxu0
        %v3823 = vadd.f32 %v3150, %v3822
        %3824 = vmatprep.mubr.bf16.mxu0 %v1732
        %3825 = vmatmul.mubr.bf16.gmra.mrb[0].mxu0 %v1731
        %v3826 = vpop.f32.mrb[0].mxu0
        %v3827 = vadd.f32 %v3154, %v3826
        %v3828 = vpop.f32.mrb[0].mxu0
        %v3829 = vadd.f32 %v3156, %v3828
        %v3830 = vpop.f32.mrb[0].mxu0
        %v3831 = vadd.f32 %v3158, %v3830
        %v3832 = vpop.f32.mrb[0].mxu0
        %v3833 = vadd.f32 %v3160, %v3832
        %3834 = vmatprep.mubr.bf16.mxu0 %v1740
        %3835 = vmatmul.mubr.bf16.gmra.mrb[0].mxu0 %v1739
        %v3836 = vpop.f32.mrb[0].mxu0
        %v3837 = vadd.f32 %v3164, %v3836
        %v3838 = vpop.f32.mrb[0].mxu0
        %v3839 = vadd.f32 %v3166, %v3838
        %v3840 = vpop.f32.mrb[0].mxu0
        %v3841 = vadd.f32 %v3168, %v3840
        %v3842 = vpop.f32.mrb[0].mxu0
        %v3843 = vadd.f32 %v3170, %v3842
        %3844 = vmatprep.mubr.bf16.mxu0 %v1748
        %3845 = vmatmul.mubr.bf16.gmra.mrb[0].mxu0 %v1747
        %v3846 = vpop.f32.mrb[0].mxu0
        %v3847 = vadd.f32 %v3174, %v3846
        %v3848 = vpop.f32.mrb[0].mxu0
        %v3849 = vadd.f32 %v3176, %v3848
        %v3850 = vpop.f32.mrb[0].mxu0
        %v3851 = vadd.f32 %v3178, %v3850
        %v3852 = vpop.f32.mrb[0].mxu0
        %v3853 = vadd.f32 %v3180, %v3852
        %3854 = vmatprep.mubr.bf16.mxu0 %v1756
        %3855 = vmatmul.mubr.bf16.gmra.mrb[0].mxu0 %v1755
        %v3856 = vpop.f32.mrb[0].mxu0
        %v3857 = vadd.f32 %v3184, %v3856
        %v3858 = vpop.f32.mrb[0].mxu0
        %v3859 = vadd.f32 %v3186, %v3858
        %v3860 = vpop.f32.mrb[0].mxu0
        %v3861 = vadd.f32 %v3188, %v3860
        %v3862 = vpop.f32.mrb[0].mxu0
        %v3863 = vadd.f32 %v3190, %v3862
        %3864 = vmatprep.mubr.bf16.mxu0 %v1764
        %3865 = vmatmul.mubr.bf16.gmra.mrb[0].mxu0 %v1763
        %v3866 = vpop.f32.mrb[0].mxu0
        %v3867 = vadd.f32 %v3194, %v3866
        %v3868 = vpop.f32.mrb[0].mxu0
        %v3869 = vadd.f32 %v3196, %v3868
        %v3870 = vpop.f32.mrb[0].mxu0
        %v3871 = vadd.f32 %v3198, %v3870
        %v3872 = vpop.f32.mrb[0].mxu0
        %v3873 = vadd.f32 %v3200, %v3872
        %3874 = vmatprep.mubr.bf16.mxu0 %v1772
        %3875 = vmatmul.mubr.bf16.gmra.mrb[0].mxu0 %v1771
        %v3876 = vpop.f32.mrb[0].mxu0
        %v3877 = vadd.f32 %v3204, %v3876
        %v3878 = vpop.f32.mrb[0].mxu0
        %v3879 = vadd.f32 %v3206, %v3878
        %v3880 = vpop.f32.mrb[0].mxu0
        %v3881 = vadd.f32 %v3208, %v3880
        %v3882 = vpop.f32.mrb[0].mxu0
        %v3883 = vadd.f32 %v3210, %v3882
        %3884 = vmatprep.mubr.bf16.mxu0 %v1780
        %3885 = vmatmul.mubr.bf16.gmra.mrb[0].mxu0 %v1779
        %v3886 = vpop.f32.mrb[0].mxu0
        %v3887 = vadd.f32 %v3214, %v3886
        %v3888 = vpop.f32.mrb[0].mxu0
        %v3889 = vadd.f32 %v3216, %v3888
        %v3890 = vpop.f32.mrb[0].mxu0
        %v3891 = vadd.f32 %v3218, %v3890
        %v3892 = vpop.f32.mrb[0].mxu0
        %v3893 = vadd.f32 %v3220, %v3892
        %3894 = vmatprep.mubr.bf16.mxu0 %v1788
        %3895 = vmatmul.mubr.bf16.gmra.mrb[0].mxu0 %v1787
        %v3896 = vpop.f32.mrb[0].mxu0
        %v3897 = vadd.f32 %v3224, %v3896
        %v3898 = vpop.f32.mrb[0].mxu0
        %v3899 = vadd.f32 %v3226, %v3898
        %v3900 = vpop.f32.mrb[0].mxu0
        %v3901 = vadd.f32 %v3228, %v3900
        %v3902 = vpop.f32.mrb[0].mxu0
        %v3903 = vadd.f32 %v3230, %v3902
        %3904 = vmatprep.mubr.bf16.mxu0 %v1796
        %3905 = vmatmul.mubr.bf16.gmra.mrb[0].mxu0 %v1795
        %v3906 = vpop.f32.mrb[0].mxu0
        %v3907 = vadd.f32 %v3234, %v3906
        %v3908 = vpop.f32.mrb[0].mxu0
        %v3909 = vadd.f32 %v3236, %v3908
        %v3910 = vpop.f32.mrb[0].mxu0
        %v3911 = vadd.f32 %v3238, %v3910
        %v3912 = vpop.f32.mrb[0].mxu0
        %v3913 = vadd.f32 %v3240, %v3912
        %3914 = vmatprep.mubr.bf16.mxu0 %v1804
        %3915 = vmatmul.mubr.bf16.gmra.mrb[0].mxu0 %v1803
        %v3916 = vpop.f32.mrb[0].mxu0
        %v3917 = vadd.f32 %v3244, %v3916
        %v3918 = vpop.f32.mrb[0].mxu0
        %v3919 = vadd.f32 %v3246, %v3918
        %v3920 = vpop.f32.mrb[0].mxu0
        %v3921 = vadd.f32 %v3248, %v3920
        %v3922 = vpop.f32.mrb[0].mxu0
        %v3923 = vadd.f32 %v3250, %v3922
        %3924 = vmatprep.mubr.bf16.mxu0 %v1812
        %3925 = vmatmul.mubr.bf16.gmra.mrb[0].mxu0 %v1811
        %v3926 = vpop.f32.mrb[0].mxu0
        %v3927 = vadd.f32 %v3254, %v3926
        %v3928 = vpop.f32.mrb[0].mxu0
        %v3929 = vadd.f32 %v3256, %v3928
        %v3930 = vpop.f32.mrb[0].mxu0
        %v3931 = vadd.f32 %v3258, %v3930
        %v3932 = vpop.f32.mrb[0].mxu0
        %v3933 = vadd.f32 %v3260, %v3932
        %3934 = vmatprep.mubr.bf16.mxu0 %v1820
        %3935 = vmatmul.mubr.bf16.gmra.mrb[0].mxu0 %v1819
        %v3936 = vpop.f32.mrb[0].mxu0
        %v3937 = vadd.f32 %v3264, %v3936
        %v3938 = vpop.f32.mrb[0].mxu0
        %v3939 = vadd.f32 %v3266, %v3938
        %v3940 = vpop.f32.mrb[0].mxu0
        %v3941 = vadd.f32 %v3268, %v3940
        %v3942 = vpop.f32.mrb[0].mxu0
        %v3943 = vadd.f32 %v3270, %v3942
        %3944 = vmatprep.mubr.bf16.mxu0 %v1828
        %3945 = vmatmul.mubr.bf16.gmra.mrb[0].mxu0 %v1827
        %v3946 = vpop.f32.mrb[0].mxu0
        %v3947 = vadd.f32 %v3274, %v3946
        %v3948 = vpop.f32.mrb[0].mxu0
        %v3949 = vadd.f32 %v3276, %v3948
        %v3950 = vpop.f32.mrb[0].mxu0
        %v3951 = vadd.f32 %v3278, %v3950
        %v3952 = vpop.f32.mrb[0].mxu0
        %v3953 = vadd.f32 %v3280, %v3952
        %3954 = vmatprep.mubr.bf16.mxu0 %v1836
        %3955 = vmatmul.mubr.bf16.gmra.mrb[0].mxu0 %v1835
        %v3956 = vpop.f32.mrb[0].mxu0
        %v3957 = vadd.f32 %v3284, %v3956
        %v3958 = vpop.f32.mrb[0].mxu0
        %v3959 = vadd.f32 %v3286, %v3958
        %v3960 = vpop.f32.mrb[0].mxu0
        %v3961 = vadd.f32 %v3288, %v3960
        %v3962 = vpop.f32.mrb[0].mxu0
        %v3963 = vadd.f32 %v3290, %v3962
        %3964 = vmatprep.mubr.bf16.mxu0 %v1844
        %3965 = vmatmul.mubr.bf16.gmra.mrb[0].mxu0 %v1843
        %v3966 = vpop.f32.mrb[0].mxu0
        %v3967 = vadd.f32 %v3294, %v3966
        %v3968 = vpop.f32.mrb[0].mxu0
        %v3969 = vadd.f32 %v3296, %v3968
        %v3970 = vpop.f32.mrb[0].mxu0
        %v3971 = vadd.f32 %v3298, %v3970
        %v3972 = vpop.f32.mrb[0].mxu0
        %v3973 = vadd.f32 %v3300, %v3972
        %3974 = vdwg.mxu0
        %3975 = vmatprep.subr.bf16.mxu0 %v2438
        %3976 = vmatpush1.bf16.msra.mxu0 %v2437
        %3977 = vmatprep.subr.bf16.mxu0 %v2440
        %3978 = vmatpush1.bf16.msra.mxu0 %v2439
        %3979 = vmatprep.subr.bf16.mxu0 %v2442
        %3980 = vmatpush1.bf16.msra.mxu0 %v2441
        %3981 = vmatprep.subr.bf16.mxu0 %v2444
        %3982 = vmatpush1.bf16.msra.mxu0 %v2443
        %3983 = vmatprep.subr.bf16.mxu0 %v2446
        %3984 = vmatpush1.bf16.msra.mxu0 %v2445
        %3985 = vmatprep.subr.bf16.mxu0 %v2448
        %3986 = vmatpush1.bf16.msra.mxu0 %v2447
        %3987 = vmatprep.subr.bf16.mxu0 %v2450
        %3988 = vmatpush1.bf16.msra.mxu0 %v2449
        %3989 = vmatprep.subr.bf16.mxu0 %v2452
        %3990 = vmatpush1.bf16.msra.mxu0 %v2451
        %3991 = vmatprep.subr.bf16.mxu0 %v2454
        %3992 = vmatpush1.bf16.msra.mxu0 %v2453
        %3993 = vmatprep.subr.bf16.mxu0 %v2456
        %3994 = vmatpush1.bf16.msra.mxu0 %v2455
        %3995 = vmatprep.subr.bf16.mxu0 %v2458
        %3996 = vmatpush1.bf16.msra.mxu0 %v2457
        %3997 = vmatprep.subr.bf16.mxu0 %v2460
        %3998 = vmatpush1.bf16.msra.mxu0 %v2459
        %3999 = vmatprep.subr.bf16.mxu0 %v2462
        %4000 = vmatpush1.bf16.msra.mxu0 %v2461
        %4001 = vmatprep.subr.bf16.mxu0 %v2464
        %4002 = vmatpush1.bf16.msra.mxu0 %v2463
        %4003 = vmatprep.subr.bf16.mxu0 %v2466
        %4004 = vmatpush1.bf16.msra.mxu0 %v2465
        %4005 = vmatprep.subr.bf16.mxu0 %v2468
        %4006 = vmatpush1.bf16.msra.mxu0 %v2467
        %4007 = vmatprep.mubr.bf16.mxu0 %v1342
        %4008 = vmatmul.mubr.bf16.gmra.mrb[0].mxu0 %v1341
        %v4009 = vpop.f32.mrb[0].mxu0
        %v4010 = vadd.f32 %v3337, %v4009
        %v4011 = vpop.f32.mrb[0].mxu0
        %v4012 = vadd.f32 %v3339, %v4011
        %v4013 = vpop.f32.mrb[0].mxu0
        %v4014 = vadd.f32 %v3341, %v4013
        %v4015 = vpop.f32.mrb[0].mxu0
        %v4016 = vadd.f32 %v3343, %v4015
        %4017 = vmatprep.mubr.bf16.mxu0 %v1350
        %4018 = vmatmul.mubr.bf16.gmra.mrb[0].mxu0 %v1349
        %v4019 = vpop.f32.mrb[0].mxu0
        %v4020 = vadd.f32 %v3347, %v4019
        %v4021 = vpop.f32.mrb[0].mxu0
        %v4022 = vadd.f32 %v3349, %v4021
        %v4023 = vpop.f32.mrb[0].mxu0
        %v4024 = vadd.f32 %v3351, %v4023
        %v4025 = vpop.f32.mrb[0].mxu0
        %v4026 = vadd.f32 %v3353, %v4025
        %4027 = vmatprep.mubr.bf16.mxu0 %v1358
        %4028 = vmatmul.mubr.bf16.gmra.mrb[0].mxu0 %v1357
        %v4029 = vpop.f32.mrb[0].mxu0
        %v4030 = vadd.f32 %v3357, %v4029
        %v4031 = vpop.f32.mrb[0].mxu0
        %v4032 = vadd.f32 %v3359, %v4031
        %v4033 = vpop.f32.mrb[0].mxu0
        %v4034 = vadd.f32 %v3361, %v4033
        %v4035 = vpop.f32.mrb[0].mxu0
        %v4036 = vadd.f32 %v3363, %v4035
        %4037 = vmatprep.mubr.bf16.mxu0 %v1366
        %4038 = vmatmul.mubr.bf16.gmra.mrb[0].mxu0 %v1365
        %v4039 = vpop.f32.mrb[0].mxu0
        %v4040 = vadd.f32 %v3367, %v4039
        %v4041 = vpop.f32.mrb[0].mxu0
        %v4042 = vadd.f32 %v3369, %v4041
        %v4043 = vpop.f32.mrb[0].mxu0
        %v4044 = vadd.f32 %v3371, %v4043
        %v4045 = vpop.f32.mrb[0].mxu0
        %v4046 = vadd.f32 %v3373, %v4045
        %4047 = vmatprep.mubr.bf16.mxu0 %v1374
        %4048 = vmatmul.mubr.bf16.gmra.mrb[0].mxu0 %v1373
        %v4049 = vpop.f32.mrb[0].mxu0
        %v4050 = vadd.f32 %v3377, %v4049
        %v4051 = vpop.f32.mrb[0].mxu0
        %v4052 = vadd.f32 %v3379, %v4051
        %v4053 = vpop.f32.mrb[0].mxu0
        %v4054 = vadd.f32 %v3381, %v4053
        %v4055 = vpop.f32.mrb[0].mxu0
        %v4056 = vadd.f32 %v3383, %v4055
        %4057 = vmatprep.mubr.bf16.mxu0 %v1382
        %4058 = vmatmul.mubr.bf16.gmra.mrb[0].mxu0 %v1381
        %v4059 = vpop.f32.mrb[0].mxu0
        %v4060 = vadd.f32 %v3387, %v4059
        %v4061 = vpop.f32.mrb[0].mxu0
        %v4062 = vadd.f32 %v3389, %v4061
        %v4063 = vpop.f32.mrb[0].mxu0
        %v4064 = vadd.f32 %v3391, %v4063
        %v4065 = vpop.f32.mrb[0].mxu0
        %v4066 = vadd.f32 %v3393, %v4065
        %4067 = vmatprep.mubr.bf16.mxu0 %v1390
        %4068 = vmatmul.mubr.bf16.gmra.mrb[0].mxu0 %v1389
        %v4069 = vpop.f32.mrb[0].mxu0
        %v4070 = vadd.f32 %v3397, %v4069
        %v4071 = vpop.f32.mrb[0].mxu0
        %v4072 = vadd.f32 %v3399, %v4071
        %v4073 = vpop.f32.mrb[0].mxu0
        %v4074 = vadd.f32 %v3401, %v4073
        %v4075 = vpop.f32.mrb[0].mxu0
        %v4076 = vadd.f32 %v3403, %v4075
        %4077 = vmatprep.mubr.bf16.mxu0 %v1398
        %4078 = vmatmul.mubr.bf16.gmra.mrb[0].mxu0 %v1397
        %v4079 = vpop.f32.mrb[0].mxu0
        %v4080 = vadd.f32 %v3407, %v4079
        %v4081 = vpop.f32.mrb[0].mxu0
        %v4082 = vadd.f32 %v3409, %v4081
        %v4083 = vpop.f32.mrb[0].mxu0
        %v4084 = vadd.f32 %v3411, %v4083
        %v4085 = vpop.f32.mrb[0].mxu0
        %v4086 = vadd.f32 %v3413, %v4085
        %4087 = vmatprep.mubr.bf16.mxu0 %v1406
        %4088 = vmatmul.mubr.bf16.gmra.mrb[0].mxu0 %v1405
        %v4089 = vpop.f32.mrb[0].mxu0
        %v4090 = vadd.f32 %v3417, %v4089
        %v4091 = vpop.f32.mrb[0].mxu0
        %v4092 = vadd.f32 %v3419, %v4091
        %v4093 = vpop.f32.mrb[0].mxu0
        %v4094 = vadd.f32 %v3421, %v4093
        %v4095 = vpop.f32.mrb[0].mxu0
        %v4096 = vadd.f32 %v3423, %v4095
        %4097 = vmatprep.mubr.bf16.mxu0 %v1414
        %4098 = vmatmul.mubr.bf16.gmra.mrb[0].mxu0 %v1413
        %v4099 = vpop.f32.mrb[0].mxu0
        %v4100 = vadd.f32 %v3427, %v4099
        %v4101 = vpop.f32.mrb[0].mxu0
        %v4102 = vadd.f32 %v3429, %v4101
        %v4103 = vpop.f32.mrb[0].mxu0
        %v4104 = vadd.f32 %v3431, %v4103
        %v4105 = vpop.f32.mrb[0].mxu0
        %v4106 = vadd.f32 %v3433, %v4105
        %4107 = vmatprep.mubr.bf16.mxu0 %v1422
        %4108 = vmatmul.mubr.bf16.gmra.mrb[0].mxu0 %v1421
        %v4109 = vpop.f32.mrb[0].mxu0
        %v4110 = vadd.f32 %v3437, %v4109
        %v4111 = vpop.f32.mrb[0].mxu0
        %v4112 = vadd.f32 %v3439, %v4111
        %v4113 = vpop.f32.mrb[0].mxu0
        %v4114 = vadd.f32 %v3441, %v4113
        %v4115 = vpop.f32.mrb[0].mxu0
        %v4116 = vadd.f32 %v3443, %v4115
        %4117 = vmatprep.mubr.bf16.mxu0 %v1430
        %4118 = vmatmul.mubr.bf16.gmra.mrb[0].mxu0 %v1429
        %v4119 = vpop.f32.mrb[0].mxu0
        %v4120 = vadd.f32 %v3447, %v4119
        %v4121 = vpop.f32.mrb[0].mxu0
        %v4122 = vadd.f32 %v3449, %v4121
        %v4123 = vpop.f32.mrb[0].mxu0
        %v4124 = vadd.f32 %v3451, %v4123
        %v4125 = vpop.f32.mrb[0].mxu0
        %v4126 = vadd.f32 %v3453, %v4125
        %4127 = vmatprep.mubr.bf16.mxu0 %v1438
        %4128 = vmatmul.mubr.bf16.gmra.mrb[0].mxu0 %v1437
        %v4129 = vpop.f32.mrb[0].mxu0
        %v4130 = vadd.f32 %v3457, %v4129
        %v4131 = vpop.f32.mrb[0].mxu0
        %v4132 = vadd.f32 %v3459, %v4131
        %v4133 = vpop.f32.mrb[0].mxu0
        %v4134 = vadd.f32 %v3461, %v4133
        %v4135 = vpop.f32.mrb[0].mxu0
        %v4136 = vadd.f32 %v3463, %v4135
        %4137 = vmatprep.mubr.bf16.mxu0 %v1446
        %4138 = vmatmul.mubr.bf16.gmra.mrb[0].mxu0 %v1445
        %v4139 = vpop.f32.mrb[0].mxu0
        %v4140 = vadd.f32 %v3467, %v4139
        %v4141 = vpop.f32.mrb[0].mxu0
        %v4142 = vadd.f32 %v3469, %v4141
        %v4143 = vpop.f32.mrb[0].mxu0
        %v4144 = vadd.f32 %v3471, %v4143
        %v4145 = vpop.f32.mrb[0].mxu0
        %v4146 = vadd.f32 %v3473, %v4145
        %4147 = vmatprep.mubr.bf16.mxu0 %v1454
        %4148 = vmatmul.mubr.bf16.gmra.mrb[0].mxu0 %v1453
        %v4149 = vpop.f32.mrb[0].mxu0
        %v4150 = vadd.f32 %v3477, %v4149
        %v4151 = vpop.f32.mrb[0].mxu0
        %v4152 = vadd.f32 %v3479, %v4151
        %v4153 = vpop.f32.mrb[0].mxu0
        %v4154 = vadd.f32 %v3481, %v4153
        %v4155 = vpop.f32.mrb[0].mxu0
        %v4156 = vadd.f32 %v3483, %v4155
        %4157 = vmatprep.mubr.bf16.mxu0 %v1462
        %4158 = vmatmul.mubr.bf16.gmra.mrb[0].mxu0 %v1461
        %v4159 = vpop.f32.mrb[0].mxu0
        %v4160 = vadd.f32 %v3487, %v4159
        %v4161 = vpop.f32.mrb[0].mxu0
        %v4162 = vadd.f32 %v3489, %v4161
        %v4163 = vpop.f32.mrb[0].mxu0
        %v4164 = vadd.f32 %v3491, %v4163
        %v4165 = vpop.f32.mrb[0].mxu0
        %v4166 = vadd.f32 %v3493, %v4165
        %4167 = vmatprep.mubr.bf16.mxu0 %v1470
        %4168 = vmatmul.mubr.bf16.gmra.mrb[0].mxu0 %v1469
        %v4169 = vpop.f32.mrb[0].mxu0
        %v4170 = vadd.f32 %v3497, %v4169
        %v4171 = vpop.f32.mrb[0].mxu0
        %v4172 = vadd.f32 %v3499, %v4171
        %v4173 = vpop.f32.mrb[0].mxu0
        %v4174 = vadd.f32 %v3501, %v4173
        %v4175 = vpop.f32.mrb[0].mxu0
        %v4176 = vadd.f32 %v3503, %v4175
        %4177 = vmatprep.mubr.bf16.mxu0 %v1478
        %4178 = vmatmul.mubr.bf16.gmra.mrb[0].mxu0 %v1477
        %v4179 = vpop.f32.mrb[0].mxu0
        %v4180 = vadd.f32 %v3507, %v4179
        %v4181 = vpop.f32.mrb[0].mxu0
        %v4182 = vadd.f32 %v3509, %v4181
        %v4183 = vpop.f32.mrb[0].mxu0
        %v4184 = vadd.f32 %v3511, %v4183
        %v4185 = vpop.f32.mrb[0].mxu0
        %v4186 = vadd.f32 %v3513, %v4185
        %4187 = vmatprep.mubr.bf16.mxu0 %v1486
        %4188 = vmatmul.mubr.bf16.gmra.mrb[0].mxu0 %v1485
        %v4189 = vpop.f32.mrb[0].mxu0
        %v4190 = vadd.f32 %v3517, %v4189
        %v4191 = vpop.f32.mrb[0].mxu0
        %v4192 = vadd.f32 %v3519, %v4191
        %v4193 = vpop.f32.mrb[0].mxu0
        %v4194 = vadd.f32 %v3521, %v4193
        %v4195 = vpop.f32.mrb[0].mxu0
        %v4196 = vadd.f32 %v3523, %v4195
        %4197 = vmatprep.mubr.bf16.mxu0 %v1494
        %4198 = vmatmul.mubr.bf16.gmra.mrb[0].mxu0 %v1493
        %v4199 = vpop.f32.mrb[0].mxu0
        %v4200 = vadd.f32 %v3527, %v4199
        %v4201 = vpop.f32.mrb[0].mxu0
        %v4202 = vadd.f32 %v3529, %v4201
        %v4203 = vpop.f32.mrb[0].mxu0
        %v4204 = vadd.f32 %v3531, %v4203
        %v4205 = vpop.f32.mrb[0].mxu0
        %v4206 = vadd.f32 %v3533, %v4205
        %4207 = vmatprep.mubr.bf16.mxu0 %v1502
        %4208 = vmatmul.mubr.bf16.gmra.mrb[0].mxu0 %v1501
        %v4209 = vpop.f32.mrb[0].mxu0
        %v4210 = vadd.f32 %v3537, %v4209
        %v4211 = vpop.f32.mrb[0].mxu0
        %v4212 = vadd.f32 %v3539, %v4211
        %v4213 = vpop.f32.mrb[0].mxu0
        %v4214 = vadd.f32 %v3541, %v4213
        %v4215 = vpop.f32.mrb[0].mxu0
        %v4216 = vadd.f32 %v3543, %v4215
        %4217 = vmatprep.mubr.bf16.mxu0 %v1510
        %4218 = vmatmul.mubr.bf16.gmra.mrb[0].mxu0 %v1509
        %v4219 = vpop.f32.mrb[0].mxu0
        %v4220 = vadd.f32 %v3547, %v4219
        %v4221 = vpop.f32.mrb[0].mxu0
        %v4222 = vadd.f32 %v3549, %v4221
        %v4223 = vpop.f32.mrb[0].mxu0
        %v4224 = vadd.f32 %v3551, %v4223
        %v4225 = vpop.f32.mrb[0].mxu0
        %v4226 = vadd.f32 %v3553, %v4225
        %4227 = vmatprep.mubr.bf16.mxu0 %v1518
        %4228 = vmatmul.mubr.bf16.gmra.mrb[0].mxu0 %v1517
        %v4229 = vpop.f32.mrb[0].mxu0
        %v4230 = vadd.f32 %v3557, %v4229
        %v4231 = vpop.f32.mrb[0].mxu0
        %v4232 = vadd.f32 %v3559, %v4231
        %v4233 = vpop.f32.mrb[0].mxu0
        %v4234 = vadd.f32 %v3561, %v4233
        %v4235 = vpop.f32.mrb[0].mxu0
        %v4236 = vadd.f32 %v3563, %v4235
        %4237 = vmatprep.mubr.bf16.mxu0 %v1526
        %4238 = vmatmul.mubr.bf16.gmra.mrb[0].mxu0 %v1525
        %v4239 = vpop.f32.mrb[0].mxu0
        %v4240 = vadd.f32 %v3567, %v4239
        %v4241 = vpop.f32.mrb[0].mxu0
        %v4242 = vadd.f32 %v3569, %v4241
        %v4243 = vpop.f32.mrb[0].mxu0
        %v4244 = vadd.f32 %v3571, %v4243
        %v4245 = vpop.f32.mrb[0].mxu0
        %v4246 = vadd.f32 %v3573, %v4245
        %4247 = vmatprep.mubr.bf16.mxu0 %v1534
        %4248 = vmatmul.mubr.bf16.gmra.mrb[0].mxu0 %v1533
        %v4249 = vpop.f32.mrb[0].mxu0
        %v4250 = vadd.f32 %v3577, %v4249
        %v4251 = vpop.f32.mrb[0].mxu0
        %v4252 = vadd.f32 %v3579, %v4251
        %v4253 = vpop.f32.mrb[0].mxu0
        %v4254 = vadd.f32 %v3581, %v4253
        %v4255 = vpop.f32.mrb[0].mxu0
        %v4256 = vadd.f32 %v3583, %v4255
        %4257 = vmatprep.mubr.bf16.mxu0 %v1542
        %4258 = vmatmul.mubr.bf16.gmra.mrb[0].mxu0 %v1541
        %v4259 = vpop.f32.mrb[0].mxu0
        %v4260 = vadd.f32 %v3587, %v4259
        %v4261 = vpop.f32.mrb[0].mxu0
        %v4262 = vadd.f32 %v3589, %v4261
        %v4263 = vpop.f32.mrb[0].mxu0
        %v4264 = vadd.f32 %v3591, %v4263
        %v4265 = vpop.f32.mrb[0].mxu0
        %v4266 = vadd.f32 %v3593, %v4265
        %4267 = vmatprep.mubr.bf16.mxu0 %v1550
        %4268 = vmatmul.mubr.bf16.gmra.mrb[0].mxu0 %v1549
        %v4269 = vpop.f32.mrb[0].mxu0
        %v4270 = vadd.f32 %v3597, %v4269
        %v4271 = vpop.f32.mrb[0].mxu0
        %v4272 = vadd.f32 %v3599, %v4271
        %v4273 = vpop.f32.mrb[0].mxu0
        %v4274 = vadd.f32 %v3601, %v4273
        %v4275 = vpop.f32.mrb[0].mxu0
        %v4276 = vadd.f32 %v3603, %v4275
        %4277 = vmatprep.mubr.bf16.mxu0 %v1558
        %4278 = vmatmul.mubr.bf16.gmra.mrb[0].mxu0 %v1557
        %v4279 = vpop.f32.mrb[0].mxu0
        %v4280 = vadd.f32 %v3607, %v4279
        %v4281 = vpop.f32.mrb[0].mxu0
        %v4282 = vadd.f32 %v3609, %v4281
        %v4283 = vpop.f32.mrb[0].mxu0
        %v4284 = vadd.f32 %v3611, %v4283
        %v4285 = vpop.f32.mrb[0].mxu0
        %v4286 = vadd.f32 %v3613, %v4285
        %4287 = vmatprep.mubr.bf16.mxu0 %v1566
        %4288 = vmatmul.mubr.bf16.gmra.mrb[0].mxu0 %v1565
        %v4289 = vpop.f32.mrb[0].mxu0
        %v4290 = vadd.f32 %v3617, %v4289
        %v4291 = vpop.f32.mrb[0].mxu0
        %v4292 = vadd.f32 %v3619, %v4291
        %v4293 = vpop.f32.mrb[0].mxu0
        %v4294 = vadd.f32 %v3621, %v4293
        %v4295 = vpop.f32.mrb[0].mxu0
        %v4296 = vadd.f32 %v3623, %v4295
        %4297 = vmatprep.mubr.bf16.mxu0 %v1574
        %4298 = vmatmul.mubr.bf16.gmra.mrb[0].mxu0 %v1573
        %v4299 = vpop.f32.mrb[0].mxu0
        %v4300 = vadd.f32 %v3627, %v4299
        %v4301 = vpop.f32.mrb[0].mxu0
        %v4302 = vadd.f32 %v3629, %v4301
        %v4303 = vpop.f32.mrb[0].mxu0
        %v4304 = vadd.f32 %v3631, %v4303
        %v4305 = vpop.f32.mrb[0].mxu0
        %v4306 = vadd.f32 %v3633, %v4305
        %4307 = vmatprep.mubr.bf16.mxu0 %v1582
        %4308 = vmatmul.mubr.bf16.gmra.mrb[0].mxu0 %v1581
        %v4309 = vpop.f32.mrb[0].mxu0
        %v4310 = vadd.f32 %v3637, %v4309
        %v4311 = vpop.f32.mrb[0].mxu0
        %v4312 = vadd.f32 %v3639, %v4311
        %v4313 = vpop.f32.mrb[0].mxu0
        %v4314 = vadd.f32 %v3641, %v4313
        %v4315 = vpop.f32.mrb[0].mxu0
        %v4316 = vadd.f32 %v3643, %v4315
        %4317 = vmatprep.mubr.bf16.mxu0 %v1590
        %4318 = vmatmul.mubr.bf16.gmra.mrb[0].mxu0 %v1589
        %v4319 = vpop.f32.mrb[0].mxu0
        %v4320 = vadd.f32 %v3647, %v4319
        %v4321 = vpop.f32.mrb[0].mxu0
        %v4322 = vadd.f32 %v3649, %v4321
        %v4323 = vpop.f32.mrb[0].mxu0
        %v4324 = vadd.f32 %v3651, %v4323
        %v4325 = vpop.f32.mrb[0].mxu0
        %v4326 = vadd.f32 %v3653, %v4325
        %4327 = vmatprep.mubr.bf16.mxu0 %v1598
        %4328 = vmatmul.mubr.bf16.gmra.mrb[0].mxu0 %v1597
        %v4329 = vpop.f32.mrb[0].mxu0
        %v4330 = vadd.f32 %v3657, %v4329
        %v4331 = vpop.f32.mrb[0].mxu0
        %v4332 = vadd.f32 %v3659, %v4331
        %v4333 = vpop.f32.mrb[0].mxu0
        %v4334 = vadd.f32 %v3661, %v4333
        %v4335 = vpop.f32.mrb[0].mxu0
        %v4336 = vadd.f32 %v3663, %v4335
        %4337 = vmatprep.mubr.bf16.mxu0 %v1606
        %4338 = vmatmul.mubr.bf16.gmra.mrb[0].mxu0 %v1605
        %v4339 = vpop.f32.mrb[0].mxu0
        %v4340 = vadd.f32 %v3667, %v4339
        %v4341 = vpop.f32.mrb[0].mxu0
        %v4342 = vadd.f32 %v3669, %v4341
        %v4343 = vpop.f32.mrb[0].mxu0
        %v4344 = vadd.f32 %v3671, %v4343
        %v4345 = vpop.f32.mrb[0].mxu0
        %v4346 = vadd.f32 %v3673, %v4345
        %4347 = vmatprep.mubr.bf16.mxu0 %v1614
        %4348 = vmatmul.mubr.bf16.gmra.mrb[0].mxu0 %v1613
        %v4349 = vpop.f32.mrb[0].mxu0
        %v4350 = vadd.f32 %v3677, %v4349
        %v4351 = vpop.f32.mrb[0].mxu0
        %v4352 = vadd.f32 %v3679, %v4351
        %v4353 = vpop.f32.mrb[0].mxu0
        %v4354 = vadd.f32 %v3681, %v4353
        %v4355 = vpop.f32.mrb[0].mxu0
        %v4356 = vadd.f32 %v3683, %v4355
        %4357 = vmatprep.mubr.bf16.mxu0 %v1622
        %4358 = vmatmul.mubr.bf16.gmra.mrb[0].mxu0 %v1621
        %v4359 = vpop.f32.mrb[0].mxu0
        %v4360 = vadd.f32 %v3687, %v4359
        %v4361 = vpop.f32.mrb[0].mxu0
        %v4362 = vadd.f32 %v3689, %v4361
        %v4363 = vpop.f32.mrb[0].mxu0
        %v4364 = vadd.f32 %v3691, %v4363
        %v4365 = vpop.f32.mrb[0].mxu0
        %v4366 = vadd.f32 %v3693, %v4365
        %4367 = vmatprep.mubr.bf16.mxu0 %v1630
        %4368 = vmatmul.mubr.bf16.gmra.mrb[0].mxu0 %v1629
        %v4369 = vpop.f32.mrb[0].mxu0
        %v4370 = vadd.f32 %v3697, %v4369
        %v4371 = vpop.f32.mrb[0].mxu0
        %v4372 = vadd.f32 %v3699, %v4371
        %v4373 = vpop.f32.mrb[0].mxu0
        %v4374 = vadd.f32 %v3701, %v4373
        %v4375 = vpop.f32.mrb[0].mxu0
        %v4376 = vadd.f32 %v3703, %v4375
        %4377 = vmatprep.mubr.bf16.mxu0 %v1638
        %4378 = vmatmul.mubr.bf16.gmra.mrb[0].mxu0 %v1637
        %v4379 = vpop.f32.mrb[0].mxu0
        %v4380 = vadd.f32 %v3707, %v4379
        %v4381 = vpop.f32.mrb[0].mxu0
        %v4382 = vadd.f32 %v3709, %v4381
        %v4383 = vpop.f32.mrb[0].mxu0
        %v4384 = vadd.f32 %v3711, %v4383
        %v4385 = vpop.f32.mrb[0].mxu0
        %v4386 = vadd.f32 %v3713, %v4385
        %4387 = vmatprep.mubr.bf16.mxu0 %v1646
        %4388 = vmatmul.mubr.bf16.gmra.mrb[0].mxu0 %v1645
        %v4389 = vpop.f32.mrb[0].mxu0
        %v4390 = vadd.f32 %v3717, %v4389
        %v4391 = vpop.f32.mrb[0].mxu0
        %v4392 = vadd.f32 %v3719, %v4391
        %v4393 = vpop.f32.mrb[0].mxu0
        %v4394 = vadd.f32 %v3721, %v4393
        %v4395 = vpop.f32.mrb[0].mxu0
        %v4396 = vadd.f32 %v3723, %v4395
        %4397 = vmatprep.mubr.bf16.mxu0 %v1654
        %4398 = vmatmul.mubr.bf16.gmra.mrb[0].mxu0 %v1653
        %v4399 = vpop.f32.mrb[0].mxu0
        %v4400 = vadd.f32 %v3727, %v4399
        %v4401 = vpop.f32.mrb[0].mxu0
        %v4402 = vadd.f32 %v3729, %v4401
        %v4403 = vpop.f32.mrb[0].mxu0
        %v4404 = vadd.f32 %v3731, %v4403
        %v4405 = vpop.f32.mrb[0].mxu0
        %v4406 = vadd.f32 %v3733, %v4405
        %4407 = vmatprep.mubr.bf16.mxu0 %v1662
        %4408 = vmatmul.mubr.bf16.gmra.mrb[0].mxu0 %v1661
        %v4409 = vpop.f32.mrb[0].mxu0
        %v4410 = vadd.f32 %v3737, %v4409
        %v4411 = vpop.f32.mrb[0].mxu0
        %v4412 = vadd.f32 %v3739, %v4411
        %v4413 = vpop.f32.mrb[0].mxu0
        %v4414 = vadd.f32 %v3741, %v4413
        %v4415 = vpop.f32.mrb[0].mxu0
        %v4416 = vadd.f32 %v3743, %v4415
        %4417 = vmatprep.mubr.bf16.mxu0 %v1670
        %4418 = vmatmul.mubr.bf16.gmra.mrb[0].mxu0 %v1669
        %v4419 = vpop.f32.mrb[0].mxu0
        %v4420 = vadd.f32 %v3747, %v4419
        %v4421 = vpop.f32.mrb[0].mxu0
        %v4422 = vadd.f32 %v3749, %v4421
        %v4423 = vpop.f32.mrb[0].mxu0
        %v4424 = vadd.f32 %v3751, %v4423
        %v4425 = vpop.f32.mrb[0].mxu0
        %v4426 = vadd.f32 %v3753, %v4425
        %4427 = vmatprep.mubr.bf16.mxu0 %v1678
        %4428 = vmatmul.mubr.bf16.gmra.mrb[0].mxu0 %v1677
        %v4429 = vpop.f32.mrb[0].mxu0
        %v4430 = vadd.f32 %v3757, %v4429
        %v4431 = vpop.f32.mrb[0].mxu0
        %v4432 = vadd.f32 %v3759, %v4431
        %v4433 = vpop.f32.mrb[0].mxu0
        %v4434 = vadd.f32 %v3761, %v4433
        %v4435 = vpop.f32.mrb[0].mxu0
        %v4436 = vadd.f32 %v3763, %v4435
        %4437 = vmatprep.mubr.bf16.mxu0 %v1686
        %4438 = vmatmul.mubr.bf16.gmra.mrb[0].mxu0 %v1685
        %v4439 = vpop.f32.mrb[0].mxu0
        %v4440 = vadd.f32 %v3767, %v4439
        %v4441 = vpop.f32.mrb[0].mxu0
        %v4442 = vadd.f32 %v3769, %v4441
        %v4443 = vpop.f32.mrb[0].mxu0
        %v4444 = vadd.f32 %v3771, %v4443
        %v4445 = vpop.f32.mrb[0].mxu0
        %v4446 = vadd.f32 %v3773, %v4445
        %4447 = vmatprep.mubr.bf16.mxu0 %v1694
        %4448 = vmatmul.mubr.bf16.gmra.mrb[0].mxu0 %v1693
        %v4449 = vpop.f32.mrb[0].mxu0
        %v4450 = vadd.f32 %v3777, %v4449
        %v4451 = vpop.f32.mrb[0].mxu0
        %v4452 = vadd.f32 %v3779, %v4451
        %v4453 = vpop.f32.mrb[0].mxu0
        %v4454 = vadd.f32 %v3781, %v4453
        %v4455 = vpop.f32.mrb[0].mxu0
        %v4456 = vadd.f32 %v3783, %v4455
        %4457 = vmatprep.mubr.bf16.mxu0 %v1702
        %4458 = vmatmul.mubr.bf16.gmra.mrb[0].mxu0 %v1701
        %v4459 = vpop.f32.mrb[0].mxu0
        %v4460 = vadd.f32 %v3787, %v4459
        %v4461 = vpop.f32.mrb[0].mxu0
        %v4462 = vadd.f32 %v3789, %v4461
        %v4463 = vpop.f32.mrb[0].mxu0
        %v4464 = vadd.f32 %v3791, %v4463
        %v4465 = vpop.f32.mrb[0].mxu0
        %v4466 = vadd.f32 %v3793, %v4465
        %4467 = vmatprep.mubr.bf16.mxu0 %v1710
        %4468 = vmatmul.mubr.bf16.gmra.mrb[0].mxu0 %v1709
        %v4469 = vpop.f32.mrb[0].mxu0
        %v4470 = vadd.f32 %v3797, %v4469
        %v4471 = vpop.f32.mrb[0].mxu0
        %v4472 = vadd.f32 %v3799, %v4471
        %v4473 = vpop.f32.mrb[0].mxu0
        %v4474 = vadd.f32 %v3801, %v4473
        %v4475 = vpop.f32.mrb[0].mxu0
        %v4476 = vadd.f32 %v3803, %v4475
        %4477 = vmatprep.mubr.bf16.mxu0 %v1718
        %4478 = vmatmul.mubr.bf16.gmra.mrb[0].mxu0 %v1717
        %v4479 = vpop.f32.mrb[0].mxu0
        %v4480 = vadd.f32 %v3807, %v4479
        %v4481 = vpop.f32.mrb[0].mxu0
        %v4482 = vadd.f32 %v3809, %v4481
        %v4483 = vpop.f32.mrb[0].mxu0
        %v4484 = vadd.f32 %v3811, %v4483
        %v4485 = vpop.f32.mrb[0].mxu0
        %v4486 = vadd.f32 %v3813, %v4485
        %4487 = vmatprep.mubr.bf16.mxu0 %v1726
        %4488 = vmatmul.mubr.bf16.gmra.mrb[0].mxu0 %v1725
        %v4489 = vpop.f32.mrb[0].mxu0
        %v4490 = vadd.f32 %v3817, %v4489
        %v4491 = vpop.f32.mrb[0].mxu0
        %v4492 = vadd.f32 %v3819, %v4491
        %v4493 = vpop.f32.mrb[0].mxu0
        %v4494 = vadd.f32 %v3821, %v4493
        %v4495 = vpop.f32.mrb[0].mxu0
        %v4496 = vadd.f32 %v3823, %v4495
        %4497 = vmatprep.mubr.bf16.mxu0 %v1734
        %4498 = vmatmul.mubr.bf16.gmra.mrb[0].mxu0 %v1733
        %v4499 = vpop.f32.mrb[0].mxu0
        %v4500 = vadd.f32 %v3827, %v4499
        %v4501 = vpop.f32.mrb[0].mxu0
        %v4502 = vadd.f32 %v3829, %v4501
        %v4503 = vpop.f32.mrb[0].mxu0
        %v4504 = vadd.f32 %v3831, %v4503
        %v4505 = vpop.f32.mrb[0].mxu0
        %v4506 = vadd.f32 %v3833, %v4505
        %4507 = vmatprep.mubr.bf16.mxu0 %v1742
        %4508 = vmatmul.mubr.bf16.gmra.mrb[0].mxu0 %v1741
        %v4509 = vpop.f32.mrb[0].mxu0
        %v4510 = vadd.f32 %v3837, %v4509
        %v4511 = vpop.f32.mrb[0].mxu0
        %v4512 = vadd.f32 %v3839, %v4511
        %v4513 = vpop.f32.mrb[0].mxu0
        %v4514 = vadd.f32 %v3841, %v4513
        %v4515 = vpop.f32.mrb[0].mxu0
        %v4516 = vadd.f32 %v3843, %v4515
        %4517 = vmatprep.mubr.bf16.mxu0 %v1750
        %4518 = vmatmul.mubr.bf16.gmra.mrb[0].mxu0 %v1749
        %v4519 = vpop.f32.mrb[0].mxu0
        %v4520 = vadd.f32 %v3847, %v4519
        %v4521 = vpop.f32.mrb[0].mxu0
        %v4522 = vadd.f32 %v3849, %v4521
        %v4523 = vpop.f32.mrb[0].mxu0
        %v4524 = vadd.f32 %v3851, %v4523
        %v4525 = vpop.f32.mrb[0].mxu0
        %v4526 = vadd.f32 %v3853, %v4525
        %4527 = vmatprep.mubr.bf16.mxu0 %v1758
        %4528 = vmatmul.mubr.bf16.gmra.mrb[0].mxu0 %v1757
        %v4529 = vpop.f32.mrb[0].mxu0
        %v4530 = vadd.f32 %v3857, %v4529
        %v4531 = vpop.f32.mrb[0].mxu0
        %v4532 = vadd.f32 %v3859, %v4531
        %v4533 = vpop.f32.mrb[0].mxu0
        %v4534 = vadd.f32 %v3861, %v4533
        %v4535 = vpop.f32.mrb[0].mxu0
        %v4536 = vadd.f32 %v3863, %v4535
        %4537 = vmatprep.mubr.bf16.mxu0 %v1766
        %4538 = vmatmul.mubr.bf16.gmra.mrb[0].mxu0 %v1765
        %v4539 = vpop.f32.mrb[0].mxu0
        %v4540 = vadd.f32 %v3867, %v4539
        %v4541 = vpop.f32.mrb[0].mxu0
        %v4542 = vadd.f32 %v3869, %v4541
        %v4543 = vpop.f32.mrb[0].mxu0
        %v4544 = vadd.f32 %v3871, %v4543
        %v4545 = vpop.f32.mrb[0].mxu0
        %v4546 = vadd.f32 %v3873, %v4545
        %4547 = vmatprep.mubr.bf16.mxu0 %v1774
        %4548 = vmatmul.mubr.bf16.gmra.mrb[0].mxu0 %v1773
        %v4549 = vpop.f32.mrb[0].mxu0
        %v4550 = vadd.f32 %v3877, %v4549
        %v4551 = vpop.f32.mrb[0].mxu0
        %v4552 = vadd.f32 %v3879, %v4551
        %v4553 = vpop.f32.mrb[0].mxu0
        %v4554 = vadd.f32 %v3881, %v4553
        %v4555 = vpop.f32.mrb[0].mxu0
        %v4556 = vadd.f32 %v3883, %v4555
        %4557 = vmatprep.mubr.bf16.mxu0 %v1782
        %4558 = vmatmul.mubr.bf16.gmra.mrb[0].mxu0 %v1781
        %v4559 = vpop.f32.mrb[0].mxu0
        %v4560 = vadd.f32 %v3887, %v4559
        %v4561 = vpop.f32.mrb[0].mxu0
        %v4562 = vadd.f32 %v3889, %v4561
        %v4563 = vpop.f32.mrb[0].mxu0
        %v4564 = vadd.f32 %v3891, %v4563
        %v4565 = vpop.f32.mrb[0].mxu0
        %v4566 = vadd.f32 %v3893, %v4565
        %4567 = vmatprep.mubr.bf16.mxu0 %v1790
        %4568 = vmatmul.mubr.bf16.gmra.mrb[0].mxu0 %v1789
        %v4569 = vpop.f32.mrb[0].mxu0
        %v4570 = vadd.f32 %v3897, %v4569
        %v4571 = vpop.f32.mrb[0].mxu0
        %v4572 = vadd.f32 %v3899, %v4571
        %v4573 = vpop.f32.mrb[0].mxu0
        %v4574 = vadd.f32 %v3901, %v4573
        %v4575 = vpop.f32.mrb[0].mxu0
        %v4576 = vadd.f32 %v3903, %v4575
        %4577 = vmatprep.mubr.bf16.mxu0 %v1798
        %4578 = vmatmul.mubr.bf16.gmra.mrb[0].mxu0 %v1797
        %v4579 = vpop.f32.mrb[0].mxu0
        %v4580 = vadd.f32 %v3907, %v4579
        %v4581 = vpop.f32.mrb[0].mxu0
        %v4582 = vadd.f32 %v3909, %v4581
        %v4583 = vpop.f32.mrb[0].mxu0
        %v4584 = vadd.f32 %v3911, %v4583
        %v4585 = vpop.f32.mrb[0].mxu0
        %v4586 = vadd.f32 %v3913, %v4585
        %4587 = vmatprep.mubr.bf16.mxu0 %v1806
        %4588 = vmatmul.mubr.bf16.gmra.mrb[0].mxu0 %v1805
        %v4589 = vpop.f32.mrb[0].mxu0
        %v4590 = vadd.f32 %v3917, %v4589
        %v4591 = vpop.f32.mrb[0].mxu0
        %v4592 = vadd.f32 %v3919, %v4591
        %v4593 = vpop.f32.mrb[0].mxu0
        %v4594 = vadd.f32 %v3921, %v4593
        %v4595 = vpop.f32.mrb[0].mxu0
        %v4596 = vadd.f32 %v3923, %v4595
        %4597 = vmatprep.mubr.bf16.mxu0 %v1814
        %4598 = vmatmul.mubr.bf16.gmra.mrb[0].mxu0 %v1813
        %v4599 = vpop.f32.mrb[0].mxu0
        %v4600 = vadd.f32 %v3927, %v4599
        %v4601 = vpop.f32.mrb[0].mxu0
        %v4602 = vadd.f32 %v3929, %v4601
        %v4603 = vpop.f32.mrb[0].mxu0
        %v4604 = vadd.f32 %v3931, %v4603
        %v4605 = vpop.f32.mrb[0].mxu0
        %v4606 = vadd.f32 %v3933, %v4605
        %4607 = vmatprep.mubr.bf16.mxu0 %v1822
        %4608 = vmatmul.mubr.bf16.gmra.mrb[0].mxu0 %v1821
        %v4609 = vpop.f32.mrb[0].mxu0
        %v4610 = vadd.f32 %v3937, %v4609
        %v4611 = vpop.f32.mrb[0].mxu0
        %v4612 = vadd.f32 %v3939, %v4611
        %v4613 = vpop.f32.mrb[0].mxu0
        %v4614 = vadd.f32 %v3941, %v4613
        %v4615 = vpop.f32.mrb[0].mxu0
        %v4616 = vadd.f32 %v3943, %v4615
        %4617 = vmatprep.mubr.bf16.mxu0 %v1830
        %4618 = vmatmul.mubr.bf16.gmra.mrb[0].mxu0 %v1829
        %v4619 = vpop.f32.mrb[0].mxu0
        %v4620 = vadd.f32 %v3947, %v4619
        %v4621 = vpop.f32.mrb[0].mxu0
        %v4622 = vadd.f32 %v3949, %v4621
        %v4623 = vpop.f32.mrb[0].mxu0
        %v4624 = vadd.f32 %v3951, %v4623
        %v4625 = vpop.f32.mrb[0].mxu0
        %v4626 = vadd.f32 %v3953, %v4625
        %4627 = vmatprep.mubr.bf16.mxu0 %v1838
        %4628 = vmatmul.mubr.bf16.gmra.mrb[0].mxu0 %v1837
        %v4629 = vpop.f32.mrb[0].mxu0
        %v4630 = vadd.f32 %v3957, %v4629
        %v4631 = vpop.f32.mrb[0].mxu0
        %v4632 = vadd.f32 %v3959, %v4631
        %v4633 = vpop.f32.mrb[0].mxu0
        %v4634 = vadd.f32 %v3961, %v4633
        %v4635 = vpop.f32.mrb[0].mxu0
        %v4636 = vadd.f32 %v3963, %v4635
        %4637 = vmatprep.mubr.bf16.mxu0 %v1846
        %4638 = vmatmul.mubr.bf16.gmra.mrb[0].mxu0 %v1845
        %v4639 = vpop.f32.mrb[0].mxu0
        %v4640 = vadd.f32 %v3967, %v4639
        %v4641 = vpop.f32.mrb[0].mxu0
        %v4642 = vadd.f32 %v3969, %v4641
        %v4643 = vpop.f32.mrb[0].mxu0
        %v4644 = vadd.f32 %v3971, %v4643
        %v4645 = vpop.f32.mrb[0].mxu0
        %v4646 = vadd.f32 %v3973, %v4645
        %4647 = vdwg.mxu0
        %4648 = vmatprep.subr.bf16.mxu0 %v2470
        %4649 = vmatpush1.bf16.msra.mxu0 %v2469
        %4650 = vmatprep.subr.bf16.mxu0 %v2472
        %4651 = vmatpush1.bf16.msra.mxu0 %v2471
        %4652 = vmatprep.subr.bf16.mxu0 %v2474
        %4653 = vmatpush1.bf16.msra.mxu0 %v2473
        %4654 = vmatprep.subr.bf16.mxu0 %v2476
        %4655 = vmatpush1.bf16.msra.mxu0 %v2475
        %4656 = vmatprep.subr.bf16.mxu0 %v2478
        %4657 = vmatpush1.bf16.msra.mxu0 %v2477
        %4658 = vmatprep.subr.bf16.mxu0 %v2480
        %4659 = vmatpush1.bf16.msra.mxu0 %v2479
        %4660 = vmatprep.subr.bf16.mxu0 %v2482
        %4661 = vmatpush1.bf16.msra.mxu0 %v2481
        %4662 = vmatprep.subr.bf16.mxu0 %v2484
        %4663 = vmatpush1.bf16.msra.mxu0 %v2483
        %4664 = vmatprep.subr.bf16.mxu0 %v2486
        %4665 = vmatpush1.bf16.msra.mxu0 %v2485
        %4666 = vmatprep.subr.bf16.mxu0 %v2488
        %4667 = vmatpush1.bf16.msra.mxu0 %v2487
        %4668 = vmatprep.subr.bf16.mxu0 %v2490
        %4669 = vmatpush1.bf16.msra.mxu0 %v2489
        %4670 = vmatprep.subr.bf16.mxu0 %v2492
        %4671 = vmatpush1.bf16.msra.mxu0 %v2491
        %4672 = vmatprep.subr.bf16.mxu0 %v2494
        %4673 = vmatpush1.bf16.msra.mxu0 %v2493
        %4674 = vmatprep.subr.bf16.mxu0 %v2496
        %4675 = vmatpush1.bf16.msra.mxu0 %v2495
        %4676 = vmatprep.subr.bf16.mxu0 %v2498
        %4677 = vmatpush1.bf16.msra.mxu0 %v2497
        %4678 = vmatprep.subr.bf16.mxu0 %v2500
        %4679 = vmatpush1.bf16.msra.mxu0 %v2499
        %4680 = vmatprep.mubr.bf16.mxu0 %v1344
        %4681 = vmatmul.mubr.bf16.gmra.mrb[0].mxu0 %v1343
        %v4682 = vpop.f32.mrb[0].mxu0
        %v4683 = vadd.f32 %v4010, %v4682
        %v4684 = vpop.f32.mrb[0].mxu0
        %v4685 = vadd.f32 %v4012, %v4684
        %v4686 = vpop.f32.mrb[0].mxu0
        %v4687 = vadd.f32 %v4014, %v4686
        %v4688 = vpop.f32.mrb[0].mxu0
        %v4689 = vadd.f32 %v4016, %v4688
        %4690 = vmatprep.mubr.bf16.mxu0 %v1352
        %4691 = vmatmul.mubr.bf16.gmra.mrb[0].mxu0 %v1351
        %v4692 = vpop.f32.mrb[0].mxu0
        %v4693 = vadd.f32 %v4020, %v4692
        %v4694 = vpop.f32.mrb[0].mxu0
        %v4695 = vadd.f32 %v4022, %v4694
        %v4696 = vpop.f32.mrb[0].mxu0
        %v4697 = vadd.f32 %v4024, %v4696
        %v4698 = vpop.f32.mrb[0].mxu0
        %v4699 = vadd.f32 %v4026, %v4698
        %4700 = vmatprep.mubr.bf16.mxu0 %v1360
        %4701 = vmatmul.mubr.bf16.gmra.mrb[0].mxu0 %v1359
        %v4702 = vpop.f32.mrb[0].mxu0
        %v4703 = vadd.f32 %v4030, %v4702
        %v4704 = vpop.f32.mrb[0].mxu0
        %v4705 = vadd.f32 %v4032, %v4704
        %v4706 = vpop.f32.mrb[0].mxu0
        %v4707 = vadd.f32 %v4034, %v4706
        %v4708 = vpop.f32.mrb[0].mxu0
        %v4709 = vadd.f32 %v4036, %v4708
        %4710 = vmatprep.mubr.bf16.mxu0 %v1368
        %4711 = vmatmul.mubr.bf16.gmra.mrb[0].mxu0 %v1367
        %v4712 = vpop.f32.mrb[0].mxu0
        %v4713 = vadd.f32 %v4040, %v4712
        %v4714 = vpop.f32.mrb[0].mxu0
        %v4715 = vadd.f32 %v4042, %v4714
        %v4716 = vpop.f32.mrb[0].mxu0
        %v4717 = vadd.f32 %v4044, %v4716
        %v4718 = vpop.f32.mrb[0].mxu0
        %v4719 = vadd.f32 %v4046, %v4718
        %4720 = vmatprep.mubr.bf16.mxu0 %v1376
        %4721 = vmatmul.mubr.bf16.gmra.mrb[0].mxu0 %v1375
        %v4722 = vpop.f32.mrb[0].mxu0
        %v4723 = vadd.f32 %v4050, %v4722
        %v4724 = vpop.f32.mrb[0].mxu0
        %v4725 = vadd.f32 %v4052, %v4724
        %v4726 = vpop.f32.mrb[0].mxu0
        %v4727 = vadd.f32 %v4054, %v4726
        %v4728 = vpop.f32.mrb[0].mxu0
        %v4729 = vadd.f32 %v4056, %v4728
        %4730 = vmatprep.mubr.bf16.mxu0 %v1384
        %4731 = vmatmul.mubr.bf16.gmra.mrb[0].mxu0 %v1383
        %v4732 = vpop.f32.mrb[0].mxu0
        %v4733 = vadd.f32 %v4060, %v4732
        %v4734 = vpop.f32.mrb[0].mxu0
        %v4735 = vadd.f32 %v4062, %v4734
        %v4736 = vpop.f32.mrb[0].mxu0
        %v4737 = vadd.f32 %v4064, %v4736
        %v4738 = vpop.f32.mrb[0].mxu0
        %v4739 = vadd.f32 %v4066, %v4738
        %4740 = vmatprep.mubr.bf16.mxu0 %v1392
        %4741 = vmatmul.mubr.bf16.gmra.mrb[0].mxu0 %v1391
        %v4742 = vpop.f32.mrb[0].mxu0
        %v4743 = vadd.f32 %v4070, %v4742
        %v4744 = vpop.f32.mrb[0].mxu0
        %v4745 = vadd.f32 %v4072, %v4744
        %v4746 = vpop.f32.mrb[0].mxu0
        %v4747 = vadd.f32 %v4074, %v4746
        %v4748 = vpop.f32.mrb[0].mxu0
        %v4749 = vadd.f32 %v4076, %v4748
        %4750 = vmatprep.mubr.bf16.mxu0 %v1400
        %4751 = vmatmul.mubr.bf16.gmra.mrb[0].mxu0 %v1399
        %v4752 = vpop.f32.mrb[0].mxu0
        %v4753 = vadd.f32 %v4080, %v4752
        %v4754 = vpop.f32.mrb[0].mxu0
        %v4755 = vadd.f32 %v4082, %v4754
        %v4756 = vpop.f32.mrb[0].mxu0
        %v4757 = vadd.f32 %v4084, %v4756
        %v4758 = vpop.f32.mrb[0].mxu0
        %v4759 = vadd.f32 %v4086, %v4758
        %4760 = vmatprep.mubr.bf16.mxu0 %v1408
        %4761 = vmatmul.mubr.bf16.gmra.mrb[0].mxu0 %v1407
        %v4762 = vpop.f32.mrb[0].mxu0
        %v4763 = vadd.f32 %v4090, %v4762
        %v4764 = vpop.f32.mrb[0].mxu0
        %v4765 = vadd.f32 %v4092, %v4764
        %v4766 = vpop.f32.mrb[0].mxu0
        %v4767 = vadd.f32 %v4094, %v4766
        %v4768 = vpop.f32.mrb[0].mxu0
        %v4769 = vadd.f32 %v4096, %v4768
        %4770 = vmatprep.mubr.bf16.mxu0 %v1416
        %4771 = vmatmul.mubr.bf16.gmra.mrb[0].mxu0 %v1415
        %v4772 = vpop.f32.mrb[0].mxu0
        %v4773 = vadd.f32 %v4100, %v4772
        %v4774 = vpop.f32.mrb[0].mxu0
        %v4775 = vadd.f32 %v4102, %v4774
        %v4776 = vpop.f32.mrb[0].mxu0
        %v4777 = vadd.f32 %v4104, %v4776
        %v4778 = vpop.f32.mrb[0].mxu0
        %v4779 = vadd.f32 %v4106, %v4778
        %4780 = vmatprep.mubr.bf16.mxu0 %v1424
        %4781 = vmatmul.mubr.bf16.gmra.mrb[0].mxu0 %v1423
        %v4782 = vpop.f32.mrb[0].mxu0
        %v4783 = vadd.f32 %v4110, %v4782
        %v4784 = vpop.f32.mrb[0].mxu0
        %v4785 = vadd.f32 %v4112, %v4784
        %v4786 = vpop.f32.mrb[0].mxu0
        %v4787 = vadd.f32 %v4114, %v4786
        %v4788 = vpop.f32.mrb[0].mxu0
        %v4789 = vadd.f32 %v4116, %v4788
        %4790 = vmatprep.mubr.bf16.mxu0 %v1432
        %4791 = vmatmul.mubr.bf16.gmra.mrb[0].mxu0 %v1431
        %v4792 = vpop.f32.mrb[0].mxu0
        %v4793 = vadd.f32 %v4120, %v4792
        %v4794 = vpop.f32.mrb[0].mxu0
        %v4795 = vadd.f32 %v4122, %v4794
        %v4796 = vpop.f32.mrb[0].mxu0
        %v4797 = vadd.f32 %v4124, %v4796
        %v4798 = vpop.f32.mrb[0].mxu0
        %v4799 = vadd.f32 %v4126, %v4798
        %4800 = vmatprep.mubr.bf16.mxu0 %v1440
        %4801 = vmatmul.mubr.bf16.gmra.mrb[0].mxu0 %v1439
        %v4802 = vpop.f32.mrb[0].mxu0
        %v4803 = vadd.f32 %v4130, %v4802
        %v4804 = vpop.f32.mrb[0].mxu0
        %v4805 = vadd.f32 %v4132, %v4804
        %v4806 = vpop.f32.mrb[0].mxu0
        %v4807 = vadd.f32 %v4134, %v4806
        %v4808 = vpop.f32.mrb[0].mxu0
        %v4809 = vadd.f32 %v4136, %v4808
        %4810 = vmatprep.mubr.bf16.mxu0 %v1448
        %4811 = vmatmul.mubr.bf16.gmra.mrb[0].mxu0 %v1447
        %v4812 = vpop.f32.mrb[0].mxu0
        %v4813 = vadd.f32 %v4140, %v4812
        %v4814 = vpop.f32.mrb[0].mxu0
        %v4815 = vadd.f32 %v4142, %v4814
        %v4816 = vpop.f32.mrb[0].mxu0
        %v4817 = vadd.f32 %v4144, %v4816
        %v4818 = vpop.f32.mrb[0].mxu0
        %v4819 = vadd.f32 %v4146, %v4818
        %4820 = vmatprep.mubr.bf16.mxu0 %v1456
        %4821 = vmatmul.mubr.bf16.gmra.mrb[0].mxu0 %v1455
        %v4822 = vpop.f32.mrb[0].mxu0
        %v4823 = vadd.f32 %v4150, %v4822
        %v4824 = vpop.f32.mrb[0].mxu0
        %v4825 = vadd.f32 %v4152, %v4824
        %v4826 = vpop.f32.mrb[0].mxu0
        %v4827 = vadd.f32 %v4154, %v4826
        %v4828 = vpop.f32.mrb[0].mxu0
        %v4829 = vadd.f32 %v4156, %v4828
        %4830 = vmatprep.mubr.bf16.mxu0 %v1464
        %4831 = vmatmul.mubr.bf16.gmra.mrb[0].mxu0 %v1463
        %v4832 = vpop.f32.mrb[0].mxu0
        %v4833 = vadd.f32 %v4160, %v4832
        %v4834 = vpop.f32.mrb[0].mxu0
        %v4835 = vadd.f32 %v4162, %v4834
        %v4836 = vpop.f32.mrb[0].mxu0
        %v4837 = vadd.f32 %v4164, %v4836
        %v4838 = vpop.f32.mrb[0].mxu0
        %v4839 = vadd.f32 %v4166, %v4838
        %4840 = vmatprep.mubr.bf16.mxu0 %v1472
        %4841 = vmatmul.mubr.bf16.gmra.mrb[0].mxu0 %v1471
        %v4842 = vpop.f32.mrb[0].mxu0
        %v4843 = vadd.f32 %v4170, %v4842
        %v4844 = vpop.f32.mrb[0].mxu0
        %v4845 = vadd.f32 %v4172, %v4844
        %v4846 = vpop.f32.mrb[0].mxu0
        %v4847 = vadd.f32 %v4174, %v4846
        %v4848 = vpop.f32.mrb[0].mxu0
        %v4849 = vadd.f32 %v4176, %v4848
        %4850 = vmatprep.mubr.bf16.mxu0 %v1480
        %4851 = vmatmul.mubr.bf16.gmra.mrb[0].mxu0 %v1479
        %v4852 = vpop.f32.mrb[0].mxu0
        %v4853 = vadd.f32 %v4180, %v4852
        %v4854 = vpop.f32.mrb[0].mxu0
        %v4855 = vadd.f32 %v4182, %v4854
        %v4856 = vpop.f32.mrb[0].mxu0
        %v4857 = vadd.f32 %v4184, %v4856
        %v4858 = vpop.f32.mrb[0].mxu0
        %v4859 = vadd.f32 %v4186, %v4858
        %4860 = vmatprep.mubr.bf16.mxu0 %v1488
        %4861 = vmatmul.mubr.bf16.gmra.mrb[0].mxu0 %v1487
        %v4862 = vpop.f32.mrb[0].mxu0
        %v4863 = vadd.f32 %v4190, %v4862
        %v4864 = vpop.f32.mrb[0].mxu0
        %v4865 = vadd.f32 %v4192, %v4864
        %v4866 = vpop.f32.mrb[0].mxu0
        %v4867 = vadd.f32 %v4194, %v4866
        %v4868 = vpop.f32.mrb[0].mxu0
        %v4869 = vadd.f32 %v4196, %v4868
        %4870 = vmatprep.mubr.bf16.mxu0 %v1496
        %4871 = vmatmul.mubr.bf16.gmra.mrb[0].mxu0 %v1495
        %v4872 = vpop.f32.mrb[0].mxu0
        %v4873 = vadd.f32 %v4200, %v4872
        %v4874 = vpop.f32.mrb[0].mxu0
        %v4875 = vadd.f32 %v4202, %v4874
        %v4876 = vpop.f32.mrb[0].mxu0
        %v4877 = vadd.f32 %v4204, %v4876
        %v4878 = vpop.f32.mrb[0].mxu0
        %v4879 = vadd.f32 %v4206, %v4878
        %4880 = vmatprep.mubr.bf16.mxu0 %v1504
        %4881 = vmatmul.mubr.bf16.gmra.mrb[0].mxu0 %v1503
        %v4882 = vpop.f32.mrb[0].mxu0
        %v4883 = vadd.f32 %v4210, %v4882
        %v4884 = vpop.f32.mrb[0].mxu0
        %v4885 = vadd.f32 %v4212, %v4884
        %v4886 = vpop.f32.mrb[0].mxu0
        %v4887 = vadd.f32 %v4214, %v4886
        %v4888 = vpop.f32.mrb[0].mxu0
        %v4889 = vadd.f32 %v4216, %v4888
        %4890 = vmatprep.mubr.bf16.mxu0 %v1512
        %4891 = vmatmul.mubr.bf16.gmra.mrb[0].mxu0 %v1511
        %v4892 = vpop.f32.mrb[0].mxu0
        %v4893 = vadd.f32 %v4220, %v4892
        %v4894 = vpop.f32.mrb[0].mxu0
        %v4895 = vadd.f32 %v4222, %v4894
        %v4896 = vpop.f32.mrb[0].mxu0
        %v4897 = vadd.f32 %v4224, %v4896
        %v4898 = vpop.f32.mrb[0].mxu0
        %v4899 = vadd.f32 %v4226, %v4898
        %4900 = vmatprep.mubr.bf16.mxu0 %v1520
        %4901 = vmatmul.mubr.bf16.gmra.mrb[0].mxu0 %v1519
        %v4902 = vpop.f32.mrb[0].mxu0
        %v4903 = vadd.f32 %v4230, %v4902
        %v4904 = vpop.f32.mrb[0].mxu0
        %v4905 = vadd.f32 %v4232, %v4904
        %v4906 = vpop.f32.mrb[0].mxu0
        %v4907 = vadd.f32 %v4234, %v4906
        %v4908 = vpop.f32.mrb[0].mxu0
        %v4909 = vadd.f32 %v4236, %v4908
        %4910 = vmatprep.mubr.bf16.mxu0 %v1528
        %4911 = vmatmul.mubr.bf16.gmra.mrb[0].mxu0 %v1527
        %v4912 = vpop.f32.mrb[0].mxu0
        %v4913 = vadd.f32 %v4240, %v4912
        %v4914 = vpop.f32.mrb[0].mxu0
        %v4915 = vadd.f32 %v4242, %v4914
        %v4916 = vpop.f32.mrb[0].mxu0
        %v4917 = vadd.f32 %v4244, %v4916
        %v4918 = vpop.f32.mrb[0].mxu0
        %v4919 = vadd.f32 %v4246, %v4918
        %4920 = vmatprep.mubr.bf16.mxu0 %v1536
        %4921 = vmatmul.mubr.bf16.gmra.mrb[0].mxu0 %v1535
        %v4922 = vpop.f32.mrb[0].mxu0
        %v4923 = vadd.f32 %v4250, %v4922
        %v4924 = vpop.f32.mrb[0].mxu0
        %v4925 = vadd.f32 %v4252, %v4924
        %v4926 = vpop.f32.mrb[0].mxu0
        %v4927 = vadd.f32 %v4254, %v4926
        %v4928 = vpop.f32.mrb[0].mxu0
        %v4929 = vadd.f32 %v4256, %v4928
        %4930 = vmatprep.mubr.bf16.mxu0 %v1544
        %4931 = vmatmul.mubr.bf16.gmra.mrb[0].mxu0 %v1543
        %v4932 = vpop.f32.mrb[0].mxu0
        %v4933 = vadd.f32 %v4260, %v4932
        %v4934 = vpop.f32.mrb[0].mxu0
        %v4935 = vadd.f32 %v4262, %v4934
        %v4936 = vpop.f32.mrb[0].mxu0
        %v4937 = vadd.f32 %v4264, %v4936
        %v4938 = vpop.f32.mrb[0].mxu0
        %v4939 = vadd.f32 %v4266, %v4938
        %4940 = vmatprep.mubr.bf16.mxu0 %v1552
        %4941 = vmatmul.mubr.bf16.gmra.mrb[0].mxu0 %v1551
        %v4942 = vpop.f32.mrb[0].mxu0
        %v4943 = vadd.f32 %v4270, %v4942
        %v4944 = vpop.f32.mrb[0].mxu0
        %v4945 = vadd.f32 %v4272, %v4944
        %v4946 = vpop.f32.mrb[0].mxu0
        %v4947 = vadd.f32 %v4274, %v4946
        %v4948 = vpop.f32.mrb[0].mxu0
        %v4949 = vadd.f32 %v4276, %v4948
        %4950 = vmatprep.mubr.bf16.mxu0 %v1560
        %4951 = vmatmul.mubr.bf16.gmra.mrb[0].mxu0 %v1559
        %v4952 = vpop.f32.mrb[0].mxu0
        %v4953 = vadd.f32 %v4280, %v4952
        %v4954 = vpop.f32.mrb[0].mxu0
        %v4955 = vadd.f32 %v4282, %v4954
        %v4956 = vpop.f32.mrb[0].mxu0
        %v4957 = vadd.f32 %v4284, %v4956
        %v4958 = vpop.f32.mrb[0].mxu0
        %v4959 = vadd.f32 %v4286, %v4958
        %4960 = vmatprep.mubr.bf16.mxu0 %v1568
        %4961 = vmatmul.mubr.bf16.gmra.mrb[0].mxu0 %v1567
        %v4962 = vpop.f32.mrb[0].mxu0
        %v4963 = vadd.f32 %v4290, %v4962
        %v4964 = vpop.f32.mrb[0].mxu0
        %v4965 = vadd.f32 %v4292, %v4964
        %v4966 = vpop.f32.mrb[0].mxu0
        %v4967 = vadd.f32 %v4294, %v4966
        %v4968 = vpop.f32.mrb[0].mxu0
        %v4969 = vadd.f32 %v4296, %v4968
        %4970 = vmatprep.mubr.bf16.mxu0 %v1576
        %4971 = vmatmul.mubr.bf16.gmra.mrb[0].mxu0 %v1575
        %v4972 = vpop.f32.mrb[0].mxu0
        %v4973 = vadd.f32 %v4300, %v4972
        %v4974 = vpop.f32.mrb[0].mxu0
        %v4975 = vadd.f32 %v4302, %v4974
        %v4976 = vpop.f32.mrb[0].mxu0
        %v4977 = vadd.f32 %v4304, %v4976
        %v4978 = vpop.f32.mrb[0].mxu0
        %v4979 = vadd.f32 %v4306, %v4978
        %4980 = vmatprep.mubr.bf16.mxu0 %v1584
        %4981 = vmatmul.mubr.bf16.gmra.mrb[0].mxu0 %v1583
        %v4982 = vpop.f32.mrb[0].mxu0
        %v4983 = vadd.f32 %v4310, %v4982
        %v4984 = vpop.f32.mrb[0].mxu0
        %v4985 = vadd.f32 %v4312, %v4984
        %v4986 = vpop.f32.mrb[0].mxu0
        %v4987 = vadd.f32 %v4314, %v4986
        %v4988 = vpop.f32.mrb[0].mxu0
        %v4989 = vadd.f32 %v4316, %v4988
        %4990 = vmatprep.mubr.bf16.mxu0 %v1592
        %4991 = vmatmul.mubr.bf16.gmra.mrb[0].mxu0 %v1591
        %v4992 = vpop.f32.mrb[0].mxu0
        %v4993 = vadd.f32 %v4320, %v4992
        %v4994 = vpop.f32.mrb[0].mxu0
        %v4995 = vadd.f32 %v4322, %v4994
        %v4996 = vpop.f32.mrb[0].mxu0
        %v4997 = vadd.f32 %v4324, %v4996
        %v4998 = vpop.f32.mrb[0].mxu0
        %v4999 = vadd.f32 %v4326, %v4998
        %5000 = vmatprep.mubr.bf16.mxu0 %v1600
        %5001 = vmatmul.mubr.bf16.gmra.mrb[0].mxu0 %v1599
        %v5002 = vpop.f32.mrb[0].mxu0
        %v5003 = vadd.f32 %v4330, %v5002
        %v5004 = vpop.f32.mrb[0].mxu0
        %v5005 = vadd.f32 %v4332, %v5004
        %v5006 = vpop.f32.mrb[0].mxu0
        %v5007 = vadd.f32 %v4334, %v5006
        %v5008 = vpop.f32.mrb[0].mxu0
        %v5009 = vadd.f32 %v4336, %v5008
        %5010 = vmatprep.mubr.bf16.mxu0 %v1608
        %5011 = vmatmul.mubr.bf16.gmra.mrb[0].mxu0 %v1607
        %v5012 = vpop.f32.mrb[0].mxu0
        %v5013 = vadd.f32 %v4340, %v5012
        %v5014 = vpop.f32.mrb[0].mxu0
        %v5015 = vadd.f32 %v4342, %v5014
        %v5016 = vpop.f32.mrb[0].mxu0
        %v5017 = vadd.f32 %v4344, %v5016
        %v5018 = vpop.f32.mrb[0].mxu0
        %v5019 = vadd.f32 %v4346, %v5018
        %5020 = vmatprep.mubr.bf16.mxu0 %v1616
        %5021 = vmatmul.mubr.bf16.gmra.mrb[0].mxu0 %v1615
        %v5022 = vpop.f32.mrb[0].mxu0
        %v5023 = vadd.f32 %v4350, %v5022
        %v5024 = vpop.f32.mrb[0].mxu0
        %v5025 = vadd.f32 %v4352, %v5024
        %v5026 = vpop.f32.mrb[0].mxu0
        %v5027 = vadd.f32 %v4354, %v5026
        %v5028 = vpop.f32.mrb[0].mxu0
        %v5029 = vadd.f32 %v4356, %v5028
        %5030 = vmatprep.mubr.bf16.mxu0 %v1624
        %5031 = vmatmul.mubr.bf16.gmra.mrb[0].mxu0 %v1623
        %v5032 = vpop.f32.mrb[0].mxu0
        %v5033 = vadd.f32 %v4360, %v5032
        %v5034 = vpop.f32.mrb[0].mxu0
        %v5035 = vadd.f32 %v4362, %v5034
        %v5036 = vpop.f32.mrb[0].mxu0
        %v5037 = vadd.f32 %v4364, %v5036
        %v5038 = vpop.f32.mrb[0].mxu0
        %v5039 = vadd.f32 %v4366, %v5038
        %5040 = vmatprep.mubr.bf16.mxu0 %v1632
        %5041 = vmatmul.mubr.bf16.gmra.mrb[0].mxu0 %v1631
        %v5042 = vpop.f32.mrb[0].mxu0
        %v5043 = vadd.f32 %v4370, %v5042
        %v5044 = vpop.f32.mrb[0].mxu0
        %v5045 = vadd.f32 %v4372, %v5044
        %v5046 = vpop.f32.mrb[0].mxu0
        %v5047 = vadd.f32 %v4374, %v5046
        %v5048 = vpop.f32.mrb[0].mxu0
        %v5049 = vadd.f32 %v4376, %v5048
        %5050 = vmatprep.mubr.bf16.mxu0 %v1640
        %5051 = vmatmul.mubr.bf16.gmra.mrb[0].mxu0 %v1639
        %v5052 = vpop.f32.mrb[0].mxu0
        %v5053 = vadd.f32 %v4380, %v5052
        %v5054 = vpop.f32.mrb[0].mxu0
        %v5055 = vadd.f32 %v4382, %v5054
        %v5056 = vpop.f32.mrb[0].mxu0
        %v5057 = vadd.f32 %v4384, %v5056
        %v5058 = vpop.f32.mrb[0].mxu0
        %v5059 = vadd.f32 %v4386, %v5058
        %5060 = vmatprep.mubr.bf16.mxu0 %v1648
        %5061 = vmatmul.mubr.bf16.gmra.mrb[0].mxu0 %v1647
        %v5062 = vpop.f32.mrb[0].mxu0
        %v5063 = vadd.f32 %v4390, %v5062
        %v5064 = vpop.f32.mrb[0].mxu0
        %v5065 = vadd.f32 %v4392, %v5064
        %v5066 = vpop.f32.mrb[0].mxu0
        %v5067 = vadd.f32 %v4394, %v5066
        %v5068 = vpop.f32.mrb[0].mxu0
        %v5069 = vadd.f32 %v4396, %v5068
        %5070 = vmatprep.mubr.bf16.mxu0 %v1656
        %5071 = vmatmul.mubr.bf16.gmra.mrb[0].mxu0 %v1655
        %v5072 = vpop.f32.mrb[0].mxu0
        %v5073 = vadd.f32 %v4400, %v5072
        %v5074 = vpop.f32.mrb[0].mxu0
        %v5075 = vadd.f32 %v4402, %v5074
        %v5076 = vpop.f32.mrb[0].mxu0
        %v5077 = vadd.f32 %v4404, %v5076
        %v5078 = vpop.f32.mrb[0].mxu0
        %v5079 = vadd.f32 %v4406, %v5078
        %5080 = vmatprep.mubr.bf16.mxu0 %v1664
        %5081 = vmatmul.mubr.bf16.gmra.mrb[0].mxu0 %v1663
        %v5082 = vpop.f32.mrb[0].mxu0
        %v5083 = vadd.f32 %v4410, %v5082
        %v5084 = vpop.f32.mrb[0].mxu0
        %v5085 = vadd.f32 %v4412, %v5084
        %v5086 = vpop.f32.mrb[0].mxu0
        %v5087 = vadd.f32 %v4414, %v5086
        %v5088 = vpop.f32.mrb[0].mxu0
        %v5089 = vadd.f32 %v4416, %v5088
        %5090 = vmatprep.mubr.bf16.mxu0 %v1672
        %5091 = vmatmul.mubr.bf16.gmra.mrb[0].mxu0 %v1671
        %v5092 = vpop.f32.mrb[0].mxu0
        %v5093 = vadd.f32 %v4420, %v5092
        %v5094 = vpop.f32.mrb[0].mxu0
        %v5095 = vadd.f32 %v4422, %v5094
        %v5096 = vpop.f32.mrb[0].mxu0
        %v5097 = vadd.f32 %v4424, %v5096
        %v5098 = vpop.f32.mrb[0].mxu0
        %v5099 = vadd.f32 %v4426, %v5098
        %5100 = vmatprep.mubr.bf16.mxu0 %v1680
        %5101 = vmatmul.mubr.bf16.gmra.mrb[0].mxu0 %v1679
        %v5102 = vpop.f32.mrb[0].mxu0
        %v5103 = vadd.f32 %v4430, %v5102
        %v5104 = vpop.f32.mrb[0].mxu0
        %v5105 = vadd.f32 %v4432, %v5104
        %v5106 = vpop.f32.mrb[0].mxu0
        %v5107 = vadd.f32 %v4434, %v5106
        %v5108 = vpop.f32.mrb[0].mxu0
        %v5109 = vadd.f32 %v4436, %v5108
        %5110 = vmatprep.mubr.bf16.mxu0 %v1688
        %5111 = vmatmul.mubr.bf16.gmra.mrb[0].mxu0 %v1687
        %v5112 = vpop.f32.mrb[0].mxu0
        %v5113 = vadd.f32 %v4440, %v5112
        %v5114 = vpop.f32.mrb[0].mxu0
        %v5115 = vadd.f32 %v4442, %v5114
        %v5116 = vpop.f32.mrb[0].mxu0
        %v5117 = vadd.f32 %v4444, %v5116
        %v5118 = vpop.f32.mrb[0].mxu0
        %v5119 = vadd.f32 %v4446, %v5118
        %5120 = vmatprep.mubr.bf16.mxu0 %v1696
        %5121 = vmatmul.mubr.bf16.gmra.mrb[0].mxu0 %v1695
        %v5122 = vpop.f32.mrb[0].mxu0
        %v5123 = vadd.f32 %v4450, %v5122
        %v5124 = vpop.f32.mrb[0].mxu0
        %v5125 = vadd.f32 %v4452, %v5124
        %v5126 = vpop.f32.mrb[0].mxu0
        %v5127 = vadd.f32 %v4454, %v5126
        %v5128 = vpop.f32.mrb[0].mxu0
        %v5129 = vadd.f32 %v4456, %v5128
        %5130 = vmatprep.mubr.bf16.mxu0 %v1704
        %5131 = vmatmul.mubr.bf16.gmra.mrb[0].mxu0 %v1703
        %v5132 = vpop.f32.mrb[0].mxu0
        %v5133 = vadd.f32 %v4460, %v5132
        %v5134 = vpop.f32.mrb[0].mxu0
        %v5135 = vadd.f32 %v4462, %v5134
        %v5136 = vpop.f32.mrb[0].mxu0
        %v5137 = vadd.f32 %v4464, %v5136
        %v5138 = vpop.f32.mrb[0].mxu0
        %v5139 = vadd.f32 %v4466, %v5138
        %5140 = vmatprep.mubr.bf16.mxu0 %v1712
        %5141 = vmatmul.mubr.bf16.gmra.mrb[0].mxu0 %v1711
        %v5142 = vpop.f32.mrb[0].mxu0
        %v5143 = vadd.f32 %v4470, %v5142
        %v5144 = vpop.f32.mrb[0].mxu0
        %v5145 = vadd.f32 %v4472, %v5144
        %v5146 = vpop.f32.mrb[0].mxu0
        %v5147 = vadd.f32 %v4474, %v5146
        %v5148 = vpop.f32.mrb[0].mxu0
        %v5149 = vadd.f32 %v4476, %v5148
        %5150 = vmatprep.mubr.bf16.mxu0 %v1720
        %5151 = vmatmul.mubr.bf16.gmra.mrb[0].mxu0 %v1719
        %v5152 = vpop.f32.mrb[0].mxu0
        %v5153 = vadd.f32 %v4480, %v5152
        %v5154 = vpop.f32.mrb[0].mxu0
        %v5155 = vadd.f32 %v4482, %v5154
        %v5156 = vpop.f32.mrb[0].mxu0
        %v5157 = vadd.f32 %v4484, %v5156
        %v5158 = vpop.f32.mrb[0].mxu0
        %v5159 = vadd.f32 %v4486, %v5158
        %5160 = vmatprep.mubr.bf16.mxu0 %v1728
        %5161 = vmatmul.mubr.bf16.gmra.mrb[0].mxu0 %v1727
        %v5162 = vpop.f32.mrb[0].mxu0
        %v5163 = vadd.f32 %v4490, %v5162
        %v5164 = vpop.f32.mrb[0].mxu0
        %v5165 = vadd.f32 %v4492, %v5164
        %v5166 = vpop.f32.mrb[0].mxu0
        %v5167 = vadd.f32 %v4494, %v5166
        %v5168 = vpop.f32.mrb[0].mxu0
        %v5169 = vadd.f32 %v4496, %v5168
        %5170 = vmatprep.mubr.bf16.mxu0 %v1736
        %5171 = vmatmul.mubr.bf16.gmra.mrb[0].mxu0 %v1735
        %v5172 = vpop.f32.mrb[0].mxu0
        %v5173 = vadd.f32 %v4500, %v5172
        %v5174 = vpop.f32.mrb[0].mxu0
        %v5175 = vadd.f32 %v4502, %v5174
        %v5176 = vpop.f32.mrb[0].mxu0
        %v5177 = vadd.f32 %v4504, %v5176
        %v5178 = vpop.f32.mrb[0].mxu0
        %v5179 = vadd.f32 %v4506, %v5178
        %5180 = vmatprep.mubr.bf16.mxu0 %v1744
        %5181 = vmatmul.mubr.bf16.gmra.mrb[0].mxu0 %v1743
        %v5182 = vpop.f32.mrb[0].mxu0
        %v5183 = vadd.f32 %v4510, %v5182
        %v5184 = vpop.f32.mrb[0].mxu0
        %v5185 = vadd.f32 %v4512, %v5184
        %v5186 = vpop.f32.mrb[0].mxu0
        %v5187 = vadd.f32 %v4514, %v5186
        %v5188 = vpop.f32.mrb[0].mxu0
        %v5189 = vadd.f32 %v4516, %v5188
        %5190 = vmatprep.mubr.bf16.mxu0 %v1752
        %5191 = vmatmul.mubr.bf16.gmra.mrb[0].mxu0 %v1751
        %v5192 = vpop.f32.mrb[0].mxu0
        %v5193 = vadd.f32 %v4520, %v5192
        %v5194 = vpop.f32.mrb[0].mxu0
        %v5195 = vadd.f32 %v4522, %v5194
        %v5196 = vpop.f32.mrb[0].mxu0
        %v5197 = vadd.f32 %v4524, %v5196
        %v5198 = vpop.f32.mrb[0].mxu0
        %v5199 = vadd.f32 %v4526, %v5198
        %5200 = vmatprep.mubr.bf16.mxu0 %v1760
        %5201 = vmatmul.mubr.bf16.gmra.mrb[0].mxu0 %v1759
        %v5202 = vpop.f32.mrb[0].mxu0
        %v5203 = vadd.f32 %v4530, %v5202
        %v5204 = vpop.f32.mrb[0].mxu0
        %v5205 = vadd.f32 %v4532, %v5204
        %v5206 = vpop.f32.mrb[0].mxu0
        %v5207 = vadd.f32 %v4534, %v5206
        %v5208 = vpop.f32.mrb[0].mxu0
        %v5209 = vadd.f32 %v4536, %v5208
        %5210 = vmatprep.mubr.bf16.mxu0 %v1768
        %5211 = vmatmul.mubr.bf16.gmra.mrb[0].mxu0 %v1767
        %v5212 = vpop.f32.mrb[0].mxu0
        %v5213 = vadd.f32 %v4540, %v5212
        %v5214 = vpop.f32.mrb[0].mxu0
        %v5215 = vadd.f32 %v4542, %v5214
        %v5216 = vpop.f32.mrb[0].mxu0
        %v5217 = vadd.f32 %v4544, %v5216
        %v5218 = vpop.f32.mrb[0].mxu0
        %v5219 = vadd.f32 %v4546, %v5218
        %5220 = vmatprep.mubr.bf16.mxu0 %v1776
        %5221 = vmatmul.mubr.bf16.gmra.mrb[0].mxu0 %v1775
        %v5222 = vpop.f32.mrb[0].mxu0
        %v5223 = vadd.f32 %v4550, %v5222
        %v5224 = vpop.f32.mrb[0].mxu0
        %v5225 = vadd.f32 %v4552, %v5224
        %v5226 = vpop.f32.mrb[0].mxu0
        %v5227 = vadd.f32 %v4554, %v5226
        %v5228 = vpop.f32.mrb[0].mxu0
        %v5229 = vadd.f32 %v4556, %v5228
        %5230 = vmatprep.mubr.bf16.mxu0 %v1784
        %5231 = vmatmul.mubr.bf16.gmra.mrb[0].mxu0 %v1783
        %v5232 = vpop.f32.mrb[0].mxu0
        %v5233 = vadd.f32 %v4560, %v5232
        %v5234 = vpop.f32.mrb[0].mxu0
        %v5235 = vadd.f32 %v4562, %v5234
        %v5236 = vpop.f32.mrb[0].mxu0
        %v5237 = vadd.f32 %v4564, %v5236
        %v5238 = vpop.f32.mrb[0].mxu0
        %v5239 = vadd.f32 %v4566, %v5238
        %5240 = vmatprep.mubr.bf16.mxu0 %v1792
        %5241 = vmatmul.mubr.bf16.gmra.mrb[0].mxu0 %v1791
        %v5242 = vpop.f32.mrb[0].mxu0
        %v5243 = vadd.f32 %v4570, %v5242
        %v5244 = vpop.f32.mrb[0].mxu0
        %v5245 = vadd.f32 %v4572, %v5244
        %v5246 = vpop.f32.mrb[0].mxu0
        %v5247 = vadd.f32 %v4574, %v5246
        %v5248 = vpop.f32.mrb[0].mxu0
        %v5249 = vadd.f32 %v4576, %v5248
        %5250 = vmatprep.mubr.bf16.mxu0 %v1800
        %5251 = vmatmul.mubr.bf16.gmra.mrb[0].mxu0 %v1799
        %v5252 = vpop.f32.mrb[0].mxu0
        %v5253 = vadd.f32 %v4580, %v5252
        %v5254 = vpop.f32.mrb[0].mxu0
        %v5255 = vadd.f32 %v4582, %v5254
        %v5256 = vpop.f32.mrb[0].mxu0
        %v5257 = vadd.f32 %v4584, %v5256
        %v5258 = vpop.f32.mrb[0].mxu0
        %v5259 = vadd.f32 %v4586, %v5258
        %5260 = vmatprep.mubr.bf16.mxu0 %v1808
        %5261 = vmatmul.mubr.bf16.gmra.mrb[0].mxu0 %v1807
        %v5262 = vpop.f32.mrb[0].mxu0
        %v5263 = vadd.f32 %v4590, %v5262
        %v5264 = vpop.f32.mrb[0].mxu0
        %v5265 = vadd.f32 %v4592, %v5264
        %v5266 = vpop.f32.mrb[0].mxu0
        %v5267 = vadd.f32 %v4594, %v5266
        %v5268 = vpop.f32.mrb[0].mxu0
        %v5269 = vadd.f32 %v4596, %v5268
        %5270 = vmatprep.mubr.bf16.mxu0 %v1816
        %5271 = vmatmul.mubr.bf16.gmra.mrb[0].mxu0 %v1815
        %v5272 = vpop.f32.mrb[0].mxu0
        %v5273 = vadd.f32 %v4600, %v5272
        %v5274 = vpop.f32.mrb[0].mxu0
        %v5275 = vadd.f32 %v4602, %v5274
        %v5276 = vpop.f32.mrb[0].mxu0
        %v5277 = vadd.f32 %v4604, %v5276
        %v5278 = vpop.f32.mrb[0].mxu0
        %v5279 = vadd.f32 %v4606, %v5278
        %5280 = vmatprep.mubr.bf16.mxu0 %v1824
        %5281 = vmatmul.mubr.bf16.gmra.mrb[0].mxu0 %v1823
        %v5282 = vpop.f32.mrb[0].mxu0
        %v5283 = vadd.f32 %v4610, %v5282
        %v5284 = vpop.f32.mrb[0].mxu0
        %v5285 = vadd.f32 %v4612, %v5284
        %v5286 = vpop.f32.mrb[0].mxu0
        %v5287 = vadd.f32 %v4614, %v5286
        %v5288 = vpop.f32.mrb[0].mxu0
        %v5289 = vadd.f32 %v4616, %v5288
        %5290 = vmatprep.mubr.bf16.mxu0 %v1832
        %5291 = vmatmul.mubr.bf16.gmra.mrb[0].mxu0 %v1831
        %v5292 = vpop.f32.mrb[0].mxu0
        %v5293 = vadd.f32 %v4620, %v5292
        %v5294 = vpop.f32.mrb[0].mxu0
        %v5295 = vadd.f32 %v4622, %v5294
        %v5296 = vpop.f32.mrb[0].mxu0
        %v5297 = vadd.f32 %v4624, %v5296
        %v5298 = vpop.f32.mrb[0].mxu0
        %v5299 = vadd.f32 %v4626, %v5298
        %5300 = vmatprep.mubr.bf16.mxu0 %v1840
        %5301 = vmatmul.mubr.bf16.gmra.mrb[0].mxu0 %v1839
        %v5302 = vpop.f32.mrb[0].mxu0
        %v5303 = vadd.f32 %v4630, %v5302
        %v5304 = vpop.f32.mrb[0].mxu0
        %v5305 = vadd.f32 %v4632, %v5304
        %v5306 = vpop.f32.mrb[0].mxu0
        %v5307 = vadd.f32 %v4634, %v5306
        %v5308 = vpop.f32.mrb[0].mxu0
        %v5309 = vadd.f32 %v4636, %v5308
        %5310 = vmatprep.mubr.bf16.mxu0 %v1848
        %5311 = vmatmul.mubr.bf16.gmra.mrb[0].mxu0 %v1847
        %v5312 = vpop.f32.mrb[0].mxu0
        %v5313 = vadd.f32 %v4640, %v5312
        %v5314 = vpop.f32.mrb[0].mxu0
        %v5315 = vadd.f32 %v4642, %v5314
        %v5316 = vpop.f32.mrb[0].mxu0
        %v5317 = vadd.f32 %v4644, %v5316
        %v5318 = vpop.f32.mrb[0].mxu0
        %v5319 = vadd.f32 %v4646, %v5318
        %5320 = vdwg.mxu0
        %v5321 = vtanh.pop %v4683
        %v5322 = vtanh.pop %v4685
        %v5323 = vtanh.pop %v4687
        %v5324 = vtanh.pop %v4689
        %v5325 = vtanh.pop %v4693
        %v5326 = vtanh.pop %v4695
        %v5327 = vtanh.pop %v4697
        %v5328 = vtanh.pop %v4699
        %v5329 = vtanh.pop %v4703
        %v5330 = vtanh.pop %v4705
        %v5331 = vtanh.pop %v4707
        %v5332 = vtanh.pop %v4709
        %v5333 = vtanh.pop %v4713
        %v5334 = vtanh.pop %v4715
        %v5335 = vtanh.pop %v4717
        %v5336 = vtanh.pop %v4719
        %v5337 = vtanh.pop %v4723
        %v5338 = vtanh.pop %v4725
        %v5339 = vtanh.pop %v4727
        %v5340 = vtanh.pop %v4729
        %v5341 = vtanh.pop %v4733
        %v5342 = vtanh.pop %v4735
        %v5343 = vtanh.pop %v4737
        %v5344 = vtanh.pop %v4739
        %v5345 = vtanh.pop %v4743
        %v5346 = vtanh.pop %v4745
        %v5347 = vtanh.pop %v4747
        %v5348 = vtanh.pop %v4749
        %v5349 = vtanh.pop %v4753
        %v5350 = vtanh.pop %v4755
        %v5351 = vtanh.pop %v4757
        %v5352 = vtanh.pop %v4759
        %v5353 = vtanh.pop %v4763
        %v5354 = vtanh.pop %v4765
        %v5355 = vtanh.pop %v4767
        %v5356 = vtanh.pop %v4769
        %v5357 = vtanh.pop %v4773
        %v5358 = vtanh.pop %v4775
        %v5359 = vtanh.pop %v4777
        %v5360 = vtanh.pop %v4779
        %v5361 = vtanh.pop %v4783
        %v5362 = vtanh.pop %v4785
        %v5363 = vtanh.pop %v4787
        %v5364 = vtanh.pop %v4789
        %v5365 = vtanh.pop %v4793
        %v5366 = vtanh.pop %v4795
        %v5367 = vtanh.pop %v4797
        %v5368 = vtanh.pop %v4799
        %v5369 = vtanh.pop %v4803
        %v5370 = vtanh.pop %v4805
        %v5371 = vtanh.pop %v4807
        %v5372 = vtanh.pop %v4809
        %v5373 = vtanh.pop %v4813
        %v5374 = vtanh.pop %v4815
        %v5375 = vtanh.pop %v4817
        %v5376 = vtanh.pop %v4819
        %v5377 = vtanh.pop %v4823
        %v5378 = vtanh.pop %v4825
        %v5379 = vtanh.pop %v4827
        %v5380 = vtanh.pop %v4829
        %v5381 = vtanh.pop %v4833
        %v5382 = vtanh.pop %v4835
        %v5383 = vtanh.pop %v4837
        %v5384 = vtanh.pop %v4839
        %v5385 = vtanh.pop %v4843
        %v5386 = vtanh.pop %v4845
        %v5387 = vtanh.pop %v4847
        %v5388 = vtanh.pop %v4849
        %v5389 = vtanh.pop %v4853
        %v5390 = vtanh.pop %v4855
        %v5391 = vtanh.pop %v4857
        %v5392 = vtanh.pop %v4859
        %v5393 = vtanh.pop %v4863
        %v5394 = vtanh.pop %v4865
        %v5395 = vtanh.pop %v4867
        %v5396 = vtanh.pop %v4869
        %v5397 = vtanh.pop %v4873
        %v5398 = vtanh.pop %v4875
        %v5399 = vtanh.pop %v4877
        %v5400 = vtanh.pop %v4879
        %v5401 = vtanh.pop %v4883
        %v5402 = vtanh.pop %v4885
        %v5403 = vtanh.pop %v4887
        %v5404 = vtanh.pop %v4889
        %v5405 = vtanh.pop %v4893
        %v5406 = vtanh.pop %v4895
        %v5407 = vtanh.pop %v4897
        %v5408 = vtanh.pop %v4899
        %v5409 = vtanh.pop %v4903
        %v5410 = vtanh.pop %v4905
        %v5411 = vtanh.pop %v4907
        %v5412 = vtanh.pop %v4909
        %v5413 = vtanh.pop %v4913
        %v5414 = vtanh.pop %v4915
        %v5415 = vtanh.pop %v4917
        %v5416 = vtanh.pop %v4919
        %v5417 = vtanh.pop %v4923
        %v5418 = vtanh.pop %v4925
        %v5419 = vtanh.pop %v4927
        %v5420 = vtanh.pop %v4929
        %v5421 = vtanh.pop %v4933
        %v5422 = vtanh.pop %v4935
        %v5423 = vtanh.pop %v4937
        %v5424 = vtanh.pop %v4939
        %v5425 = vtanh.pop %v4943
        %v5426 = vtanh.pop %v4945
        %v5427 = vtanh.pop %v4947
        %v5428 = vtanh.pop %v4949
        %v5429 = vtanh.pop %v4953
        %v5430 = vtanh.pop %v4955
        %v5431 = vtanh.pop %v4957
        %v5432 = vtanh.pop %v4959
        %v5433 = vtanh.pop %v4963
        %v5434 = vtanh.pop %v4965
        %v5435 = vtanh.pop %v4967
        %v5436 = vtanh.pop %v4969
        %v5437 = vtanh.pop %v4973
        %v5438 = vtanh.pop %v4975
        %v5439 = vtanh.pop %v4977
        %v5440 = vtanh.pop %v4979
        %v5441 = vtanh.pop %v4983
        %v5442 = vtanh.pop %v4985
        %v5443 = vtanh.pop %v4987
        %v5444 = vtanh.pop %v4989
        %v5445 = vtanh.pop %v4993
        %v5446 = vtanh.pop %v4995
        %v5447 = vtanh.pop %v4997
        %v5448 = vtanh.pop %v4999
        %v5449 = vtanh.pop %v5003
        %v5450 = vtanh.pop %v5005
        %v5451 = vtanh.pop %v5007
        %v5452 = vtanh.pop %v5009
        %v5453 = vtanh.pop %v5013
        %v5454 = vtanh.pop %v5015
        %v5455 = vtanh.pop %v5017
        %v5456 = vtanh.pop %v5019
        %v5457 = vtanh.pop %v5023
        %v5458 = vtanh.pop %v5025
        %v5459 = vtanh.pop %v5027
        %v5460 = vtanh.pop %v5029
        %v5461 = vtanh.pop %v5033
        %v5462 = vtanh.pop %v5035
        %v5463 = vtanh.pop %v5037
        %v5464 = vtanh.pop %v5039
        %v5465 = vtanh.pop %v5043
        %v5466 = vtanh.pop %v5045
        %v5467 = vtanh.pop %v5047
        %v5468 = vtanh.pop %v5049
        %v5469 = vtanh.pop %v5053
        %v5470 = vtanh.pop %v5055
        %v5471 = vtanh.pop %v5057
        %v5472 = vtanh.pop %v5059
        %v5473 = vtanh.pop %v5063
        %v5474 = vtanh.pop %v5065
        %v5475 = vtanh.pop %v5067
        %v5476 = vtanh.pop %v5069
        %v5477 = vtanh.pop %v5073
        %v5478 = vtanh.pop %v5075
        %v5479 = vtanh.pop %v5077
        %v5480 = vtanh.pop %v5079
        %v5481 = vtanh.pop %v5083
        %v5482 = vtanh.pop %v5085
        %v5483 = vtanh.pop %v5087
        %v5484 = vtanh.pop %v5089
        %v5485 = vtanh.pop %v5093
        %v5486 = vtanh.pop %v5095
        %v5487 = vtanh.pop %v5097
        %v5488 = vtanh.pop %v5099
        %v5489 = vtanh.pop %v5103
        %v5490 = vtanh.pop %v5105
        %v5491 = vtanh.pop %v5107
        %v5492 = vtanh.pop %v5109
        %v5493 = vtanh.pop %v5113
        %v5494 = vtanh.pop %v5115
        %v5495 = vtanh.pop %v5117
        %v5496 = vtanh.pop %v5119
        %v5497 = vtanh.pop %v5123
        %v5498 = vtanh.pop %v5125
        %v5499 = vtanh.pop %v5127
        %v5500 = vtanh.pop %v5129
        %v5501 = vtanh.pop %v5133
        %v5502 = vtanh.pop %v5135
        %v5503 = vtanh.pop %v5137
        %v5504 = vtanh.pop %v5139
        %v5505 = vtanh.pop %v5143
        %v5506 = vtanh.pop %v5145
        %v5507 = vtanh.pop %v5147
        %v5508 = vtanh.pop %v5149
        %v5509 = vtanh.pop %v5153
        %v5510 = vtanh.pop %v5155
        %v5511 = vtanh.pop %v5157
        %v5512 = vtanh.pop %v5159
        %v5513 = vtanh.pop %v5163
        %v5514 = vtanh.pop %v5165
        %v5515 = vtanh.pop %v5167
        %v5516 = vtanh.pop %v5169
        %v5517 = vtanh.pop %v5173
        %v5518 = vtanh.pop %v5175
        %v5519 = vtanh.pop %v5177
        %v5520 = vtanh.pop %v5179
        %v5521 = vtanh.pop %v5183
        %v5522 = vtanh.pop %v5185
        %v5523 = vtanh.pop %v5187
        %v5524 = vtanh.pop %v5189
        %v5525 = vtanh.pop %v5193
        %v5526 = vtanh.pop %v5195
        %v5527 = vtanh.pop %v5197
        %v5528 = vtanh.pop %v5199
        %v5529 = vtanh.pop %v5203
        %v5530 = vtanh.pop %v5205
        %v5531 = vtanh.pop %v5207
        %v5532 = vtanh.pop %v5209
        %v5533 = vtanh.pop %v5213
        %v5534 = vtanh.pop %v5215
        %v5535 = vtanh.pop %v5217
        %v5536 = vtanh.pop %v5219
        %v5537 = vtanh.pop %v5223
        %v5538 = vtanh.pop %v5225
        %v5539 = vtanh.pop %v5227
        %v5540 = vtanh.pop %v5229
        %v5541 = vtanh.pop %v5233
        %v5542 = vtanh.pop %v5235
        %v5543 = vtanh.pop %v5237
        %v5544 = vtanh.pop %v5239
        %v5545 = vtanh.pop %v5243
        %v5546 = vtanh.pop %v5245
        %v5547 = vtanh.pop %v5247
        %v5548 = vtanh.pop %v5249
        %v5549 = vtanh.pop %v5253
        %v5550 = vtanh.pop %v5255
        %v5551 = vtanh.pop %v5257
        %v5552 = vtanh.pop %v5259
        %v5553 = vtanh.pop %v5263
        %v5554 = vtanh.pop %v5265
        %v5555 = vtanh.pop %v5267
        %v5556 = vtanh.pop %v5269
        %v5557 = vtanh.pop %v5273
        %v5558 = vtanh.pop %v5275
        %v5559 = vtanh.pop %v5277
        %v5560 = vtanh.pop %v5279
        %v5561 = vtanh.pop %v5283
        %v5562 = vtanh.pop %v5285
        %v5563 = vtanh.pop %v5287
        %v5564 = vtanh.pop %v5289
        %v5565 = vtanh.pop %v5293
        %v5566 = vtanh.pop %v5295
        %v5567 = vtanh.pop %v5297
        %v5568 = vtanh.pop %v5299
        %v5569 = vtanh.pop %v5303
        %v5570 = vtanh.pop %v5305
        %v5571 = vtanh.pop %v5307
        %v5572 = vtanh.pop %v5309
        %v5573 = vtanh.pop %v5313
        %v5574 = vtanh.pop %v5315
        %v5575 = vtanh.pop %v5317
        %v5576 = vtanh.pop %v5319
        %v5577 = vpack.c.bf16 %v5323, %v5321
        %v5578 = vpack.c.bf16 %v5324, %v5322
        %v5579 = vpack.c.bf16 %v5327, %v5325
        %v5580 = vpack.c.bf16 %v5328, %v5326
        %v5581 = vpack.c.bf16 %v5331, %v5329
        %v5582 = vpack.c.bf16 %v5332, %v5330
        %v5583 = vpack.c.bf16 %v5335, %v5333
        %v5584 = vpack.c.bf16 %v5336, %v5334
        %v5585 = vpack.c.bf16 %v5339, %v5337
        %v5586 = vpack.c.bf16 %v5340, %v5338
        %v5587 = vpack.c.bf16 %v5343, %v5341
        %v5588 = vpack.c.bf16 %v5344, %v5342
        %v5589 = vpack.c.bf16 %v5347, %v5345
        %v5590 = vpack.c.bf16 %v5348, %v5346
        %v5591 = vpack.c.bf16 %v5351, %v5349
        %v5592 = vpack.c.bf16 %v5352, %v5350
        %v5593 = vpack.c.bf16 %v5355, %v5353
        %v5594 = vpack.c.bf16 %v5356, %v5354
        %v5595 = vpack.c.bf16 %v5359, %v5357
        %v5596 = vpack.c.bf16 %v5360, %v5358
        %v5597 = vpack.c.bf16 %v5363, %v5361
        %v5598 = vpack.c.bf16 %v5364, %v5362
        %v5599 = vpack.c.bf16 %v5367, %v5365
        %v5600 = vpack.c.bf16 %v5368, %v5366
        %v5601 = vpack.c.bf16 %v5371, %v5369
        %v5602 = vpack.c.bf16 %v5372, %v5370
        %v5603 = vpack.c.bf16 %v5375, %v5373
        %v5604 = vpack.c.bf16 %v5376, %v5374
        %v5605 = vpack.c.bf16 %v5379, %v5377
        %v5606 = vpack.c.bf16 %v5380, %v5378
        %v5607 = vpack.c.bf16 %v5383, %v5381
        %v5608 = vpack.c.bf16 %v5384, %v5382
        %v5609 = vpack.c.bf16 %v5387, %v5385
        %v5610 = vpack.c.bf16 %v5388, %v5386
        %v5611 = vpack.c.bf16 %v5391, %v5389
        %v5612 = vpack.c.bf16 %v5392, %v5390
        %v5613 = vpack.c.bf16 %v5395, %v5393
        %v5614 = vpack.c.bf16 %v5396, %v5394
        %v5615 = vpack.c.bf16 %v5399, %v5397
        %v5616 = vpack.c.bf16 %v5400, %v5398
        %v5617 = vpack.c.bf16 %v5403, %v5401
        %v5618 = vpack.c.bf16 %v5404, %v5402
        %v5619 = vpack.c.bf16 %v5407, %v5405
        %v5620 = vpack.c.bf16 %v5408, %v5406
        %v5621 = vpack.c.bf16 %v5411, %v5409
        %v5622 = vpack.c.bf16 %v5412, %v5410
        %v5623 = vpack.c.bf16 %v5415, %v5413
        %v5624 = vpack.c.bf16 %v5416, %v5414
        %v5625 = vpack.c.bf16 %v5419, %v5417
        %v5626 = vpack.c.bf16 %v5420, %v5418
        %v5627 = vpack.c.bf16 %v5423, %v5421
        %v5628 = vpack.c.bf16 %v5424, %v5422
        %v5629 = vpack.c.bf16 %v5427, %v5425
        %v5630 = vpack.c.bf16 %v5428, %v5426
        %v5631 = vpack.c.bf16 %v5431, %v5429
        %v5632 = vpack.c.bf16 %v5432, %v5430
        %v5633 = vpack.c.bf16 %v5435, %v5433
        %v5634 = vpack.c.bf16 %v5436, %v5434
        %v5635 = vpack.c.bf16 %v5439, %v5437
        %v5636 = vpack.c.bf16 %v5440, %v5438
        %v5637 = vpack.c.bf16 %v5443, %v5441
        %v5638 = vpack.c.bf16 %v5444, %v5442
        %v5639 = vpack.c.bf16 %v5447, %v5445
        %v5640 = vpack.c.bf16 %v5448, %v5446
        %v5641 = vpack.c.bf16 %v5451, %v5449
        %v5642 = vpack.c.bf16 %v5452, %v5450
        %v5643 = vpack.c.bf16 %v5455, %v5453
        %v5644 = vpack.c.bf16 %v5456, %v5454
        %v5645 = vpack.c.bf16 %v5459, %v5457
        %v5646 = vpack.c.bf16 %v5460, %v5458
        %v5647 = vpack.c.bf16 %v5463, %v5461
        %v5648 = vpack.c.bf16 %v5464, %v5462
        %v5649 = vpack.c.bf16 %v5467, %v5465
        %v5650 = vpack.c.bf16 %v5468, %v5466
        %v5651 = vpack.c.bf16 %v5471, %v5469
        %v5652 = vpack.c.bf16 %v5472, %v5470
        %v5653 = vpack.c.bf16 %v5475, %v5473
        %v5654 = vpack.c.bf16 %v5476, %v5474
        %v5655 = vpack.c.bf16 %v5479, %v5477
        %v5656 = vpack.c.bf16 %v5480, %v5478
        %v5657 = vpack.c.bf16 %v5483, %v5481
        %v5658 = vpack.c.bf16 %v5484, %v5482
        %v5659 = vpack.c.bf16 %v5487, %v5485
        %v5660 = vpack.c.bf16 %v5488, %v5486
        %v5661 = vpack.c.bf16 %v5491, %v5489
        %v5662 = vpack.c.bf16 %v5492, %v5490
        %v5663 = vpack.c.bf16 %v5495, %v5493
        %v5664 = vpack.c.bf16 %v5496, %v5494
        %v5665 = vpack.c.bf16 %v5499, %v5497
        %v5666 = vpack.c.bf16 %v5500, %v5498
        %v5667 = vpack.c.bf16 %v5503, %v5501
        %v5668 = vpack.c.bf16 %v5504, %v5502
        %v5669 = vpack.c.bf16 %v5507, %v5505
        %v5670 = vpack.c.bf16 %v5508, %v5506
        %v5671 = vpack.c.bf16 %v5511, %v5509
        %v5672 = vpack.c.bf16 %v5512, %v5510
        %v5673 = vpack.c.bf16 %v5515, %v5513
        %v5674 = vpack.c.bf16 %v5516, %v5514
        %v5675 = vpack.c.bf16 %v5519, %v5517
        %v5676 = vpack.c.bf16 %v5520, %v5518
        %v5677 = vpack.c.bf16 %v5523, %v5521
        %v5678 = vpack.c.bf16 %v5524, %v5522
        %v5679 = vpack.c.bf16 %v5527, %v5525
        %v5680 = vpack.c.bf16 %v5528, %v5526
        %v5681 = vpack.c.bf16 %v5531, %v5529
        %v5682 = vpack.c.bf16 %v5532, %v5530
        %v5683 = vpack.c.bf16 %v5535, %v5533
        %v5684 = vpack.c.bf16 %v5536, %v5534
        %v5685 = vpack.c.bf16 %v5539, %v5537
        %v5686 = vpack.c.bf16 %v5540, %v5538
        %v5687 = vpack.c.bf16 %v5543, %v5541
        %v5688 = vpack.c.bf16 %v5544, %v5542
        %v5689 = vpack.c.bf16 %v5547, %v5545
        %v5690 = vpack.c.bf16 %v5548, %v5546
        %v5691 = vpack.c.bf16 %v5551, %v5549
        %v5692 = vpack.c.bf16 %v5552, %v5550
        %v5693 = vpack.c.bf16 %v5555, %v5553
        %v5694 = vpack.c.bf16 %v5556, %v5554
        %v5695 = vpack.c.bf16 %v5559, %v5557
        %v5696 = vpack.c.bf16 %v5560, %v5558
        %v5697 = vpack.c.bf16 %v5563, %v5561
        %v5698 = vpack.c.bf16 %v5564, %v5562
        %v5699 = vpack.c.bf16 %v5567, %v5565
        %v5700 = vpack.c.bf16 %v5568, %v5566
        %v5701 = vpack.c.bf16 %v5571, %v5569
        %v5702 = vpack.c.bf16 %v5572, %v5570
        %v5703 = vpack.c.bf16 %v5575, %v5573
        %v5704 = vpack.c.bf16 %v5576, %v5574
        %v5705 = vld [vmem:[#allocation8] sm:$0xf]
        %v5706 = vld [vmem:[#allocation8 + $0x4] sm:$0xf]
        %v5707 = vld [vmem:[#allocation8 + $0x8] sm:$0xf]
        %v5708 = vld [vmem:[#allocation8 + $0xc] sm:$0xf]
        %v5709 = vld [vmem:[#allocation8 + $0x10] sm:$0xf]
        %v5710 = vld [vmem:[#allocation8 + $0x14] sm:$0xf]
        %v5711 = vld [vmem:[#allocation8 + $0x18] sm:$0xf]
        %v5712 = vld [vmem:[#allocation8 + $0x1c] sm:$0xf]
        %v5713 = vld [vmem:[#allocation8 + $0x20] sm:$0xf]
        %v5714 = vld [vmem:[#allocation8 + $0x24] sm:$0xf]
        %v5715 = vld [vmem:[#allocation8 + $0x28] sm:$0xf]
        %v5716 = vld [vmem:[#allocation8 + $0x2c] sm:$0xf]
        %v5717 = vld [vmem:[#allocation8 + $0x30] sm:$0xf]
        %v5718 = vld [vmem:[#allocation8 + $0x34] sm:$0xf]
        %v5719 = vld [vmem:[#allocation8 + $0x38] sm:$0xf]
        %v5720 = vld [vmem:[#allocation8 + $0x3c] sm:$0xf]
        %v5721 = vld [vmem:[#allocation8 + $0x40] sm:$0xf]
        %v5722 = vld [vmem:[#allocation8 + $0x44] sm:$0xf]
        %v5723 = vld [vmem:[#allocation8 + $0x48] sm:$0xf]
        %v5724 = vld [vmem:[#allocation8 + $0x4c] sm:$0xf]
        %v5725 = vld [vmem:[#allocation8 + $0x50] sm:$0xf]
        %v5726 = vld [vmem:[#allocation8 + $0x54] sm:$0xf]
        %v5727 = vld [vmem:[#allocation8 + $0x58] sm:$0xf]
        %v5728 = vld [vmem:[#allocation8 + $0x5c] sm:$0xf]
        %v5729 = vld [vmem:[#allocation8 + $0x60] sm:$0xf]
        %v5730 = vld [vmem:[#allocation8 + $0x64] sm:$0xf]
        %v5731 = vld [vmem:[#allocation8 + $0x68] sm:$0xf]
        %v5732 = vld [vmem:[#allocation8 + $0x6c] sm:$0xf]
        %v5733 = vld [vmem:[#allocation8 + $0x70] sm:$0xf]
        %v5734 = vld [vmem:[#allocation8 + $0x74] sm:$0xf]
        %v5735 = vld [vmem:[#allocation8 + $0x78] sm:$0xf]
        %v5736 = vld [vmem:[#allocation8 + $0x7c] sm:$0xf]
        %v5737 = vld [vmem:[#allocation10] sm:$0x1]
        %v5739 = vlaneseq
        %v5740 = vshrl.u32 %v5739, 7
        %v5741 = vsub.s32 0, %v5740
        %v5742 = vrot.slane %v5737, %v5741
        %v5776 = vunpack.c.l.b16 %v5705
        %v5777 = vunpack.c.l.b16 %v5706
        %v5778 = vunpack.c.l.b16 %v5707
        %v5779 = vunpack.c.l.b16 %v5708
        %v5780 = vunpack.c.l.b16 %v5709
        %v5781 = vunpack.c.l.b16 %v5710
        %v5782 = vunpack.c.l.b16 %v5711
        %v5783 = vunpack.c.l.b16 %v5712
        %v5784 = vunpack.c.l.b16 %v5713
        %v5785 = vunpack.c.l.b16 %v5714
        %v5786 = vunpack.c.l.b16 %v5715
        %v5787 = vunpack.c.l.b16 %v5716
        %v5788 = vunpack.c.l.b16 %v5717
        %v5789 = vunpack.c.l.b16 %v5718
        %v5790 = vunpack.c.l.b16 %v5719
        %v5791 = vunpack.c.l.b16 %v5720
        %v5792 = vunpack.c.l.b16 %v5721
        %v5793 = vunpack.c.l.b16 %v5722
        %v5794 = vunpack.c.l.b16 %v5723
        %v5795 = vunpack.c.l.b16 %v5724
        %v5796 = vunpack.c.l.b16 %v5725
        %v5797 = vunpack.c.l.b16 %v5726
        %v5798 = vunpack.c.l.b16 %v5727
        %v5799 = vunpack.c.l.b16 %v5728
        %v5800 = vunpack.c.l.b16 %v5729
        %v5801 = vunpack.c.l.b16 %v5730
        %v5802 = vunpack.c.l.b16 %v5731
        %v5803 = vunpack.c.l.b16 %v5732
        %v5804 = vunpack.c.l.b16 %v5733
        %v5805 = vunpack.c.l.b16 %v5734
        %v5806 = vunpack.c.l.b16 %v5735
        %v5807 = vunpack.c.l.b16 %v5736
        %v5808 = vpack.c.b16 %v5777, %v5776
        %v5809 = vpack.c.b16 %v5779, %v5778
        %v5810 = vpack.c.b16 %v5781, %v5780
        %v5811 = vpack.c.b16 %v5783, %v5782
        %v5812 = vpack.c.b16 %v5785, %v5784
        %v5813 = vpack.c.b16 %v5787, %v5786
        %v5814 = vpack.c.b16 %v5789, %v5788
        %v5815 = vpack.c.b16 %v5791, %v5790
        %v5816 = vpack.c.b16 %v5793, %v5792
        %v5817 = vpack.c.b16 %v5795, %v5794
        %v5818 = vpack.c.b16 %v5797, %v5796
        %v5819 = vpack.c.b16 %v5799, %v5798
        %v5820 = vpack.c.b16 %v5801, %v5800
        %v5821 = vpack.c.b16 %v5803, %v5802
        %v5822 = vpack.c.b16 %v5805, %v5804
        %v5823 = vpack.c.b16 %v5807, %v5806
        %5840 = vmatprep.subr.bf16.mxu0 0
        %5841 = vmatpush1.bf16.msra.mxu0 %v5808
        %5842 = vmatprep.subr.bf16.mxu0 0
        %5843 = vmatpush1.bf16.msra.mxu0 %v5809
        %5844 = vmatprep.subr.bf16.mxu0 0
        %5845 = vmatpush1.bf16.msra.mxu0 %v5810
        %5846 = vmatprep.subr.bf16.mxu0 0
        %5847 = vmatpush1.bf16.msra.mxu0 %v5811
        %5848 = vmatprep.subr.bf16.mxu0 0
        %5849 = vmatpush1.bf16.msra.mxu0 %v5812
        %5850 = vmatprep.subr.bf16.mxu0 0
        %5851 = vmatpush1.bf16.msra.mxu0 %v5813
        %5852 = vmatprep.subr.bf16.mxu0 0
        %5853 = vmatpush1.bf16.msra.mxu0 %v5814
        %5854 = vmatprep.subr.bf16.mxu0 0
        %5855 = vmatpush1.bf16.msra.mxu0 %v5815
        %5856 = vmatprep.subr.bf16.mxu0 0
        %5857 = vmatpush1.bf16.msra.mxu0 %v5816
        %5858 = vmatprep.subr.bf16.mxu0 0
        %5859 = vmatpush1.bf16.msra.mxu0 %v5817
        %5860 = vmatprep.subr.bf16.mxu0 0
        %5861 = vmatpush1.bf16.msra.mxu0 %v5818
        %5862 = vmatprep.subr.bf16.mxu0 0
        %5863 = vmatpush1.bf16.msra.mxu0 %v5819
        %5864 = vmatprep.subr.bf16.mxu0 0
        %5865 = vmatpush1.bf16.msra.mxu0 %v5820
        %5866 = vmatprep.subr.bf16.mxu0 0
        %5867 = vmatpush1.bf16.msra.mxu0 %v5821
        %5868 = vmatprep.subr.bf16.mxu0 0
        %5869 = vmatpush1.bf16.msra.mxu0 %v5822
        %5870 = vmatprep.subr.bf16.mxu0 0
        %5871 = vmatpush1.bf16.msra.mxu0 %v5823
        %5872 = vmatprep.mubr.bf16.mxu0 %v5578
        %5873 = vmatmul.mubr.bf16.gmra.mrb[0].mxu0 %v5577
        %v5874 = vpop.f32.mrb[0].mxu0
        %v5875 = vadd.f32 %v5742, %v5874
        %v5876 = vpop.f32.mrb[0].mxu0
        %v5877 = vpop.f32.mrb[0].mxu0
        %v5878 = vadd.f32 %v5742, %v5877
        %v5879 = vpop.f32.mrb[0].mxu0
        %5880 = vmatprep.mubr.bf16.mxu0 %v5580
        %5881 = vmatmul.mubr.bf16.gmra.mrb[0].mxu0 %v5579
        %v5882 = vpop.f32.mrb[0].mxu0
        %v5883 = vadd.f32 %v5742, %v5882
        %v5884 = vpop.f32.mrb[0].mxu0
        %v5885 = vpop.f32.mrb[0].mxu0
        %v5886 = vadd.f32 %v5742, %v5885
        %v5887 = vpop.f32.mrb[0].mxu0
        %5888 = vmatprep.mubr.bf16.mxu0 %v5582
        %5889 = vmatmul.mubr.bf16.gmra.mrb[0].mxu0 %v5581
        %v5890 = vpop.f32.mrb[0].mxu0
        %v5891 = vadd.f32 %v5742, %v5890
        %v5892 = vpop.f32.mrb[0].mxu0
        %v5893 = vpop.f32.mrb[0].mxu0
        %v5894 = vadd.f32 %v5742, %v5893
        %v5895 = vpop.f32.mrb[0].mxu0
        %5896 = vmatprep.mubr.bf16.mxu0 %v5584
        %5897 = vmatmul.mubr.bf16.gmra.mrb[0].mxu0 %v5583
        %v5898 = vpop.f32.mrb[0].mxu0
        %v5899 = vadd.f32 %v5742, %v5898
        %v5900 = vpop.f32.mrb[0].mxu0
        %v5901 = vpop.f32.mrb[0].mxu0
        %v5902 = vadd.f32 %v5742, %v5901
        %v5903 = vpop.f32.mrb[0].mxu0
        %5904 = vmatprep.mubr.bf16.mxu0 %v5586
        %5905 = vmatmul.mubr.bf16.gmra.mrb[0].mxu0 %v5585
        %v5906 = vpop.f32.mrb[0].mxu0
        %v5907 = vadd.f32 %v5742, %v5906
        %v5908 = vpop.f32.mrb[0].mxu0
        %v5909 = vpop.f32.mrb[0].mxu0
        %v5910 = vadd.f32 %v5742, %v5909
        %v5911 = vpop.f32.mrb[0].mxu0
        %5912 = vmatprep.mubr.bf16.mxu0 %v5588
        %5913 = vmatmul.mubr.bf16.gmra.mrb[0].mxu0 %v5587
        %v5914 = vpop.f32.mrb[0].mxu0
        %v5915 = vadd.f32 %v5742, %v5914
        %v5916 = vpop.f32.mrb[0].mxu0
        %v5917 = vpop.f32.mrb[0].mxu0
        %v5918 = vadd.f32 %v5742, %v5917
        %v5919 = vpop.f32.mrb[0].mxu0
        %5920 = vmatprep.mubr.bf16.mxu0 %v5590
        %5921 = vmatmul.mubr.bf16.gmra.mrb[0].mxu0 %v5589
        %v5922 = vpop.f32.mrb[0].mxu0
        %v5923 = vadd.f32 %v5742, %v5922
        %v5924 = vpop.f32.mrb[0].mxu0
        %v5925 = vpop.f32.mrb[0].mxu0
        %v5926 = vadd.f32 %v5742, %v5925
        %v5927 = vpop.f32.mrb[0].mxu0
        %5928 = vmatprep.mubr.bf16.mxu0 %v5592
        %5929 = vmatmul.mubr.bf16.gmra.mrb[0].mxu0 %v5591
        %v5930 = vpop.f32.mrb[0].mxu0
        %v5931 = vadd.f32 %v5742, %v5930
        %v5932 = vpop.f32.mrb[0].mxu0
        %v5933 = vpop.f32.mrb[0].mxu0
        %v5934 = vadd.f32 %v5742, %v5933
        %v5935 = vpop.f32.mrb[0].mxu0
        %5936 = vmatprep.mubr.bf16.mxu0 %v5594
        %5937 = vmatmul.mubr.bf16.gmra.mrb[0].mxu0 %v5593
        %v5938 = vpop.f32.mrb[0].mxu0
        %v5939 = vadd.f32 %v5742, %v5938
        %v5940 = vpop.f32.mrb[0].mxu0
        %v5941 = vpop.f32.mrb[0].mxu0
        %v5942 = vadd.f32 %v5742, %v5941
        %v5943 = vpop.f32.mrb[0].mxu0
        %5944 = vmatprep.mubr.bf16.mxu0 %v5596
        %5945 = vmatmul.mubr.bf16.gmra.mrb[0].mxu0 %v5595
        %v5946 = vpop.f32.mrb[0].mxu0
        %v5947 = vadd.f32 %v5742, %v5946
        %v5948 = vpop.f32.mrb[0].mxu0
        %v5949 = vpop.f32.mrb[0].mxu0
        %v5950 = vadd.f32 %v5742, %v5949
        %v5951 = vpop.f32.mrb[0].mxu0
        %5952 = vmatprep.mubr.bf16.mxu0 %v5598
        %5953 = vmatmul.mubr.bf16.gmra.mrb[0].mxu0 %v5597
        %v5954 = vpop.f32.mrb[0].mxu0
        %v5955 = vadd.f32 %v5742, %v5954
        %v5956 = vpop.f32.mrb[0].mxu0
        %v5957 = vpop.f32.mrb[0].mxu0
        %v5958 = vadd.f32 %v5742, %v5957
        %v5959 = vpop.f32.mrb[0].mxu0
        %5960 = vmatprep.mubr.bf16.mxu0 %v5600
        %5961 = vmatmul.mubr.bf16.gmra.mrb[0].mxu0 %v5599
        %v5962 = vpop.f32.mrb[0].mxu0
        %v5963 = vadd.f32 %v5742, %v5962
        %v5964 = vpop.f32.mrb[0].mxu0
        %v5965 = vpop.f32.mrb[0].mxu0
        %v5966 = vadd.f32 %v5742, %v5965
        %v5967 = vpop.f32.mrb[0].mxu0
        %5968 = vmatprep.mubr.bf16.mxu0 %v5602
        %5969 = vmatmul.mubr.bf16.gmra.mrb[0].mxu0 %v5601
        %v5970 = vpop.f32.mrb[0].mxu0
        %v5971 = vadd.f32 %v5742, %v5970
        %v5972 = vpop.f32.mrb[0].mxu0
        %v5973 = vpop.f32.mrb[0].mxu0
        %v5974 = vadd.f32 %v5742, %v5973
        %v5975 = vpop.f32.mrb[0].mxu0
        %5976 = vmatprep.mubr.bf16.mxu0 %v5604
        %5977 = vmatmul.mubr.bf16.gmra.mrb[0].mxu0 %v5603
        %v5978 = vpop.f32.mrb[0].mxu0
        %v5979 = vadd.f32 %v5742, %v5978
        %v5980 = vpop.f32.mrb[0].mxu0
        %v5981 = vpop.f32.mrb[0].mxu0
        %v5982 = vadd.f32 %v5742, %v5981
        %v5983 = vpop.f32.mrb[0].mxu0
        %5984 = vmatprep.mubr.bf16.mxu0 %v5606
        %5985 = vmatmul.mubr.bf16.gmra.mrb[0].mxu0 %v5605
        %v5986 = vpop.f32.mrb[0].mxu0
        %v5987 = vadd.f32 %v5742, %v5986
        %v5988 = vpop.f32.mrb[0].mxu0
        %v5989 = vpop.f32.mrb[0].mxu0
        %v5990 = vadd.f32 %v5742, %v5989
        %v5991 = vpop.f32.mrb[0].mxu0
        %5992 = vmatprep.mubr.bf16.mxu0 %v5608
        %5993 = vmatmul.mubr.bf16.gmra.mrb[0].mxu0 %v5607
        %v5994 = vpop.f32.mrb[0].mxu0
        %v5995 = vadd.f32 %v5742, %v5994
        %v5996 = vpop.f32.mrb[0].mxu0
        %v5997 = vpop.f32.mrb[0].mxu0
        %v5998 = vadd.f32 %v5742, %v5997
        %v5999 = vpop.f32.mrb[0].mxu0
        %6000 = vmatprep.mubr.bf16.mxu0 %v5610
        %6001 = vmatmul.mubr.bf16.gmra.mrb[0].mxu0 %v5609
        %v6002 = vpop.f32.mrb[0].mxu0
        %v6003 = vadd.f32 %v5742, %v6002
        %v6004 = vpop.f32.mrb[0].mxu0
        %v6005 = vpop.f32.mrb[0].mxu0
        %v6006 = vadd.f32 %v5742, %v6005
        %v6007 = vpop.f32.mrb[0].mxu0
        %6008 = vmatprep.mubr.bf16.mxu0 %v5612
        %6009 = vmatmul.mubr.bf16.gmra.mrb[0].mxu0 %v5611
        %v6010 = vpop.f32.mrb[0].mxu0
        %v6011 = vadd.f32 %v5742, %v6010
        %v6012 = vpop.f32.mrb[0].mxu0
        %v6013 = vpop.f32.mrb[0].mxu0
        %v6014 = vadd.f32 %v5742, %v6013
        %v6015 = vpop.f32.mrb[0].mxu0
        %6016 = vmatprep.mubr.bf16.mxu0 %v5614
        %6017 = vmatmul.mubr.bf16.gmra.mrb[0].mxu0 %v5613
        %v6018 = vpop.f32.mrb[0].mxu0
        %v6019 = vadd.f32 %v5742, %v6018
        %v6020 = vpop.f32.mrb[0].mxu0
        %v6021 = vpop.f32.mrb[0].mxu0
        %v6022 = vadd.f32 %v5742, %v6021
        %v6023 = vpop.f32.mrb[0].mxu0
        %6024 = vmatprep.mubr.bf16.mxu0 %v5616
        %6025 = vmatmul.mubr.bf16.gmra.mrb[0].mxu0 %v5615
        %v6026 = vpop.f32.mrb[0].mxu0
        %v6027 = vadd.f32 %v5742, %v6026
        %v6028 = vpop.f32.mrb[0].mxu0
        %v6029 = vpop.f32.mrb[0].mxu0
        %v6030 = vadd.f32 %v5742, %v6029
        %v6031 = vpop.f32.mrb[0].mxu0
        %6032 = vmatprep.mubr.bf16.mxu0 %v5618
        %6033 = vmatmul.mubr.bf16.gmra.mrb[0].mxu0 %v5617
        %v6034 = vpop.f32.mrb[0].mxu0
        %v6035 = vadd.f32 %v5742, %v6034
        %v6036 = vpop.f32.mrb[0].mxu0
        %v6037 = vpop.f32.mrb[0].mxu0
        %v6038 = vadd.f32 %v5742, %v6037
        %v6039 = vpop.f32.mrb[0].mxu0
        %6040 = vmatprep.mubr.bf16.mxu0 %v5620
        %6041 = vmatmul.mubr.bf16.gmra.mrb[0].mxu0 %v5619
        %v6042 = vpop.f32.mrb[0].mxu0
        %v6043 = vadd.f32 %v5742, %v6042
        %v6044 = vpop.f32.mrb[0].mxu0
        %v6045 = vpop.f32.mrb[0].mxu0
        %v6046 = vadd.f32 %v5742, %v6045
        %v6047 = vpop.f32.mrb[0].mxu0
        %6048 = vmatprep.mubr.bf16.mxu0 %v5622
        %6049 = vmatmul.mubr.bf16.gmra.mrb[0].mxu0 %v5621
        %v6050 = vpop.f32.mrb[0].mxu0
        %v6051 = vadd.f32 %v5742, %v6050
        %v6052 = vpop.f32.mrb[0].mxu0
        %v6053 = vpop.f32.mrb[0].mxu0
        %v6054 = vadd.f32 %v5742, %v6053
        %v6055 = vpop.f32.mrb[0].mxu0
        %6056 = vmatprep.mubr.bf16.mxu0 %v5624
        %6057 = vmatmul.mubr.bf16.gmra.mrb[0].mxu0 %v5623
        %v6058 = vpop.f32.mrb[0].mxu0
        %v6059 = vadd.f32 %v5742, %v6058
        %v6060 = vpop.f32.mrb[0].mxu0
        %v6061 = vpop.f32.mrb[0].mxu0
        %v6062 = vadd.f32 %v5742, %v6061
        %v6063 = vpop.f32.mrb[0].mxu0
        %6064 = vmatprep.mubr.bf16.mxu0 %v5626
        %6065 = vmatmul.mubr.bf16.gmra.mrb[0].mxu0 %v5625
        %v6066 = vpop.f32.mrb[0].mxu0
        %v6067 = vadd.f32 %v5742, %v6066
        %v6068 = vpop.f32.mrb[0].mxu0
        %v6069 = vpop.f32.mrb[0].mxu0
        %v6070 = vadd.f32 %v5742, %v6069
        %v6071 = vpop.f32.mrb[0].mxu0
        %6072 = vmatprep.mubr.bf16.mxu0 %v5628
        %6073 = vmatmul.mubr.bf16.gmra.mrb[0].mxu0 %v5627
        %v6074 = vpop.f32.mrb[0].mxu0
        %v6075 = vadd.f32 %v5742, %v6074
        %v6076 = vpop.f32.mrb[0].mxu0
        %v6077 = vpop.f32.mrb[0].mxu0
        %v6078 = vadd.f32 %v5742, %v6077
        %v6079 = vpop.f32.mrb[0].mxu0
        %6080 = vmatprep.mubr.bf16.mxu0 %v5630
        %6081 = vmatmul.mubr.bf16.gmra.mrb[0].mxu0 %v5629
        %v6082 = vpop.f32.mrb[0].mxu0
        %v6083 = vadd.f32 %v5742, %v6082
        %v6084 = vpop.f32.mrb[0].mxu0
        %v6085 = vpop.f32.mrb[0].mxu0
        %v6086 = vadd.f32 %v5742, %v6085
        %v6087 = vpop.f32.mrb[0].mxu0
        %6088 = vmatprep.mubr.bf16.mxu0 %v5632
        %6089 = vmatmul.mubr.bf16.gmra.mrb[0].mxu0 %v5631
        %v6090 = vpop.f32.mrb[0].mxu0
        %v6091 = vadd.f32 %v5742, %v6090
        %v6092 = vpop.f32.mrb[0].mxu0
        %v6093 = vpop.f32.mrb[0].mxu0
        %v6094 = vadd.f32 %v5742, %v6093
        %v6095 = vpop.f32.mrb[0].mxu0
        %6096 = vmatprep.mubr.bf16.mxu0 %v5634
        %6097 = vmatmul.mubr.bf16.gmra.mrb[0].mxu0 %v5633
        %v6098 = vpop.f32.mrb[0].mxu0
        %v6099 = vadd.f32 %v5742, %v6098
        %v6100 = vpop.f32.mrb[0].mxu0
        %v6101 = vpop.f32.mrb[0].mxu0
        %v6102 = vadd.f32 %v5742, %v6101
        %v6103 = vpop.f32.mrb[0].mxu0
        %6104 = vmatprep.mubr.bf16.mxu0 %v5636
        %6105 = vmatmul.mubr.bf16.gmra.mrb[0].mxu0 %v5635
        %v6106 = vpop.f32.mrb[0].mxu0
        %v6107 = vadd.f32 %v5742, %v6106
        %v6108 = vpop.f32.mrb[0].mxu0
        %v6109 = vpop.f32.mrb[0].mxu0
        %v6110 = vadd.f32 %v5742, %v6109
        %v6111 = vpop.f32.mrb[0].mxu0
        %6112 = vmatprep.mubr.bf16.mxu0 %v5638
        %6113 = vmatmul.mubr.bf16.gmra.mrb[0].mxu0 %v5637
        %v6114 = vpop.f32.mrb[0].mxu0
        %v6115 = vadd.f32 %v5742, %v6114
        %v6116 = vpop.f32.mrb[0].mxu0
        %v6117 = vpop.f32.mrb[0].mxu0
        %v6118 = vadd.f32 %v5742, %v6117
        %v6119 = vpop.f32.mrb[0].mxu0
        %6120 = vmatprep.mubr.bf16.mxu0 %v5640
        %6121 = vmatmul.mubr.bf16.gmra.mrb[0].mxu0 %v5639
        %v6122 = vpop.f32.mrb[0].mxu0
        %v6123 = vadd.f32 %v5742, %v6122
        %v6124 = vpop.f32.mrb[0].mxu0
        %v6125 = vpop.f32.mrb[0].mxu0
        %v6126 = vadd.f32 %v5742, %v6125
        %v6127 = vpop.f32.mrb[0].mxu0
        %6128 = vmatprep.mubr.bf16.mxu0 %v5642
        %6129 = vmatmul.mubr.bf16.gmra.mrb[0].mxu0 %v5641
        %v6130 = vpop.f32.mrb[0].mxu0
        %v6131 = vadd.f32 %v5742, %v6130
        %v6132 = vpop.f32.mrb[0].mxu0
        %v6133 = vpop.f32.mrb[0].mxu0
        %v6134 = vadd.f32 %v5742, %v6133
        %v6135 = vpop.f32.mrb[0].mxu0
        %6136 = vmatprep.mubr.bf16.mxu0 %v5644
        %6137 = vmatmul.mubr.bf16.gmra.mrb[0].mxu0 %v5643
        %v6138 = vpop.f32.mrb[0].mxu0
        %v6139 = vadd.f32 %v5742, %v6138
        %v6140 = vpop.f32.mrb[0].mxu0
        %v6141 = vpop.f32.mrb[0].mxu0
        %v6142 = vadd.f32 %v5742, %v6141
        %v6143 = vpop.f32.mrb[0].mxu0
        %6144 = vmatprep.mubr.bf16.mxu0 %v5646
        %6145 = vmatmul.mubr.bf16.gmra.mrb[0].mxu0 %v5645
        %v6146 = vpop.f32.mrb[0].mxu0
        %v6147 = vadd.f32 %v5742, %v6146
        %v6148 = vpop.f32.mrb[0].mxu0
        %v6149 = vpop.f32.mrb[0].mxu0
        %v6150 = vadd.f32 %v5742, %v6149
        %v6151 = vpop.f32.mrb[0].mxu0
        %6152 = vmatprep.mubr.bf16.mxu0 %v5648
        %6153 = vmatmul.mubr.bf16.gmra.mrb[0].mxu0 %v5647
        %v6154 = vpop.f32.mrb[0].mxu0
        %v6155 = vadd.f32 %v5742, %v6154
        %v6156 = vpop.f32.mrb[0].mxu0
        %v6157 = vpop.f32.mrb[0].mxu0
        %v6158 = vadd.f32 %v5742, %v6157
        %v6159 = vpop.f32.mrb[0].mxu0
        %6160 = vmatprep.mubr.bf16.mxu0 %v5650
        %6161 = vmatmul.mubr.bf16.gmra.mrb[0].mxu0 %v5649
        %v6162 = vpop.f32.mrb[0].mxu0
        %v6163 = vadd.f32 %v5742, %v6162
        %v6164 = vpop.f32.mrb[0].mxu0
        %v6165 = vpop.f32.mrb[0].mxu0
        %v6166 = vadd.f32 %v5742, %v6165
        %v6167 = vpop.f32.mrb[0].mxu0
        %6168 = vmatprep.mubr.bf16.mxu0 %v5652
        %6169 = vmatmul.mubr.bf16.gmra.mrb[0].mxu0 %v5651
        %v6170 = vpop.f32.mrb[0].mxu0
        %v6171 = vadd.f32 %v5742, %v6170
        %v6172 = vpop.f32.mrb[0].mxu0
        %v6173 = vpop.f32.mrb[0].mxu0
        %v6174 = vadd.f32 %v5742, %v6173
        %v6175 = vpop.f32.mrb[0].mxu0
        %6176 = vmatprep.mubr.bf16.mxu0 %v5654
        %6177 = vmatmul.mubr.bf16.gmra.mrb[0].mxu0 %v5653
        %v6178 = vpop.f32.mrb[0].mxu0
        %v6179 = vadd.f32 %v5742, %v6178
        %v6180 = vpop.f32.mrb[0].mxu0
        %v6181 = vpop.f32.mrb[0].mxu0
        %v6182 = vadd.f32 %v5742, %v6181
        %v6183 = vpop.f32.mrb[0].mxu0
        %6184 = vmatprep.mubr.bf16.mxu0 %v5656
        %6185 = vmatmul.mubr.bf16.gmra.mrb[0].mxu0 %v5655
        %v6186 = vpop.f32.mrb[0].mxu0
        %v6187 = vadd.f32 %v5742, %v6186
        %v6188 = vpop.f32.mrb[0].mxu0
        %v6189 = vpop.f32.mrb[0].mxu0
        %v6190 = vadd.f32 %v5742, %v6189
        %v6191 = vpop.f32.mrb[0].mxu0
        %6192 = vmatprep.mubr.bf16.mxu0 %v5658
        %6193 = vmatmul.mubr.bf16.gmra.mrb[0].mxu0 %v5657
        %v6194 = vpop.f32.mrb[0].mxu0
        %v6195 = vadd.f32 %v5742, %v6194
        %v6196 = vpop.f32.mrb[0].mxu0
        %v6197 = vpop.f32.mrb[0].mxu0
        %v6198 = vadd.f32 %v5742, %v6197
        %v6199 = vpop.f32.mrb[0].mxu0
        %6200 = vmatprep.mubr.bf16.mxu0 %v5660
        %6201 = vmatmul.mubr.bf16.gmra.mrb[0].mxu0 %v5659
        %v6202 = vpop.f32.mrb[0].mxu0
        %v6203 = vadd.f32 %v5742, %v6202
        %v6204 = vpop.f32.mrb[0].mxu0
        %v6205 = vpop.f32.mrb[0].mxu0
        %v6206 = vadd.f32 %v5742, %v6205
        %v6207 = vpop.f32.mrb[0].mxu0
        %6208 = vmatprep.mubr.bf16.mxu0 %v5662
        %6209 = vmatmul.mubr.bf16.gmra.mrb[0].mxu0 %v5661
        %v6210 = vpop.f32.mrb[0].mxu0
        %v6211 = vadd.f32 %v5742, %v6210
        %v6212 = vpop.f32.mrb[0].mxu0
        %v6213 = vpop.f32.mrb[0].mxu0
        %v6214 = vadd.f32 %v5742, %v6213
        %v6215 = vpop.f32.mrb[0].mxu0
        %6216 = vmatprep.mubr.bf16.mxu0 %v5664
        %6217 = vmatmul.mubr.bf16.gmra.mrb[0].mxu0 %v5663
        %v6218 = vpop.f32.mrb[0].mxu0
        %v6219 = vadd.f32 %v5742, %v6218
        %v6220 = vpop.f32.mrb[0].mxu0
        %v6221 = vpop.f32.mrb[0].mxu0
        %v6222 = vadd.f32 %v5742, %v6221
        %v6223 = vpop.f32.mrb[0].mxu0
        %6224 = vmatprep.mubr.bf16.mxu0 %v5666
        %6225 = vmatmul.mubr.bf16.gmra.mrb[0].mxu0 %v5665
        %v6226 = vpop.f32.mrb[0].mxu0
        %v6227 = vadd.f32 %v5742, %v6226
        %v6228 = vpop.f32.mrb[0].mxu0
        %v6229 = vpop.f32.mrb[0].mxu0
        %v6230 = vadd.f32 %v5742, %v6229
        %v6231 = vpop.f32.mrb[0].mxu0
        %6232 = vmatprep.mubr.bf16.mxu0 %v5668
        %6233 = vmatmul.mubr.bf16.gmra.mrb[0].mxu0 %v5667
        %v6234 = vpop.f32.mrb[0].mxu0
        %v6235 = vadd.f32 %v5742, %v6234
        %v6236 = vpop.f32.mrb[0].mxu0
        %v6237 = vpop.f32.mrb[0].mxu0
        %v6238 = vadd.f32 %v5742, %v6237
        %v6239 = vpop.f32.mrb[0].mxu0
        %6240 = vmatprep.mubr.bf16.mxu0 %v5670
        %6241 = vmatmul.mubr.bf16.gmra.mrb[0].mxu0 %v5669
        %v6242 = vpop.f32.mrb[0].mxu0
        %v6243 = vadd.f32 %v5742, %v6242
        %v6244 = vpop.f32.mrb[0].mxu0
        %v6245 = vpop.f32.mrb[0].mxu0
        %v6246 = vadd.f32 %v5742, %v6245
        %v6247 = vpop.f32.mrb[0].mxu0
        %6248 = vmatprep.mubr.bf16.mxu0 %v5672
        %6249 = vmatmul.mubr.bf16.gmra.mrb[0].mxu0 %v5671
        %v6250 = vpop.f32.mrb[0].mxu0
        %v6251 = vadd.f32 %v5742, %v6250
        %v6252 = vpop.f32.mrb[0].mxu0
        %v6253 = vpop.f32.mrb[0].mxu0
        %v6254 = vadd.f32 %v5742, %v6253
        %v6255 = vpop.f32.mrb[0].mxu0
        %6256 = vmatprep.mubr.bf16.mxu0 %v5674
        %6257 = vmatmul.mubr.bf16.gmra.mrb[0].mxu0 %v5673
        %v6258 = vpop.f32.mrb[0].mxu0
        %v6259 = vadd.f32 %v5742, %v6258
        %v6260 = vpop.f32.mrb[0].mxu0
        %v6261 = vpop.f32.mrb[0].mxu0
        %v6262 = vadd.f32 %v5742, %v6261
        %v6263 = vpop.f32.mrb[0].mxu0
        %6264 = vmatprep.mubr.bf16.mxu0 %v5676
        %6265 = vmatmul.mubr.bf16.gmra.mrb[0].mxu0 %v5675
        %v6266 = vpop.f32.mrb[0].mxu0
        %v6267 = vadd.f32 %v5742, %v6266
        %v6268 = vpop.f32.mrb[0].mxu0
        %v6269 = vpop.f32.mrb[0].mxu0
        %v6270 = vadd.f32 %v5742, %v6269
        %v6271 = vpop.f32.mrb[0].mxu0
        %6272 = vmatprep.mubr.bf16.mxu0 %v5678
        %6273 = vmatmul.mubr.bf16.gmra.mrb[0].mxu0 %v5677
        %v6274 = vpop.f32.mrb[0].mxu0
        %v6275 = vadd.f32 %v5742, %v6274
        %v6276 = vpop.f32.mrb[0].mxu0
        %v6277 = vpop.f32.mrb[0].mxu0
        %v6278 = vadd.f32 %v5742, %v6277
        %v6279 = vpop.f32.mrb[0].mxu0
        %6280 = vmatprep.mubr.bf16.mxu0 %v5680
        %6281 = vmatmul.mubr.bf16.gmra.mrb[0].mxu0 %v5679
        %v6282 = vpop.f32.mrb[0].mxu0
        %v6283 = vadd.f32 %v5742, %v6282
        %v6284 = vpop.f32.mrb[0].mxu0
        %v6285 = vpop.f32.mrb[0].mxu0
        %v6286 = vadd.f32 %v5742, %v6285
        %v6287 = vpop.f32.mrb[0].mxu0
        %6288 = vmatprep.mubr.bf16.mxu0 %v5682
        %6289 = vmatmul.mubr.bf16.gmra.mrb[0].mxu0 %v5681
        %v6290 = vpop.f32.mrb[0].mxu0
        %v6291 = vadd.f32 %v5742, %v6290
        %v6292 = vpop.f32.mrb[0].mxu0
        %v6293 = vpop.f32.mrb[0].mxu0
        %v6294 = vadd.f32 %v5742, %v6293
        %v6295 = vpop.f32.mrb[0].mxu0
        %6296 = vmatprep.mubr.bf16.mxu0 %v5684
        %6297 = vmatmul.mubr.bf16.gmra.mrb[0].mxu0 %v5683
        %v6298 = vpop.f32.mrb[0].mxu0
        %v6299 = vadd.f32 %v5742, %v6298
        %v6300 = vpop.f32.mrb[0].mxu0
        %v6301 = vpop.f32.mrb[0].mxu0
        %v6302 = vadd.f32 %v5742, %v6301
        %v6303 = vpop.f32.mrb[0].mxu0
        %6304 = vmatprep.mubr.bf16.mxu0 %v5686
        %6305 = vmatmul.mubr.bf16.gmra.mrb[0].mxu0 %v5685
        %v6306 = vpop.f32.mrb[0].mxu0
        %v6307 = vadd.f32 %v5742, %v6306
        %v6308 = vpop.f32.mrb[0].mxu0
        %v6309 = vpop.f32.mrb[0].mxu0
        %v6310 = vadd.f32 %v5742, %v6309
        %v6311 = vpop.f32.mrb[0].mxu0
        %6312 = vmatprep.mubr.bf16.mxu0 %v5688
        %6313 = vmatmul.mubr.bf16.gmra.mrb[0].mxu0 %v5687
        %v6314 = vpop.f32.mrb[0].mxu0
        %v6315 = vadd.f32 %v5742, %v6314
        %v6316 = vpop.f32.mrb[0].mxu0
        %v6317 = vpop.f32.mrb[0].mxu0
        %v6318 = vadd.f32 %v5742, %v6317
        %v6319 = vpop.f32.mrb[0].mxu0
        %6320 = vmatprep.mubr.bf16.mxu0 %v5690
        %6321 = vmatmul.mubr.bf16.gmra.mrb[0].mxu0 %v5689
        %v6322 = vpop.f32.mrb[0].mxu0
        %v6323 = vadd.f32 %v5742, %v6322
        %v6324 = vpop.f32.mrb[0].mxu0
        %v6325 = vpop.f32.mrb[0].mxu0
        %v6326 = vadd.f32 %v5742, %v6325
        %v6327 = vpop.f32.mrb[0].mxu0
        %6328 = vmatprep.mubr.bf16.mxu0 %v5692
        %6329 = vmatmul.mubr.bf16.gmra.mrb[0].mxu0 %v5691
        %v6330 = vpop.f32.mrb[0].mxu0
        %v6331 = vadd.f32 %v5742, %v6330
        %v6332 = vpop.f32.mrb[0].mxu0
        %v6333 = vpop.f32.mrb[0].mxu0
        %v6334 = vadd.f32 %v5742, %v6333
        %v6335 = vpop.f32.mrb[0].mxu0
        %6336 = vmatprep.mubr.bf16.mxu0 %v5694
        %6337 = vmatmul.mubr.bf16.gmra.mrb[0].mxu0 %v5693
        %v6338 = vpop.f32.mrb[0].mxu0
        %v6339 = vadd.f32 %v5742, %v6338
        %v6340 = vpop.f32.mrb[0].mxu0
        %v6341 = vpop.f32.mrb[0].mxu0
        %v6342 = vadd.f32 %v5742, %v6341
        %v6343 = vpop.f32.mrb[0].mxu0
        %6344 = vmatprep.mubr.bf16.mxu0 %v5696
        %6345 = vmatmul.mubr.bf16.gmra.mrb[0].mxu0 %v5695
        %v6346 = vpop.f32.mrb[0].mxu0
        %v6347 = vadd.f32 %v5742, %v6346
        %v6348 = vpop.f32.mrb[0].mxu0
        %v6349 = vpop.f32.mrb[0].mxu0
        %v6350 = vadd.f32 %v5742, %v6349
        %v6351 = vpop.f32.mrb[0].mxu0
        %6352 = vmatprep.mubr.bf16.mxu0 %v5698
        %6353 = vmatmul.mubr.bf16.gmra.mrb[0].mxu0 %v5697
        %v6354 = vpop.f32.mrb[0].mxu0
        %v6355 = vadd.f32 %v5742, %v6354
        %v6356 = vpop.f32.mrb[0].mxu0
        %v6357 = vpop.f32.mrb[0].mxu0
        %v6358 = vadd.f32 %v5742, %v6357
        %v6359 = vpop.f32.mrb[0].mxu0
        %6360 = vmatprep.mubr.bf16.mxu0 %v5700
        %6361 = vmatmul.mubr.bf16.gmra.mrb[0].mxu0 %v5699
        %v6362 = vpop.f32.mrb[0].mxu0
        %v6363 = vadd.f32 %v5742, %v6362
        %v6364 = vpop.f32.mrb[0].mxu0
        %v6365 = vpop.f32.mrb[0].mxu0
        %v6366 = vadd.f32 %v5742, %v6365
        %v6367 = vpop.f32.mrb[0].mxu0
        %6368 = vmatprep.mubr.bf16.mxu0 %v5702
        %6369 = vmatmul.mubr.bf16.gmra.mrb[0].mxu0 %v5701
        %v6370 = vpop.f32.mrb[0].mxu0
        %v6371 = vadd.f32 %v5742, %v6370
        %v6372 = vpop.f32.mrb[0].mxu0
        %v6373 = vpop.f32.mrb[0].mxu0
        %v6374 = vadd.f32 %v5742, %v6373
        %v6375 = vpop.f32.mrb[0].mxu0
        %6376 = vmatprep.mubr.bf16.mxu0 %v5704
        %6377 = vmatmul.mubr.bf16.gmra.mrb[0].mxu0 %v5703
        %v6378 = vpop.f32.mrb[0].mxu0
        %v6379 = vadd.f32 %v5742, %v6378
        %v6380 = vpop.f32.mrb[0].mxu0
        %v6381 = vpop.f32.mrb[0].mxu0
        %v6382 = vadd.f32 %v5742, %v6381
        %v6383 = vpop.f32.mrb[0].mxu0
        %6384 = vdwg.mxu0
        %6385 = vxpose.xlu0.b32.start [1/16] %v5875, 128
        %6386 = vxpose.xlu0.b32.cont [2/16] %v5878, 128
        %6387 = vxpose.xlu0.b32.cont [3/16] %v5883, 128
        %6388 = vxpose.xlu0.b32.cont [4/16] %v5886, 128
        %6389 = vxpose.xlu0.b32.cont [5/16] %v5891, 128
        %6390 = vxpose.xlu0.b32.cont [6/16] %v5894, 128
        %6391 = vxpose.xlu0.b32.cont [7/16] %v5899, 128
        %6392 = vxpose.xlu0.b32.cont [8/16] %v5902, 128
        %6393 = vxpose.xlu0.b32.cont [9/16] %v5907, 128
        %6394 = vxpose.xlu0.b32.cont [10/16] %v5910, 128
        %6395 = vxpose.xlu0.b32.cont [11/16] %v5915, 128
        %6396 = vxpose.xlu0.b32.cont [12/16] %v5918, 128
        %6397 = vxpose.xlu0.b32.cont [13/16] %v5923, 128
        %6398 = vxpose.xlu0.b32.cont [14/16] %v5926, 128
        %6399 = vxpose.xlu0.b32.cont [15/16] %v5931, 128
        %6400 = vxpose.xlu0.b32.end [16/16] %v5934, 128
        %v6401 = vpop.trf.xlu0
        %v6402 = vpop.trf.xlu0
        %v6403 = vpop.trf.xlu0
        %v6404 = vpop.trf.xlu0
        %v6405 = vpop.trf.xlu0
        %v6406 = vpop.trf.xlu0
        %v6407 = vpop.trf.xlu0
        %v6408 = vpop.trf.xlu0
        %v6409 = vpop.trf.xlu0
        %v6410 = vpop.trf.xlu0
        %v6411 = vpop.trf.xlu0
        %v6412 = vpop.trf.xlu0
        %v6413 = vpop.trf.xlu0
        %v6414 = vpop.trf.xlu0
        %v6415 = vpop.trf.xlu0
        %v6416 = vpop.trf.xlu0
        %6417 = vxpose.xlu0.b32.start [1/16] %v5939, 128
        %6418 = vxpose.xlu0.b32.cont [2/16] %v5942, 128
        %6419 = vxpose.xlu0.b32.cont [3/16] %v5947, 128
        %6420 = vxpose.xlu0.b32.cont [4/16] %v5950, 128
        %6421 = vxpose.xlu0.b32.cont [5/16] %v5955, 128
        %6422 = vxpose.xlu0.b32.cont [6/16] %v5958, 128
        %6423 = vxpose.xlu0.b32.cont [7/16] %v5963, 128
        %6424 = vxpose.xlu0.b32.cont [8/16] %v5966, 128
        %6425 = vxpose.xlu0.b32.cont [9/16] %v5971, 128
        %6426 = vxpose.xlu0.b32.cont [10/16] %v5974, 128
        %6427 = vxpose.xlu0.b32.cont [11/16] %v5979, 128
        %6428 = vxpose.xlu0.b32.cont [12/16] %v5982, 128
        %6429 = vxpose.xlu0.b32.cont [13/16] %v5987, 128
        %6430 = vxpose.xlu0.b32.cont [14/16] %v5990, 128
        %6431 = vxpose.xlu0.b32.cont [15/16] %v5995, 128
        %6432 = vxpose.xlu0.b32.end [16/16] %v5998, 128
        %v6433 = vpop.trf.xlu0
        %v6434 = vpop.trf.xlu0
        %v6435 = vpop.trf.xlu0
        %v6436 = vpop.trf.xlu0
        %v6437 = vpop.trf.xlu0
        %v6438 = vpop.trf.xlu0
        %v6439 = vpop.trf.xlu0
        %v6440 = vpop.trf.xlu0
        %v6441 = vpop.trf.xlu0
        %v6442 = vpop.trf.xlu0
        %v6443 = vpop.trf.xlu0
        %v6444 = vpop.trf.xlu0
        %v6445 = vpop.trf.xlu0
        %v6446 = vpop.trf.xlu0
        %v6447 = vpop.trf.xlu0
        %v6448 = vpop.trf.xlu0
        %6449 = vxpose.xlu0.b32.start [1/16] %v6003, 128
        %6450 = vxpose.xlu0.b32.cont [2/16] %v6006, 128
        %6451 = vxpose.xlu0.b32.cont [3/16] %v6011, 128
        %6452 = vxpose.xlu0.b32.cont [4/16] %v6014, 128
        %6453 = vxpose.xlu0.b32.cont [5/16] %v6019, 128
        %6454 = vxpose.xlu0.b32.cont [6/16] %v6022, 128
        %6455 = vxpose.xlu0.b32.cont [7/16] %v6027, 128
        %6456 = vxpose.xlu0.b32.cont [8/16] %v6030, 128
        %6457 = vxpose.xlu0.b32.cont [9/16] %v6035, 128
        %6458 = vxpose.xlu0.b32.cont [10/16] %v6038, 128
        %6459 = vxpose.xlu0.b32.cont [11/16] %v6043, 128
        %6460 = vxpose.xlu0.b32.cont [12/16] %v6046, 128
        %6461 = vxpose.xlu0.b32.cont [13/16] %v6051, 128
        %6462 = vxpose.xlu0.b32.cont [14/16] %v6054, 128
        %6463 = vxpose.xlu0.b32.cont [15/16] %v6059, 128
        %6464 = vxpose.xlu0.b32.end [16/16] %v6062, 128
        %v6465 = vpop.trf.xlu0
        %v6466 = vpop.trf.xlu0
        %v6467 = vpop.trf.xlu0
        %v6468 = vpop.trf.xlu0
        %v6469 = vpop.trf.xlu0
        %v6470 = vpop.trf.xlu0
        %v6471 = vpop.trf.xlu0
        %v6472 = vpop.trf.xlu0
        %v6473 = vpop.trf.xlu0
        %v6474 = vpop.trf.xlu0
        %v6475 = vpop.trf.xlu0
        %v6476 = vpop.trf.xlu0
        %v6477 = vpop.trf.xlu0
        %v6478 = vpop.trf.xlu0
        %v6479 = vpop.trf.xlu0
        %v6480 = vpop.trf.xlu0
        %6481 = vxpose.xlu0.b32.start [1/16] %v6067, 128
        %6482 = vxpose.xlu0.b32.cont [2/16] %v6070, 128
        %6483 = vxpose.xlu0.b32.cont [3/16] %v6075, 128
        %6484 = vxpose.xlu0.b32.cont [4/16] %v6078, 128
        %6485 = vxpose.xlu0.b32.cont [5/16] %v6083, 128
        %6486 = vxpose.xlu0.b32.cont [6/16] %v6086, 128
        %6487 = vxpose.xlu0.b32.cont [7/16] %v6091, 128
        %6488 = vxpose.xlu0.b32.cont [8/16] %v6094, 128
        %6489 = vxpose.xlu0.b32.cont [9/16] %v6099, 128
        %6490 = vxpose.xlu0.b32.cont [10/16] %v6102, 128
        %6491 = vxpose.xlu0.b32.cont [11/16] %v6107, 128
        %6492 = vxpose.xlu0.b32.cont [12/16] %v6110, 128
        %6493 = vxpose.xlu0.b32.cont [13/16] %v6115, 128
        %6494 = vxpose.xlu0.b32.cont [14/16] %v6118, 128
        %6495 = vxpose.xlu0.b32.cont [15/16] %v6123, 128
        %6496 = vxpose.xlu0.b32.end [16/16] %v6126, 128
        %v6497 = vpop.trf.xlu0
        %v6498 = vpop.trf.xlu0
        %v6499 = vpop.trf.xlu0
        %v6500 = vpop.trf.xlu0
        %v6501 = vpop.trf.xlu0
        %v6502 = vpop.trf.xlu0
        %v6503 = vpop.trf.xlu0
        %v6504 = vpop.trf.xlu0
        %v6505 = vpop.trf.xlu0
        %v6506 = vpop.trf.xlu0
        %v6507 = vpop.trf.xlu0
        %v6508 = vpop.trf.xlu0
        %v6509 = vpop.trf.xlu0
        %v6510 = vpop.trf.xlu0
        %v6511 = vpop.trf.xlu0
        %v6512 = vpop.trf.xlu0
        %6513 = vxpose.xlu0.b32.start [1/16] %v6131, 128
        %6514 = vxpose.xlu0.b32.cont [2/16] %v6134, 128
        %6515 = vxpose.xlu0.b32.cont [3/16] %v6139, 128
        %6516 = vxpose.xlu0.b32.cont [4/16] %v6142, 128
        %6517 = vxpose.xlu0.b32.cont [5/16] %v6147, 128
        %6518 = vxpose.xlu0.b32.cont [6/16] %v6150, 128
        %6519 = vxpose.xlu0.b32.cont [7/16] %v6155, 128
        %6520 = vxpose.xlu0.b32.cont [8/16] %v6158, 128
        %6521 = vxpose.xlu0.b32.cont [9/16] %v6163, 128
        %6522 = vxpose.xlu0.b32.cont [10/16] %v6166, 128
        %6523 = vxpose.xlu0.b32.cont [11/16] %v6171, 128
        %6524 = vxpose.xlu0.b32.cont [12/16] %v6174, 128
        %6525 = vxpose.xlu0.b32.cont [13/16] %v6179, 128
        %6526 = vxpose.xlu0.b32.cont [14/16] %v6182, 128
        %6527 = vxpose.xlu0.b32.cont [15/16] %v6187, 128
        %6528 = vxpose.xlu0.b32.end [16/16] %v6190, 128
        %v6529 = vpop.trf.xlu0
        %v6530 = vpop.trf.xlu0
        %v6531 = vpop.trf.xlu0
        %v6532 = vpop.trf.xlu0
        %v6533 = vpop.trf.xlu0
        %v6534 = vpop.trf.xlu0
        %v6535 = vpop.trf.xlu0
        %v6536 = vpop.trf.xlu0
        %v6537 = vpop.trf.xlu0
        %v6538 = vpop.trf.xlu0
        %v6539 = vpop.trf.xlu0
        %v6540 = vpop.trf.xlu0
        %v6541 = vpop.trf.xlu0
        %v6542 = vpop.trf.xlu0
        %v6543 = vpop.trf.xlu0
        %v6544 = vpop.trf.xlu0
        %6545 = vxpose.xlu0.b32.start [1/16] %v6195, 128
        %6546 = vxpose.xlu0.b32.cont [2/16] %v6198, 128
        %6547 = vxpose.xlu0.b32.cont [3/16] %v6203, 128
        %6548 = vxpose.xlu0.b32.cont [4/16] %v6206, 128
        %6549 = vxpose.xlu0.b32.cont [5/16] %v6211, 128
        %6550 = vxpose.xlu0.b32.cont [6/16] %v6214, 128
        %6551 = vxpose.xlu0.b32.cont [7/16] %v6219, 128
        %6552 = vxpose.xlu0.b32.cont [8/16] %v6222, 128
        %6553 = vxpose.xlu0.b32.cont [9/16] %v6227, 128
        %6554 = vxpose.xlu0.b32.cont [10/16] %v6230, 128
        %6555 = vxpose.xlu0.b32.cont [11/16] %v6235, 128
        %6556 = vxpose.xlu0.b32.cont [12/16] %v6238, 128
        %6557 = vxpose.xlu0.b32.cont [13/16] %v6243, 128
        %6558 = vxpose.xlu0.b32.cont [14/16] %v6246, 128
        %6559 = vxpose.xlu0.b32.cont [15/16] %v6251, 128
        %6560 = vxpose.xlu0.b32.end [16/16] %v6254, 128
        %v6561 = vpop.trf.xlu0
        %v6562 = vpop.trf.xlu0
        %v6563 = vpop.trf.xlu0
        %v6564 = vpop.trf.xlu0
        %v6565 = vpop.trf.xlu0
        %v6566 = vpop.trf.xlu0
        %v6567 = vpop.trf.xlu0
        %v6568 = vpop.trf.xlu0
        %v6569 = vpop.trf.xlu0
        %v6570 = vpop.trf.xlu0
        %v6571 = vpop.trf.xlu0
        %v6572 = vpop.trf.xlu0
        %v6573 = vpop.trf.xlu0
        %v6574 = vpop.trf.xlu0
        %v6575 = vpop.trf.xlu0
        %v6576 = vpop.trf.xlu0
        %6577 = vxpose.xlu0.b32.start [1/16] %v6259, 128
        %6578 = vxpose.xlu0.b32.cont [2/16] %v6262, 128
        %6579 = vxpose.xlu0.b32.cont [3/16] %v6267, 128
        %6580 = vxpose.xlu0.b32.cont [4/16] %v6270, 128
        %6581 = vxpose.xlu0.b32.cont [5/16] %v6275, 128
        %6582 = vxpose.xlu0.b32.cont [6/16] %v6278, 128
        %6583 = vxpose.xlu0.b32.cont [7/16] %v6283, 128
        %6584 = vxpose.xlu0.b32.cont [8/16] %v6286, 128
        %6585 = vxpose.xlu0.b32.cont [9/16] %v6291, 128
        %6586 = vxpose.xlu0.b32.cont [10/16] %v6294, 128
        %6587 = vxpose.xlu0.b32.cont [11/16] %v6299, 128
        %6588 = vxpose.xlu0.b32.cont [12/16] %v6302, 128
        %6589 = vxpose.xlu0.b32.cont [13/16] %v6307, 128
        %6590 = vxpose.xlu0.b32.cont [14/16] %v6310, 128
        %6591 = vxpose.xlu0.b32.cont [15/16] %v6315, 128
        %6592 = vxpose.xlu0.b32.end [16/16] %v6318, 128
        %v6593 = vpop.trf.xlu0
        %v6594 = vpop.trf.xlu0
        %v6595 = vpop.trf.xlu0
        %v6596 = vpop.trf.xlu0
        %v6597 = vpop.trf.xlu0
        %v6598 = vpop.trf.xlu0
        %v6599 = vpop.trf.xlu0
        %v6600 = vpop.trf.xlu0
        %v6601 = vpop.trf.xlu0
        %v6602 = vpop.trf.xlu0
        %v6603 = vpop.trf.xlu0
        %v6604 = vpop.trf.xlu0
        %v6605 = vpop.trf.xlu0
        %v6606 = vpop.trf.xlu0
        %v6607 = vpop.trf.xlu0
        %v6608 = vpop.trf.xlu0
        %6609 = vxpose.xlu0.b32.start [1/16] %v6323, 128
        %6610 = vxpose.xlu0.b32.cont [2/16] %v6326, 128
        %6611 = vxpose.xlu0.b32.cont [3/16] %v6331, 128
        %6612 = vxpose.xlu0.b32.cont [4/16] %v6334, 128
        %6613 = vxpose.xlu0.b32.cont [5/16] %v6339, 128
        %6614 = vxpose.xlu0.b32.cont [6/16] %v6342, 128
        %6615 = vxpose.xlu0.b32.cont [7/16] %v6347, 128
        %6616 = vxpose.xlu0.b32.cont [8/16] %v6350, 128
        %6617 = vxpose.xlu0.b32.cont [9/16] %v6355, 128
        %6618 = vxpose.xlu0.b32.cont [10/16] %v6358, 128
        %6619 = vxpose.xlu0.b32.cont [11/16] %v6363, 128
        %6620 = vxpose.xlu0.b32.cont [12/16] %v6366, 128
        %6621 = vxpose.xlu0.b32.cont [13/16] %v6371, 128
        %6622 = vxpose.xlu0.b32.cont [14/16] %v6374, 128
        %6623 = vxpose.xlu0.b32.cont [15/16] %v6379, 128
        %6624 = vxpose.xlu0.b32.end [16/16] %v6382, 128
        %v6625 = vpop.trf.xlu0
        %v6626 = vpop.trf.xlu0
        %v6627 = vpop.trf.xlu0
        %v6628 = vpop.trf.xlu0
        %v6629 = vpop.trf.xlu0
        %v6630 = vpop.trf.xlu0
        %v6631 = vpop.trf.xlu0
        %v6632 = vpop.trf.xlu0
        %v6633 = vpop.trf.xlu0
        %v6634 = vpop.trf.xlu0
        %v6635 = vpop.trf.xlu0
        %v6636 = vpop.trf.xlu0
        %v6637 = vpop.trf.xlu0
        %v6638 = vpop.trf.xlu0
        %v6639 = vpop.trf.xlu0
        %v6640 = vpop.trf.xlu0
        %v6649 = vcombine.low %v6401, %v6433
        %v6650 = vcombine.low %v6465, %v6497
        %v6651 = vcombine.low %v6529, %v6561
        %v6652 = vcombine.low %v6593, %v6625
        %v6654 = vunpack.c.l.s4 1966171168
        %v6655 = vunpack.c.0.s8 %v6654
        %v6656 = vlaneseq
        %v6657 = vshrl.u32 %v6656, 7
        %v6658 = vsub.s32 %v6655, %v6657
        %v6659 = vrot.slane %v6649, %v6658
        %v6661 = vunpack.c.l.s4 1966171168
        %v6662 = vunpack.c.0.s8 %v6661
        %v6663 = vlaneseq
        %v6664 = vshrl.u32 %v6663, 7
        %v6665 = vsub.s32 %v6662, %v6664
        %v6666 = vrot.slane %v6650, %v6665
        %v6668 = vunpack.c.l.s4 1966171168
        %v6669 = vunpack.c.0.s8 %v6668
        %v6670 = vlaneseq
        %v6671 = vshrl.u32 %v6670, 7
        %v6672 = vsub.s32 %v6669, %v6671
        %v6673 = vrot.slane %v6651, %v6672
        %v6675 = vunpack.c.l.s4 1966171168
        %v6676 = vunpack.c.0.s8 %v6675
        %v6677 = vlaneseq
        %v6678 = vshrl.u32 %v6677, 7
        %v6679 = vsub.s32 %v6676, %v6678
        %v6680 = vrot.slane %v6652, %v6679
        %v6681 = vcombine.low %v6659, %v6666
        %v6682 = vcombine.low %v6673, %v6680
        %v6684 = vunpack.c.l.s4 1966171168
        %v6685 = vunpack.c.0.s8 %v6684
        %v6686 = vlaneseq
        %v6687 = vshrl.u32 %v6686, 7
        %v6688 = vsub.s32 %v6685, %v6687
        %v6689 = vrot.slane %v6681, %v6688
        %v6691 = vunpack.c.l.s4 1966171168
        %v6692 = vunpack.c.0.s8 %v6691
        %v6693 = vlaneseq
        %v6694 = vshrl.u32 %v6693, 7
        %v6695 = vsub.s32 %v6692, %v6694
        %v6696 = vrot.slane %v6682, %v6695
        %v6697 = vcombine.low %v6689, %v6696
        %6699 = vst [vmem:[%s304] sm:$0xff] %v6697
        %s6700 = sand.u32 %s142, 1
        %s6701 = scalar_lea.sflag [#allocation4], %s6700
        %s6702 = sand.u32 %s142, 1
        %s6703 = smul.addr %s6702, 8
        %s6704 = scalar_lea.vmem [#allocation11], %s6703
        // Predicated region
        $region61: #{tpu_custom_call.1} parent=39 // pred_check
          %p6705 = pneg %p152
        $region62: #{tpu_custom_call.1} parent=39 // pred_check_branch
          %6707 = sbr.rel (%p6705) target = $region64
        $region63: #{tpu_custom_call.1} parent=39 // pred_region
          %s6708 = smul.u32 8, %s24
          %s6710 = ssub.s32 128, 128
          %6711 = vsyncadd %s6701, %s6710
          %s6712 = smul.addr %s6708, 16
          %s6713 = scalar_lea.hbm %s5, %s6712
          %s6715 = sshll.u32 %s6704, 4
          %s6716 = int_to_ptr.vmem [resolvable:$true] %s6715
          %6718 = dma.vmem_to_hbm [thread:$0]  %s6716, 128, %s6713, %s6701
        $region64: #{tpu_custom_call.1} parent=39 // pred_fallthru
          _
      $region40: #{tpu_custom_call.1} parent=5 // pred_fallthru
        _
      %p6719 = scmp.le.s32.totalorder 2, %s19
      // Predicated region
      $region65: #{tpu_custom_call.1} parent=5 // pred_check
        %p6720 = pneg %p6719
      $region66: #{tpu_custom_call.1} parent=5 // pred_check_branch
        %6722 = sbr.rel (%p6720) target = $region68
      $region67: #{tpu_custom_call.1} parent=5 // pred_region
        %s6723 = ssub.s32 %s19, 2
        // Predicated region
        $region69: #{tpu_custom_call.1} parent=67 // pred_check
          %p6724 = pneg %p158
        $region70: #{tpu_custom_call.1} parent=67 // pred_check_branch
          %6726 = sbr.rel (%p6724) target = $region72
        $region71: #{tpu_custom_call.1} parent=67 // pred_region
          %s6727 = sand.u32 %s143, 1
          %s6728 = scalar_lea.sflag [#allocation4], %s6727
          %s6729 = sand.u32 %s143, 1
          %s6730 = smul.addr %s6729, 8
          %s6731 = scalar_lea.vmem [#allocation11], %s6730
          %6732 = dma.done %s6728, 128
        $region72: #{tpu_custom_call.1} parent=67 // pred_fallthru
          _
      $region68: #{tpu_custom_call.1} parent=5 // pred_fallthru
        _
    $region6: #{tpu_custom_call.1} parent=1 // loop_footer
      %s23 = sadd.s32 1, %s19
    $region7: #{tpu_custom_call.1} parent=1 // loop_footer_branch
      %18 = sbr.rel target = $region3
    $region8: #{tpu_custom_call.1} parent=1 // loop_exit
      _
    %6733 = vsyncpa [#allocation3], 1
    %s6734 = scalar_lea.sflag [#allocation3], 1
    %6735 = vsyncpa %s6734, 1
    %6736 = vsyncpa [#allocation6], 1
    %6737 = vsyncpa [#allocation9], 1
    %6738 = vsyncpa [#allocation4], 1
    %s6739 = scalar_lea.sflag [#allocation4], 1
    %6740 = vsyncpa %s6739, 1

</llo_original>
